<compile_context>
chip_gen: v5e
topology: v5e:2x2
jax: 0.10.0
libtpu: 0.0.40
codegen_flags: <defaults>
</compile_context>

<pallas_src>
import functools
import itertools

import numpy as np
import jax
import jax.numpy as jnp
from jax import lax
from jax.experimental import pallas as pl
from jax.experimental.pallas import tpu as pltpu

# ----------------------------- configuration (small) -----------------------------
DIM = 64            # dim
KEY_DIM = 8         # key_dim
NUM_HEADS = 2       # num_heads
ATTN_RATIO = 4      # attn_ratio
RESOLUTION = 8      # resolution (window size), H = W = RESOLUTION
KERNELS = [5, 5]    # dw-conv kernel per head (must all be equal in this impl)

D = ATTN_RATIO * KEY_DIM         # value dim per head
CIN = DIM // NUM_HEADS           # per-head input channels
assert D == CIN, "the cascade add in forward() requires d == dim // num_heads"
assert all(k == KERNELS[0] for k in KERNELS)
H = W = RESOLUTION
N = H * W
KK = KERNELS[0] * KERNELS[0]
SCALE = KEY_DIM ** -0.5
BN_EPS = 1e-5

PACK = 2                         # images packed along the lane axis per pair
LANES = PACK * N                 # 128 -> lane-dense tiles
NEG_INF = -1e30                  # cross-image attention mask value
PAIRS_PER_STEP = 4               # image pairs per grid step (amortize step overhead)
N_DW_ACC = 4                     # independent partial sums in the depthwise stencil
assert KK >= N_DW_ACC


# ------------------------------- host-side helpers --------------------------------
def _attention_bias_index():
    points = list(itertools.product(range(RESOLUTION), range(RESOLUTION)))
    offsets = {}
    idxs = []
    for p1 in points:
        for p2 in points:
            off = (abs(p1[0] - p2[0]), abs(p1[1] - p2[1]))
            if off not in offsets:
                offsets[off] = len(offsets)
            idxs.append(offsets[off])
    return np.array(idxs, np.int32).reshape(N, N), len(offsets)


def build_params(key):
    keys = iter(jax.random.split(key, 4 * NUM_HEADS + 4))

    def bn_params(k, c):
        k1, k2, k3, k4 = jax.random.split(k, 4)
        gamma = jax.random.uniform(k1, (c,), jnp.float32, 0.5, 1.5)
        beta = 0.1 * jax.random.normal(k2, (c,), jnp.float32)
        mean = 0.1 * jax.random.normal(k3, (c,), jnp.float32)
        var = jax.random.uniform(k4, (c,), jnp.float32, 0.5, 1.5)
        return gamma, beta, mean, var

    def fold(w2d, gamma, beta, mean, var):
        s = gamma / jnp.sqrt(var + BN_EPS)
        return w2d * s[:, None], beta - mean * s

    cout_qkv = 2 * KEY_DIM + D
    w_qkv, b_qkv, w_dw, b_dw, w_dw_img = [], [], [], [], []
    for i in range(NUM_HEADS):
        wc = 0.1 * jax.random.normal(next(keys), (cout_qkv, CIN), jnp.float32)
        g, bta, m, v = bn_params(next(keys), cout_qkv)
        wf, bf = fold(wc, g, bta, m, v)
        w_qkv.append(wf)
        b_qkv.append(bf[:, None])

        K = KERNELS[i]
        wdc = 0.1 * jax.random.normal(next(keys), (KEY_DIM, 1, K, K), jnp.float32)
        g, bta, m, v = bn_params(next(keys), KEY_DIM)
        s = g / jnp.sqrt(v + BN_EPS)
        wdf = wdc[:, 0] * s[:, None, None]            # fused depthwise weight (kd, K, K)
        w_dw.append(wdf)
        b_dw.append((bta - m * s)[:, None])           # fused depthwise bias (kd, 1)
        w_dw_img.append(wdf[:, None, :, :])           # OIHW, for the lax.conv reference

    wp = 0.1 * jax.random.normal(next(keys), (DIM, D * NUM_HEADS), jnp.float32)
    g, bta, m, v = bn_params(next(keys), DIM)
    wpf, bpf = fold(wp, g, bta, m, v)

    idxs, n_off = _attention_bias_index()
    ab_table = 0.5 * jax.random.normal(next(keys), (NUM_HEADS, n_off), jnp.float32)
    ab = ab_table[:, jnp.asarray(idxs)]               # (NH, N, N)

    # ---- kernel-side packed / folded parameters ----
    # attention bias for PACK lane-packed images: block diagonal, cross-image = -1e30
    ab_packed = jnp.full((NUM_HEADS, LANES, LANES), NEG_INF, jnp.float32)
    ab_packed = ab_packed.at[:, :N, :N].set(ab).at[:, N:, N:].set(ab)

    # depthwise KxK conv as a lane-roll stencil: per tap, a static lane rotation plus a
    # (boundary-mask * weight * SCALE) coefficient.  The mask zeroes pixels whose
    # source crosses an image-row or image<->image boundary in the packed lane layout.
    K = KERNELS[0]
    padk = K // 2
    lane = np.arange(LANES)
    pix = lane % N
    row, col = pix // W, pix % W
    tap_shifts, masks = [], []
    for a in range(K):
        for b in range(K):
            dy, dx = a - padk, b - padk
            # want shifted[l] = q[l + dy*W + dx]  ->  jnp.roll-style shift of -(dy*W+dx)
            tap_shifts.append(int((-(dy * W + dx)) % LANES))
            ok = ((row + dy >= 0) & (row + dy < H) &
                  (col + dx >= 0) & (col + dx < W))
            masks.append(ok.astype(np.float32))
    masks = jnp.asarray(np.stack(masks))                                # (KK, LANES)
    w_dw_stack = jnp.stack(w_dw).reshape(NUM_HEADS, KEY_DIM, KK)        # tap = a*K + b
    dw_coeff = SCALE * jnp.einsum('ict,tl->itcl', w_dw_stack, masks)    # (NH,KK,kd,LANES)
    b_dw_scaled = SCALE * jnp.stack(b_dw)                               # (NH, kd, 1)

    return dict(
        # kernel params
        w_qkv=jnp.stack(w_qkv),                      # (NH, 2*kd+d, CIN)  f32
        b_qkv=jnp.stack(b_qkv),                      # (NH, 2*kd+d, 1)    f32
        dw_coeff=dw_coeff.astype(jnp.bfloat16),      # (NH, KK, kd, LANES) bf16 (halve DMA/VMEM)
        b_dw_scaled=b_dw_scaled,                     # (NH, kd, 1)        f32
        tap_shifts=tuple(tap_shifts),                # static python ints (roll amounts)
        ab_packed=ab_packed.astype(jnp.bfloat16),    # (NH, LANES, LANES) bf16 (-1e30 survives)
        w_proj_heads=wpf.reshape(DIM, NUM_HEADS, D).transpose(1, 0, 2),  # (NH, DIM, d) f32
        b_proj=bpf[:, None],                         # (DIM, 1)           f32
        # reference-only params
        b_dw=jnp.stack(b_dw),                        # (NH, kd, 1), un-scaled
        w_dw_img=w_dw_img,
        ab=ab,
        w_proj_full=wpf,
    )


# ----------------------------------- the kernel -----------------------------------
def _cga_kernel(x_ref, wqkv_ref, bqkv_ref, dwc_ref, bdw_ref, ab_ref,
                wproj_ref, bproj_ref, out_ref, *,
                num_heads, key_dim, cin, taps, pairs):
    for p in range(pairs):                               # image pairs in this block
        acc = jnp.zeros(out_ref.shape[1:], jnp.float32)  # projection accumulator (vregs)
        prev = None

        for i in range(num_heads):                       # cascade fully unrolled in-body
            # per-head chunk sliced straight from the ref (no full-x load -> fewer live vregs)
            chunk = x_ref[p, i * cin:(i + 1) * cin, :]   # (CIN, LANES)
            feat = chunk if i == 0 else prev + chunk     # cascade: prev head out + chunk

            # fused 1x1 Conv2d_BN (qkv): channel matmul + bias
            qkv = jnp.dot(wqkv_ref[i], feat,
                          preferred_element_type=jnp.float32) + bqkv_ref[i]
            q = qkv[:key_dim]
            k = qkv[key_dim:2 * key_dim]
            v = qkv[2 * key_dim:]

            # fused depthwise KxK Conv2d_BN on q (softmax SCALE folded into coeffs/bias):
            # XLU lane rolls + VPU FMAs, accumulated into N_DW_ACC independent partial
            # sums so the 4 VALUs are not serialized behind one dependent chain.
            parts = [None] * N_DW_ACC
            for t, shift in enumerate(taps):
                qs = q if shift == 0 else pltpu.roll(q, shift, 1)
                term = dwc_ref[i, t].astype(jnp.float32) * qs
                j = t % N_DW_ACC
                parts[j] = term if parts[j] is None else parts[j] + term
            qd = bdw_ref[i] + ((parts[0] + parts[1]) + (parts[2] + parts[3]))

            # attention over the 2-image block-diagonal (cross-image bias = -1e30).
            # MXU operands in bf16, f32 accumulation; softmax / elementwise math stays f32.
            logits = lax.dot_general(
                qd.astype(jnp.bfloat16), k.astype(jnp.bfloat16),
                (((0,), (0,)), ((), ())),
                preferred_element_type=jnp.float32) + ab_ref[i].astype(jnp.float32)
            logits = logits - jnp.max(logits, axis=-1, keepdims=True)
            e = jnp.exp(logits)
            # (measure-first on v6e/v7x: if a bundle dump shows the 2 XLUs saturated,
            #  this row-sum can be moved onto the idle MXU via dot(e, ones((LANES,1))).)
            attn = e * pl.reciprocal(jnp.sum(e, axis=-1, keepdims=True), approx=True)

            out = lax.dot_general(
                v.astype(jnp.bfloat16), attn.astype(jnp.bfloat16),
                (((1,), (1,)), ((), ())),
                preferred_element_type=jnp.float32)      # (d, LANES)
            prev = out

            # projection (ReLU + fused 1x1 Conv2d_BN), accumulated head by head
            acc = acc + jnp.dot(wproj_ref[i], jnp.maximum(out, 0.0),
                                preferred_element_type=jnp.float32)

        out_ref[p] = acc + bproj_ref[...]                # lane-dense 128-wide store


def cga_pallas(x, params, pairs_per_step=PAIRS_PER_STEP):
    B, C, Himg, Wimg = x.shape
    assert C == DIM and Himg == H and Wimg == W
    xf = x.reshape(B, C, N).astype(jnp.float32)

    # pack PACK=2 images per pair along the lane axis, then block G pairs per grid step;
    # G is clamped so there are always >= 2 grid steps when possible (v7x megacore).
    nb = -(-B // PACK)                                           # number of pairs
    g = max(1, min(pairs_per_step, nb // 2)) if nb >= 2 else 1
    n_steps = -(-nb // g)
    nbp = n_steps * g
    total = nbp * PACK
    if total > B:
        xf = jnp.concatenate([xf, jnp.zeros((total - B, C, N), jnp.float32)], axis=0)
    # NOTE: in a full EfficientViT network this lane-packing (and the matching unpack
    # below) should be folded into the producer/consumer layout once per network, not
    # around every attention block -- kept local here so the script is self-contained.
    xp = xf.reshape(nbp, PACK, C, N).transpose(0, 2, 1, 3).reshape(nbp, C, LANES)

    cout_qkv = 2 * KEY_DIM + D
    kernel = functools.partial(_cga_kernel, num_heads=NUM_HEADS, key_dim=KEY_DIM,
                               cin=CIN, taps=params["tap_shifts"], pairs=g)

    out = pl.pallas_call(
        kernel,
        out_shape=jax.ShapeDtypeStruct((nbp, DIM, LANES), jnp.float32),
        grid_spec=pltpu.PrefetchScalarGridSpec(
            num_scalar_prefetch=0,
            grid=(n_steps,),
            in_specs=[
                pl.BlockSpec((g, DIM, LANES), lambda b: (b, 0, 0)),              # x pair-block
                pl.BlockSpec((NUM_HEADS, cout_qkv, CIN), lambda b: (0, 0, 0)),   # qkv W
                pl.BlockSpec((NUM_HEADS, cout_qkv, 1), lambda b: (0, 0, 0)),     # qkv b
                pl.BlockSpec((NUM_HEADS, KK, KEY_DIM, LANES),
                             lambda b: (0, 0, 0, 0)),                            # dw coeff (bf16)
                pl.BlockSpec((NUM_HEADS, KEY_DIM, 1), lambda b: (0, 0, 0)),      # dw bias
                pl.BlockSpec((NUM_HEADS, LANES, LANES), lambda b: (0, 0, 0)),    # attn bias (bf16)
                pl.BlockSpec((NUM_HEADS, DIM, D), lambda b: (0, 0, 0)),          # proj W
                pl.BlockSpec((DIM, 1), lambda b: (0, 0)),                        # proj b
            ],
            out_specs=pl.BlockSpec((g, DIM, LANES), lambda b: (b, 0, 0)),
        ),
        compiler_params=pltpu.CompilerParams(
            dimension_semantics=("parallel",)),       # pair-blocks are independent
    )(xp, params["w_qkv"], params["b_qkv"], params["dw_coeff"],
      params["b_dw_scaled"], params["ab_packed"], params["w_proj_heads"],
      params["b_proj"])

    y = out.reshape(nbp, DIM, PACK, N).transpose(0, 2, 1, 3).reshape(nbp * PACK, DIM, N)
    return y[:B].reshape(B, DIM, H, W)


# ------------------------------ pure-JAX reference ---------------------------------
def cga_reference(x, params):
    B = x.shape[0]
    xf = x.reshape(B, DIM, N).astype(jnp.float32)
    chunks = jnp.split(xf, NUM_HEADS, axis=1)
    feats, prev = [], None
    for i in range(NUM_HEADS):
        feat = chunks[i] if i == 0 else prev + chunks[i]
        qkv = jnp.einsum('oc,bcn->bon', params["w_qkv"][i], feat) + params["b_qkv"][i][None]
        q, k, v = qkv[:, :KEY_DIM], qkv[:, KEY_DIM:2 * KEY_DIM], qkv[:, 2 * KEY_DIM:]
        q_img = q.reshape(B, KEY_DIM, H, W)
        qd_img = lax.conv_general_dilated(
            q_img, params["w_dw_img"][i], (1, 1), 'SAME',
            feature_group_count=KEY_DIM,
            dimension_numbers=('NCHW', 'OIHW', 'NCHW'))
        qd = qd_img.reshape(B, KEY_DIM, N) + params["b_dw"][i][None]
        logits = jnp.einsum('bcn,bcm->bnm', qd, k) * SCALE + params["ab"][i][None]
        attn = jax.nn.softmax(logits, axis=-1)
        out = jnp.einsum('bdm,bnm->bdn', v, attn)
        feats.append(out)
        prev = out
    cat = jnp.concatenate(feats, axis=1)
    proj = jnp.einsum('od,bdn->bon', params["w_proj_full"],
                      jax.nn.relu(cat)) + params["b_proj"][None]
    return proj.reshape(B, DIM, H, W)


# ------------------------------------- main ----------------------------------------
if __name__ == "__main__":
    key = jax.random.PRNGKey(0)
    kx, kp = jax.random.split(key)
    # B=16 -> 8 lane-packed pairs -> 2 grid steps of 4 pairs (both v7x TensorCores busy).
    x = jax.random.normal(kx, (16, DIM, H, W), jnp.float32)
    params = build_params(kp)

    y = cga_pallas(x, params)
    y = jax.block_until_ready(y)

    y_ref = cga_reference(x, params)
    # tolerance: approx-reciprocal softmax, default (bf16-class) MXU precision, bf16-stored
    # bias / dw-conv constants and bf16 MXU operands each contribute O(1e-4..1e-3) rel error.
    np.testing.assert_allclose(np.asarray(y), np.asarray(y_ref), rtol=1e-2, atol=1e-2)
    print("KERNEL_OK")
</pallas_src>

<mosaic_0001>
module attributes {stable_mosaic.version = 11 : i64} {
  func.func @_cga_kernel(%arg0: i32, %arg1: memref<4x64x128xf32, #tpu.memory_space<vmem>>, %arg2: memref<2x48x32xf32, #tpu.memory_space<vmem>>, %arg3: memref<2x48x1xf32, #tpu.memory_space<vmem>>, %arg4: memref<2x25x8x128xbf16, #tpu.memory_space<vmem>>, %arg5: memref<2x8x1xf32, #tpu.memory_space<vmem>>, %arg6: memref<2x128x128xbf16, #tpu.memory_space<vmem>>, %arg7: memref<2x64x32xf32, #tpu.memory_space<vmem>>, %arg8: memref<64x1xf32, #tpu.memory_space<vmem>>, %arg9: memref<4x64x128xf32, #tpu.memory_space<vmem>>) attributes {dimension_semantics = [#tpu.dimension_semantics<parallel>], iteration_bounds = array<i64: 2>, scalar_prefetch = 0 : i64, scratch_operands = 0 : i64, tpu.core_type = #tpu.core_type<tc>, window_params = [{transform_indices = @transform_0, window_bounds = array<i64: 4, 64, 128>}, {pipeline_mode = #tpu.pipeline_mode<synchronous>, transform_indices = @transform_1, window_bounds = array<i64: 2, 48, 32>}, {pipeline_mode = #tpu.pipeline_mode<synchronous>, transform_indices = @transform_2, window_bounds = array<i64: 2, 48, 1>}, {pipeline_mode = #tpu.pipeline_mode<synchronous>, transform_indices = @transform_3, window_bounds = array<i64: 2, 25, 8, 128>}, {pipeline_mode = #tpu.pipeline_mode<synchronous>, transform_indices = @transform_4, window_bounds = array<i64: 2, 8, 1>}, {pipeline_mode = #tpu.pipeline_mode<synchronous>, transform_indices = @transform_5, window_bounds = array<i64: 2, 128, 128>}, {pipeline_mode = #tpu.pipeline_mode<synchronous>, transform_indices = @transform_6, window_bounds = array<i64: 2, 64, 32>}, {pipeline_mode = #tpu.pipeline_mode<synchronous>, transform_indices = @transform_7, window_bounds = array<i64: 64, 1>}, {transform_indices = @transform_8, window_bounds = array<i64: 4, 64, 128>}]} {
    %cst = arith.constant 0.000000e+00 : f32
    %0 = vector.broadcast %cst : f32 to vector<64x128xf32>
    %c0 = arith.constant 0 : index
    %c0_0 = arith.constant 0 : index
    %c0_1 = arith.constant 0 : index
    %1 = vector.load %arg1[%c0, %c0_0, %c0_1] : memref<4x64x128xf32, #tpu.memory_space<vmem>>, vector<1x32x128xf32>
    %2 = vector.shape_cast %1 : vector<1x32x128xf32> to vector<32x128xf32>
    %c0_2 = arith.constant 0 : index
    %c0_3 = arith.constant 0 : index
    %c0_4 = arith.constant 0 : index
    %3 = vector.load %arg2[%c0_2, %c0_3, %c0_4] : memref<2x48x32xf32, #tpu.memory_space<vmem>>, vector<1x48x32xf32>
    %4 = vector.shape_cast %3 : vector<1x48x32xf32> to vector<48x32xf32>
    %cst_5 = arith.constant dense<0.000000e+00> : vector<48x128xf32>
    %5 = tpu.matmul %4, %2, %cst_5 {dimension_numbers = #tpu.dot_dimension_numbers<[1], [0], [0], [1], [0, 0, 1, 1], [], []>} : vector<48x32xf32>, vector<32x128xf32>, vector<48x128xf32> -> vector<48x128xf32>
    %c0_6 = arith.constant 0 : index
    %c0_7 = arith.constant 0 : index
    %c0_8 = arith.constant 0 : index
    %6 = vector.load %arg3[%c0_6, %c0_7, %c0_8] : memref<2x48x1xf32, #tpu.memory_space<vmem>>, vector<1x48x1xf32>
    %7 = vector.shape_cast %6 : vector<1x48x1xf32> to vector<48x1xf32>
    %8 = vector.broadcast %7 : vector<48x1xf32> to vector<48x128xf32>
    %9 = arith.addf %5, %8 : vector<48x128xf32>
    %10 = vector.extract_strided_slice %9 {offsets = [0, 0], sizes = [8, 128], strides = [1, 1]} : vector<48x128xf32> to vector<8x128xf32>
    %11 = vector.extract_strided_slice %9 {offsets = [8, 0], sizes = [8, 128], strides = [1, 1]} : vector<48x128xf32> to vector<8x128xf32>
    %12 = vector.extract_strided_slice %9 {offsets = [16, 0], sizes = [32, 128], strides = [1, 1]} : vector<48x128xf32> to vector<32x128xf32>
    %c18_i32 = arith.constant 18 : i32
    %13 = tpu.dynamic_rotate %10 by %c18_i32 dim 1 : vector<8x128xf32>, i32 -> vector<8x128xf32>
    %c0_9 = arith.constant 0 : index
    %c0_10 = arith.constant 0 : index
    %c0_11 = arith.constant 0 : index
    %c0_12 = arith.constant 0 : index
    %14 = vector.load %arg4[%c0_9, %c0_10, %c0_11, %c0_12] : memref<2x25x8x128xbf16, #tpu.memory_space<vmem>>, vector<1x1x8x128xbf16>
    %15 = vector.shape_cast %14 : vector<1x1x8x128xbf16> to vector<8x128xbf16>
    %16 = arith.extf %15 : vector<8x128xbf16> to vector<8x128xf32>
    %17 = arith.mulf %16, %13 : vector<8x128xf32>
    %c17_i32 = arith.constant 17 : i32
    %18 = tpu.dynamic_rotate %10 by %c17_i32 dim 1 : vector<8x128xf32>, i32 -> vector<8x128xf32>
    %c0_13 = arith.constant 0 : index
    %c1 = arith.constant 1 : index
    %c0_14 = arith.constant 0 : index
    %c0_15 = arith.constant 0 : index
    %19 = vector.load %arg4[%c0_13, %c1, %c0_14, %c0_15] : memref<2x25x8x128xbf16, #tpu.memory_space<vmem>>, vector<1x1x8x128xbf16>
    %20 = vector.shape_cast %19 : vector<1x1x8x128xbf16> to vector<8x128xbf16>
    %21 = arith.extf %20 : vector<8x128xbf16> to vector<8x128xf32>
    %22 = arith.mulf %21, %18 : vector<8x128xf32>
    %c16_i32 = arith.constant 16 : i32
    %23 = tpu.dynamic_rotate %10 by %c16_i32 dim 1 : vector<8x128xf32>, i32 -> vector<8x128xf32>
    %c0_16 = arith.constant 0 : index
    %c2 = arith.constant 2 : index
    %c0_17 = arith.constant 0 : index
    %c0_18 = arith.constant 0 : index
    %24 = vector.load %arg4[%c0_16, %c2, %c0_17, %c0_18] : memref<2x25x8x128xbf16, #tpu.memory_space<vmem>>, vector<1x1x8x128xbf16>
    %25 = vector.shape_cast %24 : vector<1x1x8x128xbf16> to vector<8x128xbf16>
    %26 = arith.extf %25 : vector<8x128xbf16> to vector<8x128xf32>
    %27 = arith.mulf %26, %23 : vector<8x128xf32>
    %c15_i32 = arith.constant 15 : i32
    %28 = tpu.dynamic_rotate %10 by %c15_i32 dim 1 : vector<8x128xf32>, i32 -> vector<8x128xf32>
    %c0_19 = arith.constant 0 : index
    %c3 = arith.constant 3 : index
    %c0_20 = arith.constant 0 : index
    %c0_21 = arith.constant 0 : index
    %29 = vector.load %arg4[%c0_19, %c3, %c0_20, %c0_21] : memref<2x25x8x128xbf16, #tpu.memory_space<vmem>>, vector<1x1x8x128xbf16>
    %30 = vector.shape_cast %29 : vector<1x1x8x128xbf16> to vector<8x128xbf16>
    %31 = arith.extf %30 : vector<8x128xbf16> to vector<8x128xf32>
    %32 = arith.mulf %31, %28 : vector<8x128xf32>
    %c14_i32 = arith.constant 14 : i32
    %33 = tpu.dynamic_rotate %10 by %c14_i32 dim 1 : vector<8x128xf32>, i32 -> vector<8x128xf32>
    %c0_22 = arith.constant 0 : index
    %c4 = arith.constant 4 : index
    %c0_23 = arith.constant 0 : index
    %c0_24 = arith.constant 0 : index
    %34 = vector.load %arg4[%c0_22, %c4, %c0_23, %c0_24] : memref<2x25x8x128xbf16, #tpu.memory_space<vmem>>, vector<1x1x8x128xbf16>
    %35 = vector.shape_cast %34 : vector<1x1x8x128xbf16> to vector<8x128xbf16>
    %36 = arith.extf %35 : vector<8x128xbf16> to vector<8x128xf32>
    %37 = arith.mulf %36, %33 : vector<8x128xf32>
    %38 = arith.addf %17, %37 : vector<8x128xf32>
    %c10_i32 = arith.constant 10 : i32
    %39 = tpu.dynamic_rotate %10 by %c10_i32 dim 1 : vector<8x128xf32>, i32 -> vector<8x128xf32>
    %c0_25 = arith.constant 0 : index
    %c5 = arith.constant 5 : index
    %c0_26 = arith.constant 0 : index
    %c0_27 = arith.constant 0 : index
    %40 = vector.load %arg4[%c0_25, %c5, %c0_26, %c0_27] : memref<2x25x8x128xbf16, #tpu.memory_space<vmem>>, vector<1x1x8x128xbf16>
    %41 = vector.shape_cast %40 : vector<1x1x8x128xbf16> to vector<8x128xbf16>
    %42 = arith.extf %41 : vector<8x128xbf16> to vector<8x128xf32>
    %43 = arith.mulf %42, %39 : vector<8x128xf32>
    %44 = arith.addf %22, %43 : vector<8x128xf32>
    %c9_i32 = arith.constant 9 : i32
    %45 = tpu.dynamic_rotate %10 by %c9_i32 dim 1 : vector<8x128xf32>, i32 -> vector<8x128xf32>
    %c0_28 = arith.constant 0 : index
    %c6 = arith.constant 6 : index
    %c0_29 = arith.constant 0 : index
    %c0_30 = arith.constant 0 : index
    %46 = vector.load %arg4[%c0_28, %c6, %c0_29, %c0_30] : memref<2x25x8x128xbf16, #tpu.memory_space<vmem>>, vector<1x1x8x128xbf16>
    %47 = vector.shape_cast %46 : vector<1x1x8x128xbf16> to vector<8x128xbf16>
    %48 = arith.extf %47 : vector<8x128xbf16> to vector<8x128xf32>
    %49 = arith.mulf %48, %45 : vector<8x128xf32>
    %50 = arith.addf %27, %49 : vector<8x128xf32>
    %c8_i32 = arith.constant 8 : i32
    %51 = tpu.dynamic_rotate %10 by %c8_i32 dim 1 : vector<8x128xf32>, i32 -> vector<8x128xf32>
    %c0_31 = arith.constant 0 : index
    %c7 = arith.constant 7 : index
    %c0_32 = arith.constant 0 : index
    %c0_33 = arith.constant 0 : index
    %52 = vector.load %arg4[%c0_31, %c7, %c0_32, %c0_33] : memref<2x25x8x128xbf16, #tpu.memory_space<vmem>>, vector<1x1x8x128xbf16>
    %53 = vector.shape_cast %52 : vector<1x1x8x128xbf16> to vector<8x128xbf16>
    %54 = arith.extf %53 : vector<8x128xbf16> to vector<8x128xf32>
    %55 = arith.mulf %54, %51 : vector<8x128xf32>
    %56 = arith.addf %32, %55 : vector<8x128xf32>
    %c7_i32 = arith.constant 7 : i32
    %57 = tpu.dynamic_rotate %10 by %c7_i32 dim 1 : vector<8x128xf32>, i32 -> vector<8x128xf32>
    %c0_34 = arith.constant 0 : index
    %c8 = arith.constant 8 : index
    %c0_35 = arith.constant 0 : index
    %c0_36 = arith.constant 0 : index
    %58 = vector.load %arg4[%c0_34, %c8, %c0_35, %c0_36] : memref<2x25x8x128xbf16, #tpu.memory_space<vmem>>, vector<1x1x8x128xbf16>
    %59 = vector.shape_cast %58 : vector<1x1x8x128xbf16> to vector<8x128xbf16>
    %60 = arith.extf %59 : vector<8x128xbf16> to vector<8x128xf32>
    %61 = arith.mulf %60, %57 : vector<8x128xf32>
    %62 = arith.addf %38, %61 : vector<8x128xf32>
    %c6_i32 = arith.constant 6 : i32
    %63 = tpu.dynamic_rotate %10 by %c6_i32 dim 1 : vector<8x128xf32>, i32 -> vector<8x128xf32>
    %c0_37 = arith.constant 0 : index
    %c9 = arith.constant 9 : index
    %c0_38 = arith.constant 0 : index
    %c0_39 = arith.constant 0 : index
    %64 = vector.load %arg4[%c0_37, %c9, %c0_38, %c0_39] : memref<2x25x8x128xbf16, #tpu.memory_space<vmem>>, vector<1x1x8x128xbf16>
    %65 = vector.shape_cast %64 : vector<1x1x8x128xbf16> to vector<8x128xbf16>
    %66 = arith.extf %65 : vector<8x128xbf16> to vector<8x128xf32>
    %67 = arith.mulf %66, %63 : vector<8x128xf32>
    %68 = arith.addf %44, %67 : vector<8x128xf32>
    %c2_i32 = arith.constant 2 : i32
    %69 = tpu.dynamic_rotate %10 by %c2_i32 dim 1 : vector<8x128xf32>, i32 -> vector<8x128xf32>
    %c0_40 = arith.constant 0 : index
    %c10 = arith.constant 10 : index
    %c0_41 = arith.constant 0 : index
    %c0_42 = arith.constant 0 : index
    %70 = vector.load %arg4[%c0_40, %c10, %c0_41, %c0_42] : memref<2x25x8x128xbf16, #tpu.memory_space<vmem>>, vector<1x1x8x128xbf16>
    %71 = vector.shape_cast %70 : vector<1x1x8x128xbf16> to vector<8x128xbf16>
    %72 = arith.extf %71 : vector<8x128xbf16> to vector<8x128xf32>
    %73 = arith.mulf %72, %69 : vector<8x128xf32>
    %74 = arith.addf %50, %73 : vector<8x128xf32>
    %c1_i32 = arith.constant 1 : i32
    %75 = tpu.dynamic_rotate %10 by %c1_i32 dim 1 : vector<8x128xf32>, i32 -> vector<8x128xf32>
    %c0_43 = arith.constant 0 : index
    %c11 = arith.constant 11 : index
    %c0_44 = arith.constant 0 : index
    %c0_45 = arith.constant 0 : index
    %76 = vector.load %arg4[%c0_43, %c11, %c0_44, %c0_45] : memref<2x25x8x128xbf16, #tpu.memory_space<vmem>>, vector<1x1x8x128xbf16>
    %77 = vector.shape_cast %76 : vector<1x1x8x128xbf16> to vector<8x128xbf16>
    %78 = arith.extf %77 : vector<8x128xbf16> to vector<8x128xf32>
    %79 = arith.mulf %78, %75 : vector<8x128xf32>
    %80 = arith.addf %56, %79 : vector<8x128xf32>
    %c0_46 = arith.constant 0 : index
    %c12 = arith.constant 12 : index
    %c0_47 = arith.constant 0 : index
    %c0_48 = arith.constant 0 : index
    %81 = vector.load %arg4[%c0_46, %c12, %c0_47, %c0_48] : memref<2x25x8x128xbf16, #tpu.memory_space<vmem>>, vector<1x1x8x128xbf16>
    %82 = vector.shape_cast %81 : vector<1x1x8x128xbf16> to vector<8x128xbf16>
    %83 = arith.extf %82 : vector<8x128xbf16> to vector<8x128xf32>
    %84 = arith.mulf %83, %10 : vector<8x128xf32>
    %85 = arith.addf %62, %84 : vector<8x128xf32>
    %c127_i32 = arith.constant 127 : i32
    %86 = tpu.dynamic_rotate %10 by %c127_i32 dim 1 : vector<8x128xf32>, i32 -> vector<8x128xf32>
    %c0_49 = arith.constant 0 : index
    %c13 = arith.constant 13 : index
    %c0_50 = arith.constant 0 : index
    %c0_51 = arith.constant 0 : index
    %87 = vector.load %arg4[%c0_49, %c13, %c0_50, %c0_51] : memref<2x25x8x128xbf16, #tpu.memory_space<vmem>>, vector<1x1x8x128xbf16>
    %88 = vector.shape_cast %87 : vector<1x1x8x128xbf16> to vector<8x128xbf16>
    %89 = arith.extf %88 : vector<8x128xbf16> to vector<8x128xf32>
    %90 = arith.mulf %89, %86 : vector<8x128xf32>
    %91 = arith.addf %68, %90 : vector<8x128xf32>
    %c126_i32 = arith.constant 126 : i32
    %92 = tpu.dynamic_rotate %10 by %c126_i32 dim 1 : vector<8x128xf32>, i32 -> vector<8x128xf32>
    %c0_52 = arith.constant 0 : index
    %c14 = arith.constant 14 : index
    %c0_53 = arith.constant 0 : index
    %c0_54 = arith.constant 0 : index
    %93 = vector.load %arg4[%c0_52, %c14, %c0_53, %c0_54] : memref<2x25x8x128xbf16, #tpu.memory_space<vmem>>, vector<1x1x8x128xbf16>
    %94 = vector.shape_cast %93 : vector<1x1x8x128xbf16> to vector<8x128xbf16>
    %95 = arith.extf %94 : vector<8x128xbf16> to vector<8x128xf32>
    %96 = arith.mulf %95, %92 : vector<8x128xf32>
    %97 = arith.addf %74, %96 : vector<8x128xf32>
    %c122_i32 = arith.constant 122 : i32
    %98 = tpu.dynamic_rotate %10 by %c122_i32 dim 1 : vector<8x128xf32>, i32 -> vector<8x128xf32>
    %c0_55 = arith.constant 0 : index
    %c15 = arith.constant 15 : index
    %c0_56 = arith.constant 0 : index
    %c0_57 = arith.constant 0 : index
    %99 = vector.load %arg4[%c0_55, %c15, %c0_56, %c0_57] : memref<2x25x8x128xbf16, #tpu.memory_space<vmem>>, vector<1x1x8x128xbf16>
    %100 = vector.shape_cast %99 : vector<1x1x8x128xbf16> to vector<8x128xbf16>
    %101 = arith.extf %100 : vector<8x128xbf16> to vector<8x128xf32>
    %102 = arith.mulf %101, %98 : vector<8x128xf32>
    %103 = arith.addf %80, %102 : vector<8x128xf32>
    %c121_i32 = arith.constant 121 : i32
    %104 = tpu.dynamic_rotate %10 by %c121_i32 dim 1 : vector<8x128xf32>, i32 -> vector<8x128xf32>
    %c0_58 = arith.constant 0 : index
    %c16 = arith.constant 16 : index
    %c0_59 = arith.constant 0 : index
    %c0_60 = arith.constant 0 : index
    %105 = vector.load %arg4[%c0_58, %c16, %c0_59, %c0_60] : memref<2x25x8x128xbf16, #tpu.memory_space<vmem>>, vector<1x1x8x128xbf16>
    %106 = vector.shape_cast %105 : vector<1x1x8x128xbf16> to vector<8x128xbf16>
    %107 = arith.extf %106 : vector<8x128xbf16> to vector<8x128xf32>
    %108 = arith.mulf %107, %104 : vector<8x128xf32>
    %109 = arith.addf %85, %108 : vector<8x128xf32>
    %c120_i32 = arith.constant 120 : i32
    %110 = tpu.dynamic_rotate %10 by %c120_i32 dim 1 : vector<8x128xf32>, i32 -> vector<8x128xf32>
    %c0_61 = arith.constant 0 : index
    %c17 = arith.constant 17 : index
    %c0_62 = arith.constant 0 : index
    %c0_63 = arith.constant 0 : index
    %111 = vector.load %arg4[%c0_61, %c17, %c0_62, %c0_63] : memref<2x25x8x128xbf16, #tpu.memory_space<vmem>>, vector<1x1x8x128xbf16>
    %112 = vector.shape_cast %111 : vector<1x1x8x128xbf16> to vector<8x128xbf16>
    %113 = arith.extf %112 : vector<8x128xbf16> to vector<8x128xf32>
    %114 = arith.mulf %113, %110 : vector<8x128xf32>
    %115 = arith.addf %91, %114 : vector<8x128xf32>
    %c119_i32 = arith.constant 119 : i32
    %116 = tpu.dynamic_rotate %10 by %c119_i32 dim 1 : vector<8x128xf32>, i32 -> vector<8x128xf32>
    %c0_64 = arith.constant 0 : index
    %c18 = arith.constant 18 : index
    %c0_65 = arith.constant 0 : index
    %c0_66 = arith.constant 0 : index
    %117 = vector.load %arg4[%c0_64, %c18, %c0_65, %c0_66] : memref<2x25x8x128xbf16, #tpu.memory_space<vmem>>, vector<1x1x8x128xbf16>
    %118 = vector.shape_cast %117 : vector<1x1x8x128xbf16> to vector<8x128xbf16>
    %119 = arith.extf %118 : vector<8x128xbf16> to vector<8x128xf32>
    %120 = arith.mulf %119, %116 : vector<8x128xf32>
    %121 = arith.addf %97, %120 : vector<8x128xf32>
    %c118_i32 = arith.constant 118 : i32
    %122 = tpu.dynamic_rotate %10 by %c118_i32 dim 1 : vector<8x128xf32>, i32 -> vector<8x128xf32>
    %c0_67 = arith.constant 0 : index
    %c19 = arith.constant 19 : index
    %c0_68 = arith.constant 0 : index
    %c0_69 = arith.constant 0 : index
    %123 = vector.load %arg4[%c0_67, %c19, %c0_68, %c0_69] : memref<2x25x8x128xbf16, #tpu.memory_space<vmem>>, vector<1x1x8x128xbf16>
    %124 = vector.shape_cast %123 : vector<1x1x8x128xbf16> to vector<8x128xbf16>
    %125 = arith.extf %124 : vector<8x128xbf16> to vector<8x128xf32>
    %126 = arith.mulf %125, %122 : vector<8x128xf32>
    %127 = arith.addf %103, %126 : vector<8x128xf32>
    %c114_i32 = arith.constant 114 : i32
    %128 = tpu.dynamic_rotate %10 by %c114_i32 dim 1 : vector<8x128xf32>, i32 -> vector<8x128xf32>
    %c0_70 = arith.constant 0 : index
    %c20 = arith.constant 20 : index
    %c0_71 = arith.constant 0 : index
    %c0_72 = arith.constant 0 : index
    %129 = vector.load %arg4[%c0_70, %c20, %c0_71, %c0_72] : memref<2x25x8x128xbf16, #tpu.memory_space<vmem>>, vector<1x1x8x128xbf16>
    %130 = vector.shape_cast %129 : vector<1x1x8x128xbf16> to vector<8x128xbf16>
    %131 = arith.extf %130 : vector<8x128xbf16> to vector<8x128xf32>
    %132 = arith.mulf %131, %128 : vector<8x128xf32>
    %133 = arith.addf %109, %132 : vector<8x128xf32>
    %c113_i32 = arith.constant 113 : i32
    %134 = tpu.dynamic_rotate %10 by %c113_i32 dim 1 : vector<8x128xf32>, i32 -> vector<8x128xf32>
    %c0_73 = arith.constant 0 : index
    %c21 = arith.constant 21 : index
    %c0_74 = arith.constant 0 : index
    %c0_75 = arith.constant 0 : index
    %135 = vector.load %arg4[%c0_73, %c21, %c0_74, %c0_75] : memref<2x25x8x128xbf16, #tpu.memory_space<vmem>>, vector<1x1x8x128xbf16>
    %136 = vector.shape_cast %135 : vector<1x1x8x128xbf16> to vector<8x128xbf16>
    %137 = arith.extf %136 : vector<8x128xbf16> to vector<8x128xf32>
    %138 = arith.mulf %137, %134 : vector<8x128xf32>
    %139 = arith.addf %115, %138 : vector<8x128xf32>
    %c112_i32 = arith.constant 112 : i32
    %140 = tpu.dynamic_rotate %10 by %c112_i32 dim 1 : vector<8x128xf32>, i32 -> vector<8x128xf32>
    %c0_76 = arith.constant 0 : index
    %c22 = arith.constant 22 : index
    %c0_77 = arith.constant 0 : index
    %c0_78 = arith.constant 0 : index
    %141 = vector.load %arg4[%c0_76, %c22, %c0_77, %c0_78] : memref<2x25x8x128xbf16, #tpu.memory_space<vmem>>, vector<1x1x8x128xbf16>
    %142 = vector.shape_cast %141 : vector<1x1x8x128xbf16> to vector<8x128xbf16>
    %143 = arith.extf %142 : vector<8x128xbf16> to vector<8x128xf32>
    %144 = arith.mulf %143, %140 : vector<8x128xf32>
    %145 = arith.addf %121, %144 : vector<8x128xf32>
    %c111_i32 = arith.constant 111 : i32
    %146 = tpu.dynamic_rotate %10 by %c111_i32 dim 1 : vector<8x128xf32>, i32 -> vector<8x128xf32>
    %c0_79 = arith.constant 0 : index
    %c23 = arith.constant 23 : index
    %c0_80 = arith.constant 0 : index
    %c0_81 = arith.constant 0 : index
    %147 = vector.load %arg4[%c0_79, %c23, %c0_80, %c0_81] : memref<2x25x8x128xbf16, #tpu.memory_space<vmem>>, vector<1x1x8x128xbf16>
    %148 = vector.shape_cast %147 : vector<1x1x8x128xbf16> to vector<8x128xbf16>
    %149 = arith.extf %148 : vector<8x128xbf16> to vector<8x128xf32>
    %150 = arith.mulf %149, %146 : vector<8x128xf32>
    %151 = arith.addf %127, %150 : vector<8x128xf32>
    %c110_i32 = arith.constant 110 : i32
    %152 = tpu.dynamic_rotate %10 by %c110_i32 dim 1 : vector<8x128xf32>, i32 -> vector<8x128xf32>
    %c0_82 = arith.constant 0 : index
    %c24 = arith.constant 24 : index
    %c0_83 = arith.constant 0 : index
    %c0_84 = arith.constant 0 : index
    %153 = vector.load %arg4[%c0_82, %c24, %c0_83, %c0_84] : memref<2x25x8x128xbf16, #tpu.memory_space<vmem>>, vector<1x1x8x128xbf16>
    %154 = vector.shape_cast %153 : vector<1x1x8x128xbf16> to vector<8x128xbf16>
    %155 = arith.extf %154 : vector<8x128xbf16> to vector<8x128xf32>
    %156 = arith.mulf %155, %152 : vector<8x128xf32>
    %157 = arith.addf %133, %156 : vector<8x128xf32>
    %c0_85 = arith.constant 0 : index
    %c0_86 = arith.constant 0 : index
    %c0_87 = arith.constant 0 : index
    %158 = vector.load %arg5[%c0_85, %c0_86, %c0_87] : memref<2x8x1xf32, #tpu.memory_space<vmem>>, vector<1x8x1xf32>
    %159 = vector.shape_cast %158 : vector<1x8x1xf32> to vector<8x1xf32>
    %160 = arith.addf %157, %139 : vector<8x128xf32>
    %161 = arith.addf %145, %151 : vector<8x128xf32>
    %162 = arith.addf %160, %161 : vector<8x128xf32>
    %163 = vector.broadcast %159 : vector<8x1xf32> to vector<8x128xf32>
    %164 = arith.addf %163, %162 : vector<8x128xf32>
    %165 = arith.truncf %164 : vector<8x128xf32> to vector<8x128xbf16>
    %166 = arith.truncf %11 : vector<8x128xf32> to vector<8x128xbf16>
    %cst_88 = arith.constant dense<0.000000e+00> : vector<128x128xf32>
    %167 = tpu.matmul %165, %166, %cst_88 {dimension_numbers = #tpu.dot_dimension_numbers<[0], [0], [1], [1], [0, 1, 1, 1], [], []>} : vector<8x128xbf16>, vector<8x128xbf16>, vector<128x128xf32> -> vector<128x128xf32>
    %c0_89 = arith.constant 0 : index
    %c0_90 = arith.constant 0 : index
    %c0_91 = arith.constant 0 : index
    %168 = vector.load %arg6[%c0_89, %c0_90, %c0_91] : memref<2x128x128xbf16, #tpu.memory_space<vmem>>, vector<1x128x128xbf16>
    %169 = vector.shape_cast %168 : vector<1x128x128xbf16> to vector<128x128xbf16>
    %170 = arith.extf %169 : vector<128x128xbf16> to vector<128x128xf32>
    %171 = arith.addf %167, %170 : vector<128x128xf32>
    %cst_92 = arith.constant dense<0xFF800000> : vector<128xf32>
    %172 = vector.multi_reduction <maximumf>, %171, %cst_92 [1] : vector<128x128xf32> to vector<128xf32>
    %173 = vector.shape_cast %172 : vector<128xf32> to vector<128x1xf32>
    %174 = vector.broadcast %173 : vector<128x1xf32> to vector<128x128xf32>
    %175 = arith.subf %171, %174 : vector<128x128xf32>
    %176 = math.exp %175 : vector<128x128xf32>
    %cst_93 = arith.constant dense<0.000000e+00> : vector<128xf32>
    %177 = vector.multi_reduction <add>, %176, %cst_93 [1] : vector<128x128xf32> to vector<128xf32>
    %178 = vector.shape_cast %177 : vector<128xf32> to vector<128x1xf32>
    %179 = tpu.reciprocal %178 {approx = true} : vector<128x1xf32> -> vector<128x1xf32>
    %180 = vector.broadcast %179 : vector<128x1xf32> to vector<128x128xf32>
    %181 = arith.mulf %176, %180 : vector<128x128xf32>
    %182 = arith.truncf %12 : vector<32x128xf32> to vector<32x128xbf16>
    %183 = arith.truncf %181 : vector<128x128xf32> to vector<128x128xbf16>
    %cst_94 = arith.constant dense<0.000000e+00> : vector<32x128xf32>
    %184 = tpu.matmul %182, %183, %cst_94 {dimension_numbers = #tpu.dot_dimension_numbers<[1], [1], [0], [0], [0, 0, 1, 0], [], []>} : vector<32x128xbf16>, vector<128x128xbf16>, vector<32x128xf32> -> vector<32x128xf32>
    %c0_95 = arith.constant 0 : index
    %c0_96 = arith.constant 0 : index
    %c0_97 = arith.constant 0 : index
    %185 = vector.load %arg7[%c0_95, %c0_96, %c0_97] : memref<2x64x32xf32, #tpu.memory_space<vmem>>, vector<1x64x32xf32>
    %186 = vector.shape_cast %185 : vector<1x64x32xf32> to vector<64x32xf32>
    %cst_98 = arith.constant 0.000000e+00 : f32
    %187 = vector.broadcast %cst_98 : f32 to vector<32x128xf32>
    %188 = arith.maximumf %184, %187 : vector<32x128xf32>
    %cst_99 = arith.constant dense<0.000000e+00> : vector<64x128xf32>
    %189 = tpu.matmul %186, %188, %cst_99 {dimension_numbers = #tpu.dot_dimension_numbers<[1], [0], [0], [1], [0, 0, 1, 1], [], []>} : vector<64x32xf32>, vector<32x128xf32>, vector<64x128xf32> -> vector<64x128xf32>
    %190 = arith.addf %0, %189 : vector<64x128xf32>
    %c0_100 = arith.constant 0 : index
    %c32 = arith.constant 32 : index
    %c0_101 = arith.constant 0 : index
    %191 = vector.load %arg1[%c0_100, %c32, %c0_101] : memref<4x64x128xf32, #tpu.memory_space<vmem>>, vector<1x32x128xf32>
    %192 = vector.shape_cast %191 : vector<1x32x128xf32> to vector<32x128xf32>
    %193 = arith.addf %184, %192 : vector<32x128xf32>
    %c1_102 = arith.constant 1 : index
    %c0_103 = arith.constant 0 : index
    %c0_104 = arith.constant 0 : index
    %194 = vector.load %arg2[%c1_102, %c0_103, %c0_104] : memref<2x48x32xf32, #tpu.memory_space<vmem>>, vector<1x48x32xf32>
    %195 = vector.shape_cast %194 : vector<1x48x32xf32> to vector<48x32xf32>
    %cst_105 = arith.constant dense<0.000000e+00> : vector<48x128xf32>
    %196 = tpu.matmul %195, %193, %cst_105 {dimension_numbers = #tpu.dot_dimension_numbers<[1], [0], [0], [1], [0, 0, 1, 1], [], []>} : vector<48x32xf32>, vector<32x128xf32>, vector<48x128xf32> -> vector<48x128xf32>
    %c1_106 = arith.constant 1 : index
    %c0_107 = arith.constant 0 : index
    %c0_108 = arith.constant 0 : index
    %197 = vector.load %arg3[%c1_106, %c0_107, %c0_108] : memref<2x48x1xf32, #tpu.memory_space<vmem>>, vector<1x48x1xf32>
    %198 = vector.shape_cast %197 : vector<1x48x1xf32> to vector<48x1xf32>
    %199 = vector.broadcast %198 : vector<48x1xf32> to vector<48x128xf32>
    %200 = arith.addf %196, %199 : vector<48x128xf32>
    %201 = vector.extract_strided_slice %200 {offsets = [0, 0], sizes = [8, 128], strides = [1, 1]} : vector<48x128xf32> to vector<8x128xf32>
    %202 = vector.extract_strided_slice %200 {offsets = [8, 0], sizes = [8, 128], strides = [1, 1]} : vector<48x128xf32> to vector<8x128xf32>
    %203 = vector.extract_strided_slice %200 {offsets = [16, 0], sizes = [32, 128], strides = [1, 1]} : vector<48x128xf32> to vector<32x128xf32>
    %c18_i32_109 = arith.constant 18 : i32
    %204 = tpu.dynamic_rotate %201 by %c18_i32_109 dim 1 : vector<8x128xf32>, i32 -> vector<8x128xf32>
    %c1_110 = arith.constant 1 : index
    %c0_111 = arith.constant 0 : index
    %c0_112 = arith.constant 0 : index
    %c0_113 = arith.constant 0 : index
    %205 = vector.load %arg4[%c1_110, %c0_111, %c0_112, %c0_113] : memref<2x25x8x128xbf16, #tpu.memory_space<vmem>>, vector<1x1x8x128xbf16>
    %206 = vector.shape_cast %205 : vector<1x1x8x128xbf16> to vector<8x128xbf16>
    %207 = arith.extf %206 : vector<8x128xbf16> to vector<8x128xf32>
    %208 = arith.mulf %207, %204 : vector<8x128xf32>
    %c17_i32_114 = arith.constant 17 : i32
    %209 = tpu.dynamic_rotate %201 by %c17_i32_114 dim 1 : vector<8x128xf32>, i32 -> vector<8x128xf32>
    %c1_115 = arith.constant 1 : index
    %c1_116 = arith.constant 1 : index
    %c0_117 = arith.constant 0 : index
    %c0_118 = arith.constant 0 : index
    %210 = vector.load %arg4[%c1_115, %c1_116, %c0_117, %c0_118] : memref<2x25x8x128xbf16, #tpu.memory_space<vmem>>, vector<1x1x8x128xbf16>
    %211 = vector.shape_cast %210 : vector<1x1x8x128xbf16> to vector<8x128xbf16>
    %212 = arith.extf %211 : vector<8x128xbf16> to vector<8x128xf32>
    %213 = arith.mulf %212, %209 : vector<8x128xf32>
    %c16_i32_119 = arith.constant 16 : i32
    %214 = tpu.dynamic_rotate %201 by %c16_i32_119 dim 1 : vector<8x128xf32>, i32 -> vector<8x128xf32>
    %c1_120 = arith.constant 1 : index
    %c2_121 = arith.constant 2 : index
    %c0_122 = arith.constant 0 : index
    %c0_123 = arith.constant 0 : index
    %215 = vector.load %arg4[%c1_120, %c2_121, %c0_122, %c0_123] : memref<2x25x8x128xbf16, #tpu.memory_space<vmem>>, vector<1x1x8x128xbf16>
    %216 = vector.shape_cast %215 : vector<1x1x8x128xbf16> to vector<8x128xbf16>
    %217 = arith.extf %216 : vector<8x128xbf16> to vector<8x128xf32>
    %218 = arith.mulf %217, %214 : vector<8x128xf32>
    %c15_i32_124 = arith.constant 15 : i32
    %219 = tpu.dynamic_rotate %201 by %c15_i32_124 dim 1 : vector<8x128xf32>, i32 -> vector<8x128xf32>
    %c1_125 = arith.constant 1 : index
    %c3_126 = arith.constant 3 : index
    %c0_127 = arith.constant 0 : index
    %c0_128 = arith.constant 0 : index
    %220 = vector.load %arg4[%c1_125, %c3_126, %c0_127, %c0_128] : memref<2x25x8x128xbf16, #tpu.memory_space<vmem>>, vector<1x1x8x128xbf16>
    %221 = vector.shape_cast %220 : vector<1x1x8x128xbf16> to vector<8x128xbf16>
    %222 = arith.extf %221 : vector<8x128xbf16> to vector<8x128xf32>
    %223 = arith.mulf %222, %219 : vector<8x128xf32>
    %c14_i32_129 = arith.constant 14 : i32
    %224 = tpu.dynamic_rotate %201 by %c14_i32_129 dim 1 : vector<8x128xf32>, i32 -> vector<8x128xf32>
    %c1_130 = arith.constant 1 : index
    %c4_131 = arith.constant 4 : index
    %c0_132 = arith.constant 0 : index
    %c0_133 = arith.constant 0 : index
    %225 = vector.load %arg4[%c1_130, %c4_131, %c0_132, %c0_133] : memref<2x25x8x128xbf16, #tpu.memory_space<vmem>>, vector<1x1x8x128xbf16>
    %226 = vector.shape_cast %225 : vector<1x1x8x128xbf16> to vector<8x128xbf16>
    %227 = arith.extf %226 : vector<8x128xbf16> to vector<8x128xf32>
    %228 = arith.mulf %227, %224 : vector<8x128xf32>
    %229 = arith.addf %208, %228 : vector<8x128xf32>
    %c10_i32_134 = arith.constant 10 : i32
    %230 = tpu.dynamic_rotate %201 by %c10_i32_134 dim 1 : vector<8x128xf32>, i32 -> vector<8x128xf32>
    %c1_135 = arith.constant 1 : index
    %c5_136 = arith.constant 5 : index
    %c0_137 = arith.constant 0 : index
    %c0_138 = arith.constant 0 : index
    %231 = vector.load %arg4[%c1_135, %c5_136, %c0_137, %c0_138] : memref<2x25x8x128xbf16, #tpu.memory_space<vmem>>, vector<1x1x8x128xbf16>
    %232 = vector.shape_cast %231 : vector<1x1x8x128xbf16> to vector<8x128xbf16>
    %233 = arith.extf %232 : vector<8x128xbf16> to vector<8x128xf32>
    %234 = arith.mulf %233, %230 : vector<8x128xf32>
    %235 = arith.addf %213, %234 : vector<8x128xf32>
    %c9_i32_139 = arith.constant 9 : i32
    %236 = tpu.dynamic_rotate %201 by %c9_i32_139 dim 1 : vector<8x128xf32>, i32 -> vector<8x128xf32>
    %c1_140 = arith.constant 1 : index
    %c6_141 = arith.constant 6 : index
    %c0_142 = arith.constant 0 : index
    %c0_143 = arith.constant 0 : index
    %237 = vector.load %arg4[%c1_140, %c6_141, %c0_142, %c0_143] : memref<2x25x8x128xbf16, #tpu.memory_space<vmem>>, vector<1x1x8x128xbf16>
    %238 = vector.shape_cast %237 : vector<1x1x8x128xbf16> to vector<8x128xbf16>
    %239 = arith.extf %238 : vector<8x128xbf16> to vector<8x128xf32>
    %240 = arith.mulf %239, %236 : vector<8x128xf32>
    %241 = arith.addf %218, %240 : vector<8x128xf32>
    %c8_i32_144 = arith.constant 8 : i32
    %242 = tpu.dynamic_rotate %201 by %c8_i32_144 dim 1 : vector<8x128xf32>, i32 -> vector<8x128xf32>
    %c1_145 = arith.constant 1 : index
    %c7_146 = arith.constant 7 : index
    %c0_147 = arith.constant 0 : index
    %c0_148 = arith.constant 0 : index
    %243 = vector.load %arg4[%c1_145, %c7_146, %c0_147, %c0_148] : memref<2x25x8x128xbf16, #tpu.memory_space<vmem>>, vector<1x1x8x128xbf16>
    %244 = vector.shape_cast %243 : vector<1x1x8x128xbf16> to vector<8x128xbf16>
    %245 = arith.extf %244 : vector<8x128xbf16> to vector<8x128xf32>
    %246 = arith.mulf %245, %242 : vector<8x128xf32>
    %247 = arith.addf %223, %246 : vector<8x128xf32>
    %c7_i32_149 = arith.constant 7 : i32
    %248 = tpu.dynamic_rotate %201 by %c7_i32_149 dim 1 : vector<8x128xf32>, i32 -> vector<8x128xf32>
    %c1_150 = arith.constant 1 : index
    %c8_151 = arith.constant 8 : index
    %c0_152 = arith.constant 0 : index
    %c0_153 = arith.constant 0 : index
    %249 = vector.load %arg4[%c1_150, %c8_151, %c0_152, %c0_153] : memref<2x25x8x128xbf16, #tpu.memory_space<vmem>>, vector<1x1x8x128xbf16>
    %250 = vector.shape_cast %249 : vector<1x1x8x128xbf16> to vector<8x128xbf16>
    %251 = arith.extf %250 : vector<8x128xbf16> to vector<8x128xf32>
    %252 = arith.mulf %251, %248 : vector<8x128xf32>
    %253 = arith.addf %229, %252 : vector<8x128xf32>
    %c6_i32_154 = arith.constant 6 : i32
    %254 = tpu.dynamic_rotate %201 by %c6_i32_154 dim 1 : vector<8x128xf32>, i32 -> vector<8x128xf32>
    %c1_155 = arith.constant 1 : index
    %c9_156 = arith.constant 9 : index
    %c0_157 = arith.constant 0 : index
    %c0_158 = arith.constant 0 : index
    %255 = vector.load %arg4[%c1_155, %c9_156, %c0_157, %c0_158] : memref<2x25x8x128xbf16, #tpu.memory_space<vmem>>, vector<1x1x8x128xbf16>
    %256 = vector.shape_cast %255 : vector<1x1x8x128xbf16> to vector<8x128xbf16>
    %257 = arith.extf %256 : vector<8x128xbf16> to vector<8x128xf32>
    %258 = arith.mulf %257, %254 : vector<8x128xf32>
    %259 = arith.addf %235, %258 : vector<8x128xf32>
    %c2_i32_159 = arith.constant 2 : i32
    %260 = tpu.dynamic_rotate %201 by %c2_i32_159 dim 1 : vector<8x128xf32>, i32 -> vector<8x128xf32>
    %c1_160 = arith.constant 1 : index
    %c10_161 = arith.constant 10 : index
    %c0_162 = arith.constant 0 : index
    %c0_163 = arith.constant 0 : index
    %261 = vector.load %arg4[%c1_160, %c10_161, %c0_162, %c0_163] : memref<2x25x8x128xbf16, #tpu.memory_space<vmem>>, vector<1x1x8x128xbf16>
    %262 = vector.shape_cast %261 : vector<1x1x8x128xbf16> to vector<8x128xbf16>
    %263 = arith.extf %262 : vector<8x128xbf16> to vector<8x128xf32>
    %264 = arith.mulf %263, %260 : vector<8x128xf32>
    %265 = arith.addf %241, %264 : vector<8x128xf32>
    %c1_i32_164 = arith.constant 1 : i32
    %266 = tpu.dynamic_rotate %201 by %c1_i32_164 dim 1 : vector<8x128xf32>, i32 -> vector<8x128xf32>
    %c1_165 = arith.constant 1 : index
    %c11_166 = arith.constant 11 : index
    %c0_167 = arith.constant 0 : index
    %c0_168 = arith.constant 0 : index
    %267 = vector.load %arg4[%c1_165, %c11_166, %c0_167, %c0_168] : memref<2x25x8x128xbf16, #tpu.memory_space<vmem>>, vector<1x1x8x128xbf16>
    %268 = vector.shape_cast %267 : vector<1x1x8x128xbf16> to vector<8x128xbf16>
    %269 = arith.extf %268 : vector<8x128xbf16> to vector<8x128xf32>
    %270 = arith.mulf %269, %266 : vector<8x128xf32>
    %271 = arith.addf %247, %270 : vector<8x128xf32>
    %c1_169 = arith.constant 1 : index
    %c12_170 = arith.constant 12 : index
    %c0_171 = arith.constant 0 : index
    %c0_172 = arith.constant 0 : index
    %272 = vector.load %arg4[%c1_169, %c12_170, %c0_171, %c0_172] : memref<2x25x8x128xbf16, #tpu.memory_space<vmem>>, vector<1x1x8x128xbf16>
    %273 = vector.shape_cast %272 : vector<1x1x8x128xbf16> to vector<8x128xbf16>
    %274 = arith.extf %273 : vector<8x128xbf16> to vector<8x128xf32>
    %275 = arith.mulf %274, %201 : vector<8x128xf32>
    %276 = arith.addf %253, %275 : vector<8x128xf32>
    %c127_i32_173 = arith.constant 127 : i32
    %277 = tpu.dynamic_rotate %201 by %c127_i32_173 dim 1 : vector<8x128xf32>, i32 -> vector<8x128xf32>
    %c1_174 = arith.constant 1 : index
    %c13_175 = arith.constant 13 : index
    %c0_176 = arith.constant 0 : index
    %c0_177 = arith.constant 0 : index
    %278 = vector.load %arg4[%c1_174, %c13_175, %c0_176, %c0_177] : memref<2x25x8x128xbf16, #tpu.memory_space<vmem>>, vector<1x1x8x128xbf16>
    %279 = vector.shape_cast %278 : vector<1x1x8x128xbf16> to vector<8x128xbf16>
    %280 = arith.extf %279 : vector<8x128xbf16> to vector<8x128xf32>
    %281 = arith.mulf %280, %277 : vector<8x128xf32>
    %282 = arith.addf %259, %281 : vector<8x128xf32>
    %c126_i32_178 = arith.constant 126 : i32
    %283 = tpu.dynamic_rotate %201 by %c126_i32_178 dim 1 : vector<8x128xf32>, i32 -> vector<8x128xf32>
    %c1_179 = arith.constant 1 : index
    %c14_180 = arith.constant 14 : index
    %c0_181 = arith.constant 0 : index
    %c0_182 = arith.constant 0 : index
    %284 = vector.load %arg4[%c1_179, %c14_180, %c0_181, %c0_182] : memref<2x25x8x128xbf16, #tpu.memory_space<vmem>>, vector<1x1x8x128xbf16>
    %285 = vector.shape_cast %284 : vector<1x1x8x128xbf16> to vector<8x128xbf16>
    %286 = arith.extf %285 : vector<8x128xbf16> to vector<8x128xf32>
    %287 = arith.mulf %286, %283 : vector<8x128xf32>
    %288 = arith.addf %265, %287 : vector<8x128xf32>
    %c122_i32_183 = arith.constant 122 : i32
    %289 = tpu.dynamic_rotate %201 by %c122_i32_183 dim 1 : vector<8x128xf32>, i32 -> vector<8x128xf32>
    %c1_184 = arith.constant 1 : index
    %c15_185 = arith.constant 15 : index
    %c0_186 = arith.constant 0 : index
    %c0_187 = arith.constant 0 : index
    %290 = vector.load %arg4[%c1_184, %c15_185, %c0_186, %c0_187] : memref<2x25x8x128xbf16, #tpu.memory_space<vmem>>, vector<1x1x8x128xbf16>
    %291 = vector.shape_cast %290 : vector<1x1x8x128xbf16> to vector<8x128xbf16>
    %292 = arith.extf %291 : vector<8x128xbf16> to vector<8x128xf32>
    %293 = arith.mulf %292, %289 : vector<8x128xf32>
    %294 = arith.addf %271, %293 : vector<8x128xf32>
    %c121_i32_188 = arith.constant 121 : i32
    %295 = tpu.dynamic_rotate %201 by %c121_i32_188 dim 1 : vector<8x128xf32>, i32 -> vector<8x128xf32>
    %c1_189 = arith.constant 1 : index
    %c16_190 = arith.constant 16 : index
    %c0_191 = arith.constant 0 : index
    %c0_192 = arith.constant 0 : index
    %296 = vector.load %arg4[%c1_189, %c16_190, %c0_191, %c0_192] : memref<2x25x8x128xbf16, #tpu.memory_space<vmem>>, vector<1x1x8x128xbf16>
    %297 = vector.shape_cast %296 : vector<1x1x8x128xbf16> to vector<8x128xbf16>
    %298 = arith.extf %297 : vector<8x128xbf16> to vector<8x128xf32>
    %299 = arith.mulf %298, %295 : vector<8x128xf32>
    %300 = arith.addf %276, %299 : vector<8x128xf32>
    %c120_i32_193 = arith.constant 120 : i32
    %301 = tpu.dynamic_rotate %201 by %c120_i32_193 dim 1 : vector<8x128xf32>, i32 -> vector<8x128xf32>
    %c1_194 = arith.constant 1 : index
    %c17_195 = arith.constant 17 : index
    %c0_196 = arith.constant 0 : index
    %c0_197 = arith.constant 0 : index
    %302 = vector.load %arg4[%c1_194, %c17_195, %c0_196, %c0_197] : memref<2x25x8x128xbf16, #tpu.memory_space<vmem>>, vector<1x1x8x128xbf16>
    %303 = vector.shape_cast %302 : vector<1x1x8x128xbf16> to vector<8x128xbf16>
    %304 = arith.extf %303 : vector<8x128xbf16> to vector<8x128xf32>
    %305 = arith.mulf %304, %301 : vector<8x128xf32>
    %306 = arith.addf %282, %305 : vector<8x128xf32>
    %c119_i32_198 = arith.constant 119 : i32
    %307 = tpu.dynamic_rotate %201 by %c119_i32_198 dim 1 : vector<8x128xf32>, i32 -> vector<8x128xf32>
    %c1_199 = arith.constant 1 : index
    %c18_200 = arith.constant 18 : index
    %c0_201 = arith.constant 0 : index
    %c0_202 = arith.constant 0 : index
    %308 = vector.load %arg4[%c1_199, %c18_200, %c0_201, %c0_202] : memref<2x25x8x128xbf16, #tpu.memory_space<vmem>>, vector<1x1x8x128xbf16>
    %309 = vector.shape_cast %308 : vector<1x1x8x128xbf16> to vector<8x128xbf16>
    %310 = arith.extf %309 : vector<8x128xbf16> to vector<8x128xf32>
    %311 = arith.mulf %310, %307 : vector<8x128xf32>
    %312 = arith.addf %288, %311 : vector<8x128xf32>
    %c118_i32_203 = arith.constant 118 : i32
    %313 = tpu.dynamic_rotate %201 by %c118_i32_203 dim 1 : vector<8x128xf32>, i32 -> vector<8x128xf32>
    %c1_204 = arith.constant 1 : index
    %c19_205 = arith.constant 19 : index
    %c0_206 = arith.constant 0 : index
    %c0_207 = arith.constant 0 : index
    %314 = vector.load %arg4[%c1_204, %c19_205, %c0_206, %c0_207] : memref<2x25x8x128xbf16, #tpu.memory_space<vmem>>, vector<1x1x8x128xbf16>
    %315 = vector.shape_cast %314 : vector<1x1x8x128xbf16> to vector<8x128xbf16>
    %316 = arith.extf %315 : vector<8x128xbf16> to vector<8x128xf32>
    %317 = arith.mulf %316, %313 : vector<8x128xf32>
    %318 = arith.addf %294, %317 : vector<8x128xf32>
    %c114_i32_208 = arith.constant 114 : i32
    %319 = tpu.dynamic_rotate %201 by %c114_i32_208 dim 1 : vector<8x128xf32>, i32 -> vector<8x128xf32>
    %c1_209 = arith.constant 1 : index
    %c20_210 = arith.constant 20 : index
    %c0_211 = arith.constant 0 : index
    %c0_212 = arith.constant 0 : index
    %320 = vector.load %arg4[%c1_209, %c20_210, %c0_211, %c0_212] : memref<2x25x8x128xbf16, #tpu.memory_space<vmem>>, vector<1x1x8x128xbf16>
    %321 = vector.shape_cast %320 : vector<1x1x8x128xbf16> to vector<8x128xbf16>
    %322 = arith.extf %321 : vector<8x128xbf16> to vector<8x128xf32>
    %323 = arith.mulf %322, %319 : vector<8x128xf32>
    %324 = arith.addf %300, %323 : vector<8x128xf32>
    %c113_i32_213 = arith.constant 113 : i32
    %325 = tpu.dynamic_rotate %201 by %c113_i32_213 dim 1 : vector<8x128xf32>, i32 -> vector<8x128xf32>
    %c1_214 = arith.constant 1 : index
    %c21_215 = arith.constant 21 : index
    %c0_216 = arith.constant 0 : index
    %c0_217 = arith.constant 0 : index
    %326 = vector.load %arg4[%c1_214, %c21_215, %c0_216, %c0_217] : memref<2x25x8x128xbf16, #tpu.memory_space<vmem>>, vector<1x1x8x128xbf16>
    %327 = vector.shape_cast %326 : vector<1x1x8x128xbf16> to vector<8x128xbf16>
    %328 = arith.extf %327 : vector<8x128xbf16> to vector<8x128xf32>
    %329 = arith.mulf %328, %325 : vector<8x128xf32>
    %330 = arith.addf %306, %329 : vector<8x128xf32>
    %c112_i32_218 = arith.constant 112 : i32
    %331 = tpu.dynamic_rotate %201 by %c112_i32_218 dim 1 : vector<8x128xf32>, i32 -> vector<8x128xf32>
    %c1_219 = arith.constant 1 : index
    %c22_220 = arith.constant 22 : index
    %c0_221 = arith.constant 0 : index
    %c0_222 = arith.constant 0 : index
    %332 = vector.load %arg4[%c1_219, %c22_220, %c0_221, %c0_222] : memref<2x25x8x128xbf16, #tpu.memory_space<vmem>>, vector<1x1x8x128xbf16>
    %333 = vector.shape_cast %332 : vector<1x1x8x128xbf16> to vector<8x128xbf16>
    %334 = arith.extf %333 : vector<8x128xbf16> to vector<8x128xf32>
    %335 = arith.mulf %334, %331 : vector<8x128xf32>
    %336 = arith.addf %312, %335 : vector<8x128xf32>
    %c111_i32_223 = arith.constant 111 : i32
    %337 = tpu.dynamic_rotate %201 by %c111_i32_223 dim 1 : vector<8x128xf32>, i32 -> vector<8x128xf32>
    %c1_224 = arith.constant 1 : index
    %c23_225 = arith.constant 23 : index
    %c0_226 = arith.constant 0 : index
    %c0_227 = arith.constant 0 : index
    %338 = vector.load %arg4[%c1_224, %c23_225, %c0_226, %c0_227] : memref<2x25x8x128xbf16, #tpu.memory_space<vmem>>, vector<1x1x8x128xbf16>
    %339 = vector.shape_cast %338 : vector<1x1x8x128xbf16> to vector<8x128xbf16>
    %340 = arith.extf %339 : vector<8x128xbf16> to vector<8x128xf32>
    %341 = arith.mulf %340, %337 : vector<8x128xf32>
    %342 = arith.addf %318, %341 : vector<8x128xf32>
    %c110_i32_228 = arith.constant 110 : i32
    %343 = tpu.dynamic_rotate %201 by %c110_i32_228 dim 1 : vector<8x128xf32>, i32 -> vector<8x128xf32>
    %c1_229 = arith.constant 1 : index
    %c24_230 = arith.constant 24 : index
    %c0_231 = arith.constant 0 : index
    %c0_232 = arith.constant 0 : index
    %344 = vector.load %arg4[%c1_229, %c24_230, %c0_231, %c0_232] : memref<2x25x8x128xbf16, #tpu.memory_space<vmem>>, vector<1x1x8x128xbf16>
    %345 = vector.shape_cast %344 : vector<1x1x8x128xbf16> to vector<8x128xbf16>
    %346 = arith.extf %345 : vector<8x128xbf16> to vector<8x128xf32>
    %347 = arith.mulf %346, %343 : vector<8x128xf32>
    %348 = arith.addf %324, %347 : vector<8x128xf32>
    %c1_233 = arith.constant 1 : index
    %c0_234 = arith.constant 0 : index
    %c0_235 = arith.constant 0 : index
    %349 = vector.load %arg5[%c1_233, %c0_234, %c0_235] : memref<2x8x1xf32, #tpu.memory_space<vmem>>, vector<1x8x1xf32>
    %350 = vector.shape_cast %349 : vector<1x8x1xf32> to vector<8x1xf32>
    %351 = arith.addf %348, %330 : vector<8x128xf32>
    %352 = arith.addf %336, %342 : vector<8x128xf32>
    %353 = arith.addf %351, %352 : vector<8x128xf32>
    %354 = vector.broadcast %350 : vector<8x1xf32> to vector<8x128xf32>
    %355 = arith.addf %354, %353 : vector<8x128xf32>
    %356 = arith.truncf %355 : vector<8x128xf32> to vector<8x128xbf16>
    %357 = arith.truncf %202 : vector<8x128xf32> to vector<8x128xbf16>
    %cst_236 = arith.constant dense<0.000000e+00> : vector<128x128xf32>
    %358 = tpu.matmul %356, %357, %cst_236 {dimension_numbers = #tpu.dot_dimension_numbers<[0], [0], [1], [1], [0, 1, 1, 1], [], []>} : vector<8x128xbf16>, vector<8x128xbf16>, vector<128x128xf32> -> vector<128x128xf32>
    %c1_237 = arith.constant 1 : index
    %c0_238 = arith.constant 0 : index
    %c0_239 = arith.constant 0 : index
    %359 = vector.load %arg6[%c1_237, %c0_238, %c0_239] : memref<2x128x128xbf16, #tpu.memory_space<vmem>>, vector<1x128x128xbf16>
    %360 = vector.shape_cast %359 : vector<1x128x128xbf16> to vector<128x128xbf16>
    %361 = arith.extf %360 : vector<128x128xbf16> to vector<128x128xf32>
    %362 = arith.addf %358, %361 : vector<128x128xf32>
    %cst_240 = arith.constant dense<0xFF800000> : vector<128xf32>
    %363 = vector.multi_reduction <maximumf>, %362, %cst_240 [1] : vector<128x128xf32> to vector<128xf32>
    %364 = vector.shape_cast %363 : vector<128xf32> to vector<128x1xf32>
    %365 = vector.broadcast %364 : vector<128x1xf32> to vector<128x128xf32>
    %366 = arith.subf %362, %365 : vector<128x128xf32>
    %367 = math.exp %366 : vector<128x128xf32>
    %cst_241 = arith.constant dense<0.000000e+00> : vector<128xf32>
    %368 = vector.multi_reduction <add>, %367, %cst_241 [1] : vector<128x128xf32> to vector<128xf32>
    %369 = vector.shape_cast %368 : vector<128xf32> to vector<128x1xf32>
    %370 = tpu.reciprocal %369 {approx = true} : vector<128x1xf32> -> vector<128x1xf32>
    %371 = vector.broadcast %370 : vector<128x1xf32> to vector<128x128xf32>
    %372 = arith.mulf %367, %371 : vector<128x128xf32>
    %373 = arith.truncf %203 : vector<32x128xf32> to vector<32x128xbf16>
    %374 = arith.truncf %372 : vector<128x128xf32> to vector<128x128xbf16>
    %cst_242 = arith.constant dense<0.000000e+00> : vector<32x128xf32>
    %375 = tpu.matmul %373, %374, %cst_242 {dimension_numbers = #tpu.dot_dimension_numbers<[1], [1], [0], [0], [0, 0, 1, 0], [], []>} : vector<32x128xbf16>, vector<128x128xbf16>, vector<32x128xf32> -> vector<32x128xf32>
    %c1_243 = arith.constant 1 : index
    %c0_244 = arith.constant 0 : index
    %c0_245 = arith.constant 0 : index
    %376 = vector.load %arg7[%c1_243, %c0_244, %c0_245] : memref<2x64x32xf32, #tpu.memory_space<vmem>>, vector<1x64x32xf32>
    %377 = vector.shape_cast %376 : vector<1x64x32xf32> to vector<64x32xf32>
    %cst_246 = arith.constant 0.000000e+00 : f32
    %378 = vector.broadcast %cst_246 : f32 to vector<32x128xf32>
    %379 = arith.maximumf %375, %378 : vector<32x128xf32>
    %cst_247 = arith.constant dense<0.000000e+00> : vector<64x128xf32>
    %380 = tpu.matmul %377, %379, %cst_247 {dimension_numbers = #tpu.dot_dimension_numbers<[1], [0], [0], [1], [0, 0, 1, 1], [], []>} : vector<64x32xf32>, vector<32x128xf32>, vector<64x128xf32> -> vector<64x128xf32>
    %381 = arith.addf %190, %380 : vector<64x128xf32>
    %c0_248 = arith.constant 0 : index
    %c0_249 = arith.constant 0 : index
    %382 = vector.load %arg8[%c0_248, %c0_249] : memref<64x1xf32, #tpu.memory_space<vmem>>, vector<64x1xf32>
    %383 = vector.broadcast %382 : vector<64x1xf32> to vector<64x128xf32>
    %384 = arith.addf %381, %383 : vector<64x128xf32>
    %c0_250 = arith.constant 0 : index
    %c0_251 = arith.constant 0 : index
    %c0_252 = arith.constant 0 : index
    %385 = vector.load %arg9[%c0_250, %c0_251, %c0_252] : memref<4x64x128xf32, #tpu.memory_space<vmem>>, vector<1x64x128xf32>
    %386 = vector.shape_cast %385 : vector<1x64x128xf32> to vector<64x128xf32>
    %387 = vector.shape_cast %384 : vector<64x128xf32> to vector<1x64x128xf32>
    tpu.vector_store %arg9[%c0_250, %c0_251, %c0_252], %387 {strides = array<i32>} : memref<4x64x128xf32, #tpu.memory_space<vmem>>, vector<1x64x128xf32>,
    %cst_253 = arith.constant 0.000000e+00 : f32
    %388 = vector.broadcast %cst_253 : f32 to vector<64x128xf32>
    %c1_254 = arith.constant 1 : index
    %c0_255 = arith.constant 0 : index
    %c0_256 = arith.constant 0 : index
    %389 = vector.load %arg1[%c1_254, %c0_255, %c0_256] : memref<4x64x128xf32, #tpu.memory_space<vmem>>, vector<1x32x128xf32>
    %390 = vector.shape_cast %389 : vector<1x32x128xf32> to vector<32x128xf32>
    %c0_257 = arith.constant 0 : index
    %c0_258 = arith.constant 0 : index
    %c0_259 = arith.constant 0 : index
    %391 = vector.load %arg2[%c0_257, %c0_258, %c0_259] : memref<2x48x32xf32, #tpu.memory_space<vmem>>, vector<1x48x32xf32>
    %392 = vector.shape_cast %391 : vector<1x48x32xf32> to vector<48x32xf32>
    %cst_260 = arith.constant dense<0.000000e+00> : vector<48x128xf32>
    %393 = tpu.matmul %392, %390, %cst_260 {dimension_numbers = #tpu.dot_dimension_numbers<[1], [0], [0], [1], [0, 0, 1, 1], [], []>} : vector<48x32xf32>, vector<32x128xf32>, vector<48x128xf32> -> vector<48x128xf32>
    %c0_261 = arith.constant 0 : index
    %c0_262 = arith.constant 0 : index
    %c0_263 = arith.constant 0 : index
    %394 = vector.load %arg3[%c0_261, %c0_262, %c0_263] : memref<2x48x1xf32, #tpu.memory_space<vmem>>, vector<1x48x1xf32>
    %395 = vector.shape_cast %394 : vector<1x48x1xf32> to vector<48x1xf32>
    %396 = vector.broadcast %395 : vector<48x1xf32> to vector<48x128xf32>
    %397 = arith.addf %393, %396 : vector<48x128xf32>
    %398 = vector.extract_strided_slice %397 {offsets = [0, 0], sizes = [8, 128], strides = [1, 1]} : vector<48x128xf32> to vector<8x128xf32>
    %399 = vector.extract_strided_slice %397 {offsets = [8, 0], sizes = [8, 128], strides = [1, 1]} : vector<48x128xf32> to vector<8x128xf32>
    %400 = vector.extract_strided_slice %397 {offsets = [16, 0], sizes = [32, 128], strides = [1, 1]} : vector<48x128xf32> to vector<32x128xf32>
    %c18_i32_264 = arith.constant 18 : i32
    %401 = tpu.dynamic_rotate %398 by %c18_i32_264 dim 1 : vector<8x128xf32>, i32 -> vector<8x128xf32>
    %c0_265 = arith.constant 0 : index
    %c0_266 = arith.constant 0 : index
    %c0_267 = arith.constant 0 : index
    %c0_268 = arith.constant 0 : index
    %402 = vector.load %arg4[%c0_265, %c0_266, %c0_267, %c0_268] : memref<2x25x8x128xbf16, #tpu.memory_space<vmem>>, vector<1x1x8x128xbf16>
    %403 = vector.shape_cast %402 : vector<1x1x8x128xbf16> to vector<8x128xbf16>
    %404 = arith.extf %403 : vector<8x128xbf16> to vector<8x128xf32>
    %405 = arith.mulf %404, %401 : vector<8x128xf32>
    %c17_i32_269 = arith.constant 17 : i32
    %406 = tpu.dynamic_rotate %398 by %c17_i32_269 dim 1 : vector<8x128xf32>, i32 -> vector<8x128xf32>
    %c0_270 = arith.constant 0 : index
    %c1_271 = arith.constant 1 : index
    %c0_272 = arith.constant 0 : index
    %c0_273 = arith.constant 0 : index
    %407 = vector.load %arg4[%c0_270, %c1_271, %c0_272, %c0_273] : memref<2x25x8x128xbf16, #tpu.memory_space<vmem>>, vector<1x1x8x128xbf16>
    %408 = vector.shape_cast %407 : vector<1x1x8x128xbf16> to vector<8x128xbf16>
    %409 = arith.extf %408 : vector<8x128xbf16> to vector<8x128xf32>
    %410 = arith.mulf %409, %406 : vector<8x128xf32>
    %c16_i32_274 = arith.constant 16 : i32
    %411 = tpu.dynamic_rotate %398 by %c16_i32_274 dim 1 : vector<8x128xf32>, i32 -> vector<8x128xf32>
    %c0_275 = arith.constant 0 : index
    %c2_276 = arith.constant 2 : index
    %c0_277 = arith.constant 0 : index
    %c0_278 = arith.constant 0 : index
    %412 = vector.load %arg4[%c0_275, %c2_276, %c0_277, %c0_278] : memref<2x25x8x128xbf16, #tpu.memory_space<vmem>>, vector<1x1x8x128xbf16>
    %413 = vector.shape_cast %412 : vector<1x1x8x128xbf16> to vector<8x128xbf16>
    %414 = arith.extf %413 : vector<8x128xbf16> to vector<8x128xf32>
    %415 = arith.mulf %414, %411 : vector<8x128xf32>
    %c15_i32_279 = arith.constant 15 : i32
    %416 = tpu.dynamic_rotate %398 by %c15_i32_279 dim 1 : vector<8x128xf32>, i32 -> vector<8x128xf32>
    %c0_280 = arith.constant 0 : index
    %c3_281 = arith.constant 3 : index
    %c0_282 = arith.constant 0 : index
    %c0_283 = arith.constant 0 : index
    %417 = vector.load %arg4[%c0_280, %c3_281, %c0_282, %c0_283] : memref<2x25x8x128xbf16, #tpu.memory_space<vmem>>, vector<1x1x8x128xbf16>
    %418 = vector.shape_cast %417 : vector<1x1x8x128xbf16> to vector<8x128xbf16>
    %419 = arith.extf %418 : vector<8x128xbf16> to vector<8x128xf32>
    %420 = arith.mulf %419, %416 : vector<8x128xf32>
    %c14_i32_284 = arith.constant 14 : i32
    %421 = tpu.dynamic_rotate %398 by %c14_i32_284 dim 1 : vector<8x128xf32>, i32 -> vector<8x128xf32>
    %c0_285 = arith.constant 0 : index
    %c4_286 = arith.constant 4 : index
    %c0_287 = arith.constant 0 : index
    %c0_288 = arith.constant 0 : index
    %422 = vector.load %arg4[%c0_285, %c4_286, %c0_287, %c0_288] : memref<2x25x8x128xbf16, #tpu.memory_space<vmem>>, vector<1x1x8x128xbf16>
    %423 = vector.shape_cast %422 : vector<1x1x8x128xbf16> to vector<8x128xbf16>
    %424 = arith.extf %423 : vector<8x128xbf16> to vector<8x128xf32>
    %425 = arith.mulf %424, %421 : vector<8x128xf32>
    %426 = arith.addf %405, %425 : vector<8x128xf32>
    %c10_i32_289 = arith.constant 10 : i32
    %427 = tpu.dynamic_rotate %398 by %c10_i32_289 dim 1 : vector<8x128xf32>, i32 -> vector<8x128xf32>
    %c0_290 = arith.constant 0 : index
    %c5_291 = arith.constant 5 : index
    %c0_292 = arith.constant 0 : index
    %c0_293 = arith.constant 0 : index
    %428 = vector.load %arg4[%c0_290, %c5_291, %c0_292, %c0_293] : memref<2x25x8x128xbf16, #tpu.memory_space<vmem>>, vector<1x1x8x128xbf16>
    %429 = vector.shape_cast %428 : vector<1x1x8x128xbf16> to vector<8x128xbf16>
    %430 = arith.extf %429 : vector<8x128xbf16> to vector<8x128xf32>
    %431 = arith.mulf %430, %427 : vector<8x128xf32>
    %432 = arith.addf %410, %431 : vector<8x128xf32>
    %c9_i32_294 = arith.constant 9 : i32
    %433 = tpu.dynamic_rotate %398 by %c9_i32_294 dim 1 : vector<8x128xf32>, i32 -> vector<8x128xf32>
    %c0_295 = arith.constant 0 : index
    %c6_296 = arith.constant 6 : index
    %c0_297 = arith.constant 0 : index
    %c0_298 = arith.constant 0 : index
    %434 = vector.load %arg4[%c0_295, %c6_296, %c0_297, %c0_298] : memref<2x25x8x128xbf16, #tpu.memory_space<vmem>>, vector<1x1x8x128xbf16>
    %435 = vector.shape_cast %434 : vector<1x1x8x128xbf16> to vector<8x128xbf16>
    %436 = arith.extf %435 : vector<8x128xbf16> to vector<8x128xf32>
    %437 = arith.mulf %436, %433 : vector<8x128xf32>
    %438 = arith.addf %415, %437 : vector<8x128xf32>
    %c8_i32_299 = arith.constant 8 : i32
    %439 = tpu.dynamic_rotate %398 by %c8_i32_299 dim 1 : vector<8x128xf32>, i32 -> vector<8x128xf32>
    %c0_300 = arith.constant 0 : index
    %c7_301 = arith.constant 7 : index
    %c0_302 = arith.constant 0 : index
    %c0_303 = arith.constant 0 : index
    %440 = vector.load %arg4[%c0_300, %c7_301, %c0_302, %c0_303] : memref<2x25x8x128xbf16, #tpu.memory_space<vmem>>, vector<1x1x8x128xbf16>
    %441 = vector.shape_cast %440 : vector<1x1x8x128xbf16> to vector<8x128xbf16>
    %442 = arith.extf %441 : vector<8x128xbf16> to vector<8x128xf32>
    %443 = arith.mulf %442, %439 : vector<8x128xf32>
    %444 = arith.addf %420, %443 : vector<8x128xf32>
    %c7_i32_304 = arith.constant 7 : i32
    %445 = tpu.dynamic_rotate %398 by %c7_i32_304 dim 1 : vector<8x128xf32>, i32 -> vector<8x128xf32>
    %c0_305 = arith.constant 0 : index
    %c8_306 = arith.constant 8 : index
    %c0_307 = arith.constant 0 : index
    %c0_308 = arith.constant 0 : index
    %446 = vector.load %arg4[%c0_305, %c8_306, %c0_307, %c0_308] : memref<2x25x8x128xbf16, #tpu.memory_space<vmem>>, vector<1x1x8x128xbf16>
    %447 = vector.shape_cast %446 : vector<1x1x8x128xbf16> to vector<8x128xbf16>
    %448 = arith.extf %447 : vector<8x128xbf16> to vector<8x128xf32>
    %449 = arith.mulf %448, %445 : vector<8x128xf32>
    %450 = arith.addf %426, %449 : vector<8x128xf32>
    %c6_i32_309 = arith.constant 6 : i32
    %451 = tpu.dynamic_rotate %398 by %c6_i32_309 dim 1 : vector<8x128xf32>, i32 -> vector<8x128xf32>
    %c0_310 = arith.constant 0 : index
    %c9_311 = arith.constant 9 : index
    %c0_312 = arith.constant 0 : index
    %c0_313 = arith.constant 0 : index
    %452 = vector.load %arg4[%c0_310, %c9_311, %c0_312, %c0_313] : memref<2x25x8x128xbf16, #tpu.memory_space<vmem>>, vector<1x1x8x128xbf16>
    %453 = vector.shape_cast %452 : vector<1x1x8x128xbf16> to vector<8x128xbf16>
    %454 = arith.extf %453 : vector<8x128xbf16> to vector<8x128xf32>
    %455 = arith.mulf %454, %451 : vector<8x128xf32>
    %456 = arith.addf %432, %455 : vector<8x128xf32>
    %c2_i32_314 = arith.constant 2 : i32
    %457 = tpu.dynamic_rotate %398 by %c2_i32_314 dim 1 : vector<8x128xf32>, i32 -> vector<8x128xf32>
    %c0_315 = arith.constant 0 : index
    %c10_316 = arith.constant 10 : index
    %c0_317 = arith.constant 0 : index
    %c0_318 = arith.constant 0 : index
    %458 = vector.load %arg4[%c0_315, %c10_316, %c0_317, %c0_318] : memref<2x25x8x128xbf16, #tpu.memory_space<vmem>>, vector<1x1x8x128xbf16>
    %459 = vector.shape_cast %458 : vector<1x1x8x128xbf16> to vector<8x128xbf16>
    %460 = arith.extf %459 : vector<8x128xbf16> to vector<8x128xf32>
    %461 = arith.mulf %460, %457 : vector<8x128xf32>
    %462 = arith.addf %438, %461 : vector<8x128xf32>
    %c1_i32_319 = arith.constant 1 : i32
    %463 = tpu.dynamic_rotate %398 by %c1_i32_319 dim 1 : vector<8x128xf32>, i32 -> vector<8x128xf32>
    %c0_320 = arith.constant 0 : index
    %c11_321 = arith.constant 11 : index
    %c0_322 = arith.constant 0 : index
    %c0_323 = arith.constant 0 : index
    %464 = vector.load %arg4[%c0_320, %c11_321, %c0_322, %c0_323] : memref<2x25x8x128xbf16, #tpu.memory_space<vmem>>, vector<1x1x8x128xbf16>
    %465 = vector.shape_cast %464 : vector<1x1x8x128xbf16> to vector<8x128xbf16>
    %466 = arith.extf %465 : vector<8x128xbf16> to vector<8x128xf32>
    %467 = arith.mulf %466, %463 : vector<8x128xf32>
    %468 = arith.addf %444, %467 : vector<8x128xf32>
    %c0_324 = arith.constant 0 : index
    %c12_325 = arith.constant 12 : index
    %c0_326 = arith.constant 0 : index
    %c0_327 = arith.constant 0 : index
    %469 = vector.load %arg4[%c0_324, %c12_325, %c0_326, %c0_327] : memref<2x25x8x128xbf16, #tpu.memory_space<vmem>>, vector<1x1x8x128xbf16>
    %470 = vector.shape_cast %469 : vector<1x1x8x128xbf16> to vector<8x128xbf16>
    %471 = arith.extf %470 : vector<8x128xbf16> to vector<8x128xf32>
    %472 = arith.mulf %471, %398 : vector<8x128xf32>
    %473 = arith.addf %450, %472 : vector<8x128xf32>
    %c127_i32_328 = arith.constant 127 : i32
    %474 = tpu.dynamic_rotate %398 by %c127_i32_328 dim 1 : vector<8x128xf32>, i32 -> vector<8x128xf32>
    %c0_329 = arith.constant 0 : index
    %c13_330 = arith.constant 13 : index
    %c0_331 = arith.constant 0 : index
    %c0_332 = arith.constant 0 : index
    %475 = vector.load %arg4[%c0_329, %c13_330, %c0_331, %c0_332] : memref<2x25x8x128xbf16, #tpu.memory_space<vmem>>, vector<1x1x8x128xbf16>
    %476 = vector.shape_cast %475 : vector<1x1x8x128xbf16> to vector<8x128xbf16>
    %477 = arith.extf %476 : vector<8x128xbf16> to vector<8x128xf32>
    %478 = arith.mulf %477, %474 : vector<8x128xf32>
    %479 = arith.addf %456, %478 : vector<8x128xf32>
    %c126_i32_333 = arith.constant 126 : i32
    %480 = tpu.dynamic_rotate %398 by %c126_i32_333 dim 1 : vector<8x128xf32>, i32 -> vector<8x128xf32>
    %c0_334 = arith.constant 0 : index
    %c14_335 = arith.constant 14 : index
    %c0_336 = arith.constant 0 : index
    %c0_337 = arith.constant 0 : index
    %481 = vector.load %arg4[%c0_334, %c14_335, %c0_336, %c0_337] : memref<2x25x8x128xbf16, #tpu.memory_space<vmem>>, vector<1x1x8x128xbf16>
    %482 = vector.shape_cast %481 : vector<1x1x8x128xbf16> to vector<8x128xbf16>
    %483 = arith.extf %482 : vector<8x128xbf16> to vector<8x128xf32>
    %484 = arith.mulf %483, %480 : vector<8x128xf32>
    %485 = arith.addf %462, %484 : vector<8x128xf32>
    %c122_i32_338 = arith.constant 122 : i32
    %486 = tpu.dynamic_rotate %398 by %c122_i32_338 dim 1 : vector<8x128xf32>, i32 -> vector<8x128xf32>
    %c0_339 = arith.constant 0 : index
    %c15_340 = arith.constant 15 : index
    %c0_341 = arith.constant 0 : index
    %c0_342 = arith.constant 0 : index
    %487 = vector.load %arg4[%c0_339, %c15_340, %c0_341, %c0_342] : memref<2x25x8x128xbf16, #tpu.memory_space<vmem>>, vector<1x1x8x128xbf16>
    %488 = vector.shape_cast %487 : vector<1x1x8x128xbf16> to vector<8x128xbf16>
    %489 = arith.extf %488 : vector<8x128xbf16> to vector<8x128xf32>
    %490 = arith.mulf %489, %486 : vector<8x128xf32>
    %491 = arith.addf %468, %490 : vector<8x128xf32>
    %c121_i32_343 = arith.constant 121 : i32
    %492 = tpu.dynamic_rotate %398 by %c121_i32_343 dim 1 : vector<8x128xf32>, i32 -> vector<8x128xf32>
    %c0_344 = arith.constant 0 : index
    %c16_345 = arith.constant 16 : index
    %c0_346 = arith.constant 0 : index
    %c0_347 = arith.constant 0 : index
    %493 = vector.load %arg4[%c0_344, %c16_345, %c0_346, %c0_347] : memref<2x25x8x128xbf16, #tpu.memory_space<vmem>>, vector<1x1x8x128xbf16>
    %494 = vector.shape_cast %493 : vector<1x1x8x128xbf16> to vector<8x128xbf16>
    %495 = arith.extf %494 : vector<8x128xbf16> to vector<8x128xf32>
    %496 = arith.mulf %495, %492 : vector<8x128xf32>
    %497 = arith.addf %473, %496 : vector<8x128xf32>
    %c120_i32_348 = arith.constant 120 : i32
    %498 = tpu.dynamic_rotate %398 by %c120_i32_348 dim 1 : vector<8x128xf32>, i32 -> vector<8x128xf32>
    %c0_349 = arith.constant 0 : index
    %c17_350 = arith.constant 17 : index
    %c0_351 = arith.constant 0 : index
    %c0_352 = arith.constant 0 : index
    %499 = vector.load %arg4[%c0_349, %c17_350, %c0_351, %c0_352] : memref<2x25x8x128xbf16, #tpu.memory_space<vmem>>, vector<1x1x8x128xbf16>
    %500 = vector.shape_cast %499 : vector<1x1x8x128xbf16> to vector<8x128xbf16>
    %501 = arith.extf %500 : vector<8x128xbf16> to vector<8x128xf32>
    %502 = arith.mulf %501, %498 : vector<8x128xf32>
    %503 = arith.addf %479, %502 : vector<8x128xf32>
    %c119_i32_353 = arith.constant 119 : i32
    %504 = tpu.dynamic_rotate %398 by %c119_i32_353 dim 1 : vector<8x128xf32>, i32 -> vector<8x128xf32>
    %c0_354 = arith.constant 0 : index
    %c18_355 = arith.constant 18 : index
    %c0_356 = arith.constant 0 : index
    %c0_357 = arith.constant 0 : index
    %505 = vector.load %arg4[%c0_354, %c18_355, %c0_356, %c0_357] : memref<2x25x8x128xbf16, #tpu.memory_space<vmem>>, vector<1x1x8x128xbf16>
    %506 = vector.shape_cast %505 : vector<1x1x8x128xbf16> to vector<8x128xbf16>
    %507 = arith.extf %506 : vector<8x128xbf16> to vector<8x128xf32>
    %508 = arith.mulf %507, %504 : vector<8x128xf32>
    %509 = arith.addf %485, %508 : vector<8x128xf32>
    %c118_i32_358 = arith.constant 118 : i32
    %510 = tpu.dynamic_rotate %398 by %c118_i32_358 dim 1 : vector<8x128xf32>, i32 -> vector<8x128xf32>
    %c0_359 = arith.constant 0 : index
    %c19_360 = arith.constant 19 : index
    %c0_361 = arith.constant 0 : index
    %c0_362 = arith.constant 0 : index
    %511 = vector.load %arg4[%c0_359, %c19_360, %c0_361, %c0_362] : memref<2x25x8x128xbf16, #tpu.memory_space<vmem>>, vector<1x1x8x128xbf16>
    %512 = vector.shape_cast %511 : vector<1x1x8x128xbf16> to vector<8x128xbf16>
    %513 = arith.extf %512 : vector<8x128xbf16> to vector<8x128xf32>
    %514 = arith.mulf %513, %510 : vector<8x128xf32>
    %515 = arith.addf %491, %514 : vector<8x128xf32>
    %c114_i32_363 = arith.constant 114 : i32
    %516 = tpu.dynamic_rotate %398 by %c114_i32_363 dim 1 : vector<8x128xf32>, i32 -> vector<8x128xf32>
    %c0_364 = arith.constant 0 : index
    %c20_365 = arith.constant 20 : index
    %c0_366 = arith.constant 0 : index
    %c0_367 = arith.constant 0 : index
    %517 = vector.load %arg4[%c0_364, %c20_365, %c0_366, %c0_367] : memref<2x25x8x128xbf16, #tpu.memory_space<vmem>>, vector<1x1x8x128xbf16>
    %518 = vector.shape_cast %517 : vector<1x1x8x128xbf16> to vector<8x128xbf16>
    %519 = arith.extf %518 : vector<8x128xbf16> to vector<8x128xf32>
    %520 = arith.mulf %519, %516 : vector<8x128xf32>
    %521 = arith.addf %497, %520 : vector<8x128xf32>
    %c113_i32_368 = arith.constant 113 : i32
    %522 = tpu.dynamic_rotate %398 by %c113_i32_368 dim 1 : vector<8x128xf32>, i32 -> vector<8x128xf32>
    %c0_369 = arith.constant 0 : index
    %c21_370 = arith.constant 21 : index
    %c0_371 = arith.constant 0 : index
    %c0_372 = arith.constant 0 : index
    %523 = vector.load %arg4[%c0_369, %c21_370, %c0_371, %c0_372] : memref<2x25x8x128xbf16, #tpu.memory_space<vmem>>, vector<1x1x8x128xbf16>
    %524 = vector.shape_cast %523 : vector<1x1x8x128xbf16> to vector<8x128xbf16>
    %525 = arith.extf %524 : vector<8x128xbf16> to vector<8x128xf32>
    %526 = arith.mulf %525, %522 : vector<8x128xf32>
    %527 = arith.addf %503, %526 : vector<8x128xf32>
    %c112_i32_373 = arith.constant 112 : i32
    %528 = tpu.dynamic_rotate %398 by %c112_i32_373 dim 1 : vector<8x128xf32>, i32 -> vector<8x128xf32>
    %c0_374 = arith.constant 0 : index
    %c22_375 = arith.constant 22 : index
    %c0_376 = arith.constant 0 : index
    %c0_377 = arith.constant 0 : index
    %529 = vector.load %arg4[%c0_374, %c22_375, %c0_376, %c0_377] : memref<2x25x8x128xbf16, #tpu.memory_space<vmem>>, vector<1x1x8x128xbf16>
    %530 = vector.shape_cast %529 : vector<1x1x8x128xbf16> to vector<8x128xbf16>
    %531 = arith.extf %530 : vector<8x128xbf16> to vector<8x128xf32>
    %532 = arith.mulf %531, %528 : vector<8x128xf32>
    %533 = arith.addf %509, %532 : vector<8x128xf32>
    %c111_i32_378 = arith.constant 111 : i32
    %534 = tpu.dynamic_rotate %398 by %c111_i32_378 dim 1 : vector<8x128xf32>, i32 -> vector<8x128xf32>
    %c0_379 = arith.constant 0 : index
    %c23_380 = arith.constant 23 : index
    %c0_381 = arith.constant 0 : index
    %c0_382 = arith.constant 0 : index
    %535 = vector.load %arg4[%c0_379, %c23_380, %c0_381, %c0_382] : memref<2x25x8x128xbf16, #tpu.memory_space<vmem>>, vector<1x1x8x128xbf16>
    %536 = vector.shape_cast %535 : vector<1x1x8x128xbf16> to vector<8x128xbf16>
    %537 = arith.extf %536 : vector<8x128xbf16> to vector<8x128xf32>
    %538 = arith.mulf %537, %534 : vector<8x128xf32>
    %539 = arith.addf %515, %538 : vector<8x128xf32>
    %c110_i32_383 = arith.constant 110 : i32
    %540 = tpu.dynamic_rotate %398 by %c110_i32_383 dim 1 : vector<8x128xf32>, i32 -> vector<8x128xf32>
    %c0_384 = arith.constant 0 : index
    %c24_385 = arith.constant 24 : index
    %c0_386 = arith.constant 0 : index
    %c0_387 = arith.constant 0 : index
    %541 = vector.load %arg4[%c0_384, %c24_385, %c0_386, %c0_387] : memref<2x25x8x128xbf16, #tpu.memory_space<vmem>>, vector<1x1x8x128xbf16>
    %542 = vector.shape_cast %541 : vector<1x1x8x128xbf16> to vector<8x128xbf16>
    %543 = arith.extf %542 : vector<8x128xbf16> to vector<8x128xf32>
    %544 = arith.mulf %543, %540 : vector<8x128xf32>
    %545 = arith.addf %521, %544 : vector<8x128xf32>
    %c0_388 = arith.constant 0 : index
    %c0_389 = arith.constant 0 : index
    %c0_390 = arith.constant 0 : index
    %546 = vector.load %arg5[%c0_388, %c0_389, %c0_390] : memref<2x8x1xf32, #tpu.memory_space<vmem>>, vector<1x8x1xf32>
    %547 = vector.shape_cast %546 : vector<1x8x1xf32> to vector<8x1xf32>
    %548 = arith.addf %545, %527 : vector<8x128xf32>
    %549 = arith.addf %533, %539 : vector<8x128xf32>
    %550 = arith.addf %548, %549 : vector<8x128xf32>
    %551 = vector.broadcast %547 : vector<8x1xf32> to vector<8x128xf32>
    %552 = arith.addf %551, %550 : vector<8x128xf32>
    %553 = arith.truncf %552 : vector<8x128xf32> to vector<8x128xbf16>
    %554 = arith.truncf %399 : vector<8x128xf32> to vector<8x128xbf16>
    %cst_391 = arith.constant dense<0.000000e+00> : vector<128x128xf32>
    %555 = tpu.matmul %553, %554, %cst_391 {dimension_numbers = #tpu.dot_dimension_numbers<[0], [0], [1], [1], [0, 1, 1, 1], [], []>} : vector<8x128xbf16>, vector<8x128xbf16>, vector<128x128xf32> -> vector<128x128xf32>
    %c0_392 = arith.constant 0 : index
    %c0_393 = arith.constant 0 : index
    %c0_394 = arith.constant 0 : index
    %556 = vector.load %arg6[%c0_392, %c0_393, %c0_394] : memref<2x128x128xbf16, #tpu.memory_space<vmem>>, vector<1x128x128xbf16>
    %557 = vector.shape_cast %556 : vector<1x128x128xbf16> to vector<128x128xbf16>
    %558 = arith.extf %557 : vector<128x128xbf16> to vector<128x128xf32>
    %559 = arith.addf %555, %558 : vector<128x128xf32>
    %cst_395 = arith.constant dense<0xFF800000> : vector<128xf32>
    %560 = vector.multi_reduction <maximumf>, %559, %cst_395 [1] : vector<128x128xf32> to vector<128xf32>
    %561 = vector.shape_cast %560 : vector<128xf32> to vector<128x1xf32>
    %562 = vector.broadcast %561 : vector<128x1xf32> to vector<128x128xf32>
    %563 = arith.subf %559, %562 : vector<128x128xf32>
    %564 = math.exp %563 : vector<128x128xf32>
    %cst_396 = arith.constant dense<0.000000e+00> : vector<128xf32>
    %565 = vector.multi_reduction <add>, %564, %cst_396 [1] : vector<128x128xf32> to vector<128xf32>
    %566 = vector.shape_cast %565 : vector<128xf32> to vector<128x1xf32>
    %567 = tpu.reciprocal %566 {approx = true} : vector<128x1xf32> -> vector<128x1xf32>
    %568 = vector.broadcast %567 : vector<128x1xf32> to vector<128x128xf32>
    %569 = arith.mulf %564, %568 : vector<128x128xf32>
    %570 = arith.truncf %400 : vector<32x128xf32> to vector<32x128xbf16>
    %571 = arith.truncf %569 : vector<128x128xf32> to vector<128x128xbf16>
    %cst_397 = arith.constant dense<0.000000e+00> : vector<32x128xf32>
    %572 = tpu.matmul %570, %571, %cst_397 {dimension_numbers = #tpu.dot_dimension_numbers<[1], [1], [0], [0], [0, 0, 1, 0], [], []>} : vector<32x128xbf16>, vector<128x128xbf16>, vector<32x128xf32> -> vector<32x128xf32>
    %c0_398 = arith.constant 0 : index
    %c0_399 = arith.constant 0 : index
    %c0_400 = arith.constant 0 : index
    %573 = vector.load %arg7[%c0_398, %c0_399, %c0_400] : memref<2x64x32xf32, #tpu.memory_space<vmem>>, vector<1x64x32xf32>
    %574 = vector.shape_cast %573 : vector<1x64x32xf32> to vector<64x32xf32>
    %cst_401 = arith.constant 0.000000e+00 : f32
    %575 = vector.broadcast %cst_401 : f32 to vector<32x128xf32>
    %576 = arith.maximumf %572, %575 : vector<32x128xf32>
    %cst_402 = arith.constant dense<0.000000e+00> : vector<64x128xf32>
    %577 = tpu.matmul %574, %576, %cst_402 {dimension_numbers = #tpu.dot_dimension_numbers<[1], [0], [0], [1], [0, 0, 1, 1], [], []>} : vector<64x32xf32>, vector<32x128xf32>, vector<64x128xf32> -> vector<64x128xf32>
    %578 = arith.addf %388, %577 : vector<64x128xf32>
    %c1_403 = arith.constant 1 : index
    %c32_404 = arith.constant 32 : index
    %c0_405 = arith.constant 0 : index
    %579 = vector.load %arg1[%c1_403, %c32_404, %c0_405] : memref<4x64x128xf32, #tpu.memory_space<vmem>>, vector<1x32x128xf32>
    %580 = vector.shape_cast %579 : vector<1x32x128xf32> to vector<32x128xf32>
    %581 = arith.addf %572, %580 : vector<32x128xf32>
    %c1_406 = arith.constant 1 : index
    %c0_407 = arith.constant 0 : index
    %c0_408 = arith.constant 0 : index
    %582 = vector.load %arg2[%c1_406, %c0_407, %c0_408] : memref<2x48x32xf32, #tpu.memory_space<vmem>>, vector<1x48x32xf32>
    %583 = vector.shape_cast %582 : vector<1x48x32xf32> to vector<48x32xf32>
    %cst_409 = arith.constant dense<0.000000e+00> : vector<48x128xf32>
    %584 = tpu.matmul %583, %581, %cst_409 {dimension_numbers = #tpu.dot_dimension_numbers<[1], [0], [0], [1], [0, 0, 1, 1], [], []>} : vector<48x32xf32>, vector<32x128xf32>, vector<48x128xf32> -> vector<48x128xf32>
    %c1_410 = arith.constant 1 : index
    %c0_411 = arith.constant 0 : index
    %c0_412 = arith.constant 0 : index
    %585 = vector.load %arg3[%c1_410, %c0_411, %c0_412] : memref<2x48x1xf32, #tpu.memory_space<vmem>>, vector<1x48x1xf32>
    %586 = vector.shape_cast %585 : vector<1x48x1xf32> to vector<48x1xf32>
    %587 = vector.broadcast %586 : vector<48x1xf32> to vector<48x128xf32>
    %588 = arith.addf %584, %587 : vector<48x128xf32>
    %589 = vector.extract_strided_slice %588 {offsets = [0, 0], sizes = [8, 128], strides = [1, 1]} : vector<48x128xf32> to vector<8x128xf32>
    %590 = vector.extract_strided_slice %588 {offsets = [8, 0], sizes = [8, 128], strides = [1, 1]} : vector<48x128xf32> to vector<8x128xf32>
    %591 = vector.extract_strided_slice %588 {offsets = [16, 0], sizes = [32, 128], strides = [1, 1]} : vector<48x128xf32> to vector<32x128xf32>
    %c18_i32_413 = arith.constant 18 : i32
    %592 = tpu.dynamic_rotate %589 by %c18_i32_413 dim 1 : vector<8x128xf32>, i32 -> vector<8x128xf32>
    %c1_414 = arith.constant 1 : index
    %c0_415 = arith.constant 0 : index
    %c0_416 = arith.constant 0 : index
    %c0_417 = arith.constant 0 : index
    %593 = vector.load %arg4[%c1_414, %c0_415, %c0_416, %c0_417] : memref<2x25x8x128xbf16, #tpu.memory_space<vmem>>, vector<1x1x8x128xbf16>
    %594 = vector.shape_cast %593 : vector<1x1x8x128xbf16> to vector<8x128xbf16>
    %595 = arith.extf %594 : vector<8x128xbf16> to vector<8x128xf32>
    %596 = arith.mulf %595, %592 : vector<8x128xf32>
    %c17_i32_418 = arith.constant 17 : i32
    %597 = tpu.dynamic_rotate %589 by %c17_i32_418 dim 1 : vector<8x128xf32>, i32 -> vector<8x128xf32>
    %c1_419 = arith.constant 1 : index
    %c1_420 = arith.constant 1 : index
    %c0_421 = arith.constant 0 : index
    %c0_422 = arith.constant 0 : index
    %598 = vector.load %arg4[%c1_419, %c1_420, %c0_421, %c0_422] : memref<2x25x8x128xbf16, #tpu.memory_space<vmem>>, vector<1x1x8x128xbf16>
    %599 = vector.shape_cast %598 : vector<1x1x8x128xbf16> to vector<8x128xbf16>
    %600 = arith.extf %599 : vector<8x128xbf16> to vector<8x128xf32>
    %601 = arith.mulf %600, %597 : vector<8x128xf32>
    %c16_i32_423 = arith.constant 16 : i32
    %602 = tpu.dynamic_rotate %589 by %c16_i32_423 dim 1 : vector<8x128xf32>, i32 -> vector<8x128xf32>
    %c1_424 = arith.constant 1 : index
    %c2_425 = arith.constant 2 : index
    %c0_426 = arith.constant 0 : index
    %c0_427 = arith.constant 0 : index
    %603 = vector.load %arg4[%c1_424, %c2_425, %c0_426, %c0_427] : memref<2x25x8x128xbf16, #tpu.memory_space<vmem>>, vector<1x1x8x128xbf16>
    %604 = vector.shape_cast %603 : vector<1x1x8x128xbf16> to vector<8x128xbf16>
    %605 = arith.extf %604 : vector<8x128xbf16> to vector<8x128xf32>
    %606 = arith.mulf %605, %602 : vector<8x128xf32>
    %c15_i32_428 = arith.constant 15 : i32
    %607 = tpu.dynamic_rotate %589 by %c15_i32_428 dim 1 : vector<8x128xf32>, i32 -> vector<8x128xf32>
    %c1_429 = arith.constant 1 : index
    %c3_430 = arith.constant 3 : index
    %c0_431 = arith.constant 0 : index
    %c0_432 = arith.constant 0 : index
    %608 = vector.load %arg4[%c1_429, %c3_430, %c0_431, %c0_432] : memref<2x25x8x128xbf16, #tpu.memory_space<vmem>>, vector<1x1x8x128xbf16>
    %609 = vector.shape_cast %608 : vector<1x1x8x128xbf16> to vector<8x128xbf16>
    %610 = arith.extf %609 : vector<8x128xbf16> to vector<8x128xf32>
    %611 = arith.mulf %610, %607 : vector<8x128xf32>
    %c14_i32_433 = arith.constant 14 : i32
    %612 = tpu.dynamic_rotate %589 by %c14_i32_433 dim 1 : vector<8x128xf32>, i32 -> vector<8x128xf32>
    %c1_434 = arith.constant 1 : index
    %c4_435 = arith.constant 4 : index
    %c0_436 = arith.constant 0 : index
    %c0_437 = arith.constant 0 : index
    %613 = vector.load %arg4[%c1_434, %c4_435, %c0_436, %c0_437] : memref<2x25x8x128xbf16, #tpu.memory_space<vmem>>, vector<1x1x8x128xbf16>
    %614 = vector.shape_cast %613 : vector<1x1x8x128xbf16> to vector<8x128xbf16>
    %615 = arith.extf %614 : vector<8x128xbf16> to vector<8x128xf32>
    %616 = arith.mulf %615, %612 : vector<8x128xf32>
    %617 = arith.addf %596, %616 : vector<8x128xf32>
    %c10_i32_438 = arith.constant 10 : i32
    %618 = tpu.dynamic_rotate %589 by %c10_i32_438 dim 1 : vector<8x128xf32>, i32 -> vector<8x128xf32>
    %c1_439 = arith.constant 1 : index
    %c5_440 = arith.constant 5 : index
    %c0_441 = arith.constant 0 : index
    %c0_442 = arith.constant 0 : index
    %619 = vector.load %arg4[%c1_439, %c5_440, %c0_441, %c0_442] : memref<2x25x8x128xbf16, #tpu.memory_space<vmem>>, vector<1x1x8x128xbf16>
    %620 = vector.shape_cast %619 : vector<1x1x8x128xbf16> to vector<8x128xbf16>
    %621 = arith.extf %620 : vector<8x128xbf16> to vector<8x128xf32>
    %622 = arith.mulf %621, %618 : vector<8x128xf32>
    %623 = arith.addf %601, %622 : vector<8x128xf32>
    %c9_i32_443 = arith.constant 9 : i32
    %624 = tpu.dynamic_rotate %589 by %c9_i32_443 dim 1 : vector<8x128xf32>, i32 -> vector<8x128xf32>
    %c1_444 = arith.constant 1 : index
    %c6_445 = arith.constant 6 : index
    %c0_446 = arith.constant 0 : index
    %c0_447 = arith.constant 0 : index
    %625 = vector.load %arg4[%c1_444, %c6_445, %c0_446, %c0_447] : memref<2x25x8x128xbf16, #tpu.memory_space<vmem>>, vector<1x1x8x128xbf16>
    %626 = vector.shape_cast %625 : vector<1x1x8x128xbf16> to vector<8x128xbf16>
    %627 = arith.extf %626 : vector<8x128xbf16> to vector<8x128xf32>
    %628 = arith.mulf %627, %624 : vector<8x128xf32>
    %629 = arith.addf %606, %628 : vector<8x128xf32>
    %c8_i32_448 = arith.constant 8 : i32
    %630 = tpu.dynamic_rotate %589 by %c8_i32_448 dim 1 : vector<8x128xf32>, i32 -> vector<8x128xf32>
    %c1_449 = arith.constant 1 : index
    %c7_450 = arith.constant 7 : index
    %c0_451 = arith.constant 0 : index
    %c0_452 = arith.constant 0 : index
    %631 = vector.load %arg4[%c1_449, %c7_450, %c0_451, %c0_452] : memref<2x25x8x128xbf16, #tpu.memory_space<vmem>>, vector<1x1x8x128xbf16>
    %632 = vector.shape_cast %631 : vector<1x1x8x128xbf16> to vector<8x128xbf16>
    %633 = arith.extf %632 : vector<8x128xbf16> to vector<8x128xf32>
    %634 = arith.mulf %633, %630 : vector<8x128xf32>
    %635 = arith.addf %611, %634 : vector<8x128xf32>
    %c7_i32_453 = arith.constant 7 : i32
    %636 = tpu.dynamic_rotate %589 by %c7_i32_453 dim 1 : vector<8x128xf32>, i32 -> vector<8x128xf32>
    %c1_454 = arith.constant 1 : index
    %c8_455 = arith.constant 8 : index
    %c0_456 = arith.constant 0 : index
    %c0_457 = arith.constant 0 : index
    %637 = vector.load %arg4[%c1_454, %c8_455, %c0_456, %c0_457] : memref<2x25x8x128xbf16, #tpu.memory_space<vmem>>, vector<1x1x8x128xbf16>
    %638 = vector.shape_cast %637 : vector<1x1x8x128xbf16> to vector<8x128xbf16>
    %639 = arith.extf %638 : vector<8x128xbf16> to vector<8x128xf32>
    %640 = arith.mulf %639, %636 : vector<8x128xf32>
    %641 = arith.addf %617, %640 : vector<8x128xf32>
    %c6_i32_458 = arith.constant 6 : i32
    %642 = tpu.dynamic_rotate %589 by %c6_i32_458 dim 1 : vector<8x128xf32>, i32 -> vector<8x128xf32>
    %c1_459 = arith.constant 1 : index
    %c9_460 = arith.constant 9 : index
    %c0_461 = arith.constant 0 : index
    %c0_462 = arith.constant 0 : index
    %643 = vector.load %arg4[%c1_459, %c9_460, %c0_461, %c0_462] : memref<2x25x8x128xbf16, #tpu.memory_space<vmem>>, vector<1x1x8x128xbf16>
    %644 = vector.shape_cast %643 : vector<1x1x8x128xbf16> to vector<8x128xbf16>
    %645 = arith.extf %644 : vector<8x128xbf16> to vector<8x128xf32>
    %646 = arith.mulf %645, %642 : vector<8x128xf32>
    %647 = arith.addf %623, %646 : vector<8x128xf32>
    %c2_i32_463 = arith.constant 2 : i32
    %648 = tpu.dynamic_rotate %589 by %c2_i32_463 dim 1 : vector<8x128xf32>, i32 -> vector<8x128xf32>
    %c1_464 = arith.constant 1 : index
    %c10_465 = arith.constant 10 : index
    %c0_466 = arith.constant 0 : index
    %c0_467 = arith.constant 0 : index
    %649 = vector.load %arg4[%c1_464, %c10_465, %c0_466, %c0_467] : memref<2x25x8x128xbf16, #tpu.memory_space<vmem>>, vector<1x1x8x128xbf16>
    %650 = vector.shape_cast %649 : vector<1x1x8x128xbf16> to vector<8x128xbf16>
    %651 = arith.extf %650 : vector<8x128xbf16> to vector<8x128xf32>
    %652 = arith.mulf %651, %648 : vector<8x128xf32>
    %653 = arith.addf %629, %652 : vector<8x128xf32>
    %c1_i32_468 = arith.constant 1 : i32
    %654 = tpu.dynamic_rotate %589 by %c1_i32_468 dim 1 : vector<8x128xf32>, i32 -> vector<8x128xf32>
    %c1_469 = arith.constant 1 : index
    %c11_470 = arith.constant 11 : index
    %c0_471 = arith.constant 0 : index
    %c0_472 = arith.constant 0 : index
    %655 = vector.load %arg4[%c1_469, %c11_470, %c0_471, %c0_472] : memref<2x25x8x128xbf16, #tpu.memory_space<vmem>>, vector<1x1x8x128xbf16>
    %656 = vector.shape_cast %655 : vector<1x1x8x128xbf16> to vector<8x128xbf16>
    %657 = arith.extf %656 : vector<8x128xbf16> to vector<8x128xf32>
    %658 = arith.mulf %657, %654 : vector<8x128xf32>
    %659 = arith.addf %635, %658 : vector<8x128xf32>
    %c1_473 = arith.constant 1 : index
    %c12_474 = arith.constant 12 : index
    %c0_475 = arith.constant 0 : index
    %c0_476 = arith.constant 0 : index
    %660 = vector.load %arg4[%c1_473, %c12_474, %c0_475, %c0_476] : memref<2x25x8x128xbf16, #tpu.memory_space<vmem>>, vector<1x1x8x128xbf16>
    %661 = vector.shape_cast %660 : vector<1x1x8x128xbf16> to vector<8x128xbf16>
    %662 = arith.extf %661 : vector<8x128xbf16> to vector<8x128xf32>
    %663 = arith.mulf %662, %589 : vector<8x128xf32>
    %664 = arith.addf %641, %663 : vector<8x128xf32>
    %c127_i32_477 = arith.constant 127 : i32
    %665 = tpu.dynamic_rotate %589 by %c127_i32_477 dim 1 : vector<8x128xf32>, i32 -> vector<8x128xf32>
    %c1_478 = arith.constant 1 : index
    %c13_479 = arith.constant 13 : index
    %c0_480 = arith.constant 0 : index
    %c0_481 = arith.constant 0 : index
    %666 = vector.load %arg4[%c1_478, %c13_479, %c0_480, %c0_481] : memref<2x25x8x128xbf16, #tpu.memory_space<vmem>>, vector<1x1x8x128xbf16>
    %667 = vector.shape_cast %666 : vector<1x1x8x128xbf16> to vector<8x128xbf16>
    %668 = arith.extf %667 : vector<8x128xbf16> to vector<8x128xf32>
    %669 = arith.mulf %668, %665 : vector<8x128xf32>
    %670 = arith.addf %647, %669 : vector<8x128xf32>
    %c126_i32_482 = arith.constant 126 : i32
    %671 = tpu.dynamic_rotate %589 by %c126_i32_482 dim 1 : vector<8x128xf32>, i32 -> vector<8x128xf32>
    %c1_483 = arith.constant 1 : index
    %c14_484 = arith.constant 14 : index
    %c0_485 = arith.constant 0 : index
    %c0_486 = arith.constant 0 : index
    %672 = vector.load %arg4[%c1_483, %c14_484, %c0_485, %c0_486] : memref<2x25x8x128xbf16, #tpu.memory_space<vmem>>, vector<1x1x8x128xbf16>
    %673 = vector.shape_cast %672 : vector<1x1x8x128xbf16> to vector<8x128xbf16>
    %674 = arith.extf %673 : vector<8x128xbf16> to vector<8x128xf32>
    %675 = arith.mulf %674, %671 : vector<8x128xf32>
    %676 = arith.addf %653, %675 : vector<8x128xf32>
    %c122_i32_487 = arith.constant 122 : i32
    %677 = tpu.dynamic_rotate %589 by %c122_i32_487 dim 1 : vector<8x128xf32>, i32 -> vector<8x128xf32>
    %c1_488 = arith.constant 1 : index
    %c15_489 = arith.constant 15 : index
    %c0_490 = arith.constant 0 : index
    %c0_491 = arith.constant 0 : index
    %678 = vector.load %arg4[%c1_488, %c15_489, %c0_490, %c0_491] : memref<2x25x8x128xbf16, #tpu.memory_space<vmem>>, vector<1x1x8x128xbf16>
    %679 = vector.shape_cast %678 : vector<1x1x8x128xbf16> to vector<8x128xbf16>
    %680 = arith.extf %679 : vector<8x128xbf16> to vector<8x128xf32>
    %681 = arith.mulf %680, %677 : vector<8x128xf32>
    %682 = arith.addf %659, %681 : vector<8x128xf32>
    %c121_i32_492 = arith.constant 121 : i32
    %683 = tpu.dynamic_rotate %589 by %c121_i32_492 dim 1 : vector<8x128xf32>, i32 -> vector<8x128xf32>
    %c1_493 = arith.constant 1 : index
    %c16_494 = arith.constant 16 : index
    %c0_495 = arith.constant 0 : index
    %c0_496 = arith.constant 0 : index
    %684 = vector.load %arg4[%c1_493, %c16_494, %c0_495, %c0_496] : memref<2x25x8x128xbf16, #tpu.memory_space<vmem>>, vector<1x1x8x128xbf16>
    %685 = vector.shape_cast %684 : vector<1x1x8x128xbf16> to vector<8x128xbf16>
    %686 = arith.extf %685 : vector<8x128xbf16> to vector<8x128xf32>
    %687 = arith.mulf %686, %683 : vector<8x128xf32>
    %688 = arith.addf %664, %687 : vector<8x128xf32>
    %c120_i32_497 = arith.constant 120 : i32
    %689 = tpu.dynamic_rotate %589 by %c120_i32_497 dim 1 : vector<8x128xf32>, i32 -> vector<8x128xf32>
    %c1_498 = arith.constant 1 : index
    %c17_499 = arith.constant 17 : index
    %c0_500 = arith.constant 0 : index
    %c0_501 = arith.constant 0 : index
    %690 = vector.load %arg4[%c1_498, %c17_499, %c0_500, %c0_501] : memref<2x25x8x128xbf16, #tpu.memory_space<vmem>>, vector<1x1x8x128xbf16>
    %691 = vector.shape_cast %690 : vector<1x1x8x128xbf16> to vector<8x128xbf16>
    %692 = arith.extf %691 : vector<8x128xbf16> to vector<8x128xf32>
    %693 = arith.mulf %692, %689 : vector<8x128xf32>
    %694 = arith.addf %670, %693 : vector<8x128xf32>
    %c119_i32_502 = arith.constant 119 : i32
    %695 = tpu.dynamic_rotate %589 by %c119_i32_502 dim 1 : vector<8x128xf32>, i32 -> vector<8x128xf32>
    %c1_503 = arith.constant 1 : index
    %c18_504 = arith.constant 18 : index
    %c0_505 = arith.constant 0 : index
    %c0_506 = arith.constant 0 : index
    %696 = vector.load %arg4[%c1_503, %c18_504, %c0_505, %c0_506] : memref<2x25x8x128xbf16, #tpu.memory_space<vmem>>, vector<1x1x8x128xbf16>
    %697 = vector.shape_cast %696 : vector<1x1x8x128xbf16> to vector<8x128xbf16>
    %698 = arith.extf %697 : vector<8x128xbf16> to vector<8x128xf32>
    %699 = arith.mulf %698, %695 : vector<8x128xf32>
    %700 = arith.addf %676, %699 : vector<8x128xf32>
    %c118_i32_507 = arith.constant 118 : i32
    %701 = tpu.dynamic_rotate %589 by %c118_i32_507 dim 1 : vector<8x128xf32>, i32 -> vector<8x128xf32>
    %c1_508 = arith.constant 1 : index
    %c19_509 = arith.constant 19 : index
    %c0_510 = arith.constant 0 : index
    %c0_511 = arith.constant 0 : index
    %702 = vector.load %arg4[%c1_508, %c19_509, %c0_510, %c0_511] : memref<2x25x8x128xbf16, #tpu.memory_space<vmem>>, vector<1x1x8x128xbf16>
    %703 = vector.shape_cast %702 : vector<1x1x8x128xbf16> to vector<8x128xbf16>
    %704 = arith.extf %703 : vector<8x128xbf16> to vector<8x128xf32>
    %705 = arith.mulf %704, %701 : vector<8x128xf32>
    %706 = arith.addf %682, %705 : vector<8x128xf32>
    %c114_i32_512 = arith.constant 114 : i32
    %707 = tpu.dynamic_rotate %589 by %c114_i32_512 dim 1 : vector<8x128xf32>, i32 -> vector<8x128xf32>
    %c1_513 = arith.constant 1 : index
    %c20_514 = arith.constant 20 : index
    %c0_515 = arith.constant 0 : index
    %c0_516 = arith.constant 0 : index
    %708 = vector.load %arg4[%c1_513, %c20_514, %c0_515, %c0_516] : memref<2x25x8x128xbf16, #tpu.memory_space<vmem>>, vector<1x1x8x128xbf16>
    %709 = vector.shape_cast %708 : vector<1x1x8x128xbf16> to vector<8x128xbf16>
    %710 = arith.extf %709 : vector<8x128xbf16> to vector<8x128xf32>
    %711 = arith.mulf %710, %707 : vector<8x128xf32>
    %712 = arith.addf %688, %711 : vector<8x128xf32>
    %c113_i32_517 = arith.constant 113 : i32
    %713 = tpu.dynamic_rotate %589 by %c113_i32_517 dim 1 : vector<8x128xf32>, i32 -> vector<8x128xf32>
    %c1_518 = arith.constant 1 : index
    %c21_519 = arith.constant 21 : index
    %c0_520 = arith.constant 0 : index
    %c0_521 = arith.constant 0 : index
    %714 = vector.load %arg4[%c1_518, %c21_519, %c0_520, %c0_521] : memref<2x25x8x128xbf16, #tpu.memory_space<vmem>>, vector<1x1x8x128xbf16>
    %715 = vector.shape_cast %714 : vector<1x1x8x128xbf16> to vector<8x128xbf16>
    %716 = arith.extf %715 : vector<8x128xbf16> to vector<8x128xf32>
    %717 = arith.mulf %716, %713 : vector<8x128xf32>
    %718 = arith.addf %694, %717 : vector<8x128xf32>
    %c112_i32_522 = arith.constant 112 : i32
    %719 = tpu.dynamic_rotate %589 by %c112_i32_522 dim 1 : vector<8x128xf32>, i32 -> vector<8x128xf32>
    %c1_523 = arith.constant 1 : index
    %c22_524 = arith.constant 22 : index
    %c0_525 = arith.constant 0 : index
    %c0_526 = arith.constant 0 : index
    %720 = vector.load %arg4[%c1_523, %c22_524, %c0_525, %c0_526] : memref<2x25x8x128xbf16, #tpu.memory_space<vmem>>, vector<1x1x8x128xbf16>
    %721 = vector.shape_cast %720 : vector<1x1x8x128xbf16> to vector<8x128xbf16>
    %722 = arith.extf %721 : vector<8x128xbf16> to vector<8x128xf32>
    %723 = arith.mulf %722, %719 : vector<8x128xf32>
    %724 = arith.addf %700, %723 : vector<8x128xf32>
    %c111_i32_527 = arith.constant 111 : i32
    %725 = tpu.dynamic_rotate %589 by %c111_i32_527 dim 1 : vector<8x128xf32>, i32 -> vector<8x128xf32>
    %c1_528 = arith.constant 1 : index
    %c23_529 = arith.constant 23 : index
    %c0_530 = arith.constant 0 : index
    %c0_531 = arith.constant 0 : index
    %726 = vector.load %arg4[%c1_528, %c23_529, %c0_530, %c0_531] : memref<2x25x8x128xbf16, #tpu.memory_space<vmem>>, vector<1x1x8x128xbf16>
    %727 = vector.shape_cast %726 : vector<1x1x8x128xbf16> to vector<8x128xbf16>
    %728 = arith.extf %727 : vector<8x128xbf16> to vector<8x128xf32>
    %729 = arith.mulf %728, %725 : vector<8x128xf32>
    %730 = arith.addf %706, %729 : vector<8x128xf32>
    %c110_i32_532 = arith.constant 110 : i32
    %731 = tpu.dynamic_rotate %589 by %c110_i32_532 dim 1 : vector<8x128xf32>, i32 -> vector<8x128xf32>
    %c1_533 = arith.constant 1 : index
    %c24_534 = arith.constant 24 : index
    %c0_535 = arith.constant 0 : index
    %c0_536 = arith.constant 0 : index
    %732 = vector.load %arg4[%c1_533, %c24_534, %c0_535, %c0_536] : memref<2x25x8x128xbf16, #tpu.memory_space<vmem>>, vector<1x1x8x128xbf16>
    %733 = vector.shape_cast %732 : vector<1x1x8x128xbf16> to vector<8x128xbf16>
    %734 = arith.extf %733 : vector<8x128xbf16> to vector<8x128xf32>
    %735 = arith.mulf %734, %731 : vector<8x128xf32>
    %736 = arith.addf %712, %735 : vector<8x128xf32>
    %c1_537 = arith.constant 1 : index
    %c0_538 = arith.constant 0 : index
    %c0_539 = arith.constant 0 : index
    %737 = vector.load %arg5[%c1_537, %c0_538, %c0_539] : memref<2x8x1xf32, #tpu.memory_space<vmem>>, vector<1x8x1xf32>
    %738 = vector.shape_cast %737 : vector<1x8x1xf32> to vector<8x1xf32>
    %739 = arith.addf %736, %718 : vector<8x128xf32>
    %740 = arith.addf %724, %730 : vector<8x128xf32>
    %741 = arith.addf %739, %740 : vector<8x128xf32>
    %742 = vector.broadcast %738 : vector<8x1xf32> to vector<8x128xf32>
    %743 = arith.addf %742, %741 : vector<8x128xf32>
    %744 = arith.truncf %743 : vector<8x128xf32> to vector<8x128xbf16>
    %745 = arith.truncf %590 : vector<8x128xf32> to vector<8x128xbf16>
    %cst_540 = arith.constant dense<0.000000e+00> : vector<128x128xf32>
    %746 = tpu.matmul %744, %745, %cst_540 {dimension_numbers = #tpu.dot_dimension_numbers<[0], [0], [1], [1], [0, 1, 1, 1], [], []>} : vector<8x128xbf16>, vector<8x128xbf16>, vector<128x128xf32> -> vector<128x128xf32>
    %c1_541 = arith.constant 1 : index
    %c0_542 = arith.constant 0 : index
    %c0_543 = arith.constant 0 : index
    %747 = vector.load %arg6[%c1_541, %c0_542, %c0_543] : memref<2x128x128xbf16, #tpu.memory_space<vmem>>, vector<1x128x128xbf16>
    %748 = vector.shape_cast %747 : vector<1x128x128xbf16> to vector<128x128xbf16>
    %749 = arith.extf %748 : vector<128x128xbf16> to vector<128x128xf32>
    %750 = arith.addf %746, %749 : vector<128x128xf32>
    %cst_544 = arith.constant dense<0xFF800000> : vector<128xf32>
    %751 = vector.multi_reduction <maximumf>, %750, %cst_544 [1] : vector<128x128xf32> to vector<128xf32>
    %752 = vector.shape_cast %751 : vector<128xf32> to vector<128x1xf32>
    %753 = vector.broadcast %752 : vector<128x1xf32> to vector<128x128xf32>
    %754 = arith.subf %750, %753 : vector<128x128xf32>
    %755 = math.exp %754 : vector<128x128xf32>
    %cst_545 = arith.constant dense<0.000000e+00> : vector<128xf32>
    %756 = vector.multi_reduction <add>, %755, %cst_545 [1] : vector<128x128xf32> to vector<128xf32>
    %757 = vector.shape_cast %756 : vector<128xf32> to vector<128x1xf32>
    %758 = tpu.reciprocal %757 {approx = true} : vector<128x1xf32> -> vector<128x1xf32>
    %759 = vector.broadcast %758 : vector<128x1xf32> to vector<128x128xf32>
    %760 = arith.mulf %755, %759 : vector<128x128xf32>
    %761 = arith.truncf %591 : vector<32x128xf32> to vector<32x128xbf16>
    %762 = arith.truncf %760 : vector<128x128xf32> to vector<128x128xbf16>
    %cst_546 = arith.constant dense<0.000000e+00> : vector<32x128xf32>
    %763 = tpu.matmul %761, %762, %cst_546 {dimension_numbers = #tpu.dot_dimension_numbers<[1], [1], [0], [0], [0, 0, 1, 0], [], []>} : vector<32x128xbf16>, vector<128x128xbf16>, vector<32x128xf32> -> vector<32x128xf32>
    %c1_547 = arith.constant 1 : index
    %c0_548 = arith.constant 0 : index
    %c0_549 = arith.constant 0 : index
    %764 = vector.load %arg7[%c1_547, %c0_548, %c0_549] : memref<2x64x32xf32, #tpu.memory_space<vmem>>, vector<1x64x32xf32>
    %765 = vector.shape_cast %764 : vector<1x64x32xf32> to vector<64x32xf32>
    %cst_550 = arith.constant 0.000000e+00 : f32
    %766 = vector.broadcast %cst_550 : f32 to vector<32x128xf32>
    %767 = arith.maximumf %763, %766 : vector<32x128xf32>
    %cst_551 = arith.constant dense<0.000000e+00> : vector<64x128xf32>
    %768 = tpu.matmul %765, %767, %cst_551 {dimension_numbers = #tpu.dot_dimension_numbers<[1], [0], [0], [1], [0, 0, 1, 1], [], []>} : vector<64x32xf32>, vector<32x128xf32>, vector<64x128xf32> -> vector<64x128xf32>
    %769 = arith.addf %578, %768 : vector<64x128xf32>
    %c0_552 = arith.constant 0 : index
    %c0_553 = arith.constant 0 : index
    %770 = vector.load %arg8[%c0_552, %c0_553] : memref<64x1xf32, #tpu.memory_space<vmem>>, vector<64x1xf32>
    %771 = vector.broadcast %770 : vector<64x1xf32> to vector<64x128xf32>
    %772 = arith.addf %769, %771 : vector<64x128xf32>
    %c1_554 = arith.constant 1 : index
    %c0_555 = arith.constant 0 : index
    %c0_556 = arith.constant 0 : index
    %773 = vector.load %arg9[%c1_554, %c0_555, %c0_556] : memref<4x64x128xf32, #tpu.memory_space<vmem>>, vector<1x64x128xf32>
    %774 = vector.shape_cast %773 : vector<1x64x128xf32> to vector<64x128xf32>
    %775 = vector.shape_cast %772 : vector<64x128xf32> to vector<1x64x128xf32>
    tpu.vector_store %arg9[%c1_554, %c0_555, %c0_556], %775 {strides = array<i32>} : memref<4x64x128xf32, #tpu.memory_space<vmem>>, vector<1x64x128xf32>,
    %cst_557 = arith.constant 0.000000e+00 : f32
    %776 = vector.broadcast %cst_557 : f32 to vector<64x128xf32>
    %c2_558 = arith.constant 2 : index
    %c0_559 = arith.constant 0 : index
    %c0_560 = arith.constant 0 : index
    %777 = vector.load %arg1[%c2_558, %c0_559, %c0_560] : memref<4x64x128xf32, #tpu.memory_space<vmem>>, vector<1x32x128xf32>
    %778 = vector.shape_cast %777 : vector<1x32x128xf32> to vector<32x128xf32>
    %c0_561 = arith.constant 0 : index
    %c0_562 = arith.constant 0 : index
    %c0_563 = arith.constant 0 : index
    %779 = vector.load %arg2[%c0_561, %c0_562, %c0_563] : memref<2x48x32xf32, #tpu.memory_space<vmem>>, vector<1x48x32xf32>
    %780 = vector.shape_cast %779 : vector<1x48x32xf32> to vector<48x32xf32>
    %cst_564 = arith.constant dense<0.000000e+00> : vector<48x128xf32>
    %781 = tpu.matmul %780, %778, %cst_564 {dimension_numbers = #tpu.dot_dimension_numbers<[1], [0], [0], [1], [0, 0, 1, 1], [], []>} : vector<48x32xf32>, vector<32x128xf32>, vector<48x128xf32> -> vector<48x128xf32>
    %c0_565 = arith.constant 0 : index
    %c0_566 = arith.constant 0 : index
    %c0_567 = arith.constant 0 : index
    %782 = vector.load %arg3[%c0_565, %c0_566, %c0_567] : memref<2x48x1xf32, #tpu.memory_space<vmem>>, vector<1x48x1xf32>
    %783 = vector.shape_cast %782 : vector<1x48x1xf32> to vector<48x1xf32>
    %784 = vector.broadcast %783 : vector<48x1xf32> to vector<48x128xf32>
    %785 = arith.addf %781, %784 : vector<48x128xf32>
    %786 = vector.extract_strided_slice %785 {offsets = [0, 0], sizes = [8, 128], strides = [1, 1]} : vector<48x128xf32> to vector<8x128xf32>
    %787 = vector.extract_strided_slice %785 {offsets = [8, 0], sizes = [8, 128], strides = [1, 1]} : vector<48x128xf32> to vector<8x128xf32>
    %788 = vector.extract_strided_slice %785 {offsets = [16, 0], sizes = [32, 128], strides = [1, 1]} : vector<48x128xf32> to vector<32x128xf32>
    %c18_i32_568 = arith.constant 18 : i32
    %789 = tpu.dynamic_rotate %786 by %c18_i32_568 dim 1 : vector<8x128xf32>, i32 -> vector<8x128xf32>
    %c0_569 = arith.constant 0 : index
    %c0_570 = arith.constant 0 : index
    %c0_571 = arith.constant 0 : index
    %c0_572 = arith.constant 0 : index
    %790 = vector.load %arg4[%c0_569, %c0_570, %c0_571, %c0_572] : memref<2x25x8x128xbf16, #tpu.memory_space<vmem>>, vector<1x1x8x128xbf16>
    %791 = vector.shape_cast %790 : vector<1x1x8x128xbf16> to vector<8x128xbf16>
    %792 = arith.extf %791 : vector<8x128xbf16> to vector<8x128xf32>
    %793 = arith.mulf %792, %789 : vector<8x128xf32>
    %c17_i32_573 = arith.constant 17 : i32
    %794 = tpu.dynamic_rotate %786 by %c17_i32_573 dim 1 : vector<8x128xf32>, i32 -> vector<8x128xf32>
    %c0_574 = arith.constant 0 : index
    %c1_575 = arith.constant 1 : index
    %c0_576 = arith.constant 0 : index
    %c0_577 = arith.constant 0 : index
    %795 = vector.load %arg4[%c0_574, %c1_575, %c0_576, %c0_577] : memref<2x25x8x128xbf16, #tpu.memory_space<vmem>>, vector<1x1x8x128xbf16>
    %796 = vector.shape_cast %795 : vector<1x1x8x128xbf16> to vector<8x128xbf16>
    %797 = arith.extf %796 : vector<8x128xbf16> to vector<8x128xf32>
    %798 = arith.mulf %797, %794 : vector<8x128xf32>
    %c16_i32_578 = arith.constant 16 : i32
    %799 = tpu.dynamic_rotate %786 by %c16_i32_578 dim 1 : vector<8x128xf32>, i32 -> vector<8x128xf32>
    %c0_579 = arith.constant 0 : index
    %c2_580 = arith.constant 2 : index
    %c0_581 = arith.constant 0 : index
    %c0_582 = arith.constant 0 : index
    %800 = vector.load %arg4[%c0_579, %c2_580, %c0_581, %c0_582] : memref<2x25x8x128xbf16, #tpu.memory_space<vmem>>, vector<1x1x8x128xbf16>
    %801 = vector.shape_cast %800 : vector<1x1x8x128xbf16> to vector<8x128xbf16>
    %802 = arith.extf %801 : vector<8x128xbf16> to vector<8x128xf32>
    %803 = arith.mulf %802, %799 : vector<8x128xf32>
    %c15_i32_583 = arith.constant 15 : i32
    %804 = tpu.dynamic_rotate %786 by %c15_i32_583 dim 1 : vector<8x128xf32>, i32 -> vector<8x128xf32>
    %c0_584 = arith.constant 0 : index
    %c3_585 = arith.constant 3 : index
    %c0_586 = arith.constant 0 : index
    %c0_587 = arith.constant 0 : index
    %805 = vector.load %arg4[%c0_584, %c3_585, %c0_586, %c0_587] : memref<2x25x8x128xbf16, #tpu.memory_space<vmem>>, vector<1x1x8x128xbf16>
    %806 = vector.shape_cast %805 : vector<1x1x8x128xbf16> to vector<8x128xbf16>
    %807 = arith.extf %806 : vector<8x128xbf16> to vector<8x128xf32>
    %808 = arith.mulf %807, %804 : vector<8x128xf32>
    %c14_i32_588 = arith.constant 14 : i32
    %809 = tpu.dynamic_rotate %786 by %c14_i32_588 dim 1 : vector<8x128xf32>, i32 -> vector<8x128xf32>
    %c0_589 = arith.constant 0 : index
    %c4_590 = arith.constant 4 : index
    %c0_591 = arith.constant 0 : index
    %c0_592 = arith.constant 0 : index
    %810 = vector.load %arg4[%c0_589, %c4_590, %c0_591, %c0_592] : memref<2x25x8x128xbf16, #tpu.memory_space<vmem>>, vector<1x1x8x128xbf16>
    %811 = vector.shape_cast %810 : vector<1x1x8x128xbf16> to vector<8x128xbf16>
    %812 = arith.extf %811 : vector<8x128xbf16> to vector<8x128xf32>
    %813 = arith.mulf %812, %809 : vector<8x128xf32>
    %814 = arith.addf %793, %813 : vector<8x128xf32>
    %c10_i32_593 = arith.constant 10 : i32
    %815 = tpu.dynamic_rotate %786 by %c10_i32_593 dim 1 : vector<8x128xf32>, i32 -> vector<8x128xf32>
    %c0_594 = arith.constant 0 : index
    %c5_595 = arith.constant 5 : index
    %c0_596 = arith.constant 0 : index
    %c0_597 = arith.constant 0 : index
    %816 = vector.load %arg4[%c0_594, %c5_595, %c0_596, %c0_597] : memref<2x25x8x128xbf16, #tpu.memory_space<vmem>>, vector<1x1x8x128xbf16>
    %817 = vector.shape_cast %816 : vector<1x1x8x128xbf16> to vector<8x128xbf16>
    %818 = arith.extf %817 : vector<8x128xbf16> to vector<8x128xf32>
    %819 = arith.mulf %818, %815 : vector<8x128xf32>
    %820 = arith.addf %798, %819 : vector<8x128xf32>
    %c9_i32_598 = arith.constant 9 : i32
    %821 = tpu.dynamic_rotate %786 by %c9_i32_598 dim 1 : vector<8x128xf32>, i32 -> vector<8x128xf32>
    %c0_599 = arith.constant 0 : index
    %c6_600 = arith.constant 6 : index
    %c0_601 = arith.constant 0 : index
    %c0_602 = arith.constant 0 : index
    %822 = vector.load %arg4[%c0_599, %c6_600, %c0_601, %c0_602] : memref<2x25x8x128xbf16, #tpu.memory_space<vmem>>, vector<1x1x8x128xbf16>
    %823 = vector.shape_cast %822 : vector<1x1x8x128xbf16> to vector<8x128xbf16>
    %824 = arith.extf %823 : vector<8x128xbf16> to vector<8x128xf32>
    %825 = arith.mulf %824, %821 : vector<8x128xf32>
    %826 = arith.addf %803, %825 : vector<8x128xf32>
    %c8_i32_603 = arith.constant 8 : i32
    %827 = tpu.dynamic_rotate %786 by %c8_i32_603 dim 1 : vector<8x128xf32>, i32 -> vector<8x128xf32>
    %c0_604 = arith.constant 0 : index
    %c7_605 = arith.constant 7 : index
    %c0_606 = arith.constant 0 : index
    %c0_607 = arith.constant 0 : index
    %828 = vector.load %arg4[%c0_604, %c7_605, %c0_606, %c0_607] : memref<2x25x8x128xbf16, #tpu.memory_space<vmem>>, vector<1x1x8x128xbf16>
    %829 = vector.shape_cast %828 : vector<1x1x8x128xbf16> to vector<8x128xbf16>
    %830 = arith.extf %829 : vector<8x128xbf16> to vector<8x128xf32>
    %831 = arith.mulf %830, %827 : vector<8x128xf32>
    %832 = arith.addf %808, %831 : vector<8x128xf32>
    %c7_i32_608 = arith.constant 7 : i32
    %833 = tpu.dynamic_rotate %786 by %c7_i32_608 dim 1 : vector<8x128xf32>, i32 -> vector<8x128xf32>
    %c0_609 = arith.constant 0 : index
    %c8_610 = arith.constant 8 : index
    %c0_611 = arith.constant 0 : index
    %c0_612 = arith.constant 0 : index
    %834 = vector.load %arg4[%c0_609, %c8_610, %c0_611, %c0_612] : memref<2x25x8x128xbf16, #tpu.memory_space<vmem>>, vector<1x1x8x128xbf16>
    %835 = vector.shape_cast %834 : vector<1x1x8x128xbf16> to vector<8x128xbf16>
    %836 = arith.extf %835 : vector<8x128xbf16> to vector<8x128xf32>
    %837 = arith.mulf %836, %833 : vector<8x128xf32>
    %838 = arith.addf %814, %837 : vector<8x128xf32>
    %c6_i32_613 = arith.constant 6 : i32
    %839 = tpu.dynamic_rotate %786 by %c6_i32_613 dim 1 : vector<8x128xf32>, i32 -> vector<8x128xf32>
    %c0_614 = arith.constant 0 : index
    %c9_615 = arith.constant 9 : index
    %c0_616 = arith.constant 0 : index
    %c0_617 = arith.constant 0 : index
    %840 = vector.load %arg4[%c0_614, %c9_615, %c0_616, %c0_617] : memref<2x25x8x128xbf16, #tpu.memory_space<vmem>>, vector<1x1x8x128xbf16>
    %841 = vector.shape_cast %840 : vector<1x1x8x128xbf16> to vector<8x128xbf16>
    %842 = arith.extf %841 : vector<8x128xbf16> to vector<8x128xf32>
    %843 = arith.mulf %842, %839 : vector<8x128xf32>
    %844 = arith.addf %820, %843 : vector<8x128xf32>
    %c2_i32_618 = arith.constant 2 : i32
    %845 = tpu.dynamic_rotate %786 by %c2_i32_618 dim 1 : vector<8x128xf32>, i32 -> vector<8x128xf32>
    %c0_619 = arith.constant 0 : index
    %c10_620 = arith.constant 10 : index
    %c0_621 = arith.constant 0 : index
    %c0_622 = arith.constant 0 : index
    %846 = vector.load %arg4[%c0_619, %c10_620, %c0_621, %c0_622] : memref<2x25x8x128xbf16, #tpu.memory_space<vmem>>, vector<1x1x8x128xbf16>
    %847 = vector.shape_cast %846 : vector<1x1x8x128xbf16> to vector<8x128xbf16>
    %848 = arith.extf %847 : vector<8x128xbf16> to vector<8x128xf32>
    %849 = arith.mulf %848, %845 : vector<8x128xf32>
    %850 = arith.addf %826, %849 : vector<8x128xf32>
    %c1_i32_623 = arith.constant 1 : i32
    %851 = tpu.dynamic_rotate %786 by %c1_i32_623 dim 1 : vector<8x128xf32>, i32 -> vector<8x128xf32>
    %c0_624 = arith.constant 0 : index
    %c11_625 = arith.constant 11 : index
    %c0_626 = arith.constant 0 : index
    %c0_627 = arith.constant 0 : index
    %852 = vector.load %arg4[%c0_624, %c11_625, %c0_626, %c0_627] : memref<2x25x8x128xbf16, #tpu.memory_space<vmem>>, vector<1x1x8x128xbf16>
    %853 = vector.shape_cast %852 : vector<1x1x8x128xbf16> to vector<8x128xbf16>
    %854 = arith.extf %853 : vector<8x128xbf16> to vector<8x128xf32>
    %855 = arith.mulf %854, %851 : vector<8x128xf32>
    %856 = arith.addf %832, %855 : vector<8x128xf32>
    %c0_628 = arith.constant 0 : index
    %c12_629 = arith.constant 12 : index
    %c0_630 = arith.constant 0 : index
    %c0_631 = arith.constant 0 : index
    %857 = vector.load %arg4[%c0_628, %c12_629, %c0_630, %c0_631] : memref<2x25x8x128xbf16, #tpu.memory_space<vmem>>, vector<1x1x8x128xbf16>
    %858 = vector.shape_cast %857 : vector<1x1x8x128xbf16> to vector<8x128xbf16>
    %859 = arith.extf %858 : vector<8x128xbf16> to vector<8x128xf32>
    %860 = arith.mulf %859, %786 : vector<8x128xf32>
    %861 = arith.addf %838, %860 : vector<8x128xf32>
    %c127_i32_632 = arith.constant 127 : i32
    %862 = tpu.dynamic_rotate %786 by %c127_i32_632 dim 1 : vector<8x128xf32>, i32 -> vector<8x128xf32>
    %c0_633 = arith.constant 0 : index
    %c13_634 = arith.constant 13 : index
    %c0_635 = arith.constant 0 : index
    %c0_636 = arith.constant 0 : index
    %863 = vector.load %arg4[%c0_633, %c13_634, %c0_635, %c0_636] : memref<2x25x8x128xbf16, #tpu.memory_space<vmem>>, vector<1x1x8x128xbf16>
    %864 = vector.shape_cast %863 : vector<1x1x8x128xbf16> to vector<8x128xbf16>
    %865 = arith.extf %864 : vector<8x128xbf16> to vector<8x128xf32>
    %866 = arith.mulf %865, %862 : vector<8x128xf32>
    %867 = arith.addf %844, %866 : vector<8x128xf32>
    %c126_i32_637 = arith.constant 126 : i32
    %868 = tpu.dynamic_rotate %786 by %c126_i32_637 dim 1 : vector<8x128xf32>, i32 -> vector<8x128xf32>
    %c0_638 = arith.constant 0 : index
    %c14_639 = arith.constant 14 : index
    %c0_640 = arith.constant 0 : index
    %c0_641 = arith.constant 0 : index
    %869 = vector.load %arg4[%c0_638, %c14_639, %c0_640, %c0_641] : memref<2x25x8x128xbf16, #tpu.memory_space<vmem>>, vector<1x1x8x128xbf16>
    %870 = vector.shape_cast %869 : vector<1x1x8x128xbf16> to vector<8x128xbf16>
    %871 = arith.extf %870 : vector<8x128xbf16> to vector<8x128xf32>
    %872 = arith.mulf %871, %868 : vector<8x128xf32>
    %873 = arith.addf %850, %872 : vector<8x128xf32>
    %c122_i32_642 = arith.constant 122 : i32
    %874 = tpu.dynamic_rotate %786 by %c122_i32_642 dim 1 : vector<8x128xf32>, i32 -> vector<8x128xf32>
    %c0_643 = arith.constant 0 : index
    %c15_644 = arith.constant 15 : index
    %c0_645 = arith.constant 0 : index
    %c0_646 = arith.constant 0 : index
    %875 = vector.load %arg4[%c0_643, %c15_644, %c0_645, %c0_646] : memref<2x25x8x128xbf16, #tpu.memory_space<vmem>>, vector<1x1x8x128xbf16>
    %876 = vector.shape_cast %875 : vector<1x1x8x128xbf16> to vector<8x128xbf16>
    %877 = arith.extf %876 : vector<8x128xbf16> to vector<8x128xf32>
    %878 = arith.mulf %877, %874 : vector<8x128xf32>
    %879 = arith.addf %856, %878 : vector<8x128xf32>
    %c121_i32_647 = arith.constant 121 : i32
    %880 = tpu.dynamic_rotate %786 by %c121_i32_647 dim 1 : vector<8x128xf32>, i32 -> vector<8x128xf32>
    %c0_648 = arith.constant 0 : index
    %c16_649 = arith.constant 16 : index
    %c0_650 = arith.constant 0 : index
    %c0_651 = arith.constant 0 : index
    %881 = vector.load %arg4[%c0_648, %c16_649, %c0_650, %c0_651] : memref<2x25x8x128xbf16, #tpu.memory_space<vmem>>, vector<1x1x8x128xbf16>
    %882 = vector.shape_cast %881 : vector<1x1x8x128xbf16> to vector<8x128xbf16>
    %883 = arith.extf %882 : vector<8x128xbf16> to vector<8x128xf32>
    %884 = arith.mulf %883, %880 : vector<8x128xf32>
    %885 = arith.addf %861, %884 : vector<8x128xf32>
    %c120_i32_652 = arith.constant 120 : i32
    %886 = tpu.dynamic_rotate %786 by %c120_i32_652 dim 1 : vector<8x128xf32>, i32 -> vector<8x128xf32>
    %c0_653 = arith.constant 0 : index
    %c17_654 = arith.constant 17 : index
    %c0_655 = arith.constant 0 : index
    %c0_656 = arith.constant 0 : index
    %887 = vector.load %arg4[%c0_653, %c17_654, %c0_655, %c0_656] : memref<2x25x8x128xbf16, #tpu.memory_space<vmem>>, vector<1x1x8x128xbf16>
    %888 = vector.shape_cast %887 : vector<1x1x8x128xbf16> to vector<8x128xbf16>
    %889 = arith.extf %888 : vector<8x128xbf16> to vector<8x128xf32>
    %890 = arith.mulf %889, %886 : vector<8x128xf32>
    %891 = arith.addf %867, %890 : vector<8x128xf32>
    %c119_i32_657 = arith.constant 119 : i32
    %892 = tpu.dynamic_rotate %786 by %c119_i32_657 dim 1 : vector<8x128xf32>, i32 -> vector<8x128xf32>
    %c0_658 = arith.constant 0 : index
    %c18_659 = arith.constant 18 : index
    %c0_660 = arith.constant 0 : index
    %c0_661 = arith.constant 0 : index
    %893 = vector.load %arg4[%c0_658, %c18_659, %c0_660, %c0_661] : memref<2x25x8x128xbf16, #tpu.memory_space<vmem>>, vector<1x1x8x128xbf16>
    %894 = vector.shape_cast %893 : vector<1x1x8x128xbf16> to vector<8x128xbf16>
    %895 = arith.extf %894 : vector<8x128xbf16> to vector<8x128xf32>
    %896 = arith.mulf %895, %892 : vector<8x128xf32>
    %897 = arith.addf %873, %896 : vector<8x128xf32>
    %c118_i32_662 = arith.constant 118 : i32
    %898 = tpu.dynamic_rotate %786 by %c118_i32_662 dim 1 : vector<8x128xf32>, i32 -> vector<8x128xf32>
    %c0_663 = arith.constant 0 : index
    %c19_664 = arith.constant 19 : index
    %c0_665 = arith.constant 0 : index
    %c0_666 = arith.constant 0 : index
    %899 = vector.load %arg4[%c0_663, %c19_664, %c0_665, %c0_666] : memref<2x25x8x128xbf16, #tpu.memory_space<vmem>>, vector<1x1x8x128xbf16>
    %900 = vector.shape_cast %899 : vector<1x1x8x128xbf16> to vector<8x128xbf16>
    %901 = arith.extf %900 : vector<8x128xbf16> to vector<8x128xf32>
    %902 = arith.mulf %901, %898 : vector<8x128xf32>
    %903 = arith.addf %879, %902 : vector<8x128xf32>
    %c114_i32_667 = arith.constant 114 : i32
    %904 = tpu.dynamic_rotate %786 by %c114_i32_667 dim 1 : vector<8x128xf32>, i32 -> vector<8x128xf32>
    %c0_668 = arith.constant 0 : index
    %c20_669 = arith.constant 20 : index
    %c0_670 = arith.constant 0 : index
    %c0_671 = arith.constant 0 : index
    %905 = vector.load %arg4[%c0_668, %c20_669, %c0_670, %c0_671] : memref<2x25x8x128xbf16, #tpu.memory_space<vmem>>, vector<1x1x8x128xbf16>
    %906 = vector.shape_cast %905 : vector<1x1x8x128xbf16> to vector<8x128xbf16>
    %907 = arith.extf %906 : vector<8x128xbf16> to vector<8x128xf32>
    %908 = arith.mulf %907, %904 : vector<8x128xf32>
    %909 = arith.addf %885, %908 : vector<8x128xf32>
    %c113_i32_672 = arith.constant 113 : i32
    %910 = tpu.dynamic_rotate %786 by %c113_i32_672 dim 1 : vector<8x128xf32>, i32 -> vector<8x128xf32>
    %c0_673 = arith.constant 0 : index
    %c21_674 = arith.constant 21 : index
    %c0_675 = arith.constant 0 : index
    %c0_676 = arith.constant 0 : index
    %911 = vector.load %arg4[%c0_673, %c21_674, %c0_675, %c0_676] : memref<2x25x8x128xbf16, #tpu.memory_space<vmem>>, vector<1x1x8x128xbf16>
    %912 = vector.shape_cast %911 : vector<1x1x8x128xbf16> to vector<8x128xbf16>
    %913 = arith.extf %912 : vector<8x128xbf16> to vector<8x128xf32>
    %914 = arith.mulf %913, %910 : vector<8x128xf32>
    %915 = arith.addf %891, %914 : vector<8x128xf32>
    %c112_i32_677 = arith.constant 112 : i32
    %916 = tpu.dynamic_rotate %786 by %c112_i32_677 dim 1 : vector<8x128xf32>, i32 -> vector<8x128xf32>
    %c0_678 = arith.constant 0 : index
    %c22_679 = arith.constant 22 : index
    %c0_680 = arith.constant 0 : index
    %c0_681 = arith.constant 0 : index
    %917 = vector.load %arg4[%c0_678, %c22_679, %c0_680, %c0_681] : memref<2x25x8x128xbf16, #tpu.memory_space<vmem>>, vector<1x1x8x128xbf16>
    %918 = vector.shape_cast %917 : vector<1x1x8x128xbf16> to vector<8x128xbf16>
    %919 = arith.extf %918 : vector<8x128xbf16> to vector<8x128xf32>
    %920 = arith.mulf %919, %916 : vector<8x128xf32>
    %921 = arith.addf %897, %920 : vector<8x128xf32>
    %c111_i32_682 = arith.constant 111 : i32
    %922 = tpu.dynamic_rotate %786 by %c111_i32_682 dim 1 : vector<8x128xf32>, i32 -> vector<8x128xf32>
    %c0_683 = arith.constant 0 : index
    %c23_684 = arith.constant 23 : index
    %c0_685 = arith.constant 0 : index
    %c0_686 = arith.constant 0 : index
    %923 = vector.load %arg4[%c0_683, %c23_684, %c0_685, %c0_686] : memref<2x25x8x128xbf16, #tpu.memory_space<vmem>>, vector<1x1x8x128xbf16>
    %924 = vector.shape_cast %923 : vector<1x1x8x128xbf16> to vector<8x128xbf16>
    %925 = arith.extf %924 : vector<8x128xbf16> to vector<8x128xf32>
    %926 = arith.mulf %925, %922 : vector<8x128xf32>
    %927 = arith.addf %903, %926 : vector<8x128xf32>
    %c110_i32_687 = arith.constant 110 : i32
    %928 = tpu.dynamic_rotate %786 by %c110_i32_687 dim 1 : vector<8x128xf32>, i32 -> vector<8x128xf32>
    %c0_688 = arith.constant 0 : index
    %c24_689 = arith.constant 24 : index
    %c0_690 = arith.constant 0 : index
    %c0_691 = arith.constant 0 : index
    %929 = vector.load %arg4[%c0_688, %c24_689, %c0_690, %c0_691] : memref<2x25x8x128xbf16, #tpu.memory_space<vmem>>, vector<1x1x8x128xbf16>
    %930 = vector.shape_cast %929 : vector<1x1x8x128xbf16> to vector<8x128xbf16>
    %931 = arith.extf %930 : vector<8x128xbf16> to vector<8x128xf32>
    %932 = arith.mulf %931, %928 : vector<8x128xf32>
    %933 = arith.addf %909, %932 : vector<8x128xf32>
    %c0_692 = arith.constant 0 : index
    %c0_693 = arith.constant 0 : index
    %c0_694 = arith.constant 0 : index
    %934 = vector.load %arg5[%c0_692, %c0_693, %c0_694] : memref<2x8x1xf32, #tpu.memory_space<vmem>>, vector<1x8x1xf32>
    %935 = vector.shape_cast %934 : vector<1x8x1xf32> to vector<8x1xf32>
    %936 = arith.addf %933, %915 : vector<8x128xf32>
    %937 = arith.addf %921, %927 : vector<8x128xf32>
    %938 = arith.addf %936, %937 : vector<8x128xf32>
    %939 = vector.broadcast %935 : vector<8x1xf32> to vector<8x128xf32>
    %940 = arith.addf %939, %938 : vector<8x128xf32>
    %941 = arith.truncf %940 : vector<8x128xf32> to vector<8x128xbf16>
    %942 = arith.truncf %787 : vector<8x128xf32> to vector<8x128xbf16>
    %cst_695 = arith.constant dense<0.000000e+00> : vector<128x128xf32>
    %943 = tpu.matmul %941, %942, %cst_695 {dimension_numbers = #tpu.dot_dimension_numbers<[0], [0], [1], [1], [0, 1, 1, 1], [], []>} : vector<8x128xbf16>, vector<8x128xbf16>, vector<128x128xf32> -> vector<128x128xf32>
    %c0_696 = arith.constant 0 : index
    %c0_697 = arith.constant 0 : index
    %c0_698 = arith.constant 0 : index
    %944 = vector.load %arg6[%c0_696, %c0_697, %c0_698] : memref<2x128x128xbf16, #tpu.memory_space<vmem>>, vector<1x128x128xbf16>
    %945 = vector.shape_cast %944 : vector<1x128x128xbf16> to vector<128x128xbf16>
    %946 = arith.extf %945 : vector<128x128xbf16> to vector<128x128xf32>
    %947 = arith.addf %943, %946 : vector<128x128xf32>
    %cst_699 = arith.constant dense<0xFF800000> : vector<128xf32>
    %948 = vector.multi_reduction <maximumf>, %947, %cst_699 [1] : vector<128x128xf32> to vector<128xf32>
    %949 = vector.shape_cast %948 : vector<128xf32> to vector<128x1xf32>
    %950 = vector.broadcast %949 : vector<128x1xf32> to vector<128x128xf32>
    %951 = arith.subf %947, %950 : vector<128x128xf32>
    %952 = math.exp %951 : vector<128x128xf32>
    %cst_700 = arith.constant dense<0.000000e+00> : vector<128xf32>
    %953 = vector.multi_reduction <add>, %952, %cst_700 [1] : vector<128x128xf32> to vector<128xf32>
    %954 = vector.shape_cast %953 : vector<128xf32> to vector<128x1xf32>
    %955 = tpu.reciprocal %954 {approx = true} : vector<128x1xf32> -> vector<128x1xf32>
    %956 = vector.broadcast %955 : vector<128x1xf32> to vector<128x128xf32>
    %957 = arith.mulf %952, %956 : vector<128x128xf32>
    %958 = arith.truncf %788 : vector<32x128xf32> to vector<32x128xbf16>
    %959 = arith.truncf %957 : vector<128x128xf32> to vector<128x128xbf16>
    %cst_701 = arith.constant dense<0.000000e+00> : vector<32x128xf32>
    %960 = tpu.matmul %958, %959, %cst_701 {dimension_numbers = #tpu.dot_dimension_numbers<[1], [1], [0], [0], [0, 0, 1, 0], [], []>} : vector<32x128xbf16>, vector<128x128xbf16>, vector<32x128xf32> -> vector<32x128xf32>
    %c0_702 = arith.constant 0 : index
    %c0_703 = arith.constant 0 : index
    %c0_704 = arith.constant 0 : index
    %961 = vector.load %arg7[%c0_702, %c0_703, %c0_704] : memref<2x64x32xf32, #tpu.memory_space<vmem>>, vector<1x64x32xf32>
    %962 = vector.shape_cast %961 : vector<1x64x32xf32> to vector<64x32xf32>
    %cst_705 = arith.constant 0.000000e+00 : f32
    %963 = vector.broadcast %cst_705 : f32 to vector<32x128xf32>
    %964 = arith.maximumf %960, %963 : vector<32x128xf32>
    %cst_706 = arith.constant dense<0.000000e+00> : vector<64x128xf32>
    %965 = tpu.matmul %962, %964, %cst_706 {dimension_numbers = #tpu.dot_dimension_numbers<[1], [0], [0], [1], [0, 0, 1, 1], [], []>} : vector<64x32xf32>, vector<32x128xf32>, vector<64x128xf32> -> vector<64x128xf32>
    %966 = arith.addf %776, %965 : vector<64x128xf32>
    %c2_707 = arith.constant 2 : index
    %c32_708 = arith.constant 32 : index
    %c0_709 = arith.constant 0 : index
    %967 = vector.load %arg1[%c2_707, %c32_708, %c0_709] : memref<4x64x128xf32, #tpu.memory_space<vmem>>, vector<1x32x128xf32>
    %968 = vector.shape_cast %967 : vector<1x32x128xf32> to vector<32x128xf32>
    %969 = arith.addf %960, %968 : vector<32x128xf32>
    %c1_710 = arith.constant 1 : index
    %c0_711 = arith.constant 0 : index
    %c0_712 = arith.constant 0 : index
    %970 = vector.load %arg2[%c1_710, %c0_711, %c0_712] : memref<2x48x32xf32, #tpu.memory_space<vmem>>, vector<1x48x32xf32>
    %971 = vector.shape_cast %970 : vector<1x48x32xf32> to vector<48x32xf32>
    %cst_713 = arith.constant dense<0.000000e+00> : vector<48x128xf32>
    %972 = tpu.matmul %971, %969, %cst_713 {dimension_numbers = #tpu.dot_dimension_numbers<[1], [0], [0], [1], [0, 0, 1, 1], [], []>} : vector<48x32xf32>, vector<32x128xf32>, vector<48x128xf32> -> vector<48x128xf32>
    %c1_714 = arith.constant 1 : index
    %c0_715 = arith.constant 0 : index
    %c0_716 = arith.constant 0 : index
    %973 = vector.load %arg3[%c1_714, %c0_715, %c0_716] : memref<2x48x1xf32, #tpu.memory_space<vmem>>, vector<1x48x1xf32>
    %974 = vector.shape_cast %973 : vector<1x48x1xf32> to vector<48x1xf32>
    %975 = vector.broadcast %974 : vector<48x1xf32> to vector<48x128xf32>
    %976 = arith.addf %972, %975 : vector<48x128xf32>
    %977 = vector.extract_strided_slice %976 {offsets = [0, 0], sizes = [8, 128], strides = [1, 1]} : vector<48x128xf32> to vector<8x128xf32>
    %978 = vector.extract_strided_slice %976 {offsets = [8, 0], sizes = [8, 128], strides = [1, 1]} : vector<48x128xf32> to vector<8x128xf32>
    %979 = vector.extract_strided_slice %976 {offsets = [16, 0], sizes = [32, 128], strides = [1, 1]} : vector<48x128xf32> to vector<32x128xf32>
    %c18_i32_717 = arith.constant 18 : i32
    %980 = tpu.dynamic_rotate %977 by %c18_i32_717 dim 1 : vector<8x128xf32>, i32 -> vector<8x128xf32>
    %c1_718 = arith.constant 1 : index
    %c0_719 = arith.constant 0 : index
    %c0_720 = arith.constant 0 : index
    %c0_721 = arith.constant 0 : index
    %981 = vector.load %arg4[%c1_718, %c0_719, %c0_720, %c0_721] : memref<2x25x8x128xbf16, #tpu.memory_space<vmem>>, vector<1x1x8x128xbf16>
    %982 = vector.shape_cast %981 : vector<1x1x8x128xbf16> to vector<8x128xbf16>
    %983 = arith.extf %982 : vector<8x128xbf16> to vector<8x128xf32>
    %984 = arith.mulf %983, %980 : vector<8x128xf32>
    %c17_i32_722 = arith.constant 17 : i32
    %985 = tpu.dynamic_rotate %977 by %c17_i32_722 dim 1 : vector<8x128xf32>, i32 -> vector<8x128xf32>
    %c1_723 = arith.constant 1 : index
    %c1_724 = arith.constant 1 : index
    %c0_725 = arith.constant 0 : index
    %c0_726 = arith.constant 0 : index
    %986 = vector.load %arg4[%c1_723, %c1_724, %c0_725, %c0_726] : memref<2x25x8x128xbf16, #tpu.memory_space<vmem>>, vector<1x1x8x128xbf16>
    %987 = vector.shape_cast %986 : vector<1x1x8x128xbf16> to vector<8x128xbf16>
    %988 = arith.extf %987 : vector<8x128xbf16> to vector<8x128xf32>
    %989 = arith.mulf %988, %985 : vector<8x128xf32>
    %c16_i32_727 = arith.constant 16 : i32
    %990 = tpu.dynamic_rotate %977 by %c16_i32_727 dim 1 : vector<8x128xf32>, i32 -> vector<8x128xf32>
    %c1_728 = arith.constant 1 : index
    %c2_729 = arith.constant 2 : index
    %c0_730 = arith.constant 0 : index
    %c0_731 = arith.constant 0 : index
    %991 = vector.load %arg4[%c1_728, %c2_729, %c0_730, %c0_731] : memref<2x25x8x128xbf16, #tpu.memory_space<vmem>>, vector<1x1x8x128xbf16>
    %992 = vector.shape_cast %991 : vector<1x1x8x128xbf16> to vector<8x128xbf16>
    %993 = arith.extf %992 : vector<8x128xbf16> to vector<8x128xf32>
    %994 = arith.mulf %993, %990 : vector<8x128xf32>
    %c15_i32_732 = arith.constant 15 : i32
    %995 = tpu.dynamic_rotate %977 by %c15_i32_732 dim 1 : vector<8x128xf32>, i32 -> vector<8x128xf32>
    %c1_733 = arith.constant 1 : index
    %c3_734 = arith.constant 3 : index
    %c0_735 = arith.constant 0 : index
    %c0_736 = arith.constant 0 : index
    %996 = vector.load %arg4[%c1_733, %c3_734, %c0_735, %c0_736] : memref<2x25x8x128xbf16, #tpu.memory_space<vmem>>, vector<1x1x8x128xbf16>
    %997 = vector.shape_cast %996 : vector<1x1x8x128xbf16> to vector<8x128xbf16>
    %998 = arith.extf %997 : vector<8x128xbf16> to vector<8x128xf32>
    %999 = arith.mulf %998, %995 : vector<8x128xf32>
    %c14_i32_737 = arith.constant 14 : i32
    %1000 = tpu.dynamic_rotate %977 by %c14_i32_737 dim 1 : vector<8x128xf32>, i32 -> vector<8x128xf32>
    %c1_738 = arith.constant 1 : index
    %c4_739 = arith.constant 4 : index
    %c0_740 = arith.constant 0 : index
    %c0_741 = arith.constant 0 : index
    %1001 = vector.load %arg4[%c1_738, %c4_739, %c0_740, %c0_741] : memref<2x25x8x128xbf16, #tpu.memory_space<vmem>>, vector<1x1x8x128xbf16>
    %1002 = vector.shape_cast %1001 : vector<1x1x8x128xbf16> to vector<8x128xbf16>
    %1003 = arith.extf %1002 : vector<8x128xbf16> to vector<8x128xf32>
    %1004 = arith.mulf %1003, %1000 : vector<8x128xf32>
    %1005 = arith.addf %984, %1004 : vector<8x128xf32>
    %c10_i32_742 = arith.constant 10 : i32
    %1006 = tpu.dynamic_rotate %977 by %c10_i32_742 dim 1 : vector<8x128xf32>, i32 -> vector<8x128xf32>
    %c1_743 = arith.constant 1 : index
    %c5_744 = arith.constant 5 : index
    %c0_745 = arith.constant 0 : index
    %c0_746 = arith.constant 0 : index
    %1007 = vector.load %arg4[%c1_743, %c5_744, %c0_745, %c0_746] : memref<2x25x8x128xbf16, #tpu.memory_space<vmem>>, vector<1x1x8x128xbf16>
    %1008 = vector.shape_cast %1007 : vector<1x1x8x128xbf16> to vector<8x128xbf16>
    %1009 = arith.extf %1008 : vector<8x128xbf16> to vector<8x128xf32>
    %1010 = arith.mulf %1009, %1006 : vector<8x128xf32>
    %1011 = arith.addf %989, %1010 : vector<8x128xf32>
    %c9_i32_747 = arith.constant 9 : i32
    %1012 = tpu.dynamic_rotate %977 by %c9_i32_747 dim 1 : vector<8x128xf32>, i32 -> vector<8x128xf32>
    %c1_748 = arith.constant 1 : index
    %c6_749 = arith.constant 6 : index
    %c0_750 = arith.constant 0 : index
    %c0_751 = arith.constant 0 : index
    %1013 = vector.load %arg4[%c1_748, %c6_749, %c0_750, %c0_751] : memref<2x25x8x128xbf16, #tpu.memory_space<vmem>>, vector<1x1x8x128xbf16>
    %1014 = vector.shape_cast %1013 : vector<1x1x8x128xbf16> to vector<8x128xbf16>
    %1015 = arith.extf %1014 : vector<8x128xbf16> to vector<8x128xf32>
    %1016 = arith.mulf %1015, %1012 : vector<8x128xf32>
    %1017 = arith.addf %994, %1016 : vector<8x128xf32>
    %c8_i32_752 = arith.constant 8 : i32
    %1018 = tpu.dynamic_rotate %977 by %c8_i32_752 dim 1 : vector<8x128xf32>, i32 -> vector<8x128xf32>
    %c1_753 = arith.constant 1 : index
    %c7_754 = arith.constant 7 : index
    %c0_755 = arith.constant 0 : index
    %c0_756 = arith.constant 0 : index
    %1019 = vector.load %arg4[%c1_753, %c7_754, %c0_755, %c0_756] : memref<2x25x8x128xbf16, #tpu.memory_space<vmem>>, vector<1x1x8x128xbf16>
    %1020 = vector.shape_cast %1019 : vector<1x1x8x128xbf16> to vector<8x128xbf16>
    %1021 = arith.extf %1020 : vector<8x128xbf16> to vector<8x128xf32>
    %1022 = arith.mulf %1021, %1018 : vector<8x128xf32>
    %1023 = arith.addf %999, %1022 : vector<8x128xf32>
    %c7_i32_757 = arith.constant 7 : i32
    %1024 = tpu.dynamic_rotate %977 by %c7_i32_757 dim 1 : vector<8x128xf32>, i32 -> vector<8x128xf32>
    %c1_758 = arith.constant 1 : index
    %c8_759 = arith.constant 8 : index
    %c0_760 = arith.constant 0 : index
    %c0_761 = arith.constant 0 : index
    %1025 = vector.load %arg4[%c1_758, %c8_759, %c0_760, %c0_761] : memref<2x25x8x128xbf16, #tpu.memory_space<vmem>>, vector<1x1x8x128xbf16>
    %1026 = vector.shape_cast %1025 : vector<1x1x8x128xbf16> to vector<8x128xbf16>
    %1027 = arith.extf %1026 : vector<8x128xbf16> to vector<8x128xf32>
    %1028 = arith.mulf %1027, %1024 : vector<8x128xf32>
    %1029 = arith.addf %1005, %1028 : vector<8x128xf32>
    %c6_i32_762 = arith.constant 6 : i32
    %1030 = tpu.dynamic_rotate %977 by %c6_i32_762 dim 1 : vector<8x128xf32>, i32 -> vector<8x128xf32>
    %c1_763 = arith.constant 1 : index
    %c9_764 = arith.constant 9 : index
    %c0_765 = arith.constant 0 : index
    %c0_766 = arith.constant 0 : index
    %1031 = vector.load %arg4[%c1_763, %c9_764, %c0_765, %c0_766] : memref<2x25x8x128xbf16, #tpu.memory_space<vmem>>, vector<1x1x8x128xbf16>
    %1032 = vector.shape_cast %1031 : vector<1x1x8x128xbf16> to vector<8x128xbf16>
    %1033 = arith.extf %1032 : vector<8x128xbf16> to vector<8x128xf32>
    %1034 = arith.mulf %1033, %1030 : vector<8x128xf32>
    %1035 = arith.addf %1011, %1034 : vector<8x128xf32>
    %c2_i32_767 = arith.constant 2 : i32
    %1036 = tpu.dynamic_rotate %977 by %c2_i32_767 dim 1 : vector<8x128xf32>, i32 -> vector<8x128xf32>
    %c1_768 = arith.constant 1 : index
    %c10_769 = arith.constant 10 : index
    %c0_770 = arith.constant 0 : index
    %c0_771 = arith.constant 0 : index
    %1037 = vector.load %arg4[%c1_768, %c10_769, %c0_770, %c0_771] : memref<2x25x8x128xbf16, #tpu.memory_space<vmem>>, vector<1x1x8x128xbf16>
    %1038 = vector.shape_cast %1037 : vector<1x1x8x128xbf16> to vector<8x128xbf16>
    %1039 = arith.extf %1038 : vector<8x128xbf16> to vector<8x128xf32>
    %1040 = arith.mulf %1039, %1036 : vector<8x128xf32>
    %1041 = arith.addf %1017, %1040 : vector<8x128xf32>
    %c1_i32_772 = arith.constant 1 : i32
    %1042 = tpu.dynamic_rotate %977 by %c1_i32_772 dim 1 : vector<8x128xf32>, i32 -> vector<8x128xf32>
    %c1_773 = arith.constant 1 : index
    %c11_774 = arith.constant 11 : index
    %c0_775 = arith.constant 0 : index
    %c0_776 = arith.constant 0 : index
    %1043 = vector.load %arg4[%c1_773, %c11_774, %c0_775, %c0_776] : memref<2x25x8x128xbf16, #tpu.memory_space<vmem>>, vector<1x1x8x128xbf16>
    %1044 = vector.shape_cast %1043 : vector<1x1x8x128xbf16> to vector<8x128xbf16>
    %1045 = arith.extf %1044 : vector<8x128xbf16> to vector<8x128xf32>
    %1046 = arith.mulf %1045, %1042 : vector<8x128xf32>
    %1047 = arith.addf %1023, %1046 : vector<8x128xf32>
    %c1_777 = arith.constant 1 : index
    %c12_778 = arith.constant 12 : index
    %c0_779 = arith.constant 0 : index
    %c0_780 = arith.constant 0 : index
    %1048 = vector.load %arg4[%c1_777, %c12_778, %c0_779, %c0_780] : memref<2x25x8x128xbf16, #tpu.memory_space<vmem>>, vector<1x1x8x128xbf16>
    %1049 = vector.shape_cast %1048 : vector<1x1x8x128xbf16> to vector<8x128xbf16>
    %1050 = arith.extf %1049 : vector<8x128xbf16> to vector<8x128xf32>
    %1051 = arith.mulf %1050, %977 : vector<8x128xf32>
    %1052 = arith.addf %1029, %1051 : vector<8x128xf32>
    %c127_i32_781 = arith.constant 127 : i32
    %1053 = tpu.dynamic_rotate %977 by %c127_i32_781 dim 1 : vector<8x128xf32>, i32 -> vector<8x128xf32>
    %c1_782 = arith.constant 1 : index
    %c13_783 = arith.constant 13 : index
    %c0_784 = arith.constant 0 : index
    %c0_785 = arith.constant 0 : index
    %1054 = vector.load %arg4[%c1_782, %c13_783, %c0_784, %c0_785] : memref<2x25x8x128xbf16, #tpu.memory_space<vmem>>, vector<1x1x8x128xbf16>
    %1055 = vector.shape_cast %1054 : vector<1x1x8x128xbf16> to vector<8x128xbf16>
    %1056 = arith.extf %1055 : vector<8x128xbf16> to vector<8x128xf32>
    %1057 = arith.mulf %1056, %1053 : vector<8x128xf32>
    %1058 = arith.addf %1035, %1057 : vector<8x128xf32>
    %c126_i32_786 = arith.constant 126 : i32
    %1059 = tpu.dynamic_rotate %977 by %c126_i32_786 dim 1 : vector<8x128xf32>, i32 -> vector<8x128xf32>
    %c1_787 = arith.constant 1 : index
    %c14_788 = arith.constant 14 : index
    %c0_789 = arith.constant 0 : index
    %c0_790 = arith.constant 0 : index
    %1060 = vector.load %arg4[%c1_787, %c14_788, %c0_789, %c0_790] : memref<2x25x8x128xbf16, #tpu.memory_space<vmem>>, vector<1x1x8x128xbf16>
    %1061 = vector.shape_cast %1060 : vector<1x1x8x128xbf16> to vector<8x128xbf16>
    %1062 = arith.extf %1061 : vector<8x128xbf16> to vector<8x128xf32>
    %1063 = arith.mulf %1062, %1059 : vector<8x128xf32>
    %1064 = arith.addf %1041, %1063 : vector<8x128xf32>
    %c122_i32_791 = arith.constant 122 : i32
    %1065 = tpu.dynamic_rotate %977 by %c122_i32_791 dim 1 : vector<8x128xf32>, i32 -> vector<8x128xf32>
    %c1_792 = arith.constant 1 : index
    %c15_793 = arith.constant 15 : index
    %c0_794 = arith.constant 0 : index
    %c0_795 = arith.constant 0 : index
    %1066 = vector.load %arg4[%c1_792, %c15_793, %c0_794, %c0_795] : memref<2x25x8x128xbf16, #tpu.memory_space<vmem>>, vector<1x1x8x128xbf16>
    %1067 = vector.shape_cast %1066 : vector<1x1x8x128xbf16> to vector<8x128xbf16>
    %1068 = arith.extf %1067 : vector<8x128xbf16> to vector<8x128xf32>
    %1069 = arith.mulf %1068, %1065 : vector<8x128xf32>
    %1070 = arith.addf %1047, %1069 : vector<8x128xf32>
    %c121_i32_796 = arith.constant 121 : i32
    %1071 = tpu.dynamic_rotate %977 by %c121_i32_796 dim 1 : vector<8x128xf32>, i32 -> vector<8x128xf32>
    %c1_797 = arith.constant 1 : index
    %c16_798 = arith.constant 16 : index
    %c0_799 = arith.constant 0 : index
    %c0_800 = arith.constant 0 : index
    %1072 = vector.load %arg4[%c1_797, %c16_798, %c0_799, %c0_800] : memref<2x25x8x128xbf16, #tpu.memory_space<vmem>>, vector<1x1x8x128xbf16>
    %1073 = vector.shape_cast %1072 : vector<1x1x8x128xbf16> to vector<8x128xbf16>
    %1074 = arith.extf %1073 : vector<8x128xbf16> to vector<8x128xf32>
    %1075 = arith.mulf %1074, %1071 : vector<8x128xf32>
    %1076 = arith.addf %1052, %1075 : vector<8x128xf32>
    %c120_i32_801 = arith.constant 120 : i32
    %1077 = tpu.dynamic_rotate %977 by %c120_i32_801 dim 1 : vector<8x128xf32>, i32 -> vector<8x128xf32>
    %c1_802 = arith.constant 1 : index
    %c17_803 = arith.constant 17 : index
    %c0_804 = arith.constant 0 : index
    %c0_805 = arith.constant 0 : index
    %1078 = vector.load %arg4[%c1_802, %c17_803, %c0_804, %c0_805] : memref<2x25x8x128xbf16, #tpu.memory_space<vmem>>, vector<1x1x8x128xbf16>
    %1079 = vector.shape_cast %1078 : vector<1x1x8x128xbf16> to vector<8x128xbf16>
    %1080 = arith.extf %1079 : vector<8x128xbf16> to vector<8x128xf32>
    %1081 = arith.mulf %1080, %1077 : vector<8x128xf32>
    %1082 = arith.addf %1058, %1081 : vector<8x128xf32>
    %c119_i32_806 = arith.constant 119 : i32
    %1083 = tpu.dynamic_rotate %977 by %c119_i32_806 dim 1 : vector<8x128xf32>, i32 -> vector<8x128xf32>
    %c1_807 = arith.constant 1 : index
    %c18_808 = arith.constant 18 : index
    %c0_809 = arith.constant 0 : index
    %c0_810 = arith.constant 0 : index
    %1084 = vector.load %arg4[%c1_807, %c18_808, %c0_809, %c0_810] : memref<2x25x8x128xbf16, #tpu.memory_space<vmem>>, vector<1x1x8x128xbf16>
    %1085 = vector.shape_cast %1084 : vector<1x1x8x128xbf16> to vector<8x128xbf16>
    %1086 = arith.extf %1085 : vector<8x128xbf16> to vector<8x128xf32>
    %1087 = arith.mulf %1086, %1083 : vector<8x128xf32>
    %1088 = arith.addf %1064, %1087 : vector<8x128xf32>
    %c118_i32_811 = arith.constant 118 : i32
    %1089 = tpu.dynamic_rotate %977 by %c118_i32_811 dim 1 : vector<8x128xf32>, i32 -> vector<8x128xf32>
    %c1_812 = arith.constant 1 : index
    %c19_813 = arith.constant 19 : index
    %c0_814 = arith.constant 0 : index
    %c0_815 = arith.constant 0 : index
    %1090 = vector.load %arg4[%c1_812, %c19_813, %c0_814, %c0_815] : memref<2x25x8x128xbf16, #tpu.memory_space<vmem>>, vector<1x1x8x128xbf16>
    %1091 = vector.shape_cast %1090 : vector<1x1x8x128xbf16> to vector<8x128xbf16>
    %1092 = arith.extf %1091 : vector<8x128xbf16> to vector<8x128xf32>
    %1093 = arith.mulf %1092, %1089 : vector<8x128xf32>
    %1094 = arith.addf %1070, %1093 : vector<8x128xf32>
    %c114_i32_816 = arith.constant 114 : i32
    %1095 = tpu.dynamic_rotate %977 by %c114_i32_816 dim 1 : vector<8x128xf32>, i32 -> vector<8x128xf32>
    %c1_817 = arith.constant 1 : index
    %c20_818 = arith.constant 20 : index
    %c0_819 = arith.constant 0 : index
    %c0_820 = arith.constant 0 : index
    %1096 = vector.load %arg4[%c1_817, %c20_818, %c0_819, %c0_820] : memref<2x25x8x128xbf16, #tpu.memory_space<vmem>>, vector<1x1x8x128xbf16>
    %1097 = vector.shape_cast %1096 : vector<1x1x8x128xbf16> to vector<8x128xbf16>
    %1098 = arith.extf %1097 : vector<8x128xbf16> to vector<8x128xf32>
    %1099 = arith.mulf %1098, %1095 : vector<8x128xf32>
    %1100 = arith.addf %1076, %1099 : vector<8x128xf32>
    %c113_i32_821 = arith.constant 113 : i32
    %1101 = tpu.dynamic_rotate %977 by %c113_i32_821 dim 1 : vector<8x128xf32>, i32 -> vector<8x128xf32>
    %c1_822 = arith.constant 1 : index
    %c21_823 = arith.constant 21 : index
    %c0_824 = arith.constant 0 : index
    %c0_825 = arith.constant 0 : index
    %1102 = vector.load %arg4[%c1_822, %c21_823, %c0_824, %c0_825] : memref<2x25x8x128xbf16, #tpu.memory_space<vmem>>, vector<1x1x8x128xbf16>
    %1103 = vector.shape_cast %1102 : vector<1x1x8x128xbf16> to vector<8x128xbf16>
    %1104 = arith.extf %1103 : vector<8x128xbf16> to vector<8x128xf32>
    %1105 = arith.mulf %1104, %1101 : vector<8x128xf32>
    %1106 = arith.addf %1082, %1105 : vector<8x128xf32>
    %c112_i32_826 = arith.constant 112 : i32
    %1107 = tpu.dynamic_rotate %977 by %c112_i32_826 dim 1 : vector<8x128xf32>, i32 -> vector<8x128xf32>
    %c1_827 = arith.constant 1 : index
    %c22_828 = arith.constant 22 : index
    %c0_829 = arith.constant 0 : index
    %c0_830 = arith.constant 0 : index
    %1108 = vector.load %arg4[%c1_827, %c22_828, %c0_829, %c0_830] : memref<2x25x8x128xbf16, #tpu.memory_space<vmem>>, vector<1x1x8x128xbf16>
    %1109 = vector.shape_cast %1108 : vector<1x1x8x128xbf16> to vector<8x128xbf16>
    %1110 = arith.extf %1109 : vector<8x128xbf16> to vector<8x128xf32>
    %1111 = arith.mulf %1110, %1107 : vector<8x128xf32>
    %1112 = arith.addf %1088, %1111 : vector<8x128xf32>
    %c111_i32_831 = arith.constant 111 : i32
    %1113 = tpu.dynamic_rotate %977 by %c111_i32_831 dim 1 : vector<8x128xf32>, i32 -> vector<8x128xf32>
    %c1_832 = arith.constant 1 : index
    %c23_833 = arith.constant 23 : index
    %c0_834 = arith.constant 0 : index
    %c0_835 = arith.constant 0 : index
    %1114 = vector.load %arg4[%c1_832, %c23_833, %c0_834, %c0_835] : memref<2x25x8x128xbf16, #tpu.memory_space<vmem>>, vector<1x1x8x128xbf16>
    %1115 = vector.shape_cast %1114 : vector<1x1x8x128xbf16> to vector<8x128xbf16>
    %1116 = arith.extf %1115 : vector<8x128xbf16> to vector<8x128xf32>
    %1117 = arith.mulf %1116, %1113 : vector<8x128xf32>
    %1118 = arith.addf %1094, %1117 : vector<8x128xf32>
    %c110_i32_836 = arith.constant 110 : i32
    %1119 = tpu.dynamic_rotate %977 by %c110_i32_836 dim 1 : vector<8x128xf32>, i32 -> vector<8x128xf32>
    %c1_837 = arith.constant 1 : index
    %c24_838 = arith.constant 24 : index
    %c0_839 = arith.constant 0 : index
    %c0_840 = arith.constant 0 : index
    %1120 = vector.load %arg4[%c1_837, %c24_838, %c0_839, %c0_840] : memref<2x25x8x128xbf16, #tpu.memory_space<vmem>>, vector<1x1x8x128xbf16>
    %1121 = vector.shape_cast %1120 : vector<1x1x8x128xbf16> to vector<8x128xbf16>
    %1122 = arith.extf %1121 : vector<8x128xbf16> to vector<8x128xf32>
    %1123 = arith.mulf %1122, %1119 : vector<8x128xf32>
    %1124 = arith.addf %1100, %1123 : vector<8x128xf32>
    %c1_841 = arith.constant 1 : index
    %c0_842 = arith.constant 0 : index
    %c0_843 = arith.constant 0 : index
    %1125 = vector.load %arg5[%c1_841, %c0_842, %c0_843] : memref<2x8x1xf32, #tpu.memory_space<vmem>>, vector<1x8x1xf32>
    %1126 = vector.shape_cast %1125 : vector<1x8x1xf32> to vector<8x1xf32>
    %1127 = arith.addf %1124, %1106 : vector<8x128xf32>
    %1128 = arith.addf %1112, %1118 : vector<8x128xf32>
    %1129 = arith.addf %1127, %1128 : vector<8x128xf32>
    %1130 = vector.broadcast %1126 : vector<8x1xf32> to vector<8x128xf32>
    %1131 = arith.addf %1130, %1129 : vector<8x128xf32>
    %1132 = arith.truncf %1131 : vector<8x128xf32> to vector<8x128xbf16>
    %1133 = arith.truncf %978 : vector<8x128xf32> to vector<8x128xbf16>
    %cst_844 = arith.constant dense<0.000000e+00> : vector<128x128xf32>
    %1134 = tpu.matmul %1132, %1133, %cst_844 {dimension_numbers = #tpu.dot_dimension_numbers<[0], [0], [1], [1], [0, 1, 1, 1], [], []>} : vector<8x128xbf16>, vector<8x128xbf16>, vector<128x128xf32> -> vector<128x128xf32>
    %c1_845 = arith.constant 1 : index
    %c0_846 = arith.constant 0 : index
    %c0_847 = arith.constant 0 : index
    %1135 = vector.load %arg6[%c1_845, %c0_846, %c0_847] : memref<2x128x128xbf16, #tpu.memory_space<vmem>>, vector<1x128x128xbf16>
    %1136 = vector.shape_cast %1135 : vector<1x128x128xbf16> to vector<128x128xbf16>
    %1137 = arith.extf %1136 : vector<128x128xbf16> to vector<128x128xf32>
    %1138 = arith.addf %1134, %1137 : vector<128x128xf32>
    %cst_848 = arith.constant dense<0xFF800000> : vector<128xf32>
    %1139 = vector.multi_reduction <maximumf>, %1138, %cst_848 [1] : vector<128x128xf32> to vector<128xf32>
    %1140 = vector.shape_cast %1139 : vector<128xf32> to vector<128x1xf32>
    %1141 = vector.broadcast %1140 : vector<128x1xf32> to vector<128x128xf32>
    %1142 = arith.subf %1138, %1141 : vector<128x128xf32>
    %1143 = math.exp %1142 : vector<128x128xf32>
    %cst_849 = arith.constant dense<0.000000e+00> : vector<128xf32>
    %1144 = vector.multi_reduction <add>, %1143, %cst_849 [1] : vector<128x128xf32> to vector<128xf32>
    %1145 = vector.shape_cast %1144 : vector<128xf32> to vector<128x1xf32>
    %1146 = tpu.reciprocal %1145 {approx = true} : vector<128x1xf32> -> vector<128x1xf32>
    %1147 = vector.broadcast %1146 : vector<128x1xf32> to vector<128x128xf32>
    %1148 = arith.mulf %1143, %1147 : vector<128x128xf32>
    %1149 = arith.truncf %979 : vector<32x128xf32> to vector<32x128xbf16>
    %1150 = arith.truncf %1148 : vector<128x128xf32> to vector<128x128xbf16>
    %cst_850 = arith.constant dense<0.000000e+00> : vector<32x128xf32>
    %1151 = tpu.matmul %1149, %1150, %cst_850 {dimension_numbers = #tpu.dot_dimension_numbers<[1], [1], [0], [0], [0, 0, 1, 0], [], []>} : vector<32x128xbf16>, vector<128x128xbf16>, vector<32x128xf32> -> vector<32x128xf32>
    %c1_851 = arith.constant 1 : index
    %c0_852 = arith.constant 0 : index
    %c0_853 = arith.constant 0 : index
    %1152 = vector.load %arg7[%c1_851, %c0_852, %c0_853] : memref<2x64x32xf32, #tpu.memory_space<vmem>>, vector<1x64x32xf32>
    %1153 = vector.shape_cast %1152 : vector<1x64x32xf32> to vector<64x32xf32>
    %cst_854 = arith.constant 0.000000e+00 : f32
    %1154 = vector.broadcast %cst_854 : f32 to vector<32x128xf32>
    %1155 = arith.maximumf %1151, %1154 : vector<32x128xf32>
    %cst_855 = arith.constant dense<0.000000e+00> : vector<64x128xf32>
    %1156 = tpu.matmul %1153, %1155, %cst_855 {dimension_numbers = #tpu.dot_dimension_numbers<[1], [0], [0], [1], [0, 0, 1, 1], [], []>} : vector<64x32xf32>, vector<32x128xf32>, vector<64x128xf32> -> vector<64x128xf32>
    %1157 = arith.addf %966, %1156 : vector<64x128xf32>
    %c0_856 = arith.constant 0 : index
    %c0_857 = arith.constant 0 : index
    %1158 = vector.load %arg8[%c0_856, %c0_857] : memref<64x1xf32, #tpu.memory_space<vmem>>, vector<64x1xf32>
    %1159 = vector.broadcast %1158 : vector<64x1xf32> to vector<64x128xf32>
    %1160 = arith.addf %1157, %1159 : vector<64x128xf32>
    %c2_858 = arith.constant 2 : index
    %c0_859 = arith.constant 0 : index
    %c0_860 = arith.constant 0 : index
    %1161 = vector.load %arg9[%c2_858, %c0_859, %c0_860] : memref<4x64x128xf32, #tpu.memory_space<vmem>>, vector<1x64x128xf32>
    %1162 = vector.shape_cast %1161 : vector<1x64x128xf32> to vector<64x128xf32>
    %1163 = vector.shape_cast %1160 : vector<64x128xf32> to vector<1x64x128xf32>
    tpu.vector_store %arg9[%c2_858, %c0_859, %c0_860], %1163 {strides = array<i32>} : memref<4x64x128xf32, #tpu.memory_space<vmem>>, vector<1x64x128xf32>,
    %cst_861 = arith.constant 0.000000e+00 : f32
    %1164 = vector.broadcast %cst_861 : f32 to vector<64x128xf32>
    %c3_862 = arith.constant 3 : index
    %c0_863 = arith.constant 0 : index
    %c0_864 = arith.constant 0 : index
    %1165 = vector.load %arg1[%c3_862, %c0_863, %c0_864] : memref<4x64x128xf32, #tpu.memory_space<vmem>>, vector<1x32x128xf32>
    %1166 = vector.shape_cast %1165 : vector<1x32x128xf32> to vector<32x128xf32>
    %c0_865 = arith.constant 0 : index
    %c0_866 = arith.constant 0 : index
    %c0_867 = arith.constant 0 : index
    %1167 = vector.load %arg2[%c0_865, %c0_866, %c0_867] : memref<2x48x32xf32, #tpu.memory_space<vmem>>, vector<1x48x32xf32>
    %1168 = vector.shape_cast %1167 : vector<1x48x32xf32> to vector<48x32xf32>
    %cst_868 = arith.constant dense<0.000000e+00> : vector<48x128xf32>
    %1169 = tpu.matmul %1168, %1166, %cst_868 {dimension_numbers = #tpu.dot_dimension_numbers<[1], [0], [0], [1], [0, 0, 1, 1], [], []>} : vector<48x32xf32>, vector<32x128xf32>, vector<48x128xf32> -> vector<48x128xf32>
    %c0_869 = arith.constant 0 : index
    %c0_870 = arith.constant 0 : index
    %c0_871 = arith.constant 0 : index
    %1170 = vector.load %arg3[%c0_869, %c0_870, %c0_871] : memref<2x48x1xf32, #tpu.memory_space<vmem>>, vector<1x48x1xf32>
    %1171 = vector.shape_cast %1170 : vector<1x48x1xf32> to vector<48x1xf32>
    %1172 = vector.broadcast %1171 : vector<48x1xf32> to vector<48x128xf32>
    %1173 = arith.addf %1169, %1172 : vector<48x128xf32>
    %1174 = vector.extract_strided_slice %1173 {offsets = [0, 0], sizes = [8, 128], strides = [1, 1]} : vector<48x128xf32> to vector<8x128xf32>
    %1175 = vector.extract_strided_slice %1173 {offsets = [8, 0], sizes = [8, 128], strides = [1, 1]} : vector<48x128xf32> to vector<8x128xf32>
    %1176 = vector.extract_strided_slice %1173 {offsets = [16, 0], sizes = [32, 128], strides = [1, 1]} : vector<48x128xf32> to vector<32x128xf32>
    %c18_i32_872 = arith.constant 18 : i32
    %1177 = tpu.dynamic_rotate %1174 by %c18_i32_872 dim 1 : vector<8x128xf32>, i32 -> vector<8x128xf32>
    %c0_873 = arith.constant 0 : index
    %c0_874 = arith.constant 0 : index
    %c0_875 = arith.constant 0 : index
    %c0_876 = arith.constant 0 : index
    %1178 = vector.load %arg4[%c0_873, %c0_874, %c0_875, %c0_876] : memref<2x25x8x128xbf16, #tpu.memory_space<vmem>>, vector<1x1x8x128xbf16>
    %1179 = vector.shape_cast %1178 : vector<1x1x8x128xbf16> to vector<8x128xbf16>
    %1180 = arith.extf %1179 : vector<8x128xbf16> to vector<8x128xf32>
    %1181 = arith.mulf %1180, %1177 : vector<8x128xf32>
    %c17_i32_877 = arith.constant 17 : i32
    %1182 = tpu.dynamic_rotate %1174 by %c17_i32_877 dim 1 : vector<8x128xf32>, i32 -> vector<8x128xf32>
    %c0_878 = arith.constant 0 : index
    %c1_879 = arith.constant 1 : index
    %c0_880 = arith.constant 0 : index
    %c0_881 = arith.constant 0 : index
    %1183 = vector.load %arg4[%c0_878, %c1_879, %c0_880, %c0_881] : memref<2x25x8x128xbf16, #tpu.memory_space<vmem>>, vector<1x1x8x128xbf16>
    %1184 = vector.shape_cast %1183 : vector<1x1x8x128xbf16> to vector<8x128xbf16>
    %1185 = arith.extf %1184 : vector<8x128xbf16> to vector<8x128xf32>
    %1186 = arith.mulf %1185, %1182 : vector<8x128xf32>
    %c16_i32_882 = arith.constant 16 : i32
    %1187 = tpu.dynamic_rotate %1174 by %c16_i32_882 dim 1 : vector<8x128xf32>, i32 -> vector<8x128xf32>
    %c0_883 = arith.constant 0 : index
    %c2_884 = arith.constant 2 : index
    %c0_885 = arith.constant 0 : index
    %c0_886 = arith.constant 0 : index
    %1188 = vector.load %arg4[%c0_883, %c2_884, %c0_885, %c0_886] : memref<2x25x8x128xbf16, #tpu.memory_space<vmem>>, vector<1x1x8x128xbf16>
    %1189 = vector.shape_cast %1188 : vector<1x1x8x128xbf16> to vector<8x128xbf16>
    %1190 = arith.extf %1189 : vector<8x128xbf16> to vector<8x128xf32>
    %1191 = arith.mulf %1190, %1187 : vector<8x128xf32>
    %c15_i32_887 = arith.constant 15 : i32
    %1192 = tpu.dynamic_rotate %1174 by %c15_i32_887 dim 1 : vector<8x128xf32>, i32 -> vector<8x128xf32>
    %c0_888 = arith.constant 0 : index
    %c3_889 = arith.constant 3 : index
    %c0_890 = arith.constant 0 : index
    %c0_891 = arith.constant 0 : index
    %1193 = vector.load %arg4[%c0_888, %c3_889, %c0_890, %c0_891] : memref<2x25x8x128xbf16, #tpu.memory_space<vmem>>, vector<1x1x8x128xbf16>
    %1194 = vector.shape_cast %1193 : vector<1x1x8x128xbf16> to vector<8x128xbf16>
    %1195 = arith.extf %1194 : vector<8x128xbf16> to vector<8x128xf32>
    %1196 = arith.mulf %1195, %1192 : vector<8x128xf32>
    %c14_i32_892 = arith.constant 14 : i32
    %1197 = tpu.dynamic_rotate %1174 by %c14_i32_892 dim 1 : vector<8x128xf32>, i32 -> vector<8x128xf32>
    %c0_893 = arith.constant 0 : index
    %c4_894 = arith.constant 4 : index
    %c0_895 = arith.constant 0 : index
    %c0_896 = arith.constant 0 : index
    %1198 = vector.load %arg4[%c0_893, %c4_894, %c0_895, %c0_896] : memref<2x25x8x128xbf16, #tpu.memory_space<vmem>>, vector<1x1x8x128xbf16>
    %1199 = vector.shape_cast %1198 : vector<1x1x8x128xbf16> to vector<8x128xbf16>
    %1200 = arith.extf %1199 : vector<8x128xbf16> to vector<8x128xf32>
    %1201 = arith.mulf %1200, %1197 : vector<8x128xf32>
    %1202 = arith.addf %1181, %1201 : vector<8x128xf32>
    %c10_i32_897 = arith.constant 10 : i32
    %1203 = tpu.dynamic_rotate %1174 by %c10_i32_897 dim 1 : vector<8x128xf32>, i32 -> vector<8x128xf32>
    %c0_898 = arith.constant 0 : index
    %c5_899 = arith.constant 5 : index
    %c0_900 = arith.constant 0 : index
    %c0_901 = arith.constant 0 : index
    %1204 = vector.load %arg4[%c0_898, %c5_899, %c0_900, %c0_901] : memref<2x25x8x128xbf16, #tpu.memory_space<vmem>>, vector<1x1x8x128xbf16>
    %1205 = vector.shape_cast %1204 : vector<1x1x8x128xbf16> to vector<8x128xbf16>
    %1206 = arith.extf %1205 : vector<8x128xbf16> to vector<8x128xf32>
    %1207 = arith.mulf %1206, %1203 : vector<8x128xf32>
    %1208 = arith.addf %1186, %1207 : vector<8x128xf32>
    %c9_i32_902 = arith.constant 9 : i32
    %1209 = tpu.dynamic_rotate %1174 by %c9_i32_902 dim 1 : vector<8x128xf32>, i32 -> vector<8x128xf32>
    %c0_903 = arith.constant 0 : index
    %c6_904 = arith.constant 6 : index
    %c0_905 = arith.constant 0 : index
    %c0_906 = arith.constant 0 : index
    %1210 = vector.load %arg4[%c0_903, %c6_904, %c0_905, %c0_906] : memref<2x25x8x128xbf16, #tpu.memory_space<vmem>>, vector<1x1x8x128xbf16>
    %1211 = vector.shape_cast %1210 : vector<1x1x8x128xbf16> to vector<8x128xbf16>
    %1212 = arith.extf %1211 : vector<8x128xbf16> to vector<8x128xf32>
    %1213 = arith.mulf %1212, %1209 : vector<8x128xf32>
    %1214 = arith.addf %1191, %1213 : vector<8x128xf32>
    %c8_i32_907 = arith.constant 8 : i32
    %1215 = tpu.dynamic_rotate %1174 by %c8_i32_907 dim 1 : vector<8x128xf32>, i32 -> vector<8x128xf32>
    %c0_908 = arith.constant 0 : index
    %c7_909 = arith.constant 7 : index
    %c0_910 = arith.constant 0 : index
    %c0_911 = arith.constant 0 : index
    %1216 = vector.load %arg4[%c0_908, %c7_909, %c0_910, %c0_911] : memref<2x25x8x128xbf16, #tpu.memory_space<vmem>>, vector<1x1x8x128xbf16>
    %1217 = vector.shape_cast %1216 : vector<1x1x8x128xbf16> to vector<8x128xbf16>
    %1218 = arith.extf %1217 : vector<8x128xbf16> to vector<8x128xf32>
    %1219 = arith.mulf %1218, %1215 : vector<8x128xf32>
    %1220 = arith.addf %1196, %1219 : vector<8x128xf32>
    %c7_i32_912 = arith.constant 7 : i32
    %1221 = tpu.dynamic_rotate %1174 by %c7_i32_912 dim 1 : vector<8x128xf32>, i32 -> vector<8x128xf32>
    %c0_913 = arith.constant 0 : index
    %c8_914 = arith.constant 8 : index
    %c0_915 = arith.constant 0 : index
    %c0_916 = arith.constant 0 : index
    %1222 = vector.load %arg4[%c0_913, %c8_914, %c0_915, %c0_916] : memref<2x25x8x128xbf16, #tpu.memory_space<vmem>>, vector<1x1x8x128xbf16>
    %1223 = vector.shape_cast %1222 : vector<1x1x8x128xbf16> to vector<8x128xbf16>
    %1224 = arith.extf %1223 : vector<8x128xbf16> to vector<8x128xf32>
    %1225 = arith.mulf %1224, %1221 : vector<8x128xf32>
    %1226 = arith.addf %1202, %1225 : vector<8x128xf32>
    %c6_i32_917 = arith.constant 6 : i32
    %1227 = tpu.dynamic_rotate %1174 by %c6_i32_917 dim 1 : vector<8x128xf32>, i32 -> vector<8x128xf32>
    %c0_918 = arith.constant 0 : index
    %c9_919 = arith.constant 9 : index
    %c0_920 = arith.constant 0 : index
    %c0_921 = arith.constant 0 : index
    %1228 = vector.load %arg4[%c0_918, %c9_919, %c0_920, %c0_921] : memref<2x25x8x128xbf16, #tpu.memory_space<vmem>>, vector<1x1x8x128xbf16>
    %1229 = vector.shape_cast %1228 : vector<1x1x8x128xbf16> to vector<8x128xbf16>
    %1230 = arith.extf %1229 : vector<8x128xbf16> to vector<8x128xf32>
    %1231 = arith.mulf %1230, %1227 : vector<8x128xf32>
    %1232 = arith.addf %1208, %1231 : vector<8x128xf32>
    %c2_i32_922 = arith.constant 2 : i32
    %1233 = tpu.dynamic_rotate %1174 by %c2_i32_922 dim 1 : vector<8x128xf32>, i32 -> vector<8x128xf32>
    %c0_923 = arith.constant 0 : index
    %c10_924 = arith.constant 10 : index
    %c0_925 = arith.constant 0 : index
    %c0_926 = arith.constant 0 : index
    %1234 = vector.load %arg4[%c0_923, %c10_924, %c0_925, %c0_926] : memref<2x25x8x128xbf16, #tpu.memory_space<vmem>>, vector<1x1x8x128xbf16>
    %1235 = vector.shape_cast %1234 : vector<1x1x8x128xbf16> to vector<8x128xbf16>
    %1236 = arith.extf %1235 : vector<8x128xbf16> to vector<8x128xf32>
    %1237 = arith.mulf %1236, %1233 : vector<8x128xf32>
    %1238 = arith.addf %1214, %1237 : vector<8x128xf32>
    %c1_i32_927 = arith.constant 1 : i32
    %1239 = tpu.dynamic_rotate %1174 by %c1_i32_927 dim 1 : vector<8x128xf32>, i32 -> vector<8x128xf32>
    %c0_928 = arith.constant 0 : index
    %c11_929 = arith.constant 11 : index
    %c0_930 = arith.constant 0 : index
    %c0_931 = arith.constant 0 : index
    %1240 = vector.load %arg4[%c0_928, %c11_929, %c0_930, %c0_931] : memref<2x25x8x128xbf16, #tpu.memory_space<vmem>>, vector<1x1x8x128xbf16>
    %1241 = vector.shape_cast %1240 : vector<1x1x8x128xbf16> to vector<8x128xbf16>
    %1242 = arith.extf %1241 : vector<8x128xbf16> to vector<8x128xf32>
    %1243 = arith.mulf %1242, %1239 : vector<8x128xf32>
    %1244 = arith.addf %1220, %1243 : vector<8x128xf32>
    %c0_932 = arith.constant 0 : index
    %c12_933 = arith.constant 12 : index
    %c0_934 = arith.constant 0 : index
    %c0_935 = arith.constant 0 : index
    %1245 = vector.load %arg4[%c0_932, %c12_933, %c0_934, %c0_935] : memref<2x25x8x128xbf16, #tpu.memory_space<vmem>>, vector<1x1x8x128xbf16>
    %1246 = vector.shape_cast %1245 : vector<1x1x8x128xbf16> to vector<8x128xbf16>
    %1247 = arith.extf %1246 : vector<8x128xbf16> to vector<8x128xf32>
    %1248 = arith.mulf %1247, %1174 : vector<8x128xf32>
    %1249 = arith.addf %1226, %1248 : vector<8x128xf32>
    %c127_i32_936 = arith.constant 127 : i32
    %1250 = tpu.dynamic_rotate %1174 by %c127_i32_936 dim 1 : vector<8x128xf32>, i32 -> vector<8x128xf32>
    %c0_937 = arith.constant 0 : index
    %c13_938 = arith.constant 13 : index
    %c0_939 = arith.constant 0 : index
    %c0_940 = arith.constant 0 : index
    %1251 = vector.load %arg4[%c0_937, %c13_938, %c0_939, %c0_940] : memref<2x25x8x128xbf16, #tpu.memory_space<vmem>>, vector<1x1x8x128xbf16>
    %1252 = vector.shape_cast %1251 : vector<1x1x8x128xbf16> to vector<8x128xbf16>
    %1253 = arith.extf %1252 : vector<8x128xbf16> to vector<8x128xf32>
    %1254 = arith.mulf %1253, %1250 : vector<8x128xf32>
    %1255 = arith.addf %1232, %1254 : vector<8x128xf32>
    %c126_i32_941 = arith.constant 126 : i32
    %1256 = tpu.dynamic_rotate %1174 by %c126_i32_941 dim 1 : vector<8x128xf32>, i32 -> vector<8x128xf32>
    %c0_942 = arith.constant 0 : index
    %c14_943 = arith.constant 14 : index
    %c0_944 = arith.constant 0 : index
    %c0_945 = arith.constant 0 : index
    %1257 = vector.load %arg4[%c0_942, %c14_943, %c0_944, %c0_945] : memref<2x25x8x128xbf16, #tpu.memory_space<vmem>>, vector<1x1x8x128xbf16>
    %1258 = vector.shape_cast %1257 : vector<1x1x8x128xbf16> to vector<8x128xbf16>
    %1259 = arith.extf %1258 : vector<8x128xbf16> to vector<8x128xf32>
    %1260 = arith.mulf %1259, %1256 : vector<8x128xf32>
    %1261 = arith.addf %1238, %1260 : vector<8x128xf32>
    %c122_i32_946 = arith.constant 122 : i32
    %1262 = tpu.dynamic_rotate %1174 by %c122_i32_946 dim 1 : vector<8x128xf32>, i32 -> vector<8x128xf32>
    %c0_947 = arith.constant 0 : index
    %c15_948 = arith.constant 15 : index
    %c0_949 = arith.constant 0 : index
    %c0_950 = arith.constant 0 : index
    %1263 = vector.load %arg4[%c0_947, %c15_948, %c0_949, %c0_950] : memref<2x25x8x128xbf16, #tpu.memory_space<vmem>>, vector<1x1x8x128xbf16>
    %1264 = vector.shape_cast %1263 : vector<1x1x8x128xbf16> to vector<8x128xbf16>
    %1265 = arith.extf %1264 : vector<8x128xbf16> to vector<8x128xf32>
    %1266 = arith.mulf %1265, %1262 : vector<8x128xf32>
    %1267 = arith.addf %1244, %1266 : vector<8x128xf32>
    %c121_i32_951 = arith.constant 121 : i32
    %1268 = tpu.dynamic_rotate %1174 by %c121_i32_951 dim 1 : vector<8x128xf32>, i32 -> vector<8x128xf32>
    %c0_952 = arith.constant 0 : index
    %c16_953 = arith.constant 16 : index
    %c0_954 = arith.constant 0 : index
    %c0_955 = arith.constant 0 : index
    %1269 = vector.load %arg4[%c0_952, %c16_953, %c0_954, %c0_955] : memref<2x25x8x128xbf16, #tpu.memory_space<vmem>>, vector<1x1x8x128xbf16>
    %1270 = vector.shape_cast %1269 : vector<1x1x8x128xbf16> to vector<8x128xbf16>
    %1271 = arith.extf %1270 : vector<8x128xbf16> to vector<8x128xf32>
    %1272 = arith.mulf %1271, %1268 : vector<8x128xf32>
    %1273 = arith.addf %1249, %1272 : vector<8x128xf32>
    %c120_i32_956 = arith.constant 120 : i32
    %1274 = tpu.dynamic_rotate %1174 by %c120_i32_956 dim 1 : vector<8x128xf32>, i32 -> vector<8x128xf32>
    %c0_957 = arith.constant 0 : index
    %c17_958 = arith.constant 17 : index
    %c0_959 = arith.constant 0 : index
    %c0_960 = arith.constant 0 : index
    %1275 = vector.load %arg4[%c0_957, %c17_958, %c0_959, %c0_960] : memref<2x25x8x128xbf16, #tpu.memory_space<vmem>>, vector<1x1x8x128xbf16>
    %1276 = vector.shape_cast %1275 : vector<1x1x8x128xbf16> to vector<8x128xbf16>
    %1277 = arith.extf %1276 : vector<8x128xbf16> to vector<8x128xf32>
    %1278 = arith.mulf %1277, %1274 : vector<8x128xf32>
    %1279 = arith.addf %1255, %1278 : vector<8x128xf32>
    %c119_i32_961 = arith.constant 119 : i32
    %1280 = tpu.dynamic_rotate %1174 by %c119_i32_961 dim 1 : vector<8x128xf32>, i32 -> vector<8x128xf32>
    %c0_962 = arith.constant 0 : index
    %c18_963 = arith.constant 18 : index
    %c0_964 = arith.constant 0 : index
    %c0_965 = arith.constant 0 : index
    %1281 = vector.load %arg4[%c0_962, %c18_963, %c0_964, %c0_965] : memref<2x25x8x128xbf16, #tpu.memory_space<vmem>>, vector<1x1x8x128xbf16>
    %1282 = vector.shape_cast %1281 : vector<1x1x8x128xbf16> to vector<8x128xbf16>
    %1283 = arith.extf %1282 : vector<8x128xbf16> to vector<8x128xf32>
    %1284 = arith.mulf %1283, %1280 : vector<8x128xf32>
    %1285 = arith.addf %1261, %1284 : vector<8x128xf32>
    %c118_i32_966 = arith.constant 118 : i32
    %1286 = tpu.dynamic_rotate %1174 by %c118_i32_966 dim 1 : vector<8x128xf32>, i32 -> vector<8x128xf32>
    %c0_967 = arith.constant 0 : index
    %c19_968 = arith.constant 19 : index
    %c0_969 = arith.constant 0 : index
    %c0_970 = arith.constant 0 : index
    %1287 = vector.load %arg4[%c0_967, %c19_968, %c0_969, %c0_970] : memref<2x25x8x128xbf16, #tpu.memory_space<vmem>>, vector<1x1x8x128xbf16>
    %1288 = vector.shape_cast %1287 : vector<1x1x8x128xbf16> to vector<8x128xbf16>
    %1289 = arith.extf %1288 : vector<8x128xbf16> to vector<8x128xf32>
    %1290 = arith.mulf %1289, %1286 : vector<8x128xf32>
    %1291 = arith.addf %1267, %1290 : vector<8x128xf32>
    %c114_i32_971 = arith.constant 114 : i32
    %1292 = tpu.dynamic_rotate %1174 by %c114_i32_971 dim 1 : vector<8x128xf32>, i32 -> vector<8x128xf32>
    %c0_972 = arith.constant 0 : index
    %c20_973 = arith.constant 20 : index
    %c0_974 = arith.constant 0 : index
    %c0_975 = arith.constant 0 : index
    %1293 = vector.load %arg4[%c0_972, %c20_973, %c0_974, %c0_975] : memref<2x25x8x128xbf16, #tpu.memory_space<vmem>>, vector<1x1x8x128xbf16>
    %1294 = vector.shape_cast %1293 : vector<1x1x8x128xbf16> to vector<8x128xbf16>
    %1295 = arith.extf %1294 : vector<8x128xbf16> to vector<8x128xf32>
    %1296 = arith.mulf %1295, %1292 : vector<8x128xf32>
    %1297 = arith.addf %1273, %1296 : vector<8x128xf32>
    %c113_i32_976 = arith.constant 113 : i32
    %1298 = tpu.dynamic_rotate %1174 by %c113_i32_976 dim 1 : vector<8x128xf32>, i32 -> vector<8x128xf32>
    %c0_977 = arith.constant 0 : index
    %c21_978 = arith.constant 21 : index
    %c0_979 = arith.constant 0 : index
    %c0_980 = arith.constant 0 : index
    %1299 = vector.load %arg4[%c0_977, %c21_978, %c0_979, %c0_980] : memref<2x25x8x128xbf16, #tpu.memory_space<vmem>>, vector<1x1x8x128xbf16>
    %1300 = vector.shape_cast %1299 : vector<1x1x8x128xbf16> to vector<8x128xbf16>
    %1301 = arith.extf %1300 : vector<8x128xbf16> to vector<8x128xf32>
    %1302 = arith.mulf %1301, %1298 : vector<8x128xf32>
    %1303 = arith.addf %1279, %1302 : vector<8x128xf32>
    %c112_i32_981 = arith.constant 112 : i32
    %1304 = tpu.dynamic_rotate %1174 by %c112_i32_981 dim 1 : vector<8x128xf32>, i32 -> vector<8x128xf32>
    %c0_982 = arith.constant 0 : index
    %c22_983 = arith.constant 22 : index
    %c0_984 = arith.constant 0 : index
    %c0_985 = arith.constant 0 : index
    %1305 = vector.load %arg4[%c0_982, %c22_983, %c0_984, %c0_985] : memref<2x25x8x128xbf16, #tpu.memory_space<vmem>>, vector<1x1x8x128xbf16>
    %1306 = vector.shape_cast %1305 : vector<1x1x8x128xbf16> to vector<8x128xbf16>
    %1307 = arith.extf %1306 : vector<8x128xbf16> to vector<8x128xf32>
    %1308 = arith.mulf %1307, %1304 : vector<8x128xf32>
    %1309 = arith.addf %1285, %1308 : vector<8x128xf32>
    %c111_i32_986 = arith.constant 111 : i32
    %1310 = tpu.dynamic_rotate %1174 by %c111_i32_986 dim 1 : vector<8x128xf32>, i32 -> vector<8x128xf32>
    %c0_987 = arith.constant 0 : index
    %c23_988 = arith.constant 23 : index
    %c0_989 = arith.constant 0 : index
    %c0_990 = arith.constant 0 : index
    %1311 = vector.load %arg4[%c0_987, %c23_988, %c0_989, %c0_990] : memref<2x25x8x128xbf16, #tpu.memory_space<vmem>>, vector<1x1x8x128xbf16>
    %1312 = vector.shape_cast %1311 : vector<1x1x8x128xbf16> to vector<8x128xbf16>
    %1313 = arith.extf %1312 : vector<8x128xbf16> to vector<8x128xf32>
    %1314 = arith.mulf %1313, %1310 : vector<8x128xf32>
    %1315 = arith.addf %1291, %1314 : vector<8x128xf32>
    %c110_i32_991 = arith.constant 110 : i32
    %1316 = tpu.dynamic_rotate %1174 by %c110_i32_991 dim 1 : vector<8x128xf32>, i32 -> vector<8x128xf32>
    %c0_992 = arith.constant 0 : index
    %c24_993 = arith.constant 24 : index
    %c0_994 = arith.constant 0 : index
    %c0_995 = arith.constant 0 : index
    %1317 = vector.load %arg4[%c0_992, %c24_993, %c0_994, %c0_995] : memref<2x25x8x128xbf16, #tpu.memory_space<vmem>>, vector<1x1x8x128xbf16>
    %1318 = vector.shape_cast %1317 : vector<1x1x8x128xbf16> to vector<8x128xbf16>
    %1319 = arith.extf %1318 : vector<8x128xbf16> to vector<8x128xf32>
    %1320 = arith.mulf %1319, %1316 : vector<8x128xf32>
    %1321 = arith.addf %1297, %1320 : vector<8x128xf32>
    %c0_996 = arith.constant 0 : index
    %c0_997 = arith.constant 0 : index
    %c0_998 = arith.constant 0 : index
    %1322 = vector.load %arg5[%c0_996, %c0_997, %c0_998] : memref<2x8x1xf32, #tpu.memory_space<vmem>>, vector<1x8x1xf32>
    %1323 = vector.shape_cast %1322 : vector<1x8x1xf32> to vector<8x1xf32>
    %1324 = arith.addf %1321, %1303 : vector<8x128xf32>
    %1325 = arith.addf %1309, %1315 : vector<8x128xf32>
    %1326 = arith.addf %1324, %1325 : vector<8x128xf32>
    %1327 = vector.broadcast %1323 : vector<8x1xf32> to vector<8x128xf32>
    %1328 = arith.addf %1327, %1326 : vector<8x128xf32>
    %1329 = arith.truncf %1328 : vector<8x128xf32> to vector<8x128xbf16>
    %1330 = arith.truncf %1175 : vector<8x128xf32> to vector<8x128xbf16>
    %cst_999 = arith.constant dense<0.000000e+00> : vector<128x128xf32>
    %1331 = tpu.matmul %1329, %1330, %cst_999 {dimension_numbers = #tpu.dot_dimension_numbers<[0], [0], [1], [1], [0, 1, 1, 1], [], []>} : vector<8x128xbf16>, vector<8x128xbf16>, vector<128x128xf32> -> vector<128x128xf32>
    %c0_1000 = arith.constant 0 : index
    %c0_1001 = arith.constant 0 : index
    %c0_1002 = arith.constant 0 : index
    %1332 = vector.load %arg6[%c0_1000, %c0_1001, %c0_1002] : memref<2x128x128xbf16, #tpu.memory_space<vmem>>, vector<1x128x128xbf16>
    %1333 = vector.shape_cast %1332 : vector<1x128x128xbf16> to vector<128x128xbf16>
    %1334 = arith.extf %1333 : vector<128x128xbf16> to vector<128x128xf32>
    %1335 = arith.addf %1331, %1334 : vector<128x128xf32>
    %cst_1003 = arith.constant dense<0xFF800000> : vector<128xf32>
    %1336 = vector.multi_reduction <maximumf>, %1335, %cst_1003 [1] : vector<128x128xf32> to vector<128xf32>
    %1337 = vector.shape_cast %1336 : vector<128xf32> to vector<128x1xf32>
    %1338 = vector.broadcast %1337 : vector<128x1xf32> to vector<128x128xf32>
    %1339 = arith.subf %1335, %1338 : vector<128x128xf32>
    %1340 = math.exp %1339 : vector<128x128xf32>
    %cst_1004 = arith.constant dense<0.000000e+00> : vector<128xf32>
    %1341 = vector.multi_reduction <add>, %1340, %cst_1004 [1] : vector<128x128xf32> to vector<128xf32>
    %1342 = vector.shape_cast %1341 : vector<128xf32> to vector<128x1xf32>
    %1343 = tpu.reciprocal %1342 {approx = true} : vector<128x1xf32> -> vector<128x1xf32>
    %1344 = vector.broadcast %1343 : vector<128x1xf32> to vector<128x128xf32>
    %1345 = arith.mulf %1340, %1344 : vector<128x128xf32>
    %1346 = arith.truncf %1176 : vector<32x128xf32> to vector<32x128xbf16>
    %1347 = arith.truncf %1345 : vector<128x128xf32> to vector<128x128xbf16>
    %cst_1005 = arith.constant dense<0.000000e+00> : vector<32x128xf32>
    %1348 = tpu.matmul %1346, %1347, %cst_1005 {dimension_numbers = #tpu.dot_dimension_numbers<[1], [1], [0], [0], [0, 0, 1, 0], [], []>} : vector<32x128xbf16>, vector<128x128xbf16>, vector<32x128xf32> -> vector<32x128xf32>
    %c0_1006 = arith.constant 0 : index
    %c0_1007 = arith.constant 0 : index
    %c0_1008 = arith.constant 0 : index
    %1349 = vector.load %arg7[%c0_1006, %c0_1007, %c0_1008] : memref<2x64x32xf32, #tpu.memory_space<vmem>>, vector<1x64x32xf32>
    %1350 = vector.shape_cast %1349 : vector<1x64x32xf32> to vector<64x32xf32>
    %cst_1009 = arith.constant 0.000000e+00 : f32
    %1351 = vector.broadcast %cst_1009 : f32 to vector<32x128xf32>
    %1352 = arith.maximumf %1348, %1351 : vector<32x128xf32>
    %cst_1010 = arith.constant dense<0.000000e+00> : vector<64x128xf32>
    %1353 = tpu.matmul %1350, %1352, %cst_1010 {dimension_numbers = #tpu.dot_dimension_numbers<[1], [0], [0], [1], [0, 0, 1, 1], [], []>} : vector<64x32xf32>, vector<32x128xf32>, vector<64x128xf32> -> vector<64x128xf32>
    %1354 = arith.addf %1164, %1353 : vector<64x128xf32>
    %c3_1011 = arith.constant 3 : index
    %c32_1012 = arith.constant 32 : index
    %c0_1013 = arith.constant 0 : index
    %1355 = vector.load %arg1[%c3_1011, %c32_1012, %c0_1013] : memref<4x64x128xf32, #tpu.memory_space<vmem>>, vector<1x32x128xf32>
    %1356 = vector.shape_cast %1355 : vector<1x32x128xf32> to vector<32x128xf32>
    %1357 = arith.addf %1348, %1356 : vector<32x128xf32>
    %c1_1014 = arith.constant 1 : index
    %c0_1015 = arith.constant 0 : index
    %c0_1016 = arith.constant 0 : index
    %1358 = vector.load %arg2[%c1_1014, %c0_1015, %c0_1016] : memref<2x48x32xf32, #tpu.memory_space<vmem>>, vector<1x48x32xf32>
    %1359 = vector.shape_cast %1358 : vector<1x48x32xf32> to vector<48x32xf32>
    %cst_1017 = arith.constant dense<0.000000e+00> : vector<48x128xf32>
    %1360 = tpu.matmul %1359, %1357, %cst_1017 {dimension_numbers = #tpu.dot_dimension_numbers<[1], [0], [0], [1], [0, 0, 1, 1], [], []>} : vector<48x32xf32>, vector<32x128xf32>, vector<48x128xf32> -> vector<48x128xf32>
    %c1_1018 = arith.constant 1 : index
    %c0_1019 = arith.constant 0 : index
    %c0_1020 = arith.constant 0 : index
    %1361 = vector.load %arg3[%c1_1018, %c0_1019, %c0_1020] : memref<2x48x1xf32, #tpu.memory_space<vmem>>, vector<1x48x1xf32>
    %1362 = vector.shape_cast %1361 : vector<1x48x1xf32> to vector<48x1xf32>
    %1363 = vector.broadcast %1362 : vector<48x1xf32> to vector<48x128xf32>
    %1364 = arith.addf %1360, %1363 : vector<48x128xf32>
    %1365 = vector.extract_strided_slice %1364 {offsets = [0, 0], sizes = [8, 128], strides = [1, 1]} : vector<48x128xf32> to vector<8x128xf32>
    %1366 = vector.extract_strided_slice %1364 {offsets = [8, 0], sizes = [8, 128], strides = [1, 1]} : vector<48x128xf32> to vector<8x128xf32>
    %1367 = vector.extract_strided_slice %1364 {offsets = [16, 0], sizes = [32, 128], strides = [1, 1]} : vector<48x128xf32> to vector<32x128xf32>
    %c18_i32_1021 = arith.constant 18 : i32
    %1368 = tpu.dynamic_rotate %1365 by %c18_i32_1021 dim 1 : vector<8x128xf32>, i32 -> vector<8x128xf32>
    %c1_1022 = arith.constant 1 : index
    %c0_1023 = arith.constant 0 : index
    %c0_1024 = arith.constant 0 : index
    %c0_1025 = arith.constant 0 : index
    %1369 = vector.load %arg4[%c1_1022, %c0_1023, %c0_1024, %c0_1025] : memref<2x25x8x128xbf16, #tpu.memory_space<vmem>>, vector<1x1x8x128xbf16>
    %1370 = vector.shape_cast %1369 : vector<1x1x8x128xbf16> to vector<8x128xbf16>
    %1371 = arith.extf %1370 : vector<8x128xbf16> to vector<8x128xf32>
    %1372 = arith.mulf %1371, %1368 : vector<8x128xf32>
    %c17_i32_1026 = arith.constant 17 : i32
    %1373 = tpu.dynamic_rotate %1365 by %c17_i32_1026 dim 1 : vector<8x128xf32>, i32 -> vector<8x128xf32>
    %c1_1027 = arith.constant 1 : index
    %c1_1028 = arith.constant 1 : index
    %c0_1029 = arith.constant 0 : index
    %c0_1030 = arith.constant 0 : index
    %1374 = vector.load %arg4[%c1_1027, %c1_1028, %c0_1029, %c0_1030] : memref<2x25x8x128xbf16, #tpu.memory_space<vmem>>, vector<1x1x8x128xbf16>
    %1375 = vector.shape_cast %1374 : vector<1x1x8x128xbf16> to vector<8x128xbf16>
    %1376 = arith.extf %1375 : vector<8x128xbf16> to vector<8x128xf32>
    %1377 = arith.mulf %1376, %1373 : vector<8x128xf32>
    %c16_i32_1031 = arith.constant 16 : i32
    %1378 = tpu.dynamic_rotate %1365 by %c16_i32_1031 dim 1 : vector<8x128xf32>, i32 -> vector<8x128xf32>
    %c1_1032 = arith.constant 1 : index
    %c2_1033 = arith.constant 2 : index
    %c0_1034 = arith.constant 0 : index
    %c0_1035 = arith.constant 0 : index
    %1379 = vector.load %arg4[%c1_1032, %c2_1033, %c0_1034, %c0_1035] : memref<2x25x8x128xbf16, #tpu.memory_space<vmem>>, vector<1x1x8x128xbf16>
    %1380 = vector.shape_cast %1379 : vector<1x1x8x128xbf16> to vector<8x128xbf16>
    %1381 = arith.extf %1380 : vector<8x128xbf16> to vector<8x128xf32>
    %1382 = arith.mulf %1381, %1378 : vector<8x128xf32>
    %c15_i32_1036 = arith.constant 15 : i32
    %1383 = tpu.dynamic_rotate %1365 by %c15_i32_1036 dim 1 : vector<8x128xf32>, i32 -> vector<8x128xf32>
    %c1_1037 = arith.constant 1 : index
    %c3_1038 = arith.constant 3 : index
    %c0_1039 = arith.constant 0 : index
    %c0_1040 = arith.constant 0 : index
    %1384 = vector.load %arg4[%c1_1037, %c3_1038, %c0_1039, %c0_1040] : memref<2x25x8x128xbf16, #tpu.memory_space<vmem>>, vector<1x1x8x128xbf16>
    %1385 = vector.shape_cast %1384 : vector<1x1x8x128xbf16> to vector<8x128xbf16>
    %1386 = arith.extf %1385 : vector<8x128xbf16> to vector<8x128xf32>
    %1387 = arith.mulf %1386, %1383 : vector<8x128xf32>
    %c14_i32_1041 = arith.constant 14 : i32
    %1388 = tpu.dynamic_rotate %1365 by %c14_i32_1041 dim 1 : vector<8x128xf32>, i32 -> vector<8x128xf32>
    %c1_1042 = arith.constant 1 : index
    %c4_1043 = arith.constant 4 : index
    %c0_1044 = arith.constant 0 : index
    %c0_1045 = arith.constant 0 : index
    %1389 = vector.load %arg4[%c1_1042, %c4_1043, %c0_1044, %c0_1045] : memref<2x25x8x128xbf16, #tpu.memory_space<vmem>>, vector<1x1x8x128xbf16>
    %1390 = vector.shape_cast %1389 : vector<1x1x8x128xbf16> to vector<8x128xbf16>
    %1391 = arith.extf %1390 : vector<8x128xbf16> to vector<8x128xf32>
    %1392 = arith.mulf %1391, %1388 : vector<8x128xf32>
    %1393 = arith.addf %1372, %1392 : vector<8x128xf32>
    %c10_i32_1046 = arith.constant 10 : i32
    %1394 = tpu.dynamic_rotate %1365 by %c10_i32_1046 dim 1 : vector<8x128xf32>, i32 -> vector<8x128xf32>
    %c1_1047 = arith.constant 1 : index
    %c5_1048 = arith.constant 5 : index
    %c0_1049 = arith.constant 0 : index
    %c0_1050 = arith.constant 0 : index
    %1395 = vector.load %arg4[%c1_1047, %c5_1048, %c0_1049, %c0_1050] : memref<2x25x8x128xbf16, #tpu.memory_space<vmem>>, vector<1x1x8x128xbf16>
    %1396 = vector.shape_cast %1395 : vector<1x1x8x128xbf16> to vector<8x128xbf16>
    %1397 = arith.extf %1396 : vector<8x128xbf16> to vector<8x128xf32>
    %1398 = arith.mulf %1397, %1394 : vector<8x128xf32>
    %1399 = arith.addf %1377, %1398 : vector<8x128xf32>
    %c9_i32_1051 = arith.constant 9 : i32
    %1400 = tpu.dynamic_rotate %1365 by %c9_i32_1051 dim 1 : vector<8x128xf32>, i32 -> vector<8x128xf32>
    %c1_1052 = arith.constant 1 : index
    %c6_1053 = arith.constant 6 : index
    %c0_1054 = arith.constant 0 : index
    %c0_1055 = arith.constant 0 : index
    %1401 = vector.load %arg4[%c1_1052, %c6_1053, %c0_1054, %c0_1055] : memref<2x25x8x128xbf16, #tpu.memory_space<vmem>>, vector<1x1x8x128xbf16>
    %1402 = vector.shape_cast %1401 : vector<1x1x8x128xbf16> to vector<8x128xbf16>
    %1403 = arith.extf %1402 : vector<8x128xbf16> to vector<8x128xf32>
    %1404 = arith.mulf %1403, %1400 : vector<8x128xf32>
    %1405 = arith.addf %1382, %1404 : vector<8x128xf32>
    %c8_i32_1056 = arith.constant 8 : i32
    %1406 = tpu.dynamic_rotate %1365 by %c8_i32_1056 dim 1 : vector<8x128xf32>, i32 -> vector<8x128xf32>
    %c1_1057 = arith.constant 1 : index
    %c7_1058 = arith.constant 7 : index
    %c0_1059 = arith.constant 0 : index
    %c0_1060 = arith.constant 0 : index
    %1407 = vector.load %arg4[%c1_1057, %c7_1058, %c0_1059, %c0_1060] : memref<2x25x8x128xbf16, #tpu.memory_space<vmem>>, vector<1x1x8x128xbf16>
    %1408 = vector.shape_cast %1407 : vector<1x1x8x128xbf16> to vector<8x128xbf16>
    %1409 = arith.extf %1408 : vector<8x128xbf16> to vector<8x128xf32>
    %1410 = arith.mulf %1409, %1406 : vector<8x128xf32>
    %1411 = arith.addf %1387, %1410 : vector<8x128xf32>
    %c7_i32_1061 = arith.constant 7 : i32
    %1412 = tpu.dynamic_rotate %1365 by %c7_i32_1061 dim 1 : vector<8x128xf32>, i32 -> vector<8x128xf32>
    %c1_1062 = arith.constant 1 : index
    %c8_1063 = arith.constant 8 : index
    %c0_1064 = arith.constant 0 : index
    %c0_1065 = arith.constant 0 : index
    %1413 = vector.load %arg4[%c1_1062, %c8_1063, %c0_1064, %c0_1065] : memref<2x25x8x128xbf16, #tpu.memory_space<vmem>>, vector<1x1x8x128xbf16>
    %1414 = vector.shape_cast %1413 : vector<1x1x8x128xbf16> to vector<8x128xbf16>
    %1415 = arith.extf %1414 : vector<8x128xbf16> to vector<8x128xf32>
    %1416 = arith.mulf %1415, %1412 : vector<8x128xf32>
    %1417 = arith.addf %1393, %1416 : vector<8x128xf32>
    %c6_i32_1066 = arith.constant 6 : i32
    %1418 = tpu.dynamic_rotate %1365 by %c6_i32_1066 dim 1 : vector<8x128xf32>, i32 -> vector<8x128xf32>
    %c1_1067 = arith.constant 1 : index
    %c9_1068 = arith.constant 9 : index
    %c0_1069 = arith.constant 0 : index
    %c0_1070 = arith.constant 0 : index
    %1419 = vector.load %arg4[%c1_1067, %c9_1068, %c0_1069, %c0_1070] : memref<2x25x8x128xbf16, #tpu.memory_space<vmem>>, vector<1x1x8x128xbf16>
    %1420 = vector.shape_cast %1419 : vector<1x1x8x128xbf16> to vector<8x128xbf16>
    %1421 = arith.extf %1420 : vector<8x128xbf16> to vector<8x128xf32>
    %1422 = arith.mulf %1421, %1418 : vector<8x128xf32>
    %1423 = arith.addf %1399, %1422 : vector<8x128xf32>
    %c2_i32_1071 = arith.constant 2 : i32
    %1424 = tpu.dynamic_rotate %1365 by %c2_i32_1071 dim 1 : vector<8x128xf32>, i32 -> vector<8x128xf32>
    %c1_1072 = arith.constant 1 : index
    %c10_1073 = arith.constant 10 : index
    %c0_1074 = arith.constant 0 : index
    %c0_1075 = arith.constant 0 : index
    %1425 = vector.load %arg4[%c1_1072, %c10_1073, %c0_1074, %c0_1075] : memref<2x25x8x128xbf16, #tpu.memory_space<vmem>>, vector<1x1x8x128xbf16>
    %1426 = vector.shape_cast %1425 : vector<1x1x8x128xbf16> to vector<8x128xbf16>
    %1427 = arith.extf %1426 : vector<8x128xbf16> to vector<8x128xf32>
    %1428 = arith.mulf %1427, %1424 : vector<8x128xf32>
    %1429 = arith.addf %1405, %1428 : vector<8x128xf32>
    %c1_i32_1076 = arith.constant 1 : i32
    %1430 = tpu.dynamic_rotate %1365 by %c1_i32_1076 dim 1 : vector<8x128xf32>, i32 -> vector<8x128xf32>
    %c1_1077 = arith.constant 1 : index
    %c11_1078 = arith.constant 11 : index
    %c0_1079 = arith.constant 0 : index
    %c0_1080 = arith.constant 0 : index
    %1431 = vector.load %arg4[%c1_1077, %c11_1078, %c0_1079, %c0_1080] : memref<2x25x8x128xbf16, #tpu.memory_space<vmem>>, vector<1x1x8x128xbf16>
    %1432 = vector.shape_cast %1431 : vector<1x1x8x128xbf16> to vector<8x128xbf16>
    %1433 = arith.extf %1432 : vector<8x128xbf16> to vector<8x128xf32>
    %1434 = arith.mulf %1433, %1430 : vector<8x128xf32>
    %1435 = arith.addf %1411, %1434 : vector<8x128xf32>
    %c1_1081 = arith.constant 1 : index
    %c12_1082 = arith.constant 12 : index
    %c0_1083 = arith.constant 0 : index
    %c0_1084 = arith.constant 0 : index
    %1436 = vector.load %arg4[%c1_1081, %c12_1082, %c0_1083, %c0_1084] : memref<2x25x8x128xbf16, #tpu.memory_space<vmem>>, vector<1x1x8x128xbf16>
    %1437 = vector.shape_cast %1436 : vector<1x1x8x128xbf16> to vector<8x128xbf16>
    %1438 = arith.extf %1437 : vector<8x128xbf16> to vector<8x128xf32>
    %1439 = arith.mulf %1438, %1365 : vector<8x128xf32>
    %1440 = arith.addf %1417, %1439 : vector<8x128xf32>
    %c127_i32_1085 = arith.constant 127 : i32
    %1441 = tpu.dynamic_rotate %1365 by %c127_i32_1085 dim 1 : vector<8x128xf32>, i32 -> vector<8x128xf32>
    %c1_1086 = arith.constant 1 : index
    %c13_1087 = arith.constant 13 : index
    %c0_1088 = arith.constant 0 : index
    %c0_1089 = arith.constant 0 : index
    %1442 = vector.load %arg4[%c1_1086, %c13_1087, %c0_1088, %c0_1089] : memref<2x25x8x128xbf16, #tpu.memory_space<vmem>>, vector<1x1x8x128xbf16>
    %1443 = vector.shape_cast %1442 : vector<1x1x8x128xbf16> to vector<8x128xbf16>
    %1444 = arith.extf %1443 : vector<8x128xbf16> to vector<8x128xf32>
    %1445 = arith.mulf %1444, %1441 : vector<8x128xf32>
    %1446 = arith.addf %1423, %1445 : vector<8x128xf32>
    %c126_i32_1090 = arith.constant 126 : i32
    %1447 = tpu.dynamic_rotate %1365 by %c126_i32_1090 dim 1 : vector<8x128xf32>, i32 -> vector<8x128xf32>
    %c1_1091 = arith.constant 1 : index
    %c14_1092 = arith.constant 14 : index
    %c0_1093 = arith.constant 0 : index
    %c0_1094 = arith.constant 0 : index
    %1448 = vector.load %arg4[%c1_1091, %c14_1092, %c0_1093, %c0_1094] : memref<2x25x8x128xbf16, #tpu.memory_space<vmem>>, vector<1x1x8x128xbf16>
    %1449 = vector.shape_cast %1448 : vector<1x1x8x128xbf16> to vector<8x128xbf16>
    %1450 = arith.extf %1449 : vector<8x128xbf16> to vector<8x128xf32>
    %1451 = arith.mulf %1450, %1447 : vector<8x128xf32>
    %1452 = arith.addf %1429, %1451 : vector<8x128xf32>
    %c122_i32_1095 = arith.constant 122 : i32
    %1453 = tpu.dynamic_rotate %1365 by %c122_i32_1095 dim 1 : vector<8x128xf32>, i32 -> vector<8x128xf32>
    %c1_1096 = arith.constant 1 : index
    %c15_1097 = arith.constant 15 : index
    %c0_1098 = arith.constant 0 : index
    %c0_1099 = arith.constant 0 : index
    %1454 = vector.load %arg4[%c1_1096, %c15_1097, %c0_1098, %c0_1099] : memref<2x25x8x128xbf16, #tpu.memory_space<vmem>>, vector<1x1x8x128xbf16>
    %1455 = vector.shape_cast %1454 : vector<1x1x8x128xbf16> to vector<8x128xbf16>
    %1456 = arith.extf %1455 : vector<8x128xbf16> to vector<8x128xf32>
    %1457 = arith.mulf %1456, %1453 : vector<8x128xf32>
    %1458 = arith.addf %1435, %1457 : vector<8x128xf32>
    %c121_i32_1100 = arith.constant 121 : i32
    %1459 = tpu.dynamic_rotate %1365 by %c121_i32_1100 dim 1 : vector<8x128xf32>, i32 -> vector<8x128xf32>
    %c1_1101 = arith.constant 1 : index
    %c16_1102 = arith.constant 16 : index
    %c0_1103 = arith.constant 0 : index
    %c0_1104 = arith.constant 0 : index
    %1460 = vector.load %arg4[%c1_1101, %c16_1102, %c0_1103, %c0_1104] : memref<2x25x8x128xbf16, #tpu.memory_space<vmem>>, vector<1x1x8x128xbf16>
    %1461 = vector.shape_cast %1460 : vector<1x1x8x128xbf16> to vector<8x128xbf16>
    %1462 = arith.extf %1461 : vector<8x128xbf16> to vector<8x128xf32>
    %1463 = arith.mulf %1462, %1459 : vector<8x128xf32>
    %1464 = arith.addf %1440, %1463 : vector<8x128xf32>
    %c120_i32_1105 = arith.constant 120 : i32
    %1465 = tpu.dynamic_rotate %1365 by %c120_i32_1105 dim 1 : vector<8x128xf32>, i32 -> vector<8x128xf32>
    %c1_1106 = arith.constant 1 : index
    %c17_1107 = arith.constant 17 : index
    %c0_1108 = arith.constant 0 : index
    %c0_1109 = arith.constant 0 : index
    %1466 = vector.load %arg4[%c1_1106, %c17_1107, %c0_1108, %c0_1109] : memref<2x25x8x128xbf16, #tpu.memory_space<vmem>>, vector<1x1x8x128xbf16>
    %1467 = vector.shape_cast %1466 : vector<1x1x8x128xbf16> to vector<8x128xbf16>
    %1468 = arith.extf %1467 : vector<8x128xbf16> to vector<8x128xf32>
    %1469 = arith.mulf %1468, %1465 : vector<8x128xf32>
    %1470 = arith.addf %1446, %1469 : vector<8x128xf32>
    %c119_i32_1110 = arith.constant 119 : i32
    %1471 = tpu.dynamic_rotate %1365 by %c119_i32_1110 dim 1 : vector<8x128xf32>, i32 -> vector<8x128xf32>
    %c1_1111 = arith.constant 1 : index
    %c18_1112 = arith.constant 18 : index
    %c0_1113 = arith.constant 0 : index
    %c0_1114 = arith.constant 0 : index
    %1472 = vector.load %arg4[%c1_1111, %c18_1112, %c0_1113, %c0_1114] : memref<2x25x8x128xbf16, #tpu.memory_space<vmem>>, vector<1x1x8x128xbf16>
    %1473 = vector.shape_cast %1472 : vector<1x1x8x128xbf16> to vector<8x128xbf16>
    %1474 = arith.extf %1473 : vector<8x128xbf16> to vector<8x128xf32>
    %1475 = arith.mulf %1474, %1471 : vector<8x128xf32>
    %1476 = arith.addf %1452, %1475 : vector<8x128xf32>
    %c118_i32_1115 = arith.constant 118 : i32
    %1477 = tpu.dynamic_rotate %1365 by %c118_i32_1115 dim 1 : vector<8x128xf32>, i32 -> vector<8x128xf32>
    %c1_1116 = arith.constant 1 : index
    %c19_1117 = arith.constant 19 : index
    %c0_1118 = arith.constant 0 : index
    %c0_1119 = arith.constant 0 : index
    %1478 = vector.load %arg4[%c1_1116, %c19_1117, %c0_1118, %c0_1119] : memref<2x25x8x128xbf16, #tpu.memory_space<vmem>>, vector<1x1x8x128xbf16>
    %1479 = vector.shape_cast %1478 : vector<1x1x8x128xbf16> to vector<8x128xbf16>
    %1480 = arith.extf %1479 : vector<8x128xbf16> to vector<8x128xf32>
    %1481 = arith.mulf %1480, %1477 : vector<8x128xf32>
    %1482 = arith.addf %1458, %1481 : vector<8x128xf32>
    %c114_i32_1120 = arith.constant 114 : i32
    %1483 = tpu.dynamic_rotate %1365 by %c114_i32_1120 dim 1 : vector<8x128xf32>, i32 -> vector<8x128xf32>
    %c1_1121 = arith.constant 1 : index
    %c20_1122 = arith.constant 20 : index
    %c0_1123 = arith.constant 0 : index
    %c0_1124 = arith.constant 0 : index
    %1484 = vector.load %arg4[%c1_1121, %c20_1122, %c0_1123, %c0_1124] : memref<2x25x8x128xbf16, #tpu.memory_space<vmem>>, vector<1x1x8x128xbf16>
    %1485 = vector.shape_cast %1484 : vector<1x1x8x128xbf16> to vector<8x128xbf16>
    %1486 = arith.extf %1485 : vector<8x128xbf16> to vector<8x128xf32>
    %1487 = arith.mulf %1486, %1483 : vector<8x128xf32>
    %1488 = arith.addf %1464, %1487 : vector<8x128xf32>
    %c113_i32_1125 = arith.constant 113 : i32
    %1489 = tpu.dynamic_rotate %1365 by %c113_i32_1125 dim 1 : vector<8x128xf32>, i32 -> vector<8x128xf32>
    %c1_1126 = arith.constant 1 : index
    %c21_1127 = arith.constant 21 : index
    %c0_1128 = arith.constant 0 : index
    %c0_1129 = arith.constant 0 : index
    %1490 = vector.load %arg4[%c1_1126, %c21_1127, %c0_1128, %c0_1129] : memref<2x25x8x128xbf16, #tpu.memory_space<vmem>>, vector<1x1x8x128xbf16>
    %1491 = vector.shape_cast %1490 : vector<1x1x8x128xbf16> to vector<8x128xbf16>
    %1492 = arith.extf %1491 : vector<8x128xbf16> to vector<8x128xf32>
    %1493 = arith.mulf %1492, %1489 : vector<8x128xf32>
    %1494 = arith.addf %1470, %1493 : vector<8x128xf32>
    %c112_i32_1130 = arith.constant 112 : i32
    %1495 = tpu.dynamic_rotate %1365 by %c112_i32_1130 dim 1 : vector<8x128xf32>, i32 -> vector<8x128xf32>
    %c1_1131 = arith.constant 1 : index
    %c22_1132 = arith.constant 22 : index
    %c0_1133 = arith.constant 0 : index
    %c0_1134 = arith.constant 0 : index
    %1496 = vector.load %arg4[%c1_1131, %c22_1132, %c0_1133, %c0_1134] : memref<2x25x8x128xbf16, #tpu.memory_space<vmem>>, vector<1x1x8x128xbf16>
    %1497 = vector.shape_cast %1496 : vector<1x1x8x128xbf16> to vector<8x128xbf16>
    %1498 = arith.extf %1497 : vector<8x128xbf16> to vector<8x128xf32>
    %1499 = arith.mulf %1498, %1495 : vector<8x128xf32>
    %1500 = arith.addf %1476, %1499 : vector<8x128xf32>
    %c111_i32_1135 = arith.constant 111 : i32
    %1501 = tpu.dynamic_rotate %1365 by %c111_i32_1135 dim 1 : vector<8x128xf32>, i32 -> vector<8x128xf32>
    %c1_1136 = arith.constant 1 : index
    %c23_1137 = arith.constant 23 : index
    %c0_1138 = arith.constant 0 : index
    %c0_1139 = arith.constant 0 : index
    %1502 = vector.load %arg4[%c1_1136, %c23_1137, %c0_1138, %c0_1139] : memref<2x25x8x128xbf16, #tpu.memory_space<vmem>>, vector<1x1x8x128xbf16>
    %1503 = vector.shape_cast %1502 : vector<1x1x8x128xbf16> to vector<8x128xbf16>
    %1504 = arith.extf %1503 : vector<8x128xbf16> to vector<8x128xf32>
    %1505 = arith.mulf %1504, %1501 : vector<8x128xf32>
    %1506 = arith.addf %1482, %1505 : vector<8x128xf32>
    %c110_i32_1140 = arith.constant 110 : i32
    %1507 = tpu.dynamic_rotate %1365 by %c110_i32_1140 dim 1 : vector<8x128xf32>, i32 -> vector<8x128xf32>
    %c1_1141 = arith.constant 1 : index
    %c24_1142 = arith.constant 24 : index
    %c0_1143 = arith.constant 0 : index
    %c0_1144 = arith.constant 0 : index
    %1508 = vector.load %arg4[%c1_1141, %c24_1142, %c0_1143, %c0_1144] : memref<2x25x8x128xbf16, #tpu.memory_space<vmem>>, vector<1x1x8x128xbf16>
    %1509 = vector.shape_cast %1508 : vector<1x1x8x128xbf16> to vector<8x128xbf16>
    %1510 = arith.extf %1509 : vector<8x128xbf16> to vector<8x128xf32>
    %1511 = arith.mulf %1510, %1507 : vector<8x128xf32>
    %1512 = arith.addf %1488, %1511 : vector<8x128xf32>
    %c1_1145 = arith.constant 1 : index
    %c0_1146 = arith.constant 0 : index
    %c0_1147 = arith.constant 0 : index
    %1513 = vector.load %arg5[%c1_1145, %c0_1146, %c0_1147] : memref<2x8x1xf32, #tpu.memory_space<vmem>>, vector<1x8x1xf32>
    %1514 = vector.shape_cast %1513 : vector<1x8x1xf32> to vector<8x1xf32>
    %1515 = arith.addf %1512, %1494 : vector<8x128xf32>
    %1516 = arith.addf %1500, %1506 : vector<8x128xf32>
    %1517 = arith.addf %1515, %1516 : vector<8x128xf32>
    %1518 = vector.broadcast %1514 : vector<8x1xf32> to vector<8x128xf32>
    %1519 = arith.addf %1518, %1517 : vector<8x128xf32>
    %1520 = arith.truncf %1519 : vector<8x128xf32> to vector<8x128xbf16>
    %1521 = arith.truncf %1366 : vector<8x128xf32> to vector<8x128xbf16>
    %cst_1148 = arith.constant dense<0.000000e+00> : vector<128x128xf32>
    %1522 = tpu.matmul %1520, %1521, %cst_1148 {dimension_numbers = #tpu.dot_dimension_numbers<[0], [0], [1], [1], [0, 1, 1, 1], [], []>} : vector<8x128xbf16>, vector<8x128xbf16>, vector<128x128xf32> -> vector<128x128xf32>
    %c1_1149 = arith.constant 1 : index
    %c0_1150 = arith.constant 0 : index
    %c0_1151 = arith.constant 0 : index
    %1523 = vector.load %arg6[%c1_1149, %c0_1150, %c0_1151] : memref<2x128x128xbf16, #tpu.memory_space<vmem>>, vector<1x128x128xbf16>
    %1524 = vector.shape_cast %1523 : vector<1x128x128xbf16> to vector<128x128xbf16>
    %1525 = arith.extf %1524 : vector<128x128xbf16> to vector<128x128xf32>
    %1526 = arith.addf %1522, %1525 : vector<128x128xf32>
    %cst_1152 = arith.constant dense<0xFF800000> : vector<128xf32>
    %1527 = vector.multi_reduction <maximumf>, %1526, %cst_1152 [1] : vector<128x128xf32> to vector<128xf32>
    %1528 = vector.shape_cast %1527 : vector<128xf32> to vector<128x1xf32>
    %1529 = vector.broadcast %1528 : vector<128x1xf32> to vector<128x128xf32>
    %1530 = arith.subf %1526, %1529 : vector<128x128xf32>
    %1531 = math.exp %1530 : vector<128x128xf32>
    %cst_1153 = arith.constant dense<0.000000e+00> : vector<128xf32>
    %1532 = vector.multi_reduction <add>, %1531, %cst_1153 [1] : vector<128x128xf32> to vector<128xf32>
    %1533 = vector.shape_cast %1532 : vector<128xf32> to vector<128x1xf32>
    %1534 = tpu.reciprocal %1533 {approx = true} : vector<128x1xf32> -> vector<128x1xf32>
    %1535 = vector.broadcast %1534 : vector<128x1xf32> to vector<128x128xf32>
    %1536 = arith.mulf %1531, %1535 : vector<128x128xf32>
    %1537 = arith.truncf %1367 : vector<32x128xf32> to vector<32x128xbf16>
    %1538 = arith.truncf %1536 : vector<128x128xf32> to vector<128x128xbf16>
    %cst_1154 = arith.constant dense<0.000000e+00> : vector<32x128xf32>
    %1539 = tpu.matmul %1537, %1538, %cst_1154 {dimension_numbers = #tpu.dot_dimension_numbers<[1], [1], [0], [0], [0, 0, 1, 0], [], []>} : vector<32x128xbf16>, vector<128x128xbf16>, vector<32x128xf32> -> vector<32x128xf32>
    %c1_1155 = arith.constant 1 : index
    %c0_1156 = arith.constant 0 : index
    %c0_1157 = arith.constant 0 : index
    %1540 = vector.load %arg7[%c1_1155, %c0_1156, %c0_1157] : memref<2x64x32xf32, #tpu.memory_space<vmem>>, vector<1x64x32xf32>
    %1541 = vector.shape_cast %1540 : vector<1x64x32xf32> to vector<64x32xf32>
    %cst_1158 = arith.constant 0.000000e+00 : f32
    %1542 = vector.broadcast %cst_1158 : f32 to vector<32x128xf32>
    %1543 = arith.maximumf %1539, %1542 : vector<32x128xf32>
    %cst_1159 = arith.constant dense<0.000000e+00> : vector<64x128xf32>
    %1544 = tpu.matmul %1541, %1543, %cst_1159 {dimension_numbers = #tpu.dot_dimension_numbers<[1], [0], [0], [1], [0, 0, 1, 1], [], []>} : vector<64x32xf32>, vector<32x128xf32>, vector<64x128xf32> -> vector<64x128xf32>
    %1545 = arith.addf %1354, %1544 : vector<64x128xf32>
    %c0_1160 = arith.constant 0 : index
    %c0_1161 = arith.constant 0 : index
    %1546 = vector.load %arg8[%c0_1160, %c0_1161] : memref<64x1xf32, #tpu.memory_space<vmem>>, vector<64x1xf32>
    %1547 = vector.broadcast %1546 : vector<64x1xf32> to vector<64x128xf32>
    %1548 = arith.addf %1545, %1547 : vector<64x128xf32>
    %c3_1162 = arith.constant 3 : index
    %c0_1163 = arith.constant 0 : index
    %c0_1164 = arith.constant 0 : index
    %1549 = vector.load %arg9[%c3_1162, %c0_1163, %c0_1164] : memref<4x64x128xf32, #tpu.memory_space<vmem>>, vector<1x64x128xf32>
    %1550 = vector.shape_cast %1549 : vector<1x64x128xf32> to vector<64x128xf32>
    %1551 = vector.shape_cast %1548 : vector<64x128xf32> to vector<1x64x128xf32>
    tpu.vector_store %arg9[%c3_1162, %c0_1163, %c0_1164], %1551 {strides = array<i32>} : memref<4x64x128xf32, #tpu.memory_space<vmem>>, vector<1x64x128xf32>,
    return
  }
  func.func @transform_0(%arg0: i32) -> (i32, i32, i32) {
    %c0_i32 = arith.constant 0 : i32
    %c0_i32_0 = arith.constant 0 : i32
    %c0_i32_1 = arith.constant 0 : i32
    return %arg0, %c0_i32, %c0_i32_0 : i32, i32, i32
  }
  func.func @transform_1(%arg0: i32) -> (i32, i32, i32) {
    %c0_i32 = arith.constant 0 : i32
    %c0_i32_0 = arith.constant 0 : i32
    %c0_i32_1 = arith.constant 0 : i32
    %c0_i32_2 = arith.constant 0 : i32
    return %c0_i32, %c0_i32_0, %c0_i32_1 : i32, i32, i32
  }
  func.func @transform_2(%arg0: i32) -> (i32, i32, i32) {
    %c0_i32 = arith.constant 0 : i32
    %c0_i32_0 = arith.constant 0 : i32
    %c0_i32_1 = arith.constant 0 : i32
    %c0_i32_2 = arith.constant 0 : i32
    return %c0_i32, %c0_i32_0, %c0_i32_1 : i32, i32, i32
  }
  func.func @transform_3(%arg0: i32) -> (i32, i32, i32, i32) {
    %c0_i32 = arith.constant 0 : i32
    %c0_i32_0 = arith.constant 0 : i32
    %c0_i32_1 = arith.constant 0 : i32
    %c0_i32_2 = arith.constant 0 : i32
    %c0_i32_3 = arith.constant 0 : i32
    return %c0_i32, %c0_i32_0, %c0_i32_1, %c0_i32_2 : i32, i32, i32, i32
  }
  func.func @transform_4(%arg0: i32) -> (i32, i32, i32) {
    %c0_i32 = arith.constant 0 : i32
    %c0_i32_0 = arith.constant 0 : i32
    %c0_i32_1 = arith.constant 0 : i32
    %c0_i32_2 = arith.constant 0 : i32
    return %c0_i32, %c0_i32_0, %c0_i32_1 : i32, i32, i32
  }
  func.func @transform_5(%arg0: i32) -> (i32, i32, i32) {
    %c0_i32 = arith.constant 0 : i32
    %c0_i32_0 = arith.constant 0 : i32
    %c0_i32_1 = arith.constant 0 : i32
    %c0_i32_2 = arith.constant 0 : i32
    return %c0_i32, %c0_i32_0, %c0_i32_1 : i32, i32, i32
  }
  func.func @transform_6(%arg0: i32) -> (i32, i32, i32) {
    %c0_i32 = arith.constant 0 : i32
    %c0_i32_0 = arith.constant 0 : i32
    %c0_i32_1 = arith.constant 0 : i32
    %c0_i32_2 = arith.constant 0 : i32
    return %c0_i32, %c0_i32_0, %c0_i32_1 : i32, i32, i32
  }
  func.func @transform_7(%arg0: i32) -> (i32, i32) {
    %c0_i32 = arith.constant 0 : i32
    %c0_i32_0 = arith.constant 0 : i32
    %c0_i32_1 = arith.constant 0 : i32
    return %c0_i32, %c0_i32_0 : i32, i32
  }
  func.func @transform_8(%arg0: i32) -> (i32, i32, i32) {
    %c0_i32 = arith.constant 0 : i32
    %c0_i32_0 = arith.constant 0 : i32
    %c0_i32_1 = arith.constant 0 : i32
    return %arg0, %c0_i32, %c0_i32_0 : i32, i32, i32
  }
}

</mosaic_0001>

<llo_original>
// kernel: tpu_custom_call.1
$region0: #{tpu_custom_call.1}
  #allocation0 [shape = 'u32[]', space=smem, size = 0x4, offset = 0x4, fixed_abs, tag = 'smem constant byte address 0x4 - core index']
  #allocation1 [shape = 'u32[72,128]{1,0:T(1,128)}', space=vmem, size = 0x9000, scoped, tag = 'internal scratch']
  %s0 = inlined_call_operand.hbm [shape: f32[8,64,128], index: 0, kind: input, shape index: {}]
  %s1 = inlined_call_operand.vmem [shape: f32[2,48,32], index: 1, kind: input, shape index: {}]
  %s2 = inlined_call_operand.vmem [shape: f32[2,48,1], index: 2, kind: input, shape index: {}]
  %s3 = inlined_call_operand.vmem [shape: bf16[2,25,8,128], index: 3, kind: input, shape index: {}]
  %s4 = inlined_call_operand.vmem [shape: f32[2,8,1], index: 4, kind: input, shape index: {}]
  %s5 = inlined_call_operand.vmem [shape: bf16[2,128,128], index: 5, kind: input, shape index: {}]
  %s6 = inlined_call_operand.vmem [shape: f32[2,64,32], index: 6, kind: input, shape index: {}]
  %s7 = inlined_call_operand.vmem [shape: f32[64,1], index: 7, kind: input, shape index: {}]
  %s8 = inlined_call_operand.hbm [shape: f32[8,64,128], index: 8, kind: output, shape index: {}]
  %s9 = sld [smem:[#allocation0]]
  $region69: #{tpu_custom_call.1} parent=0
    _
  %s11 = ssub.s32 1, %s9
  %s12 = scalar_select 0, %s11, %s9
  $region1: #{tpu_custom_call.1} parent=0
    #allocation2 [shape = 'u8[262144]{0}', space=vmem, size = 0x40000, scoped, tag = 'input window, operand 0']
    #allocation3 [shape = 's32[2]{0}', space=sflag, size = 0x8, scoped, tag = 'scoped memory for tpu_custom_call.1']
    #allocation4 [shape = 's32[2]{0}', space=sflag, size = 0x8, scoped, tag = 'scoped memory for tpu_custom_call.1']
    #allocation5 [shape = 'u8[262144]{0}', space=vmem, size = 0x40000, scoped, tag = 'output window, operand 0']
    %13 = vsyncpa [#allocation3], 0
    %s14 = scalar_lea.sflag [#allocation3], 1
    %15 = vsyncpa %s14, 0
    %16 = vsyncpa [#allocation4], 0
    %s17 = scalar_lea.sflag [#allocation4], 1
    %18 = vsyncpa %s17, 0
    loop: start=0, step=1, limit=4
    $region2: #{tpu_custom_call.1} parent=1 // loop_pre_header
      _
    $region3: #{tpu_custom_call.1} parent=1 // loop_header
      %s20 = sphi 0, %s24
      %p21 = scmp.ge.s32.totalorder %s20, 4
      %s30 = sphi 0, %s32
      %s33 = sphi 0, %s30
      %s34 = sphi 0, %s33
      %s50 = sphi 0, %s34
      %s54 = sphi 0, %s54
      %s56 = sphi 0, %s54
      %s57 = sphi 0, %s56
      %s71 = sphi 0, %s57
      %s75 = sphi 0, %s75
      %s77 = sphi 0, %s75
      %s78 = sphi 0, %s77
      %s92 = sphi 0, %s78
      %s96 = sphi 0, %s96
      %s98 = sphi 0, %s96
      %s99 = sphi 0, %s98
      %s113 = sphi 0, %s99
      %s117 = sphi 0, %s117
      %s119 = sphi 0, %s117
      %s120 = sphi 0, %s119
      %s134 = sphi 0, %s120
      %s138 = sphi 0, %s138
      %s140 = sphi 0, %s138
      %s141 = sphi 0, %s140
      %s155 = sphi 0, %s141
      %s159 = sphi 0, %s159
      %s161 = sphi 0, %s159
      %s162 = sphi 0, %s161
      %s176 = sphi 0, %s162
      %s180 = sphi 0, %s180
      %s182 = sphi 0, %s180
      %s183 = sphi 0, %s182
      %s197 = sphi 0, %s183
      %s203 = sphi 0, %s205
      %s206 = sphi 0, %s203
      %s207 = sphi 0, %s206
      %s223 = sphi 0, %s207
    $region4: #{tpu_custom_call.1} parent=1 // loop_header_branch
      %23 = sbr.rel (%p21) target = $region8
    $region5: #{tpu_custom_call.1} parent=1 // loop_body
      %s25 = ssub.s32 %s20, 1
      %s26 = ssub.s32 %s20, 2
      %s27 = sadd.s32 %s20, 1
      %s28 = ssub.s32 %s20, %s27
      %p29 = scmp.eq.s32.totalorder %s28, 0
      %s31 = sadd.s32 %s30, 1
      %s32 = scalar_select %p29, %s30, %s31
      %p35 = pneg %p29
      %p36 = scmp.eq.s32.totalorder %s20, 1
      %p37 = por %p35, %p36
      %p38 = scmp.ne.s32.totalorder %s30, %s33
      %p39 = scmp.eq.s32.totalorder %s20, 0
      %p40 = por %p38, %p39
      %p41 = scmp.ne.s32.totalorder %s30, %s33
      %p42 = scmp.eq.s32.totalorder %s25, 1
      %p43 = por %p41, %p42
      %p44 = scmp.ne.s32.totalorder %s33, %s34
      %p45 = scmp.eq.s32.totalorder %s25, 0
      %p46 = por %p44, %p45
      %p47 = scmp.ne.s32.totalorder %s33, %s34
      %p48 = scmp.eq.s32.totalorder %s26, 1
      %p49 = por %p47, %p48
      %p51 = scmp.ne.s32.totalorder %s34, %s50
      %p52 = scmp.eq.s32.totalorder %s26, 0
      %p53 = por %p51, %p52
      %s55 = sadd.s32 %s54, 1
      %p58 = scmp.eq.s32.totalorder %s20, 1
      %p59 = scmp.ne.s32.totalorder %s54, %s56
      %p60 = scmp.eq.s32.totalorder %s20, 0
      %p61 = por %p59, %p60
      %p62 = scmp.ne.s32.totalorder %s54, %s56
      %p63 = scmp.eq.s32.totalorder %s25, 1
      %p64 = por %p62, %p63
      %p65 = scmp.ne.s32.totalorder %s56, %s57
      %p66 = scmp.eq.s32.totalorder %s25, 0
      %p67 = por %p65, %p66
      %p68 = scmp.ne.s32.totalorder %s56, %s57
      %p69 = scmp.eq.s32.totalorder %s26, 1
      %p70 = por %p68, %p69
      %p72 = scmp.ne.s32.totalorder %s57, %s71
      %p73 = scmp.eq.s32.totalorder %s26, 0
      %p74 = por %p72, %p73
      %s76 = sadd.s32 %s75, 1
      %p79 = scmp.eq.s32.totalorder %s20, 1
      %p80 = scmp.ne.s32.totalorder %s75, %s77
      %p81 = scmp.eq.s32.totalorder %s20, 0
      %p82 = por %p80, %p81
      %p83 = scmp.ne.s32.totalorder %s75, %s77
      %p84 = scmp.eq.s32.totalorder %s25, 1
      %p85 = por %p83, %p84
      %p86 = scmp.ne.s32.totalorder %s77, %s78
      %p87 = scmp.eq.s32.totalorder %s25, 0
      %p88 = por %p86, %p87
      %p89 = scmp.ne.s32.totalorder %s77, %s78
      %p90 = scmp.eq.s32.totalorder %s26, 1
      %p91 = por %p89, %p90
      %p93 = scmp.ne.s32.totalorder %s78, %s92
      %p94 = scmp.eq.s32.totalorder %s26, 0
      %p95 = por %p93, %p94
      %s97 = sadd.s32 %s96, 1
      %p100 = scmp.eq.s32.totalorder %s20, 1
      %p101 = scmp.ne.s32.totalorder %s96, %s98
      %p102 = scmp.eq.s32.totalorder %s20, 0
      %p103 = por %p101, %p102
      %p104 = scmp.ne.s32.totalorder %s96, %s98
      %p105 = scmp.eq.s32.totalorder %s25, 1
      %p106 = por %p104, %p105
      %p107 = scmp.ne.s32.totalorder %s98, %s99
      %p108 = scmp.eq.s32.totalorder %s25, 0
      %p109 = por %p107, %p108
      %p110 = scmp.ne.s32.totalorder %s98, %s99
      %p111 = scmp.eq.s32.totalorder %s26, 1
      %p112 = por %p110, %p111
      %p114 = scmp.ne.s32.totalorder %s99, %s113
      %p115 = scmp.eq.s32.totalorder %s26, 0
      %p116 = por %p114, %p115
      %s118 = sadd.s32 %s117, 1
      %p121 = scmp.eq.s32.totalorder %s20, 1
      %p122 = scmp.ne.s32.totalorder %s117, %s119
      %p123 = scmp.eq.s32.totalorder %s20, 0
      %p124 = por %p122, %p123
      %p125 = scmp.ne.s32.totalorder %s117, %s119
      %p126 = scmp.eq.s32.totalorder %s25, 1
      %p127 = por %p125, %p126
      %p128 = scmp.ne.s32.totalorder %s119, %s120
      %p129 = scmp.eq.s32.totalorder %s25, 0
      %p130 = por %p128, %p129
      %p131 = scmp.ne.s32.totalorder %s119, %s120
      %p132 = scmp.eq.s32.totalorder %s26, 1
      %p133 = por %p131, %p132
      %p135 = scmp.ne.s32.totalorder %s120, %s134
      %p136 = scmp.eq.s32.totalorder %s26, 0
      %p137 = por %p135, %p136
      %s139 = sadd.s32 %s138, 1
      %p142 = scmp.eq.s32.totalorder %s20, 1
      %p143 = scmp.ne.s32.totalorder %s138, %s140
      %p144 = scmp.eq.s32.totalorder %s20, 0
      %p145 = por %p143, %p144
      %p146 = scmp.ne.s32.totalorder %s138, %s140
      %p147 = scmp.eq.s32.totalorder %s25, 1
      %p148 = por %p146, %p147
      %p149 = scmp.ne.s32.totalorder %s140, %s141
      %p150 = scmp.eq.s32.totalorder %s25, 0
      %p151 = por %p149, %p150
      %p152 = scmp.ne.s32.totalorder %s140, %s141
      %p153 = scmp.eq.s32.totalorder %s26, 1
      %p154 = por %p152, %p153
      %p156 = scmp.ne.s32.totalorder %s141, %s155
      %p157 = scmp.eq.s32.totalorder %s26, 0
      %p158 = por %p156, %p157
      %s160 = sadd.s32 %s159, 1
      %p163 = scmp.eq.s32.totalorder %s20, 1
      %p164 = scmp.ne.s32.totalorder %s159, %s161
      %p165 = scmp.eq.s32.totalorder %s20, 0
      %p166 = por %p164, %p165
      %p167 = scmp.ne.s32.totalorder %s159, %s161
      %p168 = scmp.eq.s32.totalorder %s25, 1
      %p169 = por %p167, %p168
      %p170 = scmp.ne.s32.totalorder %s161, %s162
      %p171 = scmp.eq.s32.totalorder %s25, 0
      %p172 = por %p170, %p171
      %p173 = scmp.ne.s32.totalorder %s161, %s162
      %p174 = scmp.eq.s32.totalorder %s26, 1
      %p175 = por %p173, %p174
      %p177 = scmp.ne.s32.totalorder %s162, %s176
      %p178 = scmp.eq.s32.totalorder %s26, 0
      %p179 = por %p177, %p178
      %s181 = sadd.s32 %s180, 1
      %p184 = scmp.eq.s32.totalorder %s20, 1
      %p185 = scmp.ne.s32.totalorder %s180, %s182
      %p186 = scmp.eq.s32.totalorder %s20, 0
      %p187 = por %p185, %p186
      %p188 = scmp.ne.s32.totalorder %s180, %s182
      %p189 = scmp.eq.s32.totalorder %s25, 1
      %p190 = por %p188, %p189
      %p191 = scmp.ne.s32.totalorder %s182, %s183
      %p192 = scmp.eq.s32.totalorder %s25, 0
      %p193 = por %p191, %p192
      %p194 = scmp.ne.s32.totalorder %s182, %s183
      %p195 = scmp.eq.s32.totalorder %s26, 1
      %p196 = por %p194, %p195
      %p198 = scmp.ne.s32.totalorder %s183, %s197
      %p199 = scmp.eq.s32.totalorder %s26, 0
      %p200 = por %p198, %p199
      %s201 = ssub.s32 %s20, %s27
      %p202 = scmp.eq.s32.totalorder %s201, 0
      %s204 = sadd.s32 %s203, 1
      %s205 = scalar_select %p202, %s203, %s204
      %p208 = pneg %p202
      %p209 = scmp.eq.s32.totalorder %s20, 1
      %p210 = por %p208, %p209
      %p211 = scmp.ne.s32.totalorder %s203, %s206
      %p212 = scmp.eq.s32.totalorder %s20, 0
      %p213 = por %p211, %p212
      %p214 = scmp.ne.s32.totalorder %s203, %s206
      %p215 = scmp.eq.s32.totalorder %s25, 1
      %p216 = por %p214, %p215
      %p217 = scmp.ne.s32.totalorder %s206, %s207
      %p218 = scmp.eq.s32.totalorder %s25, 0
      %p219 = por %p217, %p218
      %p220 = scmp.ne.s32.totalorder %s206, %s207
      %p221 = scmp.eq.s32.totalorder %s26, 1
      %p222 = por %p220, %p221
      %p224 = scmp.ne.s32.totalorder %s207, %s223
      %p225 = scmp.eq.s32.totalorder %s26, 0
      %p226 = por %p224, %p225
      %p227 = scmp.le.s32.totalorder 1, %s20
      %p228 = scmp.lt.s32.totalorder %s20, 3
      %p229 = pnand %p227, %p228
      %p230 = pneg %p229
      // Predicated region
      $region9: #{tpu_custom_call.1} parent=5 // pred_check
        _
      $region10: #{tpu_custom_call.1} parent=5 // pred_check_branch
        %232 = sbr.rel (%p229) target = $region12
      $region11: #{tpu_custom_call.1} parent=5 // pred_region
        %s233 = ssub.s32 %s20, 1
        // Predicated region
        $region13: #{tpu_custom_call.1} parent=11 // pred_check
          %p234 = pneg %p67
        $region14: #{tpu_custom_call.1} parent=11 // pred_check_branch
          %236 = sbr.rel (%p234) target = $region16
        $region15: #{tpu_custom_call.1} parent=11 // pred_region
          _
        $region16: #{tpu_custom_call.1} parent=11 // pred_fallthru
          _
        // Predicated region
        $region17: #{tpu_custom_call.1} parent=11 // pred_check
          %p237 = pneg %p88
        $region18: #{tpu_custom_call.1} parent=11 // pred_check_branch
          %239 = sbr.rel (%p237) target = $region20
        $region19: #{tpu_custom_call.1} parent=11 // pred_region
          _
        $region20: #{tpu_custom_call.1} parent=11 // pred_fallthru
          _
        // Predicated region
        $region21: #{tpu_custom_call.1} parent=11 // pred_check
          %p240 = pneg %p109
        $region22: #{tpu_custom_call.1} parent=11 // pred_check_branch
          %242 = sbr.rel (%p240) target = $region24
        $region23: #{tpu_custom_call.1} parent=11 // pred_region
          _
        $region24: #{tpu_custom_call.1} parent=11 // pred_fallthru
          _
        // Predicated region
        $region25: #{tpu_custom_call.1} parent=11 // pred_check
          %p243 = pneg %p130
        $region26: #{tpu_custom_call.1} parent=11 // pred_check_branch
          %245 = sbr.rel (%p243) target = $region28
        $region27: #{tpu_custom_call.1} parent=11 // pred_region
          _
        $region28: #{tpu_custom_call.1} parent=11 // pred_fallthru
          _
        // Predicated region
        $region29: #{tpu_custom_call.1} parent=11 // pred_check
          %p246 = pneg %p151
        $region30: #{tpu_custom_call.1} parent=11 // pred_check_branch
          %248 = sbr.rel (%p246) target = $region32
        $region31: #{tpu_custom_call.1} parent=11 // pred_region
          _
        $region32: #{tpu_custom_call.1} parent=11 // pred_fallthru
          _
        // Predicated region
        $region33: #{tpu_custom_call.1} parent=11 // pred_check
          %p249 = pneg %p172
        $region34: #{tpu_custom_call.1} parent=11 // pred_check_branch
          %251 = sbr.rel (%p249) target = $region36
        $region35: #{tpu_custom_call.1} parent=11 // pred_region
          _
        $region36: #{tpu_custom_call.1} parent=11 // pred_fallthru
          _
        // Predicated region
        $region37: #{tpu_custom_call.1} parent=11 // pred_check
          %p252 = pneg %p193
        $region38: #{tpu_custom_call.1} parent=11 // pred_check_branch
          %254 = sbr.rel (%p252) target = $region40
        $region39: #{tpu_custom_call.1} parent=11 // pred_region
          _
        $region40: #{tpu_custom_call.1} parent=11 // pred_fallthru
          _
      $region12: #{tpu_custom_call.1} parent=5 // pred_fallthru
        _
      %p255 = scmp.lt.s32.totalorder %s20, 2
      // Predicated region
      $region41: #{tpu_custom_call.1} parent=5 // pred_check
        %p256 = pneg %p255
      $region42: #{tpu_custom_call.1} parent=5 // pred_check_branch
        %258 = sbr.rel (%p256) target = $region44
      $region43: #{tpu_custom_call.1} parent=5 // pred_region
        // Predicated region
        $region45: #{tpu_custom_call.1} parent=43 // pred_check
          %p259 = pneg %p40
        $region46: #{tpu_custom_call.1} parent=43 // pred_check_branch
          %261 = sbr.rel (%p259) target = $region48
        $region47: #{tpu_custom_call.1} parent=43 // pred_region
          %s262 = sand.u32 %s30, 1
          %s263 = scalar_lea.sflag [#allocation3], %s262
          %s264 = sand.u32 %s30, 1
          %s265 = smul.addr %s264, 256
          %s266 = scalar_lea.vmem [#allocation2], %s265
          %s267 = smul.u32 4, %s20
          %269 = vsyncadd %s263, 0
          %s270 = smul.addr %s267, 8
          %s271 = smul.addr %s270, 8
          %s272 = scalar_lea.hbm %s0, %s271
          %s273 = sshll.u32 %s272, 4
          %s274 = int_to_ptr.hbm [resolvable:$true] %s273
          %s275 = sshll.u32 %s266, 4
          %s276 = int_to_ptr.vmem [resolvable:$true] %s275
          %281 = dma.hbm_to_vmem [thread:$0]  %s274, 4096, %s276, %s263, 128, 128, 8
        $region48: #{tpu_custom_call.1} parent=43 // pred_fallthru
          _
      $region44: #{tpu_custom_call.1} parent=5 // pred_fallthru
        _
      %p282 = scmp.le.s32.totalorder 1, %s20
      %p283 = scmp.lt.s32.totalorder %s20, 3
      %p284 = pnand %p282, %p283
      %p285 = pneg %p284
      // Predicated region
      $region49: #{tpu_custom_call.1} parent=5 // pred_check
        _
      $region50: #{tpu_custom_call.1} parent=5 // pred_check_branch
        %287 = sbr.rel (%p284) target = $region52
      $region51: #{tpu_custom_call.1} parent=5 // pred_region
        %s288 = ssub.s32 %s20, 1
        %s289 = sand.u32 %s33, 1
        %s290 = scalar_lea.sflag [#allocation3], %s289
        %s291 = sand.u32 %s33, 1
        %s292 = smul.addr %s291, 256
        %s293 = scalar_lea.vmem [#allocation2], %s292
        // Predicated region
        $region53: #{tpu_custom_call.1} parent=51 // pred_check
          %p294 = pneg %p46
        $region54: #{tpu_custom_call.1} parent=51 // pred_check_branch
          %296 = sbr.rel (%p294) target = $region56
        $region55: #{tpu_custom_call.1} parent=51 // pred_region
          %298 = dma.done %s290, 4096
        $region56: #{tpu_custom_call.1} parent=51 // pred_fallthru
          _
        %s299 = sand.u32 %s33, 1
        %s300 = scalar_lea.sflag [#allocation3], %s299
        %s301 = sand.u32 %s33, 1
        %s302 = smul.addr %s301, 256
        %s303 = scalar_lea.vmem [#allocation2], %s302
        %p304 = pneg %p46
        %p305 = pneg %p43
        %p306 = pneg %p67
        %p307 = pneg %p64
        %p308 = pneg %p88
        %p309 = pneg %p85
        %p310 = pneg %p109
        %p311 = pneg %p106
        %p312 = pneg %p130
        %p313 = pneg %p127
        %p314 = pneg %p151
        %p315 = pneg %p148
        %p316 = pneg %p172
        %p317 = pneg %p169
        %p318 = pneg %p193
        %p319 = pneg %p190
        %p320 = pneg %p219
        %p321 = pneg %p216
        %s322 = sand.u32 %s206, 1
        %s323 = scalar_lea.sflag [#allocation4], %s322
        %s324 = sand.u32 %s206, 1
        %s325 = smul.addr %s324, 256
        %s326 = scalar_lea.vmem [#allocation5], %s325
        %s327 = smul.u32 4, %s25
        %s328 = smul.u32 4, %s25
        %v330 = vld [vmem:[%s293] sm:$0xff]
        %v331 = vld [vmem:[%s293 + $0x8] sm:$0xff]
        %v332 = vld [vmem:[%s293 + $0x10] sm:$0xff]
        %v333 = vld [vmem:[%s293 + $0x18] sm:$0xff]
        %v334 = vld [vmem:[%s1] sm:$0xff]
        %v335 = vld [vmem:[%s1 + $0x8] sm:$0xff]
        %v336 = vld [vmem:[%s1 + $0x10] sm:$0xff]
        %v337 = vld [vmem:[%s1 + $0x18] sm:$0xff]
        %v338 = vld [vmem:[%s1 + $0x20] sm:$0xff]
        %v339 = vld [vmem:[%s1 + $0x28] sm:$0xff]
        %v340 = vld [vmem:[%s2] sm:$0xff]
        %v341 = vld [vmem:[%s2 + $0x8] sm:$0xff]
        %v342 = vld [vmem:[%s2 + $0x10] sm:$0xff]
        %v343 = vld [vmem:[%s2 + $0x18] sm:$0xff]
        %v344 = vld [vmem:[%s2 + $0x20] sm:$0xff]
        %v345 = vld [vmem:[%s2 + $0x28] sm:$0xff]
        %347 = vset.pattern.permute.xlu0 0
        %348 = vperm.xlu0 %347, %v340
        %v349 = vpop.permute.xlu0 %348
        %352 = vset.pattern.permute.xlu0 0
        %353 = vperm.xlu0 %352, %v341
        %v354 = vpop.permute.xlu0 %353
        %357 = vset.pattern.permute.xlu0 0
        %358 = vperm.xlu0 %357, %v342
        %v359 = vpop.permute.xlu0 %358
        %362 = vset.pattern.permute.xlu0 0
        %363 = vperm.xlu0 %362, %v343
        %v364 = vpop.permute.xlu0 %363
        %367 = vset.pattern.permute.xlu0 0
        %368 = vperm.xlu0 %367, %v344
        %v369 = vpop.permute.xlu0 %368
        %372 = vset.pattern.permute.xlu0 0
        %373 = vperm.xlu0 %372, %v345
        %v374 = vpop.permute.xlu0 %373
        %vm376 = vcmask 261120
        %v378 = vsel %vm376, %v334, 0
        %v381 = vsel %vm376, %v335, 0
        %v384 = vsel %vm376, %v336, 0
        %v387 = vsel %vm376, %v337, 0
        %v390 = vsel %vm376, %v338, 0
        %v393 = vsel %vm376, %v339, 0
        %395 = vmatpush.msra.mxu0 0.0
        %396 = vmatpush.msra.mxu0 0.0
        %397 = vmatpush.msra.mxu0 0.0
        %398 = vmatpush.msra.mxu0 0.0
        %399 = vmatpush.msra.mxu0 0.0
        %400 = vmatpush.msra.mxu0 0.0
        %401 = vmatpush.msra.mxu0 0.0
        %402 = vmatpush.msra.mxu0 0.0
        %403 = vmatpush.msra.mxu0 0.0
        %404 = vmatpush.msra.mxu0 0.0
        %405 = vmatpush.msra.mxu0 0.0
        %406 = vmatpush.msra.mxu0 0.0
        %407 = vmatpush.msra.mxu0 %v333
        %408 = vmatpush.msra.mxu0 %v332
        %409 = vmatpush.msra.mxu0 %v331
        %410 = vmatpush.msra.mxu0 %v330
        %411 = vmatmul.f32.gmra.mxu0 %v378
        %v412 = vpop.f32.mrf.mxu0
        %v413 = vadd.f32 %v349, %v412
        %414 = vmatmul.f32.gmra.mxu0 %v381
        %v415 = vpop.f32.mrf.mxu0
        %v416 = vadd.f32 %v354, %v415
        %417 = vmatmul.f32.gmra.mxu0 %v384
        %v418 = vpop.f32.mrf.mxu0
        %v419 = vadd.f32 %v359, %v418
        %420 = vmatmul.f32.gmra.mxu0 %v387
        %v421 = vpop.f32.mrf.mxu0
        %v422 = vadd.f32 %v364, %v421
        %423 = vmatmul.f32.gmra.mxu0 %v390
        %v424 = vpop.f32.mrf.mxu0
        %v425 = vadd.f32 %v369, %v424
        %426 = vmatmul.f32.gmra.mxu0 %v393
        %v427 = vpop.f32.mrf.mxu0
        %v428 = vadd.f32 %v374, %v427
        %429 = vdwg.mxu0
        %430 = vrot.lane.b32.xlu0 %v413, 18
        %v431 = vpop.permute.xlu0 %430
        %v432 = vld [vmem:[%s3] sm:$0xf]
        %v433 = vunpack.c.l.bf16 %v432
        %v434 = vmul.f32 %v433, %v431
        %435 = vrot.lane.b32.xlu0 %v413, 17
        %v436 = vpop.permute.xlu0 %435
        %s437 = scalar_lea.vmem %s3, 4
        %v438 = vld [vmem:[%s437] sm:$0xf]
        %v439 = vunpack.c.l.bf16 %v438
        %v440 = vmul.f32 %v439, %v436
        %441 = vrot.lane.b32.xlu0 %v413, 16
        %v442 = vpop.permute.xlu0 %441
        %s443 = scalar_lea.vmem %s3, 8
        %v444 = vld [vmem:[%s443] sm:$0xf]
        %v445 = vunpack.c.l.bf16 %v444
        %v446 = vmul.f32 %v445, %v442
        %447 = vrot.lane.b32.xlu0 %v413, 15
        %v448 = vpop.permute.xlu0 %447
        %s449 = scalar_lea.vmem %s3, 12
        %v450 = vld [vmem:[%s449] sm:$0xf]
        %v451 = vunpack.c.l.bf16 %v450
        %v452 = vmul.f32 %v451, %v448
        %453 = vrot.lane.b32.xlu0 %v413, 14
        %v454 = vpop.permute.xlu0 %453
        %s455 = scalar_lea.vmem %s3, 16
        %v456 = vld [vmem:[%s455] sm:$0xf]
        %v457 = vunpack.c.l.bf16 %v456
        %v458 = vmul.f32 %v457, %v454
        %v459 = vadd.f32 %v434, %v458
        %460 = vrot.lane.b32.xlu0 %v413, 10
        %v461 = vpop.permute.xlu0 %460
        %s462 = scalar_lea.vmem %s3, 20
        %v463 = vld [vmem:[%s462] sm:$0xf]
        %v464 = vunpack.c.l.bf16 %v463
        %v465 = vmul.f32 %v464, %v461
        %v466 = vadd.f32 %v440, %v465
        %467 = vrot.lane.b32.xlu0 %v413, 9
        %v468 = vpop.permute.xlu0 %467
        %s469 = scalar_lea.vmem %s3, 24
        %v470 = vld [vmem:[%s469] sm:$0xf]
        %v471 = vunpack.c.l.bf16 %v470
        %v472 = vmul.f32 %v471, %v468
        %v473 = vadd.f32 %v446, %v472
        %474 = vrot.lane.b32.xlu0 %v413, 8
        %v475 = vpop.permute.xlu0 %474
        %s476 = scalar_lea.vmem %s3, 28
        %v477 = vld [vmem:[%s476] sm:$0xf]
        %v478 = vunpack.c.l.bf16 %v477
        %v479 = vmul.f32 %v478, %v475
        %v480 = vadd.f32 %v452, %v479
        %481 = vrot.lane.b32.xlu0 %v413, 7
        %v482 = vpop.permute.xlu0 %481
        %s483 = scalar_lea.vmem %s3, 32
        %v484 = vld [vmem:[%s483] sm:$0xf]
        %v485 = vunpack.c.l.bf16 %v484
        %v486 = vmul.f32 %v485, %v482
        %v487 = vadd.f32 %v459, %v486
        %488 = vrot.lane.b32.xlu0 %v413, 6
        %v489 = vpop.permute.xlu0 %488
        %s490 = scalar_lea.vmem %s3, 36
        %v491 = vld [vmem:[%s490] sm:$0xf]
        %v492 = vunpack.c.l.bf16 %v491
        %v493 = vmul.f32 %v492, %v489
        %v494 = vadd.f32 %v466, %v493
        %495 = vrot.lane.b32.xlu0 %v413, 2
        %v496 = vpop.permute.xlu0 %495
        %s497 = scalar_lea.vmem %s3, 40
        %v498 = vld [vmem:[%s497] sm:$0xf]
        %v499 = vunpack.c.l.bf16 %v498
        %v500 = vmul.f32 %v499, %v496
        %v501 = vadd.f32 %v473, %v500
        %502 = vrot.lane.b32.xlu0 %v413, 1
        %v503 = vpop.permute.xlu0 %502
        %s504 = scalar_lea.vmem %s3, 44
        %v505 = vld [vmem:[%s504] sm:$0xf]
        %v506 = vunpack.c.l.bf16 %v505
        %v507 = vmul.f32 %v506, %v503
        %v508 = vadd.f32 %v480, %v507
        %s509 = scalar_lea.vmem %s3, 48
        %v510 = vld [vmem:[%s509] sm:$0xf]
        %v511 = vunpack.c.l.bf16 %v510
        %v512 = vmul.f32 %v511, %v413
        %v513 = vadd.f32 %v487, %v512
        %514 = vrot.lane.b32.xlu0 %v413, 127
        %v515 = vpop.permute.xlu0 %514
        %s516 = scalar_lea.vmem %s3, 52
        %v517 = vld [vmem:[%s516] sm:$0xf]
        %v518 = vunpack.c.l.bf16 %v517
        %v519 = vmul.f32 %v518, %v515
        %v520 = vadd.f32 %v494, %v519
        %521 = vrot.lane.b32.xlu0 %v413, 126
        %v522 = vpop.permute.xlu0 %521
        %s523 = scalar_lea.vmem %s3, 56
        %v524 = vld [vmem:[%s523] sm:$0xf]
        %v525 = vunpack.c.l.bf16 %v524
        %v526 = vmul.f32 %v525, %v522
        %v527 = vadd.f32 %v501, %v526
        %528 = vrot.lane.b32.xlu0 %v413, 122
        %v529 = vpop.permute.xlu0 %528
        %s530 = scalar_lea.vmem %s3, 60
        %v531 = vld [vmem:[%s530] sm:$0xf]
        %v532 = vunpack.c.l.bf16 %v531
        %v533 = vmul.f32 %v532, %v529
        %v534 = vadd.f32 %v508, %v533
        %535 = vrot.lane.b32.xlu0 %v413, 121
        %v536 = vpop.permute.xlu0 %535
        %s537 = scalar_lea.vmem %s3, 64
        %v538 = vld [vmem:[%s537] sm:$0xf]
        %v539 = vunpack.c.l.bf16 %v538
        %v540 = vmul.f32 %v539, %v536
        %v541 = vadd.f32 %v513, %v540
        %542 = vrot.lane.b32.xlu0 %v413, 120
        %v543 = vpop.permute.xlu0 %542
        %s544 = scalar_lea.vmem %s3, 68
        %v545 = vld [vmem:[%s544] sm:$0xf]
        %v546 = vunpack.c.l.bf16 %v545
        %v547 = vmul.f32 %v546, %v543
        %v548 = vadd.f32 %v520, %v547
        %549 = vrot.lane.b32.xlu0 %v413, 119
        %v550 = vpop.permute.xlu0 %549
        %s551 = scalar_lea.vmem %s3, 72
        %v552 = vld [vmem:[%s551] sm:$0xf]
        %v553 = vunpack.c.l.bf16 %v552
        %v554 = vmul.f32 %v553, %v550
        %v555 = vadd.f32 %v527, %v554
        %556 = vrot.lane.b32.xlu0 %v413, 118
        %v557 = vpop.permute.xlu0 %556
        %s558 = scalar_lea.vmem %s3, 76
        %v559 = vld [vmem:[%s558] sm:$0xf]
        %v560 = vunpack.c.l.bf16 %v559
        %v561 = vmul.f32 %v560, %v557
        %v562 = vadd.f32 %v534, %v561
        %563 = vrot.lane.b32.xlu0 %v413, 114
        %v564 = vpop.permute.xlu0 %563
        %s565 = scalar_lea.vmem %s3, 80
        %v566 = vld [vmem:[%s565] sm:$0xf]
        %v567 = vunpack.c.l.bf16 %v566
        %v568 = vmul.f32 %v567, %v564
        %v569 = vadd.f32 %v541, %v568
        %570 = vrot.lane.b32.xlu0 %v413, 113
        %v571 = vpop.permute.xlu0 %570
        %s572 = scalar_lea.vmem %s3, 84
        %v573 = vld [vmem:[%s572] sm:$0xf]
        %v574 = vunpack.c.l.bf16 %v573
        %v575 = vmul.f32 %v574, %v571
        %v576 = vadd.f32 %v548, %v575
        %577 = vrot.lane.b32.xlu0 %v413, 112
        %v578 = vpop.permute.xlu0 %577
        %s579 = scalar_lea.vmem %s3, 88
        %v580 = vld [vmem:[%s579] sm:$0xf]
        %v581 = vunpack.c.l.bf16 %v580
        %v582 = vmul.f32 %v581, %v578
        %v583 = vadd.f32 %v555, %v582
        %584 = vrot.lane.b32.xlu0 %v413, 111
        %v585 = vpop.permute.xlu0 %584
        %s586 = scalar_lea.vmem %s3, 92
        %v587 = vld [vmem:[%s586] sm:$0xf]
        %v588 = vunpack.c.l.bf16 %v587
        %v589 = vmul.f32 %v588, %v585
        %v590 = vadd.f32 %v562, %v589
        %591 = vrot.lane.b32.xlu0 %v413, 110
        %v592 = vpop.permute.xlu0 %591
        %s593 = scalar_lea.vmem %s3, 96
        %v594 = vld [vmem:[%s593] sm:$0xf]
        %v595 = vunpack.c.l.bf16 %v594
        %v596 = vmul.f32 %v595, %v592
        %v597 = vadd.f32 %v569, %v596
        %v598 = vld [vmem:[%s4] sm:$0xff]
        %v599 = vadd.f32 %v597, %v576
        %v600 = vadd.f32 %v583, %v590
        %v601 = vadd.f32 %v599, %v600
        %603 = vset.pattern.permute.xlu0 0
        %604 = vperm.xlu0 %603, %v598
        %v605 = vpop.permute.xlu0 %604
        %v607 = vadd.f32 %v605, %v601
        %v608 = vpack.c.bf16 %v607, %v607
        %v609 = vpack.c.bf16 %v416, %v416
        %v610 = vld [vmem:[%s5] sm:$0xf]
        %v611 = vld [vmem:[%s5 + $0x4] sm:$0xf]
        %v612 = vld [vmem:[%s5 + $0x8] sm:$0xf]
        %v613 = vld [vmem:[%s5 + $0xc] sm:$0xf]
        %v614 = vld [vmem:[%s5 + $0x10] sm:$0xf]
        %v615 = vld [vmem:[%s5 + $0x14] sm:$0xf]
        %v616 = vld [vmem:[%s5 + $0x18] sm:$0xf]
        %v617 = vld [vmem:[%s5 + $0x1c] sm:$0xf]
        %v618 = vld [vmem:[%s5 + $0x20] sm:$0xf]
        %v619 = vld [vmem:[%s5 + $0x24] sm:$0xf]
        %v620 = vld [vmem:[%s5 + $0x28] sm:$0xf]
        %v621 = vld [vmem:[%s5 + $0x2c] sm:$0xf]
        %v622 = vld [vmem:[%s5 + $0x30] sm:$0xf]
        %v623 = vld [vmem:[%s5 + $0x34] sm:$0xf]
        %v624 = vld [vmem:[%s5 + $0x38] sm:$0xf]
        %v625 = vld [vmem:[%s5 + $0x3c] sm:$0xf]
        %v626 = vunpack.c.l.bf16 %v610
        %v627 = vunpack.c.l.bf16 %v611
        %v628 = vunpack.c.l.bf16 %v612
        %v629 = vunpack.c.l.bf16 %v613
        %v630 = vunpack.c.l.bf16 %v614
        %v631 = vunpack.c.l.bf16 %v615
        %v632 = vunpack.c.l.bf16 %v616
        %v633 = vunpack.c.l.bf16 %v617
        %v634 = vunpack.c.l.bf16 %v618
        %v635 = vunpack.c.l.bf16 %v619
        %v636 = vunpack.c.l.bf16 %v620
        %v637 = vunpack.c.l.bf16 %v621
        %v638 = vunpack.c.l.bf16 %v622
        %v639 = vunpack.c.l.bf16 %v623
        %v640 = vunpack.c.l.bf16 %v624
        %v641 = vunpack.c.l.bf16 %v625
        %642 = vxpose.xlu0.c.b16.start [1/8] %v608, 128
        %643 = vxpose.xlu0.c.b16.cont [2/8] 0, 128
        %644 = vxpose.xlu0.c.b16.cont [3/8] 0, 128
        %645 = vxpose.xlu0.c.b16.cont [4/8] 0, 128
        %646 = vxpose.xlu0.c.b16.cont [5/8] 0, 128
        %647 = vxpose.xlu0.c.b16.cont [6/8] 0, 128
        %648 = vxpose.xlu0.c.b16.cont [7/8] 0, 128
        %649 = vxpose.xlu0.c.b16.end [8/8] 0, 128
        %v650 = vpop.trf.xlu0
        %v651 = vpop.trf.xlu0
        %v652 = vpop.trf.xlu0
        %v653 = vpop.trf.xlu0
        %v654 = vpop.trf.xlu0
        %v655 = vpop.trf.xlu0
        %v656 = vpop.trf.xlu0
        %v657 = vpop.trf.xlu0
        %vm658 = vcmask 64512
        %v660 = vsel %vm658, %v650, 0
        %v663 = vsel %vm658, %v651, 0
        %v666 = vsel %vm658, %v652, 0
        %v669 = vsel %vm658, %v653, 0
        %v672 = vsel %vm658, %v654, 0
        %v675 = vsel %vm658, %v655, 0
        %v678 = vsel %vm658, %v656, 0
        %v681 = vsel %vm658, %v657, 0
        %vm683 = vcmask 1043456
        %v685 = vsel %vm683, %v609, 0
        %687 = vmatpush.bf16.msra.mxu0 0
        %688 = vmatpush.bf16.msra.mxu0 0
        %689 = vmatpush.bf16.msra.mxu0 0
        %690 = vmatpush.bf16.msra.mxu0 0
        %691 = vmatpush.bf16.msra.mxu0 0
        %692 = vmatpush.bf16.msra.mxu0 0
        %693 = vmatpush.bf16.msra.mxu0 0
        %694 = vmatpush.bf16.msra.mxu0 %v685
        %695 = vmatmul.bf16.gmra.mxu0 %v660
        %v696 = vpop.f32.mrf.mxu0
        %v697 = vadd.f32 %v626, %v696
        %v698 = vpop.f32.mrf.mxu0
        %v699 = vadd.f32 %v627, %v698
        %700 = vmatmul.bf16.gmra.mxu0 %v663
        %v701 = vpop.f32.mrf.mxu0
        %v702 = vadd.f32 %v628, %v701
        %v703 = vpop.f32.mrf.mxu0
        %v704 = vadd.f32 %v629, %v703
        %705 = vmatmul.bf16.gmra.mxu0 %v666
        %v706 = vpop.f32.mrf.mxu0
        %v707 = vadd.f32 %v630, %v706
        %v708 = vpop.f32.mrf.mxu0
        %v709 = vadd.f32 %v631, %v708
        %710 = vmatmul.bf16.gmra.mxu0 %v669
        %v711 = vpop.f32.mrf.mxu0
        %v712 = vadd.f32 %v632, %v711
        %v713 = vpop.f32.mrf.mxu0
        %v714 = vadd.f32 %v633, %v713
        %715 = vmatmul.bf16.gmra.mxu0 %v672
        %v716 = vpop.f32.mrf.mxu0
        %v717 = vadd.f32 %v634, %v716
        %v718 = vpop.f32.mrf.mxu0
        %v719 = vadd.f32 %v635, %v718
        %720 = vmatmul.bf16.gmra.mxu0 %v675
        %v721 = vpop.f32.mrf.mxu0
        %v722 = vadd.f32 %v636, %v721
        %v723 = vpop.f32.mrf.mxu0
        %v724 = vadd.f32 %v637, %v723
        %725 = vmatmul.bf16.gmra.mxu0 %v678
        %v726 = vpop.f32.mrf.mxu0
        %v727 = vadd.f32 %v638, %v726
        %v728 = vpop.f32.mrf.mxu0
        %v729 = vadd.f32 %v639, %v728
        %730 = vmatmul.bf16.gmra.mxu0 %v681
        %v731 = vpop.f32.mrf.mxu0
        %v732 = vadd.f32 %v640, %v731
        %v733 = vpop.f32.mrf.mxu0
        %v734 = vadd.f32 %v641, %v733
        %735 = vdwg.mxu0
        %736 = vmax.xlane.f32.xlu0 %v697
        %v737 = vpop.xlane.xlu0 %736
        %738 = vmax.xlane.f32.xlu0 %v699
        %v739 = vpop.xlane.xlu0 %738
        %740 = vmax.xlane.f32.xlu0 %v702
        %v741 = vpop.xlane.xlu0 %740
        %742 = vmax.xlane.f32.xlu0 %v704
        %v743 = vpop.xlane.xlu0 %742
        %744 = vmax.xlane.f32.xlu0 %v707
        %v745 = vpop.xlane.xlu0 %744
        %746 = vmax.xlane.f32.xlu0 %v709
        %v747 = vpop.xlane.xlu0 %746
        %748 = vmax.xlane.f32.xlu0 %v712
        %v749 = vpop.xlane.xlu0 %748
        %750 = vmax.xlane.f32.xlu0 %v714
        %v751 = vpop.xlane.xlu0 %750
        %752 = vmax.xlane.f32.xlu0 %v717
        %v753 = vpop.xlane.xlu0 %752
        %754 = vmax.xlane.f32.xlu0 %v719
        %v755 = vpop.xlane.xlu0 %754
        %756 = vmax.xlane.f32.xlu0 %v722
        %v757 = vpop.xlane.xlu0 %756
        %758 = vmax.xlane.f32.xlu0 %v724
        %v759 = vpop.xlane.xlu0 %758
        %760 = vmax.xlane.f32.xlu0 %v727
        %v761 = vpop.xlane.xlu0 %760
        %762 = vmax.xlane.f32.xlu0 %v729
        %v763 = vpop.xlane.xlu0 %762
        %764 = vmax.xlane.f32.xlu0 %v732
        %v765 = vpop.xlane.xlu0 %764
        %766 = vmax.xlane.f32.xlu0 %v734
        %v767 = vpop.xlane.xlu0 %766
        %v768 = vsub.f32 %v697, %v737
        %v769 = vsub.f32 %v699, %v739
        %v770 = vsub.f32 %v702, %v741
        %v771 = vsub.f32 %v704, %v743
        %v772 = vsub.f32 %v707, %v745
        %v773 = vsub.f32 %v709, %v747
        %v774 = vsub.f32 %v712, %v749
        %v775 = vsub.f32 %v714, %v751
        %v776 = vsub.f32 %v717, %v753
        %v777 = vsub.f32 %v719, %v755
        %v778 = vsub.f32 %v722, %v757
        %v779 = vsub.f32 %v724, %v759
        %v780 = vsub.f32 %v727, %v761
        %v781 = vsub.f32 %v729, %v763
        %v782 = vsub.f32 %v732, %v765
        %v783 = vsub.f32 %v734, %v767
        %v784 = vmul.f32 %v768, 1.442695
        %v785 = vpow.pop %v784
        %v786 = vmul.f32 %v769, 1.442695
        %v787 = vpow.pop %v786
        %v788 = vmul.f32 %v770, 1.442695
        %v789 = vpow.pop %v788
        %v790 = vmul.f32 %v771, 1.442695
        %v791 = vpow.pop %v790
        %v792 = vmul.f32 %v772, 1.442695
        %v793 = vpow.pop %v792
        %v794 = vmul.f32 %v773, 1.442695
        %v795 = vpow.pop %v794
        %v796 = vmul.f32 %v774, 1.442695
        %v797 = vpow.pop %v796
        %v798 = vmul.f32 %v775, 1.442695
        %v799 = vpow.pop %v798
        %v800 = vmul.f32 %v776, 1.442695
        %v801 = vpow.pop %v800
        %v802 = vmul.f32 %v777, 1.442695
        %v803 = vpow.pop %v802
        %v804 = vmul.f32 %v778, 1.442695
        %v805 = vpow.pop %v804
        %v806 = vmul.f32 %v779, 1.442695
        %v807 = vpow.pop %v806
        %v808 = vmul.f32 %v780, 1.442695
        %v809 = vpow.pop %v808
        %v810 = vmul.f32 %v781, 1.442695
        %v811 = vpow.pop %v810
        %v812 = vmul.f32 %v782, 1.442695
        %v813 = vpow.pop %v812
        %v814 = vmul.f32 %v783, 1.442695
        %v815 = vpow.pop %v814
        %816 = vadd.xlane.f32.xlu0 %v785
        %v817 = vpop.xlane.xlu0 %816
        %818 = vadd.xlane.f32.xlu0 %v787
        %v819 = vpop.xlane.xlu0 %818
        %820 = vadd.xlane.f32.xlu0 %v789
        %v821 = vpop.xlane.xlu0 %820
        %822 = vadd.xlane.f32.xlu0 %v791
        %v823 = vpop.xlane.xlu0 %822
        %824 = vadd.xlane.f32.xlu0 %v793
        %v825 = vpop.xlane.xlu0 %824
        %826 = vadd.xlane.f32.xlu0 %v795
        %v827 = vpop.xlane.xlu0 %826
        %828 = vadd.xlane.f32.xlu0 %v797
        %v829 = vpop.xlane.xlu0 %828
        %830 = vadd.xlane.f32.xlu0 %v799
        %v831 = vpop.xlane.xlu0 %830
        %832 = vadd.xlane.f32.xlu0 %v801
        %v833 = vpop.xlane.xlu0 %832
        %834 = vadd.xlane.f32.xlu0 %v803
        %v835 = vpop.xlane.xlu0 %834
        %836 = vadd.xlane.f32.xlu0 %v805
        %v837 = vpop.xlane.xlu0 %836
        %838 = vadd.xlane.f32.xlu0 %v807
        %v839 = vpop.xlane.xlu0 %838
        %840 = vadd.xlane.f32.xlu0 %v809
        %v841 = vpop.xlane.xlu0 %840
        %842 = vadd.xlane.f32.xlu0 %v811
        %v843 = vpop.xlane.xlu0 %842
        %844 = vadd.xlane.f32.xlu0 %v813
        %v845 = vpop.xlane.xlu0 %844
        %846 = vadd.xlane.f32.xlu0 %v815
        %v847 = vpop.xlane.xlu0 %846
        %v848 = vrcp.pop %v817
        %v849 = vrcp.pop %v819
        %v850 = vrcp.pop %v821
        %v851 = vrcp.pop %v823
        %v852 = vrcp.pop %v825
        %v853 = vrcp.pop %v827
        %v854 = vrcp.pop %v829
        %v855 = vrcp.pop %v831
        %v856 = vrcp.pop %v833
        %v857 = vrcp.pop %v835
        %v858 = vrcp.pop %v837
        %v859 = vrcp.pop %v839
        %v860 = vrcp.pop %v841
        %v861 = vrcp.pop %v843
        %v862 = vrcp.pop %v845
        %v863 = vrcp.pop %v847
        %v864 = vmul.f32 %v785, %v848
        %v865 = vmul.f32 %v787, %v849
        %v866 = vmul.f32 %v789, %v850
        %v867 = vmul.f32 %v791, %v851
        %v868 = vmul.f32 %v793, %v852
        %v869 = vmul.f32 %v795, %v853
        %v870 = vmul.f32 %v797, %v854
        %v871 = vmul.f32 %v799, %v855
        %v872 = vmul.f32 %v801, %v856
        %v873 = vmul.f32 %v803, %v857
        %v874 = vmul.f32 %v805, %v858
        %v875 = vmul.f32 %v807, %v859
        %v876 = vmul.f32 %v809, %v860
        %v877 = vmul.f32 %v811, %v861
        %v878 = vmul.f32 %v813, %v862
        %v879 = vmul.f32 %v815, %v863
        %v880 = vpack.c.bf16 %v422, %v419
        %v881 = vpack.c.bf16 %v428, %v425
        %v882 = vpack.c.bf16 %v865, %v864
        %v883 = vpack.c.bf16 %v867, %v866
        %v884 = vpack.c.bf16 %v869, %v868
        %v885 = vpack.c.bf16 %v871, %v870
        %v886 = vpack.c.bf16 %v873, %v872
        %v887 = vpack.c.bf16 %v875, %v874
        %v888 = vpack.c.bf16 %v877, %v876
        %v889 = vpack.c.bf16 %v879, %v878
        %890 = vmatpush.bf16.xpose.msra.mxu0 %v889
        %891 = vmatpush.bf16.xpose.msra.mxu0 %v888
        %892 = vmatpush.bf16.xpose.msra.mxu0 %v887
        %893 = vmatpush.bf16.xpose.msra.mxu0 %v886
        %894 = vmatpush.bf16.xpose.msra.mxu0 %v885
        %895 = vmatpush.bf16.xpose.msra.mxu0 %v884
        %896 = vmatpush.bf16.xpose.msra.mxu0 %v883
        %897 = vmatpush.bf16.xpose.msra.mxu0 %v882
        %898 = vmatmul.bf16.gmra.mxu0 %v880
        %v899 = vpop.f32.mrf.mxu0
        %v900 = vadd.f32 0.0, %v899
        %v901 = vpop.f32.mrf.mxu0
        %v902 = vadd.f32 0.0, %v901
        %903 = vmatmul.bf16.gmra.mxu0 %v881
        %v904 = vpop.f32.mrf.mxu0
        %v905 = vadd.f32 0.0, %v904
        %v906 = vpop.f32.mrf.mxu0
        %v907 = vadd.f32 0.0, %v906
        %908 = vdwg.mxu0
        %v909 = vld [vmem:[%s6] sm:$0xff]
        %v910 = vld [vmem:[%s6 + $0x8] sm:$0xff]
        %v911 = vld [vmem:[%s6 + $0x10] sm:$0xff]
        %v912 = vld [vmem:[%s6 + $0x18] sm:$0xff]
        %v913 = vld [vmem:[%s6 + $0x20] sm:$0xff]
        %v914 = vld [vmem:[%s6 + $0x28] sm:$0xff]
        %v915 = vld [vmem:[%s6 + $0x30] sm:$0xff]
        %v916 = vld [vmem:[%s6 + $0x38] sm:$0xff]
        %v917 = vmax.f32 %v900, 0.0
        %v918 = vmax.f32 %v902, 0.0
        %v919 = vmax.f32 %v905, 0.0
        %v920 = vmax.f32 %v907, 0.0
        %v921 = vld [vmem:[%s293 + $0x20] sm:$0xff]
        %v922 = vld [vmem:[%s293 + $0x28] sm:$0xff]
        %v923 = vld [vmem:[%s293 + $0x30] sm:$0xff]
        %v924 = vld [vmem:[%s293 + $0x38] sm:$0xff]
        %v925 = vadd.f32 %v900, %v921
        %v926 = vadd.f32 %v902, %v922
        %v927 = vadd.f32 %v905, %v923
        %v928 = vadd.f32 %v907, %v924
        %s929 = scalar_lea.vmem %s1, 48
        %v930 = vld [vmem:[%s929] sm:$0xff]
        %v931 = vld [vmem:[%s929 + $0x8] sm:$0xff]
        %v932 = vld [vmem:[%s929 + $0x10] sm:$0xff]
        %v933 = vld [vmem:[%s929 + $0x18] sm:$0xff]
        %v934 = vld [vmem:[%s929 + $0x20] sm:$0xff]
        %v935 = vld [vmem:[%s929 + $0x28] sm:$0xff]
        %s936 = scalar_lea.vmem %s2, 48
        %v937 = vld [vmem:[%s936] sm:$0xff]
        %v938 = vld [vmem:[%s936 + $0x8] sm:$0xff]
        %v939 = vld [vmem:[%s936 + $0x10] sm:$0xff]
        %v940 = vld [vmem:[%s936 + $0x18] sm:$0xff]
        %v941 = vld [vmem:[%s936 + $0x20] sm:$0xff]
        %v942 = vld [vmem:[%s936 + $0x28] sm:$0xff]
        %944 = vset.pattern.permute.xlu0 0
        %945 = vperm.xlu0 %944, %v937
        %v946 = vpop.permute.xlu0 %945
        %949 = vset.pattern.permute.xlu0 0
        %950 = vperm.xlu0 %949, %v938
        %v951 = vpop.permute.xlu0 %950
        %954 = vset.pattern.permute.xlu0 0
        %955 = vperm.xlu0 %954, %v939
        %v956 = vpop.permute.xlu0 %955
        %959 = vset.pattern.permute.xlu0 0
        %960 = vperm.xlu0 %959, %v940
        %v961 = vpop.permute.xlu0 %960
        %964 = vset.pattern.permute.xlu0 0
        %965 = vperm.xlu0 %964, %v941
        %v966 = vpop.permute.xlu0 %965
        %969 = vset.pattern.permute.xlu0 0
        %970 = vperm.xlu0 %969, %v942
        %v971 = vpop.permute.xlu0 %970
        %v974 = vsel %vm376, %v930, 0
        %v977 = vsel %vm376, %v931, 0
        %v980 = vsel %vm376, %v932, 0
        %v983 = vsel %vm376, %v933, 0
        %v986 = vsel %vm376, %v934, 0
        %v989 = vsel %vm376, %v935, 0
        %991 = vmatpush.msra.mxu0 0.0
        %992 = vmatpush.msra.mxu0 0.0
        %993 = vmatpush.msra.mxu0 0.0
        %994 = vmatpush.msra.mxu0 0.0
        %995 = vmatpush.msra.mxu0 0.0
        %996 = vmatpush.msra.mxu0 0.0
        %997 = vmatpush.msra.mxu0 0.0
        %998 = vmatpush.msra.mxu0 0.0
        %999 = vmatpush.msra.mxu0 0.0
        %1000 = vmatpush.msra.mxu0 0.0
        %1001 = vmatpush.msra.mxu0 0.0
        %1002 = vmatpush.msra.mxu0 0.0
        %1003 = vmatpush.msra.mxu0 %v928
        %1004 = vmatpush.msra.mxu0 %v927
        %1005 = vmatpush.msra.mxu0 %v926
        %1006 = vmatpush.msra.mxu0 %v925
        %1007 = vmatmul.f32.gmra.mxu0 %v974
        %v1008 = vpop.f32.mrf.mxu0
        %v1009 = vadd.f32 %v946, %v1008
        %1010 = vmatmul.f32.gmra.mxu0 %v977
        %v1011 = vpop.f32.mrf.mxu0
        %v1012 = vadd.f32 %v951, %v1011
        %1013 = vmatmul.f32.gmra.mxu0 %v980
        %v1014 = vpop.f32.mrf.mxu0
        %v1015 = vadd.f32 %v956, %v1014
        %1016 = vmatmul.f32.gmra.mxu0 %v983
        %v1017 = vpop.f32.mrf.mxu0
        %v1018 = vadd.f32 %v961, %v1017
        %1019 = vmatmul.f32.gmra.mxu0 %v986
        %v1020 = vpop.f32.mrf.mxu0
        %v1021 = vadd.f32 %v966, %v1020
        %1022 = vmatmul.f32.gmra.mxu0 %v989
        %v1023 = vpop.f32.mrf.mxu0
        %v1024 = vadd.f32 %v971, %v1023
        %1025 = vdwg.mxu0
        %1026 = vrot.lane.b32.xlu0 %v1009, 18
        %v1027 = vpop.permute.xlu0 %1026
        %s1028 = scalar_lea.vmem %s3, 100
        %v1029 = vld [vmem:[%s1028] sm:$0xf]
        %v1030 = vunpack.c.l.bf16 %v1029
        %v1031 = vmul.f32 %v1030, %v1027
        %1032 = vrot.lane.b32.xlu0 %v1009, 17
        %v1033 = vpop.permute.xlu0 %1032
        %s1034 = scalar_lea.vmem %s3, 104
        %v1035 = vld [vmem:[%s1034] sm:$0xf]
        %v1036 = vunpack.c.l.bf16 %v1035
        %v1037 = vmul.f32 %v1036, %v1033
        %1038 = vrot.lane.b32.xlu0 %v1009, 16
        %v1039 = vpop.permute.xlu0 %1038
        %s1040 = scalar_lea.vmem %s3, 108
        %v1041 = vld [vmem:[%s1040] sm:$0xf]
        %v1042 = vunpack.c.l.bf16 %v1041
        %v1043 = vmul.f32 %v1042, %v1039
        %1044 = vrot.lane.b32.xlu0 %v1009, 15
        %v1045 = vpop.permute.xlu0 %1044
        %s1046 = scalar_lea.vmem %s3, 112
        %v1047 = vld [vmem:[%s1046] sm:$0xf]
        %v1048 = vunpack.c.l.bf16 %v1047
        %v1049 = vmul.f32 %v1048, %v1045
        %1050 = vrot.lane.b32.xlu0 %v1009, 14
        %v1051 = vpop.permute.xlu0 %1050
        %s1052 = scalar_lea.vmem %s3, 116
        %v1053 = vld [vmem:[%s1052] sm:$0xf]
        %v1054 = vunpack.c.l.bf16 %v1053
        %v1055 = vmul.f32 %v1054, %v1051
        %v1056 = vadd.f32 %v1031, %v1055
        %1057 = vrot.lane.b32.xlu0 %v1009, 10
        %v1058 = vpop.permute.xlu0 %1057
        %s1059 = scalar_lea.vmem %s3, 120
        %v1060 = vld [vmem:[%s1059] sm:$0xf]
        %v1061 = vunpack.c.l.bf16 %v1060
        %v1062 = vmul.f32 %v1061, %v1058
        %v1063 = vadd.f32 %v1037, %v1062
        %1064 = vrot.lane.b32.xlu0 %v1009, 9
        %v1065 = vpop.permute.xlu0 %1064
        %s1066 = scalar_lea.vmem %s3, 124
        %v1067 = vld [vmem:[%s1066] sm:$0xf]
        %v1068 = vunpack.c.l.bf16 %v1067
        %v1069 = vmul.f32 %v1068, %v1065
        %v1070 = vadd.f32 %v1043, %v1069
        %1071 = vrot.lane.b32.xlu0 %v1009, 8
        %v1072 = vpop.permute.xlu0 %1071
        %s1073 = scalar_lea.vmem %s3, 128
        %v1074 = vld [vmem:[%s1073] sm:$0xf]
        %v1075 = vunpack.c.l.bf16 %v1074
        %v1076 = vmul.f32 %v1075, %v1072
        %v1077 = vadd.f32 %v1049, %v1076
        %1078 = vrot.lane.b32.xlu0 %v1009, 7
        %v1079 = vpop.permute.xlu0 %1078
        %s1080 = scalar_lea.vmem %s3, 132
        %v1081 = vld [vmem:[%s1080] sm:$0xf]
        %v1082 = vunpack.c.l.bf16 %v1081
        %v1083 = vmul.f32 %v1082, %v1079
        %v1084 = vadd.f32 %v1056, %v1083
        %1085 = vrot.lane.b32.xlu0 %v1009, 6
        %v1086 = vpop.permute.xlu0 %1085
        %s1087 = scalar_lea.vmem %s3, 136
        %v1088 = vld [vmem:[%s1087] sm:$0xf]
        %v1089 = vunpack.c.l.bf16 %v1088
        %v1090 = vmul.f32 %v1089, %v1086
        %v1091 = vadd.f32 %v1063, %v1090
        %1092 = vrot.lane.b32.xlu0 %v1009, 2
        %v1093 = vpop.permute.xlu0 %1092
        %s1094 = scalar_lea.vmem %s3, 140
        %v1095 = vld [vmem:[%s1094] sm:$0xf]
        %v1096 = vunpack.c.l.bf16 %v1095
        %v1097 = vmul.f32 %v1096, %v1093
        %v1098 = vadd.f32 %v1070, %v1097
        %1099 = vrot.lane.b32.xlu0 %v1009, 1
        %v1100 = vpop.permute.xlu0 %1099
        %s1101 = scalar_lea.vmem %s3, 144
        %v1102 = vld [vmem:[%s1101] sm:$0xf]
        %v1103 = vunpack.c.l.bf16 %v1102
        %v1104 = vmul.f32 %v1103, %v1100
        %v1105 = vadd.f32 %v1077, %v1104
        %s1106 = scalar_lea.vmem %s3, 148
        %v1107 = vld [vmem:[%s1106] sm:$0xf]
        %v1108 = vunpack.c.l.bf16 %v1107
        %v1109 = vmul.f32 %v1108, %v1009
        %v1110 = vadd.f32 %v1084, %v1109
        %1111 = vrot.lane.b32.xlu0 %v1009, 127
        %v1112 = vpop.permute.xlu0 %1111
        %s1113 = scalar_lea.vmem %s3, 152
        %v1114 = vld [vmem:[%s1113] sm:$0xf]
        %v1115 = vunpack.c.l.bf16 %v1114
        %v1116 = vmul.f32 %v1115, %v1112
        %v1117 = vadd.f32 %v1091, %v1116
        %1118 = vrot.lane.b32.xlu0 %v1009, 126
        %v1119 = vpop.permute.xlu0 %1118
        %s1120 = scalar_lea.vmem %s3, 156
        %v1121 = vld [vmem:[%s1120] sm:$0xf]
        %v1122 = vunpack.c.l.bf16 %v1121
        %v1123 = vmul.f32 %v1122, %v1119
        %v1124 = vadd.f32 %v1098, %v1123
        %1125 = vrot.lane.b32.xlu0 %v1009, 122
        %v1126 = vpop.permute.xlu0 %1125
        %s1127 = scalar_lea.vmem %s3, 160
        %v1128 = vld [vmem:[%s1127] sm:$0xf]
        %v1129 = vunpack.c.l.bf16 %v1128
        %v1130 = vmul.f32 %v1129, %v1126
        %v1131 = vadd.f32 %v1105, %v1130
        %1132 = vrot.lane.b32.xlu0 %v1009, 121
        %v1133 = vpop.permute.xlu0 %1132
        %s1134 = scalar_lea.vmem %s3, 164
        %v1135 = vld [vmem:[%s1134] sm:$0xf]
        %v1136 = vunpack.c.l.bf16 %v1135
        %v1137 = vmul.f32 %v1136, %v1133
        %v1138 = vadd.f32 %v1110, %v1137
        %1139 = vrot.lane.b32.xlu0 %v1009, 120
        %v1140 = vpop.permute.xlu0 %1139
        %s1141 = scalar_lea.vmem %s3, 168
        %v1142 = vld [vmem:[%s1141] sm:$0xf]
        %v1143 = vunpack.c.l.bf16 %v1142
        %v1144 = vmul.f32 %v1143, %v1140
        %v1145 = vadd.f32 %v1117, %v1144
        %1146 = vrot.lane.b32.xlu0 %v1009, 119
        %v1147 = vpop.permute.xlu0 %1146
        %s1148 = scalar_lea.vmem %s3, 172
        %v1149 = vld [vmem:[%s1148] sm:$0xf]
        %v1150 = vunpack.c.l.bf16 %v1149
        %v1151 = vmul.f32 %v1150, %v1147
        %v1152 = vadd.f32 %v1124, %v1151
        %1153 = vrot.lane.b32.xlu0 %v1009, 118
        %v1154 = vpop.permute.xlu0 %1153
        %s1155 = scalar_lea.vmem %s3, 176
        %v1156 = vld [vmem:[%s1155] sm:$0xf]
        %v1157 = vunpack.c.l.bf16 %v1156
        %v1158 = vmul.f32 %v1157, %v1154
        %v1159 = vadd.f32 %v1131, %v1158
        %1160 = vrot.lane.b32.xlu0 %v1009, 114
        %v1161 = vpop.permute.xlu0 %1160
        %s1162 = scalar_lea.vmem %s3, 180
        %v1163 = vld [vmem:[%s1162] sm:$0xf]
        %v1164 = vunpack.c.l.bf16 %v1163
        %v1165 = vmul.f32 %v1164, %v1161
        %v1166 = vadd.f32 %v1138, %v1165
        %1167 = vrot.lane.b32.xlu0 %v1009, 113
        %v1168 = vpop.permute.xlu0 %1167
        %s1169 = scalar_lea.vmem %s3, 184
        %v1170 = vld [vmem:[%s1169] sm:$0xf]
        %v1171 = vunpack.c.l.bf16 %v1170
        %v1172 = vmul.f32 %v1171, %v1168
        %v1173 = vadd.f32 %v1145, %v1172
        %1174 = vrot.lane.b32.xlu0 %v1009, 112
        %v1175 = vpop.permute.xlu0 %1174
        %s1176 = scalar_lea.vmem %s3, 188
        %v1177 = vld [vmem:[%s1176] sm:$0xf]
        %v1178 = vunpack.c.l.bf16 %v1177
        %v1179 = vmul.f32 %v1178, %v1175
        %v1180 = vadd.f32 %v1152, %v1179
        %1181 = vrot.lane.b32.xlu0 %v1009, 111
        %v1182 = vpop.permute.xlu0 %1181
        %s1183 = scalar_lea.vmem %s3, 192
        %v1184 = vld [vmem:[%s1183] sm:$0xf]
        %v1185 = vunpack.c.l.bf16 %v1184
        %v1186 = vmul.f32 %v1185, %v1182
        %v1187 = vadd.f32 %v1159, %v1186
        %1188 = vrot.lane.b32.xlu0 %v1009, 110
        %v1189 = vpop.permute.xlu0 %1188
        %s1190 = scalar_lea.vmem %s3, 196
        %v1191 = vld [vmem:[%s1190] sm:$0xf]
        %v1192 = vunpack.c.l.bf16 %v1191
        %v1193 = vmul.f32 %v1192, %v1189
        %v1194 = vadd.f32 %v1166, %v1193
        %s1195 = scalar_lea.vmem %s4, 8
        %v1196 = vld [vmem:[%s1195] sm:$0xff]
        %v1197 = vadd.f32 %v1194, %v1173
        %v1198 = vadd.f32 %v1180, %v1187
        %v1199 = vadd.f32 %v1197, %v1198
        %1201 = vset.pattern.permute.xlu0 0
        %1202 = vperm.xlu0 %1201, %v1196
        %v1203 = vpop.permute.xlu0 %1202
        %v1205 = vadd.f32 %v1203, %v1199
        %v1206 = vpack.c.bf16 %v1205, %v1205
        %v1207 = vpack.c.bf16 %v1012, %v1012
        %s1208 = scalar_lea.vmem %s5, 64
        %v1209 = vld [vmem:[%s1208] sm:$0xf]
        %v1210 = vld [vmem:[%s1208 + $0x4] sm:$0xf]
        %v1211 = vld [vmem:[%s1208 + $0x8] sm:$0xf]
        %v1212 = vld [vmem:[%s1208 + $0xc] sm:$0xf]
        %v1213 = vld [vmem:[%s1208 + $0x10] sm:$0xf]
        %v1214 = vld [vmem:[%s1208 + $0x14] sm:$0xf]
        %v1215 = vld [vmem:[%s1208 + $0x18] sm:$0xf]
        %v1216 = vld [vmem:[%s1208 + $0x1c] sm:$0xf]
        %v1217 = vld [vmem:[%s1208 + $0x20] sm:$0xf]
        %v1218 = vld [vmem:[%s1208 + $0x24] sm:$0xf]
        %v1219 = vld [vmem:[%s1208 + $0x28] sm:$0xf]
        %v1220 = vld [vmem:[%s1208 + $0x2c] sm:$0xf]
        %v1221 = vld [vmem:[%s1208 + $0x30] sm:$0xf]
        %v1222 = vld [vmem:[%s1208 + $0x34] sm:$0xf]
        %v1223 = vld [vmem:[%s1208 + $0x38] sm:$0xf]
        %v1224 = vld [vmem:[%s1208 + $0x3c] sm:$0xf]
        %v1225 = vunpack.c.l.bf16 %v1209
        %v1226 = vunpack.c.l.bf16 %v1210
        %v1227 = vunpack.c.l.bf16 %v1211
        %v1228 = vunpack.c.l.bf16 %v1212
        %v1229 = vunpack.c.l.bf16 %v1213
        %v1230 = vunpack.c.l.bf16 %v1214
        %v1231 = vunpack.c.l.bf16 %v1215
        %v1232 = vunpack.c.l.bf16 %v1216
        %v1233 = vunpack.c.l.bf16 %v1217
        %v1234 = vunpack.c.l.bf16 %v1218
        %v1235 = vunpack.c.l.bf16 %v1219
        %v1236 = vunpack.c.l.bf16 %v1220
        %v1237 = vunpack.c.l.bf16 %v1221
        %v1238 = vunpack.c.l.bf16 %v1222
        %v1239 = vunpack.c.l.bf16 %v1223
        %v1240 = vunpack.c.l.bf16 %v1224
        %1241 = vxpose.xlu0.c.b16.start [1/8] %v1206, 128
        %1242 = vxpose.xlu0.c.b16.cont [2/8] 0, 128
        %1243 = vxpose.xlu0.c.b16.cont [3/8] 0, 128
        %1244 = vxpose.xlu0.c.b16.cont [4/8] 0, 128
        %1245 = vxpose.xlu0.c.b16.cont [5/8] 0, 128
        %1246 = vxpose.xlu0.c.b16.cont [6/8] 0, 128
        %1247 = vxpose.xlu0.c.b16.cont [7/8] 0, 128
        %1248 = vxpose.xlu0.c.b16.end [8/8] 0, 128
        %v1249 = vpop.trf.xlu0
        %v1250 = vpop.trf.xlu0
        %v1251 = vpop.trf.xlu0
        %v1252 = vpop.trf.xlu0
        %v1253 = vpop.trf.xlu0
        %v1254 = vpop.trf.xlu0
        %v1255 = vpop.trf.xlu0
        %v1256 = vpop.trf.xlu0
        %v1258 = vsel %vm658, %v1249, 0
        %v1261 = vsel %vm658, %v1250, 0
        %v1264 = vsel %vm658, %v1251, 0
        %v1267 = vsel %vm658, %v1252, 0
        %v1270 = vsel %vm658, %v1253, 0
        %v1273 = vsel %vm658, %v1254, 0
        %v1276 = vsel %vm658, %v1255, 0
        %v1279 = vsel %vm658, %v1256, 0
        %v1282 = vsel %vm683, %v1207, 0
        %1284 = vmatpush.bf16.msra.mxu0 0
        %1285 = vmatpush.bf16.msra.mxu0 0
        %1286 = vmatpush.bf16.msra.mxu0 0
        %1287 = vmatpush.bf16.msra.mxu0 0
        %1288 = vmatpush.bf16.msra.mxu0 0
        %1289 = vmatpush.bf16.msra.mxu0 0
        %1290 = vmatpush.bf16.msra.mxu0 0
        %1291 = vmatpush.bf16.msra.mxu0 %v1282
        %1292 = vmatmul.bf16.gmra.mxu0 %v1258
        %v1293 = vpop.f32.mrf.mxu0
        %v1294 = vadd.f32 %v1225, %v1293
        %v1295 = vpop.f32.mrf.mxu0
        %v1296 = vadd.f32 %v1226, %v1295
        %1297 = vmatmul.bf16.gmra.mxu0 %v1261
        %v1298 = vpop.f32.mrf.mxu0
        %v1299 = vadd.f32 %v1227, %v1298
        %v1300 = vpop.f32.mrf.mxu0
        %v1301 = vadd.f32 %v1228, %v1300
        %1302 = vmatmul.bf16.gmra.mxu0 %v1264
        %v1303 = vpop.f32.mrf.mxu0
        %v1304 = vadd.f32 %v1229, %v1303
        %v1305 = vpop.f32.mrf.mxu0
        %v1306 = vadd.f32 %v1230, %v1305
        %1307 = vmatmul.bf16.gmra.mxu0 %v1267
        %v1308 = vpop.f32.mrf.mxu0
        %v1309 = vadd.f32 %v1231, %v1308
        %v1310 = vpop.f32.mrf.mxu0
        %v1311 = vadd.f32 %v1232, %v1310
        %1312 = vmatmul.bf16.gmra.mxu0 %v1270
        %v1313 = vpop.f32.mrf.mxu0
        %v1314 = vadd.f32 %v1233, %v1313
        %v1315 = vpop.f32.mrf.mxu0
        %v1316 = vadd.f32 %v1234, %v1315
        %1317 = vmatmul.bf16.gmra.mxu0 %v1273
        %v1318 = vpop.f32.mrf.mxu0
        %v1319 = vadd.f32 %v1235, %v1318
        %v1320 = vpop.f32.mrf.mxu0
        %v1321 = vadd.f32 %v1236, %v1320
        %1322 = vmatmul.bf16.gmra.mxu0 %v1276
        %v1323 = vpop.f32.mrf.mxu0
        %v1324 = vadd.f32 %v1237, %v1323
        %v1325 = vpop.f32.mrf.mxu0
        %v1326 = vadd.f32 %v1238, %v1325
        %1327 = vmatmul.bf16.gmra.mxu0 %v1279
        %v1328 = vpop.f32.mrf.mxu0
        %v1329 = vadd.f32 %v1239, %v1328
        %v1330 = vpop.f32.mrf.mxu0
        %v1331 = vadd.f32 %v1240, %v1330
        %1332 = vdwg.mxu0
        %1333 = vmax.xlane.f32.xlu0 %v1294
        %v1334 = vpop.xlane.xlu0 %1333
        %1335 = vmax.xlane.f32.xlu0 %v1296
        %v1336 = vpop.xlane.xlu0 %1335
        %1337 = vmax.xlane.f32.xlu0 %v1299
        %v1338 = vpop.xlane.xlu0 %1337
        %1339 = vmax.xlane.f32.xlu0 %v1301
        %v1340 = vpop.xlane.xlu0 %1339
        %1341 = vmax.xlane.f32.xlu0 %v1304
        %v1342 = vpop.xlane.xlu0 %1341
        %1343 = vmax.xlane.f32.xlu0 %v1306
        %v1344 = vpop.xlane.xlu0 %1343
        %1345 = vmax.xlane.f32.xlu0 %v1309
        %v1346 = vpop.xlane.xlu0 %1345
        %1347 = vmax.xlane.f32.xlu0 %v1311
        %v1348 = vpop.xlane.xlu0 %1347
        %1349 = vmax.xlane.f32.xlu0 %v1314
        %v1350 = vpop.xlane.xlu0 %1349
        %1351 = vmax.xlane.f32.xlu0 %v1316
        %v1352 = vpop.xlane.xlu0 %1351
        %1353 = vmax.xlane.f32.xlu0 %v1319
        %v1354 = vpop.xlane.xlu0 %1353
        %1355 = vmax.xlane.f32.xlu0 %v1321
        %v1356 = vpop.xlane.xlu0 %1355
        %1357 = vmax.xlane.f32.xlu0 %v1324
        %v1358 = vpop.xlane.xlu0 %1357
        %1359 = vmax.xlane.f32.xlu0 %v1326
        %v1360 = vpop.xlane.xlu0 %1359
        %1361 = vmax.xlane.f32.xlu0 %v1329
        %v1362 = vpop.xlane.xlu0 %1361
        %1363 = vmax.xlane.f32.xlu0 %v1331
        %v1364 = vpop.xlane.xlu0 %1363
        %v1365 = vsub.f32 %v1294, %v1334
        %v1366 = vsub.f32 %v1296, %v1336
        %v1367 = vsub.f32 %v1299, %v1338
        %v1368 = vsub.f32 %v1301, %v1340
        %v1369 = vsub.f32 %v1304, %v1342
        %v1370 = vsub.f32 %v1306, %v1344
        %v1371 = vsub.f32 %v1309, %v1346
        %v1372 = vsub.f32 %v1311, %v1348
        %v1373 = vsub.f32 %v1314, %v1350
        %v1374 = vsub.f32 %v1316, %v1352
        %v1375 = vsub.f32 %v1319, %v1354
        %v1376 = vsub.f32 %v1321, %v1356
        %v1377 = vsub.f32 %v1324, %v1358
        %v1378 = vsub.f32 %v1326, %v1360
        %v1379 = vsub.f32 %v1329, %v1362
        %v1380 = vsub.f32 %v1331, %v1364
        %v1381 = vmul.f32 %v1365, 1.442695
        %v1382 = vpow.pop %v1381
        %v1383 = vmul.f32 %v1366, 1.442695
        %v1384 = vpow.pop %v1383
        %v1385 = vmul.f32 %v1367, 1.442695
        %v1386 = vpow.pop %v1385
        %v1387 = vmul.f32 %v1368, 1.442695
        %v1388 = vpow.pop %v1387
        %v1389 = vmul.f32 %v1369, 1.442695
        %v1390 = vpow.pop %v1389
        %v1391 = vmul.f32 %v1370, 1.442695
        %v1392 = vpow.pop %v1391
        %v1393 = vmul.f32 %v1371, 1.442695
        %v1394 = vpow.pop %v1393
        %v1395 = vmul.f32 %v1372, 1.442695
        %v1396 = vpow.pop %v1395
        %v1397 = vmul.f32 %v1373, 1.442695
        %v1398 = vpow.pop %v1397
        %v1399 = vmul.f32 %v1374, 1.442695
        %v1400 = vpow.pop %v1399
        %v1401 = vmul.f32 %v1375, 1.442695
        %v1402 = vpow.pop %v1401
        %v1403 = vmul.f32 %v1376, 1.442695
        %v1404 = vpow.pop %v1403
        %v1405 = vmul.f32 %v1377, 1.442695
        %v1406 = vpow.pop %v1405
        %v1407 = vmul.f32 %v1378, 1.442695
        %v1408 = vpow.pop %v1407
        %v1409 = vmul.f32 %v1379, 1.442695
        %v1410 = vpow.pop %v1409
        %v1411 = vmul.f32 %v1380, 1.442695
        %v1412 = vpow.pop %v1411
        %1413 = vadd.xlane.f32.xlu0 %v1382
        %v1414 = vpop.xlane.xlu0 %1413
        %1415 = vadd.xlane.f32.xlu0 %v1384
        %v1416 = vpop.xlane.xlu0 %1415
        %1417 = vadd.xlane.f32.xlu0 %v1386
        %v1418 = vpop.xlane.xlu0 %1417
        %1419 = vadd.xlane.f32.xlu0 %v1388
        %v1420 = vpop.xlane.xlu0 %1419
        %1421 = vadd.xlane.f32.xlu0 %v1390
        %v1422 = vpop.xlane.xlu0 %1421
        %1423 = vadd.xlane.f32.xlu0 %v1392
        %v1424 = vpop.xlane.xlu0 %1423
        %1425 = vadd.xlane.f32.xlu0 %v1394
        %v1426 = vpop.xlane.xlu0 %1425
        %1427 = vadd.xlane.f32.xlu0 %v1396
        %v1428 = vpop.xlane.xlu0 %1427
        %1429 = vadd.xlane.f32.xlu0 %v1398
        %v1430 = vpop.xlane.xlu0 %1429
        %1431 = vadd.xlane.f32.xlu0 %v1400
        %v1432 = vpop.xlane.xlu0 %1431
        %1433 = vadd.xlane.f32.xlu0 %v1402
        %v1434 = vpop.xlane.xlu0 %1433
        %1435 = vadd.xlane.f32.xlu0 %v1404
        %v1436 = vpop.xlane.xlu0 %1435
        %1437 = vadd.xlane.f32.xlu0 %v1406
        %v1438 = vpop.xlane.xlu0 %1437
        %1439 = vadd.xlane.f32.xlu0 %v1408
        %v1440 = vpop.xlane.xlu0 %1439
        %1441 = vadd.xlane.f32.xlu0 %v1410
        %v1442 = vpop.xlane.xlu0 %1441
        %1443 = vadd.xlane.f32.xlu0 %v1412
        %v1444 = vpop.xlane.xlu0 %1443
        %v1445 = vrcp.pop %v1414
        %v1446 = vrcp.pop %v1416
        %v1447 = vrcp.pop %v1418
        %v1448 = vrcp.pop %v1420
        %v1449 = vrcp.pop %v1422
        %v1450 = vrcp.pop %v1424
        %v1451 = vrcp.pop %v1426
        %v1452 = vrcp.pop %v1428
        %v1453 = vrcp.pop %v1430
        %v1454 = vrcp.pop %v1432
        %v1455 = vrcp.pop %v1434
        %v1456 = vrcp.pop %v1436
        %v1457 = vrcp.pop %v1438
        %v1458 = vrcp.pop %v1440
        %v1459 = vrcp.pop %v1442
        %v1460 = vrcp.pop %v1444
        %v1461 = vmul.f32 %v1382, %v1445
        %v1462 = vmul.f32 %v1384, %v1446
        %v1463 = vmul.f32 %v1386, %v1447
        %v1464 = vmul.f32 %v1388, %v1448
        %v1465 = vmul.f32 %v1390, %v1449
        %v1466 = vmul.f32 %v1392, %v1450
        %v1467 = vmul.f32 %v1394, %v1451
        %v1468 = vmul.f32 %v1396, %v1452
        %v1469 = vmul.f32 %v1398, %v1453
        %v1470 = vmul.f32 %v1400, %v1454
        %v1471 = vmul.f32 %v1402, %v1455
        %v1472 = vmul.f32 %v1404, %v1456
        %v1473 = vmul.f32 %v1406, %v1457
        %v1474 = vmul.f32 %v1408, %v1458
        %v1475 = vmul.f32 %v1410, %v1459
        %v1476 = vmul.f32 %v1412, %v1460
        %v1477 = vpack.c.bf16 %v1018, %v1015
        %v1478 = vpack.c.bf16 %v1024, %v1021
        %v1479 = vpack.c.bf16 %v1462, %v1461
        %v1480 = vpack.c.bf16 %v1464, %v1463
        %v1481 = vpack.c.bf16 %v1466, %v1465
        %v1482 = vpack.c.bf16 %v1468, %v1467
        %v1483 = vpack.c.bf16 %v1470, %v1469
        %v1484 = vpack.c.bf16 %v1472, %v1471
        %v1485 = vpack.c.bf16 %v1474, %v1473
        %v1486 = vpack.c.bf16 %v1476, %v1475
        %1487 = vmatpush.bf16.xpose.msra.mxu0 %v1486
        %1488 = vmatpush.bf16.xpose.msra.mxu0 %v1485
        %1489 = vmatpush.bf16.xpose.msra.mxu0 %v1484
        %1490 = vmatpush.bf16.xpose.msra.mxu0 %v1483
        %1491 = vmatpush.bf16.xpose.msra.mxu0 %v1482
        %1492 = vmatpush.bf16.xpose.msra.mxu0 %v1481
        %1493 = vmatpush.bf16.xpose.msra.mxu0 %v1480
        %1494 = vmatpush.bf16.xpose.msra.mxu0 %v1479
        %1495 = vmatmul.bf16.gmra.mxu0 %v1477
        %v1496 = vpop.f32.mrf.mxu0
        %v1497 = vadd.f32 0.0, %v1496
        %v1498 = vpop.f32.mrf.mxu0
        %v1499 = vadd.f32 0.0, %v1498
        %1500 = vmatmul.bf16.gmra.mxu0 %v1478
        %v1501 = vpop.f32.mrf.mxu0
        %v1502 = vadd.f32 0.0, %v1501
        %v1503 = vpop.f32.mrf.mxu0
        %v1504 = vadd.f32 0.0, %v1503
        %1505 = vdwg.mxu0
        %s1506 = scalar_lea.vmem %s6, 64
        %v1507 = vld [vmem:[%s1506] sm:$0xff]
        %v1508 = vld [vmem:[%s1506 + $0x8] sm:$0xff]
        %v1509 = vld [vmem:[%s1506 + $0x10] sm:$0xff]
        %v1510 = vld [vmem:[%s1506 + $0x18] sm:$0xff]
        %v1511 = vld [vmem:[%s1506 + $0x20] sm:$0xff]
        %v1512 = vld [vmem:[%s1506 + $0x28] sm:$0xff]
        %v1513 = vld [vmem:[%s1506 + $0x30] sm:$0xff]
        %v1514 = vld [vmem:[%s1506 + $0x38] sm:$0xff]
        %v1515 = vmax.f32 %v1497, 0.0
        %v1516 = vmax.f32 %v1499, 0.0
        %v1517 = vmax.f32 %v1502, 0.0
        %v1518 = vmax.f32 %v1504, 0.0
        %v1520 = vsel %vm376, %v1507, 0
        %v1523 = vsel %vm376, %v1508, 0
        %v1526 = vsel %vm376, %v1509, 0
        %v1529 = vsel %vm376, %v1510, 0
        %v1532 = vsel %vm376, %v1511, 0
        %v1535 = vsel %vm376, %v1512, 0
        %v1538 = vsel %vm376, %v1513, 0
        %v1541 = vsel %vm376, %v1514, 0
        %1543 = vmatpush.msra.mxu0 0.0
        %1544 = vmatpush.msra.mxu0 0.0
        %1545 = vmatpush.msra.mxu0 0.0
        %1546 = vmatpush.msra.mxu0 0.0
        %1547 = vmatpush.msra.mxu0 0.0
        %1548 = vmatpush.msra.mxu0 0.0
        %1549 = vmatpush.msra.mxu0 0.0
        %1550 = vmatpush.msra.mxu0 0.0
        %1551 = vmatpush.msra.mxu0 0.0
        %1552 = vmatpush.msra.mxu0 0.0
        %1553 = vmatpush.msra.mxu0 0.0
        %1554 = vmatpush.msra.mxu0 0.0
        %1555 = vmatpush.msra.mxu0 %v1518
        %1556 = vmatpush.msra.mxu0 %v1517
        %1557 = vmatpush.msra.mxu0 %v1516
        %1558 = vmatpush.msra.mxu0 %v1515
        %1559 = vmatmul.f32.gmra.mxu0 %v1520
        %v1560 = vpop.f32.mrf.mxu0
        %v1561 = vadd.f32 0.0, %v1560
        %1562 = vmatmul.f32.gmra.mxu0 %v1523
        %v1563 = vpop.f32.mrf.mxu0
        %v1564 = vadd.f32 0.0, %v1563
        %1565 = vmatmul.f32.gmra.mxu0 %v1526
        %v1566 = vpop.f32.mrf.mxu0
        %v1567 = vadd.f32 0.0, %v1566
        %1568 = vmatmul.f32.gmra.mxu0 %v1529
        %v1569 = vpop.f32.mrf.mxu0
        %v1570 = vadd.f32 0.0, %v1569
        %1571 = vmatmul.f32.gmra.mxu0 %v1532
        %v1572 = vpop.f32.mrf.mxu0
        %v1573 = vadd.f32 0.0, %v1572
        %1574 = vmatmul.f32.gmra.mxu0 %v1535
        %v1575 = vpop.f32.mrf.mxu0
        %v1576 = vadd.f32 0.0, %v1575
        %1577 = vmatmul.f32.gmra.mxu0 %v1538
        %v1578 = vpop.f32.mrf.mxu0
        %v1579 = vadd.f32 0.0, %v1578
        %1580 = vmatmul.f32.gmra.mxu0 %v1541
        %v1581 = vpop.f32.mrf.mxu0
        %v1582 = vadd.f32 0.0, %v1581
        %1583 = vdwg.mxu0
        %v1585 = vsel %vm376, %v909, 0
        %v1588 = vsel %vm376, %v910, 0
        %v1591 = vsel %vm376, %v911, 0
        %v1594 = vsel %vm376, %v912, 0
        %v1597 = vsel %vm376, %v913, 0
        %v1600 = vsel %vm376, %v914, 0
        %v1603 = vsel %vm376, %v915, 0
        %v1606 = vsel %vm376, %v916, 0
        %1608 = vmatpush.msra.mxu0 0.0
        %1609 = vmatpush.msra.mxu0 0.0
        %1610 = vmatpush.msra.mxu0 0.0
        %1611 = vmatpush.msra.mxu0 0.0
        %1612 = vmatpush.msra.mxu0 0.0
        %1613 = vmatpush.msra.mxu0 0.0
        %1614 = vmatpush.msra.mxu0 0.0
        %1615 = vmatpush.msra.mxu0 0.0
        %1616 = vmatpush.msra.mxu0 0.0
        %1617 = vmatpush.msra.mxu0 0.0
        %1618 = vmatpush.msra.mxu0 0.0
        %1619 = vmatpush.msra.mxu0 0.0
        %1620 = vmatpush.msra.mxu0 %v920
        %1621 = vmatpush.msra.mxu0 %v919
        %1622 = vmatpush.msra.mxu0 %v918
        %1623 = vmatpush.msra.mxu0 %v917
        %1624 = vmatmul.f32.gmra.mxu0 %v1585
        %v1625 = vpop.f32.mrf.mxu0
        %v1626 = vadd.f32 %v1561, %v1625
        %1627 = vmatmul.f32.gmra.mxu0 %v1588
        %v1628 = vpop.f32.mrf.mxu0
        %v1629 = vadd.f32 %v1564, %v1628
        %1630 = vmatmul.f32.gmra.mxu0 %v1591
        %v1631 = vpop.f32.mrf.mxu0
        %v1632 = vadd.f32 %v1567, %v1631
        %1633 = vmatmul.f32.gmra.mxu0 %v1594
        %v1634 = vpop.f32.mrf.mxu0
        %v1635 = vadd.f32 %v1570, %v1634
        %1636 = vmatmul.f32.gmra.mxu0 %v1597
        %v1637 = vpop.f32.mrf.mxu0
        %v1638 = vadd.f32 %v1573, %v1637
        %1639 = vmatmul.f32.gmra.mxu0 %v1600
        %v1640 = vpop.f32.mrf.mxu0
        %v1641 = vadd.f32 %v1576, %v1640
        %1642 = vmatmul.f32.gmra.mxu0 %v1603
        %v1643 = vpop.f32.mrf.mxu0
        %v1644 = vadd.f32 %v1579, %v1643
        %1645 = vmatmul.f32.gmra.mxu0 %v1606
        %v1646 = vpop.f32.mrf.mxu0
        %v1647 = vadd.f32 %v1582, %v1646
        %1648 = vdwg.mxu0
        %v1649 = vld [vmem:[%s7] sm:$0xff]
        %v1650 = vld [vmem:[%s7 + $0x8] sm:$0xff]
        %v1651 = vld [vmem:[%s7 + $0x10] sm:$0xff]
        %v1652 = vld [vmem:[%s7 + $0x18] sm:$0xff]
        %v1653 = vld [vmem:[%s7 + $0x20] sm:$0xff]
        %v1654 = vld [vmem:[%s7 + $0x28] sm:$0xff]
        %v1655 = vld [vmem:[%s7 + $0x30] sm:$0xff]
        %v1656 = vld [vmem:[%s7 + $0x38] sm:$0xff]
        %1658 = vset.pattern.permute.xlu0 0
        %1659 = vperm.xlu0 %1658, %v1649
        %v1660 = vpop.permute.xlu0 %1659
        %1663 = vset.pattern.permute.xlu0 0
        %1664 = vperm.xlu0 %1663, %v1650
        %v1665 = vpop.permute.xlu0 %1664
        %1668 = vset.pattern.permute.xlu0 0
        %1669 = vperm.xlu0 %1668, %v1651
        %v1670 = vpop.permute.xlu0 %1669
        %1673 = vset.pattern.permute.xlu0 0
        %1674 = vperm.xlu0 %1673, %v1652
        %v1675 = vpop.permute.xlu0 %1674
        %1678 = vset.pattern.permute.xlu0 0
        %1679 = vperm.xlu0 %1678, %v1653
        %v1680 = vpop.permute.xlu0 %1679
        %1683 = vset.pattern.permute.xlu0 0
        %1684 = vperm.xlu0 %1683, %v1654
        %v1685 = vpop.permute.xlu0 %1684
        %1688 = vset.pattern.permute.xlu0 0
        %1689 = vperm.xlu0 %1688, %v1655
        %v1690 = vpop.permute.xlu0 %1689
        %1693 = vset.pattern.permute.xlu0 0
        %1694 = vperm.xlu0 %1693, %v1656
        %v1695 = vpop.permute.xlu0 %1694
        %v1697 = vadd.f32 %v1626, %v1660
        %v1698 = vadd.f32 %v1629, %v1665
        %v1699 = vadd.f32 %v1632, %v1670
        %v1700 = vadd.f32 %v1635, %v1675
        %v1701 = vadd.f32 %v1638, %v1680
        %v1702 = vadd.f32 %v1641, %v1685
        %v1703 = vadd.f32 %v1644, %v1690
        %v1704 = vadd.f32 %v1647, %v1695
        %1705 = vst [vmem:[%s326] sm:$0xff] %v1697
        %1706 = vst [vmem:[%s326 + $0x8] sm:$0xff] %v1698
        %1707 = vst [vmem:[%s326 + $0x10] sm:$0xff] %v1699
        %1708 = vst [vmem:[%s326 + $0x18] sm:$0xff] %v1700
        %1709 = vst [vmem:[%s326 + $0x20] sm:$0xff] %v1701
        %1710 = vst [vmem:[%s326 + $0x28] sm:$0xff] %v1702
        %1711 = vst [vmem:[%s326 + $0x30] sm:$0xff] %v1703
        %1712 = vst [vmem:[%s326 + $0x38] sm:$0xff] %v1704
        %s1713 = scalar_lea.vmem %s293, 64 [#allocation2]
        %v1714 = vld [vmem:[%s1713] sm:$0xff]
        %v1715 = vld [vmem:[%s1713 + $0x8] sm:$0xff]
        %v1716 = vld [vmem:[%s1713 + $0x10] sm:$0xff]
        %v1717 = vld [vmem:[%s1713 + $0x18] sm:$0xff]
        %v1718 = vld [vmem:[%s1] sm:$0xff]
        %v1719 = vld [vmem:[%s1 + $0x8] sm:$0xff]
        %v1720 = vld [vmem:[%s1 + $0x10] sm:$0xff]
        %v1721 = vld [vmem:[%s1 + $0x18] sm:$0xff]
        %v1722 = vld [vmem:[%s1 + $0x20] sm:$0xff]
        %v1723 = vld [vmem:[%s1 + $0x28] sm:$0xff]
        %v1724 = vld [vmem:[%s2] sm:$0xff]
        %v1725 = vld [vmem:[%s2 + $0x8] sm:$0xff]
        %v1726 = vld [vmem:[%s2 + $0x10] sm:$0xff]
        %v1727 = vld [vmem:[%s2 + $0x18] sm:$0xff]
        %v1728 = vld [vmem:[%s2 + $0x20] sm:$0xff]
        %v1729 = vld [vmem:[%s2 + $0x28] sm:$0xff]
        %1731 = vset.pattern.permute.xlu0 0
        %1732 = vperm.xlu0 %1731, %v1724
        %v1733 = vpop.permute.xlu0 %1732
        %1736 = vset.pattern.permute.xlu0 0
        %1737 = vperm.xlu0 %1736, %v1725
        %v1738 = vpop.permute.xlu0 %1737
        %1741 = vset.pattern.permute.xlu0 0
        %1742 = vperm.xlu0 %1741, %v1726
        %v1743 = vpop.permute.xlu0 %1742
        %1746 = vset.pattern.permute.xlu0 0
        %1747 = vperm.xlu0 %1746, %v1727
        %v1748 = vpop.permute.xlu0 %1747
        %1751 = vset.pattern.permute.xlu0 0
        %1752 = vperm.xlu0 %1751, %v1728
        %v1753 = vpop.permute.xlu0 %1752
        %1756 = vset.pattern.permute.xlu0 0
        %1757 = vperm.xlu0 %1756, %v1729
        %v1758 = vpop.permute.xlu0 %1757
        %v1761 = vsel %vm376, %v1718, 0
        %v1764 = vsel %vm376, %v1719, 0
        %v1767 = vsel %vm376, %v1720, 0
        %v1770 = vsel %vm376, %v1721, 0
        %v1773 = vsel %vm376, %v1722, 0
        %v1776 = vsel %vm376, %v1723, 0
        %1778 = vmatpush.msra.mxu0 0.0
        %1779 = vmatpush.msra.mxu0 0.0
        %1780 = vmatpush.msra.mxu0 0.0
        %1781 = vmatpush.msra.mxu0 0.0
        %1782 = vmatpush.msra.mxu0 0.0
        %1783 = vmatpush.msra.mxu0 0.0
        %1784 = vmatpush.msra.mxu0 0.0
        %1785 = vmatpush.msra.mxu0 0.0
        %1786 = vmatpush.msra.mxu0 0.0
        %1787 = vmatpush.msra.mxu0 0.0
        %1788 = vmatpush.msra.mxu0 0.0
        %1789 = vmatpush.msra.mxu0 0.0
        %1790 = vmatpush.msra.mxu0 %v1717
        %1791 = vmatpush.msra.mxu0 %v1716
        %1792 = vmatpush.msra.mxu0 %v1715
        %1793 = vmatpush.msra.mxu0 %v1714
        %1794 = vmatmul.f32.gmra.mxu0 %v1761
        %v1795 = vpop.f32.mrf.mxu0
        %v1796 = vadd.f32 %v1733, %v1795
        %1797 = vmatmul.f32.gmra.mxu0 %v1764
        %v1798 = vpop.f32.mrf.mxu0
        %v1799 = vadd.f32 %v1738, %v1798
        %1800 = vmatmul.f32.gmra.mxu0 %v1767
        %v1801 = vpop.f32.mrf.mxu0
        %v1802 = vadd.f32 %v1743, %v1801
        %1803 = vmatmul.f32.gmra.mxu0 %v1770
        %v1804 = vpop.f32.mrf.mxu0
        %v1805 = vadd.f32 %v1748, %v1804
        %1806 = vmatmul.f32.gmra.mxu0 %v1773
        %v1807 = vpop.f32.mrf.mxu0
        %v1808 = vadd.f32 %v1753, %v1807
        %1809 = vmatmul.f32.gmra.mxu0 %v1776
        %v1810 = vpop.f32.mrf.mxu0
        %v1811 = vadd.f32 %v1758, %v1810
        %1812 = vdwg.mxu0
        %1813 = vrot.lane.b32.xlu0 %v1796, 18
        %v1814 = vpop.permute.xlu0 %1813
        %v1815 = vld [vmem:[%s3] sm:$0xf]
        %v1816 = vunpack.c.l.bf16 %v1815
        %v1817 = vmul.f32 %v1816, %v1814
        %1818 = vrot.lane.b32.xlu0 %v1796, 17
        %v1819 = vpop.permute.xlu0 %1818
        %v1820 = vld [vmem:[%s437] sm:$0xf]
        %v1821 = vunpack.c.l.bf16 %v1820
        %v1822 = vmul.f32 %v1821, %v1819
        %1823 = vrot.lane.b32.xlu0 %v1796, 16
        %v1824 = vpop.permute.xlu0 %1823
        %v1825 = vld [vmem:[%s443] sm:$0xf]
        %v1826 = vunpack.c.l.bf16 %v1825
        %v1827 = vmul.f32 %v1826, %v1824
        %1828 = vrot.lane.b32.xlu0 %v1796, 15
        %v1829 = vpop.permute.xlu0 %1828
        %v1830 = vld [vmem:[%s449] sm:$0xf]
        %v1831 = vunpack.c.l.bf16 %v1830
        %v1832 = vmul.f32 %v1831, %v1829
        %1833 = vrot.lane.b32.xlu0 %v1796, 14
        %v1834 = vpop.permute.xlu0 %1833
        %v1835 = vld [vmem:[%s455] sm:$0xf]
        %v1836 = vunpack.c.l.bf16 %v1835
        %v1837 = vmul.f32 %v1836, %v1834
        %v1838 = vadd.f32 %v1817, %v1837
        %1839 = vrot.lane.b32.xlu0 %v1796, 10
        %v1840 = vpop.permute.xlu0 %1839
        %v1841 = vld [vmem:[%s462] sm:$0xf]
        %v1842 = vunpack.c.l.bf16 %v1841
        %v1843 = vmul.f32 %v1842, %v1840
        %v1844 = vadd.f32 %v1822, %v1843
        %1845 = vrot.lane.b32.xlu0 %v1796, 9
        %v1846 = vpop.permute.xlu0 %1845
        %v1847 = vld [vmem:[%s469] sm:$0xf]
        %v1848 = vunpack.c.l.bf16 %v1847
        %v1849 = vmul.f32 %v1848, %v1846
        %v1850 = vadd.f32 %v1827, %v1849
        %1851 = vrot.lane.b32.xlu0 %v1796, 8
        %v1852 = vpop.permute.xlu0 %1851
        %v1853 = vld [vmem:[%s476] sm:$0xf]
        %v1854 = vunpack.c.l.bf16 %v1853
        %v1855 = vmul.f32 %v1854, %v1852
        %v1856 = vadd.f32 %v1832, %v1855
        %1857 = vrot.lane.b32.xlu0 %v1796, 7
        %v1858 = vpop.permute.xlu0 %1857
        %v1859 = vld [vmem:[%s483] sm:$0xf]
        %v1860 = vunpack.c.l.bf16 %v1859
        %v1861 = vmul.f32 %v1860, %v1858
        %v1862 = vadd.f32 %v1838, %v1861
        %1863 = vrot.lane.b32.xlu0 %v1796, 6
        %v1864 = vpop.permute.xlu0 %1863
        %v1865 = vld [vmem:[%s490] sm:$0xf]
        %v1866 = vunpack.c.l.bf16 %v1865
        %v1867 = vmul.f32 %v1866, %v1864
        %v1868 = vadd.f32 %v1844, %v1867
        %1869 = vrot.lane.b32.xlu0 %v1796, 2
        %v1870 = vpop.permute.xlu0 %1869
        %v1871 = vld [vmem:[%s497] sm:$0xf]
        %v1872 = vunpack.c.l.bf16 %v1871
        %v1873 = vmul.f32 %v1872, %v1870
        %v1874 = vadd.f32 %v1850, %v1873
        %1875 = vrot.lane.b32.xlu0 %v1796, 1
        %v1876 = vpop.permute.xlu0 %1875
        %v1877 = vld [vmem:[%s504] sm:$0xf]
        %v1878 = vunpack.c.l.bf16 %v1877
        %v1879 = vmul.f32 %v1878, %v1876
        %v1880 = vadd.f32 %v1856, %v1879
        %v1881 = vld [vmem:[%s509] sm:$0xf]
        %v1882 = vunpack.c.l.bf16 %v1881
        %v1883 = vmul.f32 %v1882, %v1796
        %v1884 = vadd.f32 %v1862, %v1883
        %1885 = vrot.lane.b32.xlu0 %v1796, 127
        %v1886 = vpop.permute.xlu0 %1885
        %v1887 = vld [vmem:[%s516] sm:$0xf]
        %v1888 = vunpack.c.l.bf16 %v1887
        %v1889 = vmul.f32 %v1888, %v1886
        %v1890 = vadd.f32 %v1868, %v1889
        %1891 = vrot.lane.b32.xlu0 %v1796, 126
        %v1892 = vpop.permute.xlu0 %1891
        %v1893 = vld [vmem:[%s523] sm:$0xf]
        %v1894 = vunpack.c.l.bf16 %v1893
        %v1895 = vmul.f32 %v1894, %v1892
        %v1896 = vadd.f32 %v1874, %v1895
        %1897 = vrot.lane.b32.xlu0 %v1796, 122
        %v1898 = vpop.permute.xlu0 %1897
        %v1899 = vld [vmem:[%s530] sm:$0xf]
        %v1900 = vunpack.c.l.bf16 %v1899
        %v1901 = vmul.f32 %v1900, %v1898
        %v1902 = vadd.f32 %v1880, %v1901
        %1903 = vrot.lane.b32.xlu0 %v1796, 121
        %v1904 = vpop.permute.xlu0 %1903
        %v1905 = vld [vmem:[%s537] sm:$0xf]
        %v1906 = vunpack.c.l.bf16 %v1905
        %v1907 = vmul.f32 %v1906, %v1904
        %v1908 = vadd.f32 %v1884, %v1907
        %1909 = vrot.lane.b32.xlu0 %v1796, 120
        %v1910 = vpop.permute.xlu0 %1909
        %v1911 = vld [vmem:[%s544] sm:$0xf]
        %v1912 = vunpack.c.l.bf16 %v1911
        %v1913 = vmul.f32 %v1912, %v1910
        %v1914 = vadd.f32 %v1890, %v1913
        %1915 = vrot.lane.b32.xlu0 %v1796, 119
        %v1916 = vpop.permute.xlu0 %1915
        %v1917 = vld [vmem:[%s551] sm:$0xf]
        %v1918 = vunpack.c.l.bf16 %v1917
        %v1919 = vmul.f32 %v1918, %v1916
        %v1920 = vadd.f32 %v1896, %v1919
        %1921 = vrot.lane.b32.xlu0 %v1796, 118
        %v1922 = vpop.permute.xlu0 %1921
        %v1923 = vld [vmem:[%s558] sm:$0xf]
        %v1924 = vunpack.c.l.bf16 %v1923
        %v1925 = vmul.f32 %v1924, %v1922
        %v1926 = vadd.f32 %v1902, %v1925
        %1927 = vrot.lane.b32.xlu0 %v1796, 114
        %v1928 = vpop.permute.xlu0 %1927
        %v1929 = vld [vmem:[%s565] sm:$0xf]
        %v1930 = vunpack.c.l.bf16 %v1929
        %v1931 = vmul.f32 %v1930, %v1928
        %v1932 = vadd.f32 %v1908, %v1931
        %1933 = vrot.lane.b32.xlu0 %v1796, 113
        %v1934 = vpop.permute.xlu0 %1933
        %v1935 = vld [vmem:[%s572] sm:$0xf]
        %v1936 = vunpack.c.l.bf16 %v1935
        %v1937 = vmul.f32 %v1936, %v1934
        %v1938 = vadd.f32 %v1914, %v1937
        %1939 = vrot.lane.b32.xlu0 %v1796, 112
        %v1940 = vpop.permute.xlu0 %1939
        %v1941 = vld [vmem:[%s579] sm:$0xf]
        %v1942 = vunpack.c.l.bf16 %v1941
        %v1943 = vmul.f32 %v1942, %v1940
        %v1944 = vadd.f32 %v1920, %v1943
        %1945 = vrot.lane.b32.xlu0 %v1796, 111
        %v1946 = vpop.permute.xlu0 %1945
        %v1947 = vld [vmem:[%s586] sm:$0xf]
        %v1948 = vunpack.c.l.bf16 %v1947
        %v1949 = vmul.f32 %v1948, %v1946
        %v1950 = vadd.f32 %v1926, %v1949
        %1951 = vrot.lane.b32.xlu0 %v1796, 110
        %v1952 = vpop.permute.xlu0 %1951
        %v1953 = vld [vmem:[%s593] sm:$0xf]
        %v1954 = vunpack.c.l.bf16 %v1953
        %v1955 = vmul.f32 %v1954, %v1952
        %v1956 = vadd.f32 %v1932, %v1955
        %v1957 = vld [vmem:[%s4] sm:$0xff]
        %v1958 = vadd.f32 %v1956, %v1938
        %v1959 = vadd.f32 %v1944, %v1950
        %v1960 = vadd.f32 %v1958, %v1959
        %1962 = vset.pattern.permute.xlu0 0
        %1963 = vperm.xlu0 %1962, %v1957
        %v1964 = vpop.permute.xlu0 %1963
        %v1966 = vadd.f32 %v1964, %v1960
        %v1967 = vpack.c.bf16 %v1966, %v1966
        %v1968 = vpack.c.bf16 %v1799, %v1799
        %v1969 = vld [vmem:[%s5] sm:$0xf]
        %v1970 = vld [vmem:[%s5 + $0x4] sm:$0xf]
        %v1971 = vld [vmem:[%s5 + $0x8] sm:$0xf]
        %v1972 = vld [vmem:[%s5 + $0xc] sm:$0xf]
        %v1973 = vld [vmem:[%s5 + $0x10] sm:$0xf]
        %v1974 = vld [vmem:[%s5 + $0x14] sm:$0xf]
        %v1975 = vld [vmem:[%s5 + $0x18] sm:$0xf]
        %v1976 = vld [vmem:[%s5 + $0x1c] sm:$0xf]
        %v1977 = vld [vmem:[%s5 + $0x20] sm:$0xf]
        %v1978 = vld [vmem:[%s5 + $0x24] sm:$0xf]
        %v1979 = vld [vmem:[%s5 + $0x28] sm:$0xf]
        %v1980 = vld [vmem:[%s5 + $0x2c] sm:$0xf]
        %v1981 = vld [vmem:[%s5 + $0x30] sm:$0xf]
        %v1982 = vld [vmem:[%s5 + $0x34] sm:$0xf]
        %v1983 = vld [vmem:[%s5 + $0x38] sm:$0xf]
        %v1984 = vld [vmem:[%s5 + $0x3c] sm:$0xf]
        %v1985 = vunpack.c.l.bf16 %v1969
        %v1986 = vunpack.c.l.bf16 %v1970
        %v1987 = vunpack.c.l.bf16 %v1971
        %v1988 = vunpack.c.l.bf16 %v1972
        %v1989 = vunpack.c.l.bf16 %v1973
        %v1990 = vunpack.c.l.bf16 %v1974
        %v1991 = vunpack.c.l.bf16 %v1975
        %v1992 = vunpack.c.l.bf16 %v1976
        %v1993 = vunpack.c.l.bf16 %v1977
        %v1994 = vunpack.c.l.bf16 %v1978
        %v1995 = vunpack.c.l.bf16 %v1979
        %v1996 = vunpack.c.l.bf16 %v1980
        %v1997 = vunpack.c.l.bf16 %v1981
        %v1998 = vunpack.c.l.bf16 %v1982
        %v1999 = vunpack.c.l.bf16 %v1983
        %v2000 = vunpack.c.l.bf16 %v1984
        %2001 = vxpose.xlu0.c.b16.start [1/8] %v1967, 128
        %2002 = vxpose.xlu0.c.b16.cont [2/8] 0, 128
        %2003 = vxpose.xlu0.c.b16.cont [3/8] 0, 128
        %2004 = vxpose.xlu0.c.b16.cont [4/8] 0, 128
        %2005 = vxpose.xlu0.c.b16.cont [5/8] 0, 128
        %2006 = vxpose.xlu0.c.b16.cont [6/8] 0, 128
        %2007 = vxpose.xlu0.c.b16.cont [7/8] 0, 128
        %2008 = vxpose.xlu0.c.b16.end [8/8] 0, 128
        %v2009 = vpop.trf.xlu0
        %v2010 = vpop.trf.xlu0
        %v2011 = vpop.trf.xlu0
        %v2012 = vpop.trf.xlu0
        %v2013 = vpop.trf.xlu0
        %v2014 = vpop.trf.xlu0
        %v2015 = vpop.trf.xlu0
        %v2016 = vpop.trf.xlu0
        %v2018 = vsel %vm658, %v2009, 0
        %v2021 = vsel %vm658, %v2010, 0
        %v2024 = vsel %vm658, %v2011, 0
        %v2027 = vsel %vm658, %v2012, 0
        %v2030 = vsel %vm658, %v2013, 0
        %v2033 = vsel %vm658, %v2014, 0
        %v2036 = vsel %vm658, %v2015, 0
        %v2039 = vsel %vm658, %v2016, 0
        %v2042 = vsel %vm683, %v1968, 0
        %2044 = vmatpush.bf16.msra.mxu0 0
        %2045 = vmatpush.bf16.msra.mxu0 0
        %2046 = vmatpush.bf16.msra.mxu0 0
        %2047 = vmatpush.bf16.msra.mxu0 0
        %2048 = vmatpush.bf16.msra.mxu0 0
        %2049 = vmatpush.bf16.msra.mxu0 0
        %2050 = vmatpush.bf16.msra.mxu0 0
        %2051 = vmatpush.bf16.msra.mxu0 %v2042
        %2052 = vmatmul.bf16.gmra.mxu0 %v2018
        %v2053 = vpop.f32.mrf.mxu0
        %v2054 = vadd.f32 %v1985, %v2053
        %v2055 = vpop.f32.mrf.mxu0
        %v2056 = vadd.f32 %v1986, %v2055
        %2057 = vmatmul.bf16.gmra.mxu0 %v2021
        %v2058 = vpop.f32.mrf.mxu0
        %v2059 = vadd.f32 %v1987, %v2058
        %v2060 = vpop.f32.mrf.mxu0
        %v2061 = vadd.f32 %v1988, %v2060
        %2062 = vmatmul.bf16.gmra.mxu0 %v2024
        %v2063 = vpop.f32.mrf.mxu0
        %v2064 = vadd.f32 %v1989, %v2063
        %v2065 = vpop.f32.mrf.mxu0
        %v2066 = vadd.f32 %v1990, %v2065
        %2067 = vmatmul.bf16.gmra.mxu0 %v2027
        %v2068 = vpop.f32.mrf.mxu0
        %v2069 = vadd.f32 %v1991, %v2068
        %v2070 = vpop.f32.mrf.mxu0
        %v2071 = vadd.f32 %v1992, %v2070
        %2072 = vmatmul.bf16.gmra.mxu0 %v2030
        %v2073 = vpop.f32.mrf.mxu0
        %v2074 = vadd.f32 %v1993, %v2073
        %v2075 = vpop.f32.mrf.mxu0
        %v2076 = vadd.f32 %v1994, %v2075
        %2077 = vmatmul.bf16.gmra.mxu0 %v2033
        %v2078 = vpop.f32.mrf.mxu0
        %v2079 = vadd.f32 %v1995, %v2078
        %v2080 = vpop.f32.mrf.mxu0
        %v2081 = vadd.f32 %v1996, %v2080
        %2082 = vmatmul.bf16.gmra.mxu0 %v2036
        %v2083 = vpop.f32.mrf.mxu0
        %v2084 = vadd.f32 %v1997, %v2083
        %v2085 = vpop.f32.mrf.mxu0
        %v2086 = vadd.f32 %v1998, %v2085
        %2087 = vmatmul.bf16.gmra.mxu0 %v2039
        %v2088 = vpop.f32.mrf.mxu0
        %v2089 = vadd.f32 %v1999, %v2088
        %v2090 = vpop.f32.mrf.mxu0
        %v2091 = vadd.f32 %v2000, %v2090
        %2092 = vdwg.mxu0
        %2093 = vmax.xlane.f32.xlu0 %v2054
        %v2094 = vpop.xlane.xlu0 %2093
        %2095 = vmax.xlane.f32.xlu0 %v2056
        %v2096 = vpop.xlane.xlu0 %2095
        %2097 = vmax.xlane.f32.xlu0 %v2059
        %v2098 = vpop.xlane.xlu0 %2097
        %2099 = vmax.xlane.f32.xlu0 %v2061
        %v2100 = vpop.xlane.xlu0 %2099
        %2101 = vmax.xlane.f32.xlu0 %v2064
        %v2102 = vpop.xlane.xlu0 %2101
        %2103 = vmax.xlane.f32.xlu0 %v2066
        %v2104 = vpop.xlane.xlu0 %2103
        %2105 = vmax.xlane.f32.xlu0 %v2069
        %v2106 = vpop.xlane.xlu0 %2105
        %2107 = vmax.xlane.f32.xlu0 %v2071
        %v2108 = vpop.xlane.xlu0 %2107
        %2109 = vmax.xlane.f32.xlu0 %v2074
        %v2110 = vpop.xlane.xlu0 %2109
        %2111 = vmax.xlane.f32.xlu0 %v2076
        %v2112 = vpop.xlane.xlu0 %2111
        %2113 = vmax.xlane.f32.xlu0 %v2079
        %v2114 = vpop.xlane.xlu0 %2113
        %2115 = vmax.xlane.f32.xlu0 %v2081
        %v2116 = vpop.xlane.xlu0 %2115
        %2117 = vmax.xlane.f32.xlu0 %v2084
        %v2118 = vpop.xlane.xlu0 %2117
        %2119 = vmax.xlane.f32.xlu0 %v2086
        %v2120 = vpop.xlane.xlu0 %2119
        %2121 = vmax.xlane.f32.xlu0 %v2089
        %v2122 = vpop.xlane.xlu0 %2121
        %2123 = vmax.xlane.f32.xlu0 %v2091
        %v2124 = vpop.xlane.xlu0 %2123
        %v2125 = vsub.f32 %v2054, %v2094
        %v2126 = vsub.f32 %v2056, %v2096
        %v2127 = vsub.f32 %v2059, %v2098
        %v2128 = vsub.f32 %v2061, %v2100
        %v2129 = vsub.f32 %v2064, %v2102
        %v2130 = vsub.f32 %v2066, %v2104
        %v2131 = vsub.f32 %v2069, %v2106
        %v2132 = vsub.f32 %v2071, %v2108
        %v2133 = vsub.f32 %v2074, %v2110
        %v2134 = vsub.f32 %v2076, %v2112
        %v2135 = vsub.f32 %v2079, %v2114
        %v2136 = vsub.f32 %v2081, %v2116
        %v2137 = vsub.f32 %v2084, %v2118
        %v2138 = vsub.f32 %v2086, %v2120
        %v2139 = vsub.f32 %v2089, %v2122
        %v2140 = vsub.f32 %v2091, %v2124
        %v2141 = vmul.f32 %v2125, 1.442695
        %v2142 = vpow.pop %v2141
        %v2143 = vmul.f32 %v2126, 1.442695
        %v2144 = vpow.pop %v2143
        %v2145 = vmul.f32 %v2127, 1.442695
        %v2146 = vpow.pop %v2145
        %v2147 = vmul.f32 %v2128, 1.442695
        %v2148 = vpow.pop %v2147
        %v2149 = vmul.f32 %v2129, 1.442695
        %v2150 = vpow.pop %v2149
        %v2151 = vmul.f32 %v2130, 1.442695
        %v2152 = vpow.pop %v2151
        %v2153 = vmul.f32 %v2131, 1.442695
        %v2154 = vpow.pop %v2153
        %v2155 = vmul.f32 %v2132, 1.442695
        %v2156 = vpow.pop %v2155
        %v2157 = vmul.f32 %v2133, 1.442695
        %v2158 = vpow.pop %v2157
        %v2159 = vmul.f32 %v2134, 1.442695
        %v2160 = vpow.pop %v2159
        %v2161 = vmul.f32 %v2135, 1.442695
        %v2162 = vpow.pop %v2161
        %v2163 = vmul.f32 %v2136, 1.442695
        %v2164 = vpow.pop %v2163
        %v2165 = vmul.f32 %v2137, 1.442695
        %v2166 = vpow.pop %v2165
        %v2167 = vmul.f32 %v2138, 1.442695
        %v2168 = vpow.pop %v2167
        %v2169 = vmul.f32 %v2139, 1.442695
        %v2170 = vpow.pop %v2169
        %v2171 = vmul.f32 %v2140, 1.442695
        %v2172 = vpow.pop %v2171
        %2173 = vadd.xlane.f32.xlu0 %v2142
        %v2174 = vpop.xlane.xlu0 %2173
        %2175 = vadd.xlane.f32.xlu0 %v2144
        %v2176 = vpop.xlane.xlu0 %2175
        %2177 = vadd.xlane.f32.xlu0 %v2146
        %v2178 = vpop.xlane.xlu0 %2177
        %2179 = vadd.xlane.f32.xlu0 %v2148
        %v2180 = vpop.xlane.xlu0 %2179
        %2181 = vadd.xlane.f32.xlu0 %v2150
        %v2182 = vpop.xlane.xlu0 %2181
        %2183 = vadd.xlane.f32.xlu0 %v2152
        %v2184 = vpop.xlane.xlu0 %2183
        %2185 = vadd.xlane.f32.xlu0 %v2154
        %v2186 = vpop.xlane.xlu0 %2185
        %2187 = vadd.xlane.f32.xlu0 %v2156
        %v2188 = vpop.xlane.xlu0 %2187
        %2189 = vadd.xlane.f32.xlu0 %v2158
        %v2190 = vpop.xlane.xlu0 %2189
        %2191 = vadd.xlane.f32.xlu0 %v2160
        %v2192 = vpop.xlane.xlu0 %2191
        %2193 = vadd.xlane.f32.xlu0 %v2162
        %v2194 = vpop.xlane.xlu0 %2193
        %2195 = vadd.xlane.f32.xlu0 %v2164
        %v2196 = vpop.xlane.xlu0 %2195
        %2197 = vadd.xlane.f32.xlu0 %v2166
        %v2198 = vpop.xlane.xlu0 %2197
        %2199 = vadd.xlane.f32.xlu0 %v2168
        %v2200 = vpop.xlane.xlu0 %2199
        %2201 = vadd.xlane.f32.xlu0 %v2170
        %v2202 = vpop.xlane.xlu0 %2201
        %2203 = vadd.xlane.f32.xlu0 %v2172
        %v2204 = vpop.xlane.xlu0 %2203
        %v2205 = vrcp.pop %v2174
        %v2206 = vrcp.pop %v2176
        %v2207 = vrcp.pop %v2178
        %v2208 = vrcp.pop %v2180
        %v2209 = vrcp.pop %v2182
        %v2210 = vrcp.pop %v2184
        %v2211 = vrcp.pop %v2186
        %v2212 = vrcp.pop %v2188
        %v2213 = vrcp.pop %v2190
        %v2214 = vrcp.pop %v2192
        %v2215 = vrcp.pop %v2194
        %v2216 = vrcp.pop %v2196
        %v2217 = vrcp.pop %v2198
        %v2218 = vrcp.pop %v2200
        %v2219 = vrcp.pop %v2202
        %v2220 = vrcp.pop %v2204
        %v2221 = vmul.f32 %v2142, %v2205
        %v2222 = vmul.f32 %v2144, %v2206
        %v2223 = vmul.f32 %v2146, %v2207
        %v2224 = vmul.f32 %v2148, %v2208
        %v2225 = vmul.f32 %v2150, %v2209
        %v2226 = vmul.f32 %v2152, %v2210
        %v2227 = vmul.f32 %v2154, %v2211
        %v2228 = vmul.f32 %v2156, %v2212
        %v2229 = vmul.f32 %v2158, %v2213
        %v2230 = vmul.f32 %v2160, %v2214
        %v2231 = vmul.f32 %v2162, %v2215
        %v2232 = vmul.f32 %v2164, %v2216
        %v2233 = vmul.f32 %v2166, %v2217
        %v2234 = vmul.f32 %v2168, %v2218
        %v2235 = vmul.f32 %v2170, %v2219
        %v2236 = vmul.f32 %v2172, %v2220
        %v2237 = vpack.c.bf16 %v1805, %v1802
        %v2238 = vpack.c.bf16 %v1811, %v1808
        %v2239 = vpack.c.bf16 %v2222, %v2221
        %v2240 = vpack.c.bf16 %v2224, %v2223
        %v2241 = vpack.c.bf16 %v2226, %v2225
        %v2242 = vpack.c.bf16 %v2228, %v2227
        %v2243 = vpack.c.bf16 %v2230, %v2229
        %v2244 = vpack.c.bf16 %v2232, %v2231
        %v2245 = vpack.c.bf16 %v2234, %v2233
        %v2246 = vpack.c.bf16 %v2236, %v2235
        %2247 = vmatpush.bf16.xpose.msra.mxu0 %v2246
        %2248 = vmatpush.bf16.xpose.msra.mxu0 %v2245
        %2249 = vmatpush.bf16.xpose.msra.mxu0 %v2244
        %2250 = vmatpush.bf16.xpose.msra.mxu0 %v2243
        %2251 = vmatpush.bf16.xpose.msra.mxu0 %v2242
        %2252 = vmatpush.bf16.xpose.msra.mxu0 %v2241
        %2253 = vmatpush.bf16.xpose.msra.mxu0 %v2240
        %2254 = vmatpush.bf16.xpose.msra.mxu0 %v2239
        %2255 = vmatmul.bf16.gmra.mxu0 %v2237
        %v2256 = vpop.f32.mrf.mxu0
        %v2257 = vadd.f32 0.0, %v2256
        %v2258 = vpop.f32.mrf.mxu0
        %v2259 = vadd.f32 0.0, %v2258
        %2260 = vmatmul.bf16.gmra.mxu0 %v2238
        %v2261 = vpop.f32.mrf.mxu0
        %v2262 = vadd.f32 0.0, %v2261
        %v2263 = vpop.f32.mrf.mxu0
        %v2264 = vadd.f32 0.0, %v2263
        %2265 = vdwg.mxu0
        %v2266 = vld [vmem:[%s6] sm:$0xff]
        %v2267 = vld [vmem:[%s6 + $0x8] sm:$0xff]
        %v2268 = vld [vmem:[%s6 + $0x10] sm:$0xff]
        %v2269 = vld [vmem:[%s6 + $0x18] sm:$0xff]
        %v2270 = vld [vmem:[%s6 + $0x20] sm:$0xff]
        %v2271 = vld [vmem:[%s6 + $0x28] sm:$0xff]
        %v2272 = vld [vmem:[%s6 + $0x30] sm:$0xff]
        %v2273 = vld [vmem:[%s6 + $0x38] sm:$0xff]
        %v2274 = vmax.f32 %v2257, 0.0
        %v2275 = vmax.f32 %v2259, 0.0
        %v2276 = vmax.f32 %v2262, 0.0
        %v2277 = vmax.f32 %v2264, 0.0
        %v2278 = vld [vmem:[%s1713 + $0x20] sm:$0xff]
        %v2279 = vld [vmem:[%s1713 + $0x28] sm:$0xff]
        %v2280 = vld [vmem:[%s1713 + $0x30] sm:$0xff]
        %v2281 = vld [vmem:[%s1713 + $0x38] sm:$0xff]
        %v2282 = vadd.f32 %v2257, %v2278
        %v2283 = vadd.f32 %v2259, %v2279
        %v2284 = vadd.f32 %v2262, %v2280
        %v2285 = vadd.f32 %v2264, %v2281
        %v2286 = vld [vmem:[%s929] sm:$0xff]
        %v2287 = vld [vmem:[%s929 + $0x8] sm:$0xff]
        %v2288 = vld [vmem:[%s929 + $0x10] sm:$0xff]
        %v2289 = vld [vmem:[%s929 + $0x18] sm:$0xff]
        %v2290 = vld [vmem:[%s929 + $0x20] sm:$0xff]
        %v2291 = vld [vmem:[%s929 + $0x28] sm:$0xff]
        %v2292 = vld [vmem:[%s936] sm:$0xff]
        %v2293 = vld [vmem:[%s936 + $0x8] sm:$0xff]
        %v2294 = vld [vmem:[%s936 + $0x10] sm:$0xff]
        %v2295 = vld [vmem:[%s936 + $0x18] sm:$0xff]
        %v2296 = vld [vmem:[%s936 + $0x20] sm:$0xff]
        %v2297 = vld [vmem:[%s936 + $0x28] sm:$0xff]
        %2299 = vset.pattern.permute.xlu0 0
        %2300 = vperm.xlu0 %2299, %v2292
        %v2301 = vpop.permute.xlu0 %2300
        %2304 = vset.pattern.permute.xlu0 0
        %2305 = vperm.xlu0 %2304, %v2293
        %v2306 = vpop.permute.xlu0 %2305
        %2309 = vset.pattern.permute.xlu0 0
        %2310 = vperm.xlu0 %2309, %v2294
        %v2311 = vpop.permute.xlu0 %2310
        %2314 = vset.pattern.permute.xlu0 0
        %2315 = vperm.xlu0 %2314, %v2295
        %v2316 = vpop.permute.xlu0 %2315
        %2319 = vset.pattern.permute.xlu0 0
        %2320 = vperm.xlu0 %2319, %v2296
        %v2321 = vpop.permute.xlu0 %2320
        %2324 = vset.pattern.permute.xlu0 0
        %2325 = vperm.xlu0 %2324, %v2297
        %v2326 = vpop.permute.xlu0 %2325
        %v2329 = vsel %vm376, %v2286, 0
        %v2332 = vsel %vm376, %v2287, 0
        %v2335 = vsel %vm376, %v2288, 0
        %v2338 = vsel %vm376, %v2289, 0
        %v2341 = vsel %vm376, %v2290, 0
        %v2344 = vsel %vm376, %v2291, 0
        %2346 = vmatpush.msra.mxu0 0.0
        %2347 = vmatpush.msra.mxu0 0.0
        %2348 = vmatpush.msra.mxu0 0.0
        %2349 = vmatpush.msra.mxu0 0.0
        %2350 = vmatpush.msra.mxu0 0.0
        %2351 = vmatpush.msra.mxu0 0.0
        %2352 = vmatpush.msra.mxu0 0.0
        %2353 = vmatpush.msra.mxu0 0.0
        %2354 = vmatpush.msra.mxu0 0.0
        %2355 = vmatpush.msra.mxu0 0.0
        %2356 = vmatpush.msra.mxu0 0.0
        %2357 = vmatpush.msra.mxu0 0.0
        %2358 = vmatpush.msra.mxu0 %v2285
        %2359 = vmatpush.msra.mxu0 %v2284
        %2360 = vmatpush.msra.mxu0 %v2283
        %2361 = vmatpush.msra.mxu0 %v2282
        %2362 = vmatmul.f32.gmra.mxu0 %v2329
        %v2363 = vpop.f32.mrf.mxu0
        %v2364 = vadd.f32 %v2301, %v2363
        %2365 = vmatmul.f32.gmra.mxu0 %v2332
        %v2366 = vpop.f32.mrf.mxu0
        %v2367 = vadd.f32 %v2306, %v2366
        %2368 = vmatmul.f32.gmra.mxu0 %v2335
        %v2369 = vpop.f32.mrf.mxu0
        %v2370 = vadd.f32 %v2311, %v2369
        %2371 = vmatmul.f32.gmra.mxu0 %v2338
        %v2372 = vpop.f32.mrf.mxu0
        %v2373 = vadd.f32 %v2316, %v2372
        %2374 = vmatmul.f32.gmra.mxu0 %v2341
        %v2375 = vpop.f32.mrf.mxu0
        %v2376 = vadd.f32 %v2321, %v2375
        %2377 = vmatmul.f32.gmra.mxu0 %v2344
        %v2378 = vpop.f32.mrf.mxu0
        %v2379 = vadd.f32 %v2326, %v2378
        %2380 = vdwg.mxu0
        %2381 = vrot.lane.b32.xlu0 %v2364, 18
        %v2382 = vpop.permute.xlu0 %2381
        %v2383 = vld [vmem:[%s1028] sm:$0xf]
        %v2384 = vunpack.c.l.bf16 %v2383
        %v2385 = vmul.f32 %v2384, %v2382
        %2386 = vrot.lane.b32.xlu0 %v2364, 17
        %v2387 = vpop.permute.xlu0 %2386
        %v2388 = vld [vmem:[%s1034] sm:$0xf]
        %v2389 = vunpack.c.l.bf16 %v2388
        %v2390 = vmul.f32 %v2389, %v2387
        %2391 = vrot.lane.b32.xlu0 %v2364, 16
        %v2392 = vpop.permute.xlu0 %2391
        %v2393 = vld [vmem:[%s1040] sm:$0xf]
        %v2394 = vunpack.c.l.bf16 %v2393
        %v2395 = vmul.f32 %v2394, %v2392
        %2396 = vrot.lane.b32.xlu0 %v2364, 15
        %v2397 = vpop.permute.xlu0 %2396
        %v2398 = vld [vmem:[%s1046] sm:$0xf]
        %v2399 = vunpack.c.l.bf16 %v2398
        %v2400 = vmul.f32 %v2399, %v2397
        %2401 = vrot.lane.b32.xlu0 %v2364, 14
        %v2402 = vpop.permute.xlu0 %2401
        %v2403 = vld [vmem:[%s1052] sm:$0xf]
        %v2404 = vunpack.c.l.bf16 %v2403
        %v2405 = vmul.f32 %v2404, %v2402
        %v2406 = vadd.f32 %v2385, %v2405
        %2407 = vrot.lane.b32.xlu0 %v2364, 10
        %v2408 = vpop.permute.xlu0 %2407
        %v2409 = vld [vmem:[%s1059] sm:$0xf]
        %v2410 = vunpack.c.l.bf16 %v2409
        %v2411 = vmul.f32 %v2410, %v2408
        %v2412 = vadd.f32 %v2390, %v2411
        %2413 = vrot.lane.b32.xlu0 %v2364, 9
        %v2414 = vpop.permute.xlu0 %2413
        %v2415 = vld [vmem:[%s1066] sm:$0xf]
        %v2416 = vunpack.c.l.bf16 %v2415
        %v2417 = vmul.f32 %v2416, %v2414
        %v2418 = vadd.f32 %v2395, %v2417
        %2419 = vrot.lane.b32.xlu0 %v2364, 8
        %v2420 = vpop.permute.xlu0 %2419
        %v2421 = vld [vmem:[%s1073] sm:$0xf]
        %v2422 = vunpack.c.l.bf16 %v2421
        %v2423 = vmul.f32 %v2422, %v2420
        %v2424 = vadd.f32 %v2400, %v2423
        %2425 = vrot.lane.b32.xlu0 %v2364, 7
        %v2426 = vpop.permute.xlu0 %2425
        %v2427 = vld [vmem:[%s1080] sm:$0xf]
        %v2428 = vunpack.c.l.bf16 %v2427
        %v2429 = vmul.f32 %v2428, %v2426
        %v2430 = vadd.f32 %v2406, %v2429
        %2431 = vrot.lane.b32.xlu0 %v2364, 6
        %v2432 = vpop.permute.xlu0 %2431
        %v2433 = vld [vmem:[%s1087] sm:$0xf]
        %v2434 = vunpack.c.l.bf16 %v2433
        %v2435 = vmul.f32 %v2434, %v2432
        %v2436 = vadd.f32 %v2412, %v2435
        %2437 = vrot.lane.b32.xlu0 %v2364, 2
        %v2438 = vpop.permute.xlu0 %2437
        %v2439 = vld [vmem:[%s1094] sm:$0xf]
        %v2440 = vunpack.c.l.bf16 %v2439
        %v2441 = vmul.f32 %v2440, %v2438
        %v2442 = vadd.f32 %v2418, %v2441
        %2443 = vrot.lane.b32.xlu0 %v2364, 1
        %v2444 = vpop.permute.xlu0 %2443
        %v2445 = vld [vmem:[%s1101] sm:$0xf]
        %v2446 = vunpack.c.l.bf16 %v2445
        %v2447 = vmul.f32 %v2446, %v2444
        %v2448 = vadd.f32 %v2424, %v2447
        %v2449 = vld [vmem:[%s1106] sm:$0xf]
        %v2450 = vunpack.c.l.bf16 %v2449
        %v2451 = vmul.f32 %v2450, %v2364
        %v2452 = vadd.f32 %v2430, %v2451
        %2453 = vrot.lane.b32.xlu0 %v2364, 127
        %v2454 = vpop.permute.xlu0 %2453
        %v2455 = vld [vmem:[%s1113] sm:$0xf]
        %v2456 = vunpack.c.l.bf16 %v2455
        %v2457 = vmul.f32 %v2456, %v2454
        %v2458 = vadd.f32 %v2436, %v2457
        %2459 = vrot.lane.b32.xlu0 %v2364, 126
        %v2460 = vpop.permute.xlu0 %2459
        %v2461 = vld [vmem:[%s1120] sm:$0xf]
        %v2462 = vunpack.c.l.bf16 %v2461
        %v2463 = vmul.f32 %v2462, %v2460
        %v2464 = vadd.f32 %v2442, %v2463
        %2465 = vrot.lane.b32.xlu0 %v2364, 122
        %v2466 = vpop.permute.xlu0 %2465
        %v2467 = vld [vmem:[%s1127] sm:$0xf]
        %v2468 = vunpack.c.l.bf16 %v2467
        %v2469 = vmul.f32 %v2468, %v2466
        %v2470 = vadd.f32 %v2448, %v2469
        %2471 = vrot.lane.b32.xlu0 %v2364, 121
        %v2472 = vpop.permute.xlu0 %2471
        %v2473 = vld [vmem:[%s1134] sm:$0xf]
        %v2474 = vunpack.c.l.bf16 %v2473
        %v2475 = vmul.f32 %v2474, %v2472
        %v2476 = vadd.f32 %v2452, %v2475
        %2477 = vrot.lane.b32.xlu0 %v2364, 120
        %v2478 = vpop.permute.xlu0 %2477
        %v2479 = vld [vmem:[%s1141] sm:$0xf]
        %v2480 = vunpack.c.l.bf16 %v2479
        %v2481 = vmul.f32 %v2480, %v2478
        %v2482 = vadd.f32 %v2458, %v2481
        %2483 = vrot.lane.b32.xlu0 %v2364, 119
        %v2484 = vpop.permute.xlu0 %2483
        %v2485 = vld [vmem:[%s1148] sm:$0xf]
        %v2486 = vunpack.c.l.bf16 %v2485
        %v2487 = vmul.f32 %v2486, %v2484
        %v2488 = vadd.f32 %v2464, %v2487
        %2489 = vrot.lane.b32.xlu0 %v2364, 118
        %v2490 = vpop.permute.xlu0 %2489
        %v2491 = vld [vmem:[%s1155] sm:$0xf]
        %v2492 = vunpack.c.l.bf16 %v2491
        %v2493 = vmul.f32 %v2492, %v2490
        %v2494 = vadd.f32 %v2470, %v2493
        %2495 = vrot.lane.b32.xlu0 %v2364, 114
        %v2496 = vpop.permute.xlu0 %2495
        %v2497 = vld [vmem:[%s1162] sm:$0xf]
        %v2498 = vunpack.c.l.bf16 %v2497
        %v2499 = vmul.f32 %v2498, %v2496
        %v2500 = vadd.f32 %v2476, %v2499
        %2501 = vrot.lane.b32.xlu0 %v2364, 113
        %v2502 = vpop.permute.xlu0 %2501
        %v2503 = vld [vmem:[%s1169] sm:$0xf]
        %v2504 = vunpack.c.l.bf16 %v2503
        %v2505 = vmul.f32 %v2504, %v2502
        %v2506 = vadd.f32 %v2482, %v2505
        %2507 = vrot.lane.b32.xlu0 %v2364, 112
        %v2508 = vpop.permute.xlu0 %2507
        %v2509 = vld [vmem:[%s1176] sm:$0xf]
        %v2510 = vunpack.c.l.bf16 %v2509
        %v2511 = vmul.f32 %v2510, %v2508
        %v2512 = vadd.f32 %v2488, %v2511
        %2513 = vrot.lane.b32.xlu0 %v2364, 111
        %v2514 = vpop.permute.xlu0 %2513
        %v2515 = vld [vmem:[%s1183] sm:$0xf]
        %v2516 = vunpack.c.l.bf16 %v2515
        %v2517 = vmul.f32 %v2516, %v2514
        %v2518 = vadd.f32 %v2494, %v2517
        %2519 = vrot.lane.b32.xlu0 %v2364, 110
        %v2520 = vpop.permute.xlu0 %2519
        %v2521 = vld [vmem:[%s1190] sm:$0xf]
        %v2522 = vunpack.c.l.bf16 %v2521
        %v2523 = vmul.f32 %v2522, %v2520
        %v2524 = vadd.f32 %v2500, %v2523
        %v2525 = vld [vmem:[%s1195] sm:$0xff]
        %v2526 = vadd.f32 %v2524, %v2506
        %v2527 = vadd.f32 %v2512, %v2518
        %v2528 = vadd.f32 %v2526, %v2527
        %2530 = vset.pattern.permute.xlu0 0
        %2531 = vperm.xlu0 %2530, %v2525
        %v2532 = vpop.permute.xlu0 %2531
        %v2534 = vadd.f32 %v2532, %v2528
        %v2535 = vpack.c.bf16 %v2534, %v2534
        %v2536 = vpack.c.bf16 %v2367, %v2367
        %v2537 = vld [vmem:[%s1208] sm:$0xf]
        %v2538 = vld [vmem:[%s1208 + $0x4] sm:$0xf]
        %v2539 = vld [vmem:[%s1208 + $0x8] sm:$0xf]
        %v2540 = vld [vmem:[%s1208 + $0xc] sm:$0xf]
        %v2541 = vld [vmem:[%s1208 + $0x10] sm:$0xf]
        %v2542 = vld [vmem:[%s1208 + $0x14] sm:$0xf]
        %v2543 = vld [vmem:[%s1208 + $0x18] sm:$0xf]
        %v2544 = vld [vmem:[%s1208 + $0x1c] sm:$0xf]
        %v2545 = vld [vmem:[%s1208 + $0x20] sm:$0xf]
        %v2546 = vld [vmem:[%s1208 + $0x24] sm:$0xf]
        %v2547 = vld [vmem:[%s1208 + $0x28] sm:$0xf]
        %v2548 = vld [vmem:[%s1208 + $0x2c] sm:$0xf]
        %v2549 = vld [vmem:[%s1208 + $0x30] sm:$0xf]
        %v2550 = vld [vmem:[%s1208 + $0x34] sm:$0xf]
        %v2551 = vld [vmem:[%s1208 + $0x38] sm:$0xf]
        %v2552 = vld [vmem:[%s1208 + $0x3c] sm:$0xf]
        %v2553 = vunpack.c.l.bf16 %v2537
        %v2554 = vunpack.c.l.bf16 %v2538
        %v2555 = vunpack.c.l.bf16 %v2539
        %v2556 = vunpack.c.l.bf16 %v2540
        %v2557 = vunpack.c.l.bf16 %v2541
        %v2558 = vunpack.c.l.bf16 %v2542
        %v2559 = vunpack.c.l.bf16 %v2543
        %v2560 = vunpack.c.l.bf16 %v2544
        %v2561 = vunpack.c.l.bf16 %v2545
        %v2562 = vunpack.c.l.bf16 %v2546
        %v2563 = vunpack.c.l.bf16 %v2547
        %v2564 = vunpack.c.l.bf16 %v2548
        %v2565 = vunpack.c.l.bf16 %v2549
        %v2566 = vunpack.c.l.bf16 %v2550
        %v2567 = vunpack.c.l.bf16 %v2551
        %v2568 = vunpack.c.l.bf16 %v2552
        %2569 = vxpose.xlu0.c.b16.start [1/8] %v2535, 128
        %2570 = vxpose.xlu0.c.b16.cont [2/8] 0, 128
        %2571 = vxpose.xlu0.c.b16.cont [3/8] 0, 128
        %2572 = vxpose.xlu0.c.b16.cont [4/8] 0, 128
        %2573 = vxpose.xlu0.c.b16.cont [5/8] 0, 128
        %2574 = vxpose.xlu0.c.b16.cont [6/8] 0, 128
        %2575 = vxpose.xlu0.c.b16.cont [7/8] 0, 128
        %2576 = vxpose.xlu0.c.b16.end [8/8] 0, 128
        %v2577 = vpop.trf.xlu0
        %v2578 = vpop.trf.xlu0
        %v2579 = vpop.trf.xlu0
        %v2580 = vpop.trf.xlu0
        %v2581 = vpop.trf.xlu0
        %v2582 = vpop.trf.xlu0
        %v2583 = vpop.trf.xlu0
        %v2584 = vpop.trf.xlu0
        %v2586 = vsel %vm658, %v2577, 0
        %v2589 = vsel %vm658, %v2578, 0
        %v2592 = vsel %vm658, %v2579, 0
        %v2595 = vsel %vm658, %v2580, 0
        %v2598 = vsel %vm658, %v2581, 0
        %v2601 = vsel %vm658, %v2582, 0
        %v2604 = vsel %vm658, %v2583, 0
        %v2607 = vsel %vm658, %v2584, 0
        %v2610 = vsel %vm683, %v2536, 0
        %2612 = vmatpush.bf16.msra.mxu0 0
        %2613 = vmatpush.bf16.msra.mxu0 0
        %2614 = vmatpush.bf16.msra.mxu0 0
        %2615 = vmatpush.bf16.msra.mxu0 0
        %2616 = vmatpush.bf16.msra.mxu0 0
        %2617 = vmatpush.bf16.msra.mxu0 0
        %2618 = vmatpush.bf16.msra.mxu0 0
        %2619 = vmatpush.bf16.msra.mxu0 %v2610
        %2620 = vmatmul.bf16.gmra.mxu0 %v2586
        %v2621 = vpop.f32.mrf.mxu0
        %v2622 = vadd.f32 %v2553, %v2621
        %v2623 = vpop.f32.mrf.mxu0
        %v2624 = vadd.f32 %v2554, %v2623
        %2625 = vmatmul.bf16.gmra.mxu0 %v2589
        %v2626 = vpop.f32.mrf.mxu0
        %v2627 = vadd.f32 %v2555, %v2626
        %v2628 = vpop.f32.mrf.mxu0
        %v2629 = vadd.f32 %v2556, %v2628
        %2630 = vmatmul.bf16.gmra.mxu0 %v2592
        %v2631 = vpop.f32.mrf.mxu0
        %v2632 = vadd.f32 %v2557, %v2631
        %v2633 = vpop.f32.mrf.mxu0
        %v2634 = vadd.f32 %v2558, %v2633
        %2635 = vmatmul.bf16.gmra.mxu0 %v2595
        %v2636 = vpop.f32.mrf.mxu0
        %v2637 = vadd.f32 %v2559, %v2636
        %v2638 = vpop.f32.mrf.mxu0
        %v2639 = vadd.f32 %v2560, %v2638
        %2640 = vmatmul.bf16.gmra.mxu0 %v2598
        %v2641 = vpop.f32.mrf.mxu0
        %v2642 = vadd.f32 %v2561, %v2641
        %v2643 = vpop.f32.mrf.mxu0
        %v2644 = vadd.f32 %v2562, %v2643
        %2645 = vmatmul.bf16.gmra.mxu0 %v2601
        %v2646 = vpop.f32.mrf.mxu0
        %v2647 = vadd.f32 %v2563, %v2646
        %v2648 = vpop.f32.mrf.mxu0
        %v2649 = vadd.f32 %v2564, %v2648
        %2650 = vmatmul.bf16.gmra.mxu0 %v2604
        %v2651 = vpop.f32.mrf.mxu0
        %v2652 = vadd.f32 %v2565, %v2651
        %v2653 = vpop.f32.mrf.mxu0
        %v2654 = vadd.f32 %v2566, %v2653
        %2655 = vmatmul.bf16.gmra.mxu0 %v2607
        %v2656 = vpop.f32.mrf.mxu0
        %v2657 = vadd.f32 %v2567, %v2656
        %v2658 = vpop.f32.mrf.mxu0
        %v2659 = vadd.f32 %v2568, %v2658
        %2660 = vdwg.mxu0
        %2661 = vmax.xlane.f32.xlu0 %v2622
        %v2662 = vpop.xlane.xlu0 %2661
        %2663 = vmax.xlane.f32.xlu0 %v2624
        %v2664 = vpop.xlane.xlu0 %2663
        %2665 = vmax.xlane.f32.xlu0 %v2627
        %v2666 = vpop.xlane.xlu0 %2665
        %2667 = vmax.xlane.f32.xlu0 %v2629
        %v2668 = vpop.xlane.xlu0 %2667
        %2669 = vmax.xlane.f32.xlu0 %v2632
        %v2670 = vpop.xlane.xlu0 %2669
        %2671 = vmax.xlane.f32.xlu0 %v2634
        %v2672 = vpop.xlane.xlu0 %2671
        %2673 = vmax.xlane.f32.xlu0 %v2637
        %v2674 = vpop.xlane.xlu0 %2673
        %2675 = vmax.xlane.f32.xlu0 %v2639
        %v2676 = vpop.xlane.xlu0 %2675
        %2677 = vmax.xlane.f32.xlu0 %v2642
        %v2678 = vpop.xlane.xlu0 %2677
        %2679 = vmax.xlane.f32.xlu0 %v2644
        %v2680 = vpop.xlane.xlu0 %2679
        %2681 = vmax.xlane.f32.xlu0 %v2647
        %v2682 = vpop.xlane.xlu0 %2681
        %2683 = vmax.xlane.f32.xlu0 %v2649
        %v2684 = vpop.xlane.xlu0 %2683
        %2685 = vmax.xlane.f32.xlu0 %v2652
        %v2686 = vpop.xlane.xlu0 %2685
        %2687 = vmax.xlane.f32.xlu0 %v2654
        %v2688 = vpop.xlane.xlu0 %2687
        %2689 = vmax.xlane.f32.xlu0 %v2657
        %v2690 = vpop.xlane.xlu0 %2689
        %2691 = vmax.xlane.f32.xlu0 %v2659
        %v2692 = vpop.xlane.xlu0 %2691
        %v2693 = vsub.f32 %v2622, %v2662
        %v2694 = vsub.f32 %v2624, %v2664
        %v2695 = vsub.f32 %v2627, %v2666
        %v2696 = vsub.f32 %v2629, %v2668
        %v2697 = vsub.f32 %v2632, %v2670
        %v2698 = vsub.f32 %v2634, %v2672
        %v2699 = vsub.f32 %v2637, %v2674
        %v2700 = vsub.f32 %v2639, %v2676
        %v2701 = vsub.f32 %v2642, %v2678
        %v2702 = vsub.f32 %v2644, %v2680
        %v2703 = vsub.f32 %v2647, %v2682
        %v2704 = vsub.f32 %v2649, %v2684
        %v2705 = vsub.f32 %v2652, %v2686
        %v2706 = vsub.f32 %v2654, %v2688
        %v2707 = vsub.f32 %v2657, %v2690
        %v2708 = vsub.f32 %v2659, %v2692
        %v2709 = vmul.f32 %v2693, 1.442695
        %v2710 = vpow.pop %v2709
        %v2711 = vmul.f32 %v2694, 1.442695
        %v2712 = vpow.pop %v2711
        %v2713 = vmul.f32 %v2695, 1.442695
        %v2714 = vpow.pop %v2713
        %v2715 = vmul.f32 %v2696, 1.442695
        %v2716 = vpow.pop %v2715
        %v2717 = vmul.f32 %v2697, 1.442695
        %v2718 = vpow.pop %v2717
        %v2719 = vmul.f32 %v2698, 1.442695
        %v2720 = vpow.pop %v2719
        %v2721 = vmul.f32 %v2699, 1.442695
        %v2722 = vpow.pop %v2721
        %v2723 = vmul.f32 %v2700, 1.442695
        %v2724 = vpow.pop %v2723
        %v2725 = vmul.f32 %v2701, 1.442695
        %v2726 = vpow.pop %v2725
        %v2727 = vmul.f32 %v2702, 1.442695
        %v2728 = vpow.pop %v2727
        %v2729 = vmul.f32 %v2703, 1.442695
        %v2730 = vpow.pop %v2729
        %v2731 = vmul.f32 %v2704, 1.442695
        %v2732 = vpow.pop %v2731
        %v2733 = vmul.f32 %v2705, 1.442695
        %v2734 = vpow.pop %v2733
        %v2735 = vmul.f32 %v2706, 1.442695
        %v2736 = vpow.pop %v2735
        %v2737 = vmul.f32 %v2707, 1.442695
        %v2738 = vpow.pop %v2737
        %v2739 = vmul.f32 %v2708, 1.442695
        %v2740 = vpow.pop %v2739
        %2741 = vadd.xlane.f32.xlu0 %v2710
        %v2742 = vpop.xlane.xlu0 %2741
        %2743 = vadd.xlane.f32.xlu0 %v2712
        %v2744 = vpop.xlane.xlu0 %2743
        %2745 = vadd.xlane.f32.xlu0 %v2714
        %v2746 = vpop.xlane.xlu0 %2745
        %2747 = vadd.xlane.f32.xlu0 %v2716
        %v2748 = vpop.xlane.xlu0 %2747
        %2749 = vadd.xlane.f32.xlu0 %v2718
        %v2750 = vpop.xlane.xlu0 %2749
        %2751 = vadd.xlane.f32.xlu0 %v2720
        %v2752 = vpop.xlane.xlu0 %2751
        %2753 = vadd.xlane.f32.xlu0 %v2722
        %v2754 = vpop.xlane.xlu0 %2753
        %2755 = vadd.xlane.f32.xlu0 %v2724
        %v2756 = vpop.xlane.xlu0 %2755
        %2757 = vadd.xlane.f32.xlu0 %v2726
        %v2758 = vpop.xlane.xlu0 %2757
        %2759 = vadd.xlane.f32.xlu0 %v2728
        %v2760 = vpop.xlane.xlu0 %2759
        %2761 = vadd.xlane.f32.xlu0 %v2730
        %v2762 = vpop.xlane.xlu0 %2761
        %2763 = vadd.xlane.f32.xlu0 %v2732
        %v2764 = vpop.xlane.xlu0 %2763
        %2765 = vadd.xlane.f32.xlu0 %v2734
        %v2766 = vpop.xlane.xlu0 %2765
        %2767 = vadd.xlane.f32.xlu0 %v2736
        %v2768 = vpop.xlane.xlu0 %2767
        %2769 = vadd.xlane.f32.xlu0 %v2738
        %v2770 = vpop.xlane.xlu0 %2769
        %2771 = vadd.xlane.f32.xlu0 %v2740
        %v2772 = vpop.xlane.xlu0 %2771
        %v2773 = vrcp.pop %v2742
        %v2774 = vrcp.pop %v2744
        %v2775 = vrcp.pop %v2746
        %v2776 = vrcp.pop %v2748
        %v2777 = vrcp.pop %v2750
        %v2778 = vrcp.pop %v2752
        %v2779 = vrcp.pop %v2754
        %v2780 = vrcp.pop %v2756
        %v2781 = vrcp.pop %v2758
        %v2782 = vrcp.pop %v2760
        %v2783 = vrcp.pop %v2762
        %v2784 = vrcp.pop %v2764
        %v2785 = vrcp.pop %v2766
        %v2786 = vrcp.pop %v2768
        %v2787 = vrcp.pop %v2770
        %v2788 = vrcp.pop %v2772
        %v2789 = vmul.f32 %v2710, %v2773
        %v2790 = vmul.f32 %v2712, %v2774
        %v2791 = vmul.f32 %v2714, %v2775
        %v2792 = vmul.f32 %v2716, %v2776
        %v2793 = vmul.f32 %v2718, %v2777
        %v2794 = vmul.f32 %v2720, %v2778
        %v2795 = vmul.f32 %v2722, %v2779
        %v2796 = vmul.f32 %v2724, %v2780
        %v2797 = vmul.f32 %v2726, %v2781
        %v2798 = vmul.f32 %v2728, %v2782
        %v2799 = vmul.f32 %v2730, %v2783
        %v2800 = vmul.f32 %v2732, %v2784
        %v2801 = vmul.f32 %v2734, %v2785
        %v2802 = vmul.f32 %v2736, %v2786
        %v2803 = vmul.f32 %v2738, %v2787
        %v2804 = vmul.f32 %v2740, %v2788
        %v2805 = vpack.c.bf16 %v2373, %v2370
        %v2806 = vpack.c.bf16 %v2379, %v2376
        %v2807 = vpack.c.bf16 %v2790, %v2789
        %v2808 = vpack.c.bf16 %v2792, %v2791
        %v2809 = vpack.c.bf16 %v2794, %v2793
        %v2810 = vpack.c.bf16 %v2796, %v2795
        %v2811 = vpack.c.bf16 %v2798, %v2797
        %v2812 = vpack.c.bf16 %v2800, %v2799
        %v2813 = vpack.c.bf16 %v2802, %v2801
        %v2814 = vpack.c.bf16 %v2804, %v2803
        %2815 = vmatpush.bf16.xpose.msra.mxu0 %v2814
        %2816 = vmatpush.bf16.xpose.msra.mxu0 %v2813
        %2817 = vmatpush.bf16.xpose.msra.mxu0 %v2812
        %2818 = vmatpush.bf16.xpose.msra.mxu0 %v2811
        %2819 = vmatpush.bf16.xpose.msra.mxu0 %v2810
        %2820 = vmatpush.bf16.xpose.msra.mxu0 %v2809
        %2821 = vmatpush.bf16.xpose.msra.mxu0 %v2808
        %2822 = vmatpush.bf16.xpose.msra.mxu0 %v2807
        %2823 = vmatmul.bf16.gmra.mxu0 %v2805
        %v2824 = vpop.f32.mrf.mxu0
        %v2825 = vadd.f32 0.0, %v2824
        %v2826 = vpop.f32.mrf.mxu0
        %v2827 = vadd.f32 0.0, %v2826
        %2828 = vmatmul.bf16.gmra.mxu0 %v2806
        %v2829 = vpop.f32.mrf.mxu0
        %v2830 = vadd.f32 0.0, %v2829
        %v2831 = vpop.f32.mrf.mxu0
        %v2832 = vadd.f32 0.0, %v2831
        %2833 = vdwg.mxu0
        %v2834 = vld [vmem:[%s1506] sm:$0xff]
        %v2835 = vld [vmem:[%s1506 + $0x8] sm:$0xff]
        %v2836 = vld [vmem:[%s1506 + $0x10] sm:$0xff]
        %v2837 = vld [vmem:[%s1506 + $0x18] sm:$0xff]
        %v2838 = vld [vmem:[%s1506 + $0x20] sm:$0xff]
        %v2839 = vld [vmem:[%s1506 + $0x28] sm:$0xff]
        %v2840 = vld [vmem:[%s1506 + $0x30] sm:$0xff]
        %v2841 = vld [vmem:[%s1506 + $0x38] sm:$0xff]
        %v2842 = vmax.f32 %v2825, 0.0
        %v2843 = vmax.f32 %v2827, 0.0
        %v2844 = vmax.f32 %v2830, 0.0
        %v2845 = vmax.f32 %v2832, 0.0
        %v2847 = vsel %vm376, %v2834, 0
        %v2850 = vsel %vm376, %v2835, 0
        %v2853 = vsel %vm376, %v2836, 0
        %v2856 = vsel %vm376, %v2837, 0
        %v2859 = vsel %vm376, %v2838, 0
        %v2862 = vsel %vm376, %v2839, 0
        %v2865 = vsel %vm376, %v2840, 0
        %v2868 = vsel %vm376, %v2841, 0
        %2870 = vmatpush.msra.mxu0 0.0
        %2871 = vmatpush.msra.mxu0 0.0
        %2872 = vmatpush.msra.mxu0 0.0
        %2873 = vmatpush.msra.mxu0 0.0
        %2874 = vmatpush.msra.mxu0 0.0
        %2875 = vmatpush.msra.mxu0 0.0
        %2876 = vmatpush.msra.mxu0 0.0
        %2877 = vmatpush.msra.mxu0 0.0
        %2878 = vmatpush.msra.mxu0 0.0
        %2879 = vmatpush.msra.mxu0 0.0
        %2880 = vmatpush.msra.mxu0 0.0
        %2881 = vmatpush.msra.mxu0 0.0
        %2882 = vmatpush.msra.mxu0 %v2845
        %2883 = vmatpush.msra.mxu0 %v2844
        %2884 = vmatpush.msra.mxu0 %v2843
        %2885 = vmatpush.msra.mxu0 %v2842
        %2886 = vmatmul.f32.gmra.mxu0 %v2847
        %v2887 = vpop.f32.mrf.mxu0
        %v2888 = vadd.f32 0.0, %v2887
        %2889 = vmatmul.f32.gmra.mxu0 %v2850
        %v2890 = vpop.f32.mrf.mxu0
        %v2891 = vadd.f32 0.0, %v2890
        %2892 = vmatmul.f32.gmra.mxu0 %v2853
        %v2893 = vpop.f32.mrf.mxu0
        %v2894 = vadd.f32 0.0, %v2893
        %2895 = vmatmul.f32.gmra.mxu0 %v2856
        %v2896 = vpop.f32.mrf.mxu0
        %v2897 = vadd.f32 0.0, %v2896
        %2898 = vmatmul.f32.gmra.mxu0 %v2859
        %v2899 = vpop.f32.mrf.mxu0
        %v2900 = vadd.f32 0.0, %v2899
        %2901 = vmatmul.f32.gmra.mxu0 %v2862
        %v2902 = vpop.f32.mrf.mxu0
        %v2903 = vadd.f32 0.0, %v2902
        %2904 = vmatmul.f32.gmra.mxu0 %v2865
        %v2905 = vpop.f32.mrf.mxu0
        %v2906 = vadd.f32 0.0, %v2905
        %2907 = vmatmul.f32.gmra.mxu0 %v2868
        %v2908 = vpop.f32.mrf.mxu0
        %v2909 = vadd.f32 0.0, %v2908
        %2910 = vdwg.mxu0
        %v2912 = vsel %vm376, %v2266, 0
        %v2915 = vsel %vm376, %v2267, 0
        %v2918 = vsel %vm376, %v2268, 0
        %v2921 = vsel %vm376, %v2269, 0
        %v2924 = vsel %vm376, %v2270, 0
        %v2927 = vsel %vm376, %v2271, 0
        %v2930 = vsel %vm376, %v2272, 0
        %v2933 = vsel %vm376, %v2273, 0
        %2935 = vmatpush.msra.mxu0 0.0
        %2936 = vmatpush.msra.mxu0 0.0
        %2937 = vmatpush.msra.mxu0 0.0
        %2938 = vmatpush.msra.mxu0 0.0
        %2939 = vmatpush.msra.mxu0 0.0
        %2940 = vmatpush.msra.mxu0 0.0
        %2941 = vmatpush.msra.mxu0 0.0
        %2942 = vmatpush.msra.mxu0 0.0
        %2943 = vmatpush.msra.mxu0 0.0
        %2944 = vmatpush.msra.mxu0 0.0
        %2945 = vmatpush.msra.mxu0 0.0
        %2946 = vmatpush.msra.mxu0 0.0
        %2947 = vmatpush.msra.mxu0 %v2277
        %2948 = vmatpush.msra.mxu0 %v2276
        %2949 = vmatpush.msra.mxu0 %v2275
        %2950 = vmatpush.msra.mxu0 %v2274
        %2951 = vmatmul.f32.gmra.mxu0 %v2912
        %v2952 = vpop.f32.mrf.mxu0
        %v2953 = vadd.f32 %v2888, %v2952
        %2954 = vmatmul.f32.gmra.mxu0 %v2915
        %v2955 = vpop.f32.mrf.mxu0
        %v2956 = vadd.f32 %v2891, %v2955
        %2957 = vmatmul.f32.gmra.mxu0 %v2918
        %v2958 = vpop.f32.mrf.mxu0
        %v2959 = vadd.f32 %v2894, %v2958
        %2960 = vmatmul.f32.gmra.mxu0 %v2921
        %v2961 = vpop.f32.mrf.mxu0
        %v2962 = vadd.f32 %v2897, %v2961
        %2963 = vmatmul.f32.gmra.mxu0 %v2924
        %v2964 = vpop.f32.mrf.mxu0
        %v2965 = vadd.f32 %v2900, %v2964
        %2966 = vmatmul.f32.gmra.mxu0 %v2927
        %v2967 = vpop.f32.mrf.mxu0
        %v2968 = vadd.f32 %v2903, %v2967
        %2969 = vmatmul.f32.gmra.mxu0 %v2930
        %v2970 = vpop.f32.mrf.mxu0
        %v2971 = vadd.f32 %v2906, %v2970
        %2972 = vmatmul.f32.gmra.mxu0 %v2933
        %v2973 = vpop.f32.mrf.mxu0
        %v2974 = vadd.f32 %v2909, %v2973
        %2975 = vdwg.mxu0
        %v2976 = vld [vmem:[%s7] sm:$0xff]
        %v2977 = vld [vmem:[%s7 + $0x8] sm:$0xff]
        %v2978 = vld [vmem:[%s7 + $0x10] sm:$0xff]
        %v2979 = vld [vmem:[%s7 + $0x18] sm:$0xff]
        %v2980 = vld [vmem:[%s7 + $0x20] sm:$0xff]
        %v2981 = vld [vmem:[%s7 + $0x28] sm:$0xff]
        %v2982 = vld [vmem:[%s7 + $0x30] sm:$0xff]
        %v2983 = vld [vmem:[%s7 + $0x38] sm:$0xff]
        %2985 = vset.pattern.permute.xlu0 0
        %2986 = vperm.xlu0 %2985, %v2976
        %v2987 = vpop.permute.xlu0 %2986
        %2990 = vset.pattern.permute.xlu0 0
        %2991 = vperm.xlu0 %2990, %v2977
        %v2992 = vpop.permute.xlu0 %2991
        %2995 = vset.pattern.permute.xlu0 0
        %2996 = vperm.xlu0 %2995, %v2978
        %v2997 = vpop.permute.xlu0 %2996
        %3000 = vset.pattern.permute.xlu0 0
        %3001 = vperm.xlu0 %3000, %v2979
        %v3002 = vpop.permute.xlu0 %3001
        %3005 = vset.pattern.permute.xlu0 0
        %3006 = vperm.xlu0 %3005, %v2980
        %v3007 = vpop.permute.xlu0 %3006
        %3010 = vset.pattern.permute.xlu0 0
        %3011 = vperm.xlu0 %3010, %v2981
        %v3012 = vpop.permute.xlu0 %3011
        %3015 = vset.pattern.permute.xlu0 0
        %3016 = vperm.xlu0 %3015, %v2982
        %v3017 = vpop.permute.xlu0 %3016
        %3020 = vset.pattern.permute.xlu0 0
        %3021 = vperm.xlu0 %3020, %v2983
        %v3022 = vpop.permute.xlu0 %3021
        %v3024 = vadd.f32 %v2953, %v2987
        %v3025 = vadd.f32 %v2956, %v2992
        %v3026 = vadd.f32 %v2959, %v2997
        %v3027 = vadd.f32 %v2962, %v3002
        %v3028 = vadd.f32 %v2965, %v3007
        %v3029 = vadd.f32 %v2968, %v3012
        %v3030 = vadd.f32 %v2971, %v3017
        %v3031 = vadd.f32 %v2974, %v3022
        %s3032 = scalar_lea.vmem %s326, 64 [#allocation5]
        %3033 = vst [vmem:[%s3032] sm:$0xff] %v3024
        %3034 = vst [vmem:[%s3032 + $0x8] sm:$0xff] %v3025
        %3035 = vst [vmem:[%s3032 + $0x10] sm:$0xff] %v3026
        %3036 = vst [vmem:[%s3032 + $0x18] sm:$0xff] %v3027
        %3037 = vst [vmem:[%s3032 + $0x20] sm:$0xff] %v3028
        %3038 = vst [vmem:[%s3032 + $0x28] sm:$0xff] %v3029
        %3039 = vst [vmem:[%s3032 + $0x30] sm:$0xff] %v3030
        %3040 = vst [vmem:[%s3032 + $0x38] sm:$0xff] %v3031
        %s3041 = scalar_lea.vmem %s293, 128 [#allocation2]
        %v3042 = vld [vmem:[%s3041] sm:$0xff]
        %v3043 = vld [vmem:[%s3041 + $0x8] sm:$0xff]
        %v3044 = vld [vmem:[%s3041 + $0x10] sm:$0xff]
        %v3045 = vld [vmem:[%s3041 + $0x18] sm:$0xff]
        %v3046 = vld [vmem:[%s1] sm:$0xff]
        %v3047 = vld [vmem:[%s1 + $0x8] sm:$0xff]
        %v3048 = vld [vmem:[%s1 + $0x10] sm:$0xff]
        %v3049 = vld [vmem:[%s1 + $0x18] sm:$0xff]
        %v3050 = vld [vmem:[%s1 + $0x20] sm:$0xff]
        %v3051 = vld [vmem:[%s1 + $0x28] sm:$0xff]
        %v3052 = vld [vmem:[%s2] sm:$0xff]
        %v3053 = vld [vmem:[%s2 + $0x8] sm:$0xff]
        %v3054 = vld [vmem:[%s2 + $0x10] sm:$0xff]
        %v3055 = vld [vmem:[%s2 + $0x18] sm:$0xff]
        %v3056 = vld [vmem:[%s2 + $0x20] sm:$0xff]
        %v3057 = vld [vmem:[%s2 + $0x28] sm:$0xff]
        %3059 = vset.pattern.permute.xlu0 0
        %3060 = vperm.xlu0 %3059, %v3052
        %v3061 = vpop.permute.xlu0 %3060
        %3064 = vset.pattern.permute.xlu0 0
        %3065 = vperm.xlu0 %3064, %v3053
        %v3066 = vpop.permute.xlu0 %3065
        %3069 = vset.pattern.permute.xlu0 0
        %3070 = vperm.xlu0 %3069, %v3054
        %v3071 = vpop.permute.xlu0 %3070
        %3074 = vset.pattern.permute.xlu0 0
        %3075 = vperm.xlu0 %3074, %v3055
        %v3076 = vpop.permute.xlu0 %3075
        %3079 = vset.pattern.permute.xlu0 0
        %3080 = vperm.xlu0 %3079, %v3056
        %v3081 = vpop.permute.xlu0 %3080
        %3084 = vset.pattern.permute.xlu0 0
        %3085 = vperm.xlu0 %3084, %v3057
        %v3086 = vpop.permute.xlu0 %3085
        %v3089 = vsel %vm376, %v3046, 0
        %v3092 = vsel %vm376, %v3047, 0
        %v3095 = vsel %vm376, %v3048, 0
        %v3098 = vsel %vm376, %v3049, 0
        %v3101 = vsel %vm376, %v3050, 0
        %v3104 = vsel %vm376, %v3051, 0
        %3106 = vmatpush.msra.mxu0 0.0
        %3107 = vmatpush.msra.mxu0 0.0
        %3108 = vmatpush.msra.mxu0 0.0
        %3109 = vmatpush.msra.mxu0 0.0
        %3110 = vmatpush.msra.mxu0 0.0
        %3111 = vmatpush.msra.mxu0 0.0
        %3112 = vmatpush.msra.mxu0 0.0
        %3113 = vmatpush.msra.mxu0 0.0
        %3114 = vmatpush.msra.mxu0 0.0
        %3115 = vmatpush.msra.mxu0 0.0
        %3116 = vmatpush.msra.mxu0 0.0
        %3117 = vmatpush.msra.mxu0 0.0
        %3118 = vmatpush.msra.mxu0 %v3045
        %3119 = vmatpush.msra.mxu0 %v3044
        %3120 = vmatpush.msra.mxu0 %v3043
        %3121 = vmatpush.msra.mxu0 %v3042
        %3122 = vmatmul.f32.gmra.mxu0 %v3089
        %v3123 = vpop.f32.mrf.mxu0
        %v3124 = vadd.f32 %v3061, %v3123
        %3125 = vmatmul.f32.gmra.mxu0 %v3092
        %v3126 = vpop.f32.mrf.mxu0
        %v3127 = vadd.f32 %v3066, %v3126
        %3128 = vmatmul.f32.gmra.mxu0 %v3095
        %v3129 = vpop.f32.mrf.mxu0
        %v3130 = vadd.f32 %v3071, %v3129
        %3131 = vmatmul.f32.gmra.mxu0 %v3098
        %v3132 = vpop.f32.mrf.mxu0
        %v3133 = vadd.f32 %v3076, %v3132
        %3134 = vmatmul.f32.gmra.mxu0 %v3101
        %v3135 = vpop.f32.mrf.mxu0
        %v3136 = vadd.f32 %v3081, %v3135
        %3137 = vmatmul.f32.gmra.mxu0 %v3104
        %v3138 = vpop.f32.mrf.mxu0
        %v3139 = vadd.f32 %v3086, %v3138
        %3140 = vdwg.mxu0
        %3141 = vrot.lane.b32.xlu0 %v3124, 18
        %v3142 = vpop.permute.xlu0 %3141
        %v3143 = vld [vmem:[%s3] sm:$0xf]
        %v3144 = vunpack.c.l.bf16 %v3143
        %v3145 = vmul.f32 %v3144, %v3142
        %3146 = vrot.lane.b32.xlu0 %v3124, 17
        %v3147 = vpop.permute.xlu0 %3146
        %v3148 = vld [vmem:[%s437] sm:$0xf]
        %v3149 = vunpack.c.l.bf16 %v3148
        %v3150 = vmul.f32 %v3149, %v3147
        %3151 = vrot.lane.b32.xlu0 %v3124, 16
        %v3152 = vpop.permute.xlu0 %3151
        %v3153 = vld [vmem:[%s443] sm:$0xf]
        %v3154 = vunpack.c.l.bf16 %v3153
        %v3155 = vmul.f32 %v3154, %v3152
        %3156 = vrot.lane.b32.xlu0 %v3124, 15
        %v3157 = vpop.permute.xlu0 %3156
        %v3158 = vld [vmem:[%s449] sm:$0xf]
        %v3159 = vunpack.c.l.bf16 %v3158
        %v3160 = vmul.f32 %v3159, %v3157
        %3161 = vrot.lane.b32.xlu0 %v3124, 14
        %v3162 = vpop.permute.xlu0 %3161
        %v3163 = vld [vmem:[%s455] sm:$0xf]
        %v3164 = vunpack.c.l.bf16 %v3163
        %v3165 = vmul.f32 %v3164, %v3162
        %v3166 = vadd.f32 %v3145, %v3165
        %3167 = vrot.lane.b32.xlu0 %v3124, 10
        %v3168 = vpop.permute.xlu0 %3167
        %v3169 = vld [vmem:[%s462] sm:$0xf]
        %v3170 = vunpack.c.l.bf16 %v3169
        %v3171 = vmul.f32 %v3170, %v3168
        %v3172 = vadd.f32 %v3150, %v3171
        %3173 = vrot.lane.b32.xlu0 %v3124, 9
        %v3174 = vpop.permute.xlu0 %3173
        %v3175 = vld [vmem:[%s469] sm:$0xf]
        %v3176 = vunpack.c.l.bf16 %v3175
        %v3177 = vmul.f32 %v3176, %v3174
        %v3178 = vadd.f32 %v3155, %v3177
        %3179 = vrot.lane.b32.xlu0 %v3124, 8
        %v3180 = vpop.permute.xlu0 %3179
        %v3181 = vld [vmem:[%s476] sm:$0xf]
        %v3182 = vunpack.c.l.bf16 %v3181
        %v3183 = vmul.f32 %v3182, %v3180
        %v3184 = vadd.f32 %v3160, %v3183
        %3185 = vrot.lane.b32.xlu0 %v3124, 7
        %v3186 = vpop.permute.xlu0 %3185
        %v3187 = vld [vmem:[%s483] sm:$0xf]
        %v3188 = vunpack.c.l.bf16 %v3187
        %v3189 = vmul.f32 %v3188, %v3186
        %v3190 = vadd.f32 %v3166, %v3189
        %3191 = vrot.lane.b32.xlu0 %v3124, 6
        %v3192 = vpop.permute.xlu0 %3191
        %v3193 = vld [vmem:[%s490] sm:$0xf]
        %v3194 = vunpack.c.l.bf16 %v3193
        %v3195 = vmul.f32 %v3194, %v3192
        %v3196 = vadd.f32 %v3172, %v3195
        %3197 = vrot.lane.b32.xlu0 %v3124, 2
        %v3198 = vpop.permute.xlu0 %3197
        %v3199 = vld [vmem:[%s497] sm:$0xf]
        %v3200 = vunpack.c.l.bf16 %v3199
        %v3201 = vmul.f32 %v3200, %v3198
        %v3202 = vadd.f32 %v3178, %v3201
        %3203 = vrot.lane.b32.xlu0 %v3124, 1
        %v3204 = vpop.permute.xlu0 %3203
        %v3205 = vld [vmem:[%s504] sm:$0xf]
        %v3206 = vunpack.c.l.bf16 %v3205
        %v3207 = vmul.f32 %v3206, %v3204
        %v3208 = vadd.f32 %v3184, %v3207
        %v3209 = vld [vmem:[%s509] sm:$0xf]
        %v3210 = vunpack.c.l.bf16 %v3209
        %v3211 = vmul.f32 %v3210, %v3124
        %v3212 = vadd.f32 %v3190, %v3211
        %3213 = vrot.lane.b32.xlu0 %v3124, 127
        %v3214 = vpop.permute.xlu0 %3213
        %v3215 = vld [vmem:[%s516] sm:$0xf]
        %v3216 = vunpack.c.l.bf16 %v3215
        %v3217 = vmul.f32 %v3216, %v3214
        %v3218 = vadd.f32 %v3196, %v3217
        %3219 = vrot.lane.b32.xlu0 %v3124, 126
        %v3220 = vpop.permute.xlu0 %3219
        %v3221 = vld [vmem:[%s523] sm:$0xf]
        %v3222 = vunpack.c.l.bf16 %v3221
        %v3223 = vmul.f32 %v3222, %v3220
        %v3224 = vadd.f32 %v3202, %v3223
        %3225 = vrot.lane.b32.xlu0 %v3124, 122
        %v3226 = vpop.permute.xlu0 %3225
        %v3227 = vld [vmem:[%s530] sm:$0xf]
        %v3228 = vunpack.c.l.bf16 %v3227
        %v3229 = vmul.f32 %v3228, %v3226
        %v3230 = vadd.f32 %v3208, %v3229
        %3231 = vrot.lane.b32.xlu0 %v3124, 121
        %v3232 = vpop.permute.xlu0 %3231
        %v3233 = vld [vmem:[%s537] sm:$0xf]
        %v3234 = vunpack.c.l.bf16 %v3233
        %v3235 = vmul.f32 %v3234, %v3232
        %v3236 = vadd.f32 %v3212, %v3235
        %3237 = vrot.lane.b32.xlu0 %v3124, 120
        %v3238 = vpop.permute.xlu0 %3237
        %v3239 = vld [vmem:[%s544] sm:$0xf]
        %v3240 = vunpack.c.l.bf16 %v3239
        %v3241 = vmul.f32 %v3240, %v3238
        %v3242 = vadd.f32 %v3218, %v3241
        %3243 = vrot.lane.b32.xlu0 %v3124, 119
        %v3244 = vpop.permute.xlu0 %3243
        %v3245 = vld [vmem:[%s551] sm:$0xf]
        %v3246 = vunpack.c.l.bf16 %v3245
        %v3247 = vmul.f32 %v3246, %v3244
        %v3248 = vadd.f32 %v3224, %v3247
        %3249 = vrot.lane.b32.xlu0 %v3124, 118
        %v3250 = vpop.permute.xlu0 %3249
        %v3251 = vld [vmem:[%s558] sm:$0xf]
        %v3252 = vunpack.c.l.bf16 %v3251
        %v3253 = vmul.f32 %v3252, %v3250
        %v3254 = vadd.f32 %v3230, %v3253
        %3255 = vrot.lane.b32.xlu0 %v3124, 114
        %v3256 = vpop.permute.xlu0 %3255
        %v3257 = vld [vmem:[%s565] sm:$0xf]
        %v3258 = vunpack.c.l.bf16 %v3257
        %v3259 = vmul.f32 %v3258, %v3256
        %v3260 = vadd.f32 %v3236, %v3259
        %3261 = vrot.lane.b32.xlu0 %v3124, 113
        %v3262 = vpop.permute.xlu0 %3261
        %v3263 = vld [vmem:[%s572] sm:$0xf]
        %v3264 = vunpack.c.l.bf16 %v3263
        %v3265 = vmul.f32 %v3264, %v3262
        %v3266 = vadd.f32 %v3242, %v3265
        %3267 = vrot.lane.b32.xlu0 %v3124, 112
        %v3268 = vpop.permute.xlu0 %3267
        %v3269 = vld [vmem:[%s579] sm:$0xf]
        %v3270 = vunpack.c.l.bf16 %v3269
        %v3271 = vmul.f32 %v3270, %v3268
        %v3272 = vadd.f32 %v3248, %v3271
        %3273 = vrot.lane.b32.xlu0 %v3124, 111
        %v3274 = vpop.permute.xlu0 %3273
        %v3275 = vld [vmem:[%s586] sm:$0xf]
        %v3276 = vunpack.c.l.bf16 %v3275
        %v3277 = vmul.f32 %v3276, %v3274
        %v3278 = vadd.f32 %v3254, %v3277
        %3279 = vrot.lane.b32.xlu0 %v3124, 110
        %v3280 = vpop.permute.xlu0 %3279
        %v3281 = vld [vmem:[%s593] sm:$0xf]
        %v3282 = vunpack.c.l.bf16 %v3281
        %v3283 = vmul.f32 %v3282, %v3280
        %v3284 = vadd.f32 %v3260, %v3283
        %v3285 = vld [vmem:[%s4] sm:$0xff]
        %v3286 = vadd.f32 %v3284, %v3266
        %v3287 = vadd.f32 %v3272, %v3278
        %v3288 = vadd.f32 %v3286, %v3287
        %3290 = vset.pattern.permute.xlu0 0
        %3291 = vperm.xlu0 %3290, %v3285
        %v3292 = vpop.permute.xlu0 %3291
        %v3294 = vadd.f32 %v3292, %v3288
        %v3295 = vpack.c.bf16 %v3294, %v3294
        %v3296 = vpack.c.bf16 %v3127, %v3127
        %v3297 = vld [vmem:[%s5] sm:$0xf]
        %v3298 = vld [vmem:[%s5 + $0x4] sm:$0xf]
        %v3299 = vld [vmem:[%s5 + $0x8] sm:$0xf]
        %v3300 = vld [vmem:[%s5 + $0xc] sm:$0xf]
        %v3301 = vld [vmem:[%s5 + $0x10] sm:$0xf]
        %v3302 = vld [vmem:[%s5 + $0x14] sm:$0xf]
        %v3303 = vld [vmem:[%s5 + $0x18] sm:$0xf]
        %v3304 = vld [vmem:[%s5 + $0x1c] sm:$0xf]
        %v3305 = vld [vmem:[%s5 + $0x20] sm:$0xf]
        %v3306 = vld [vmem:[%s5 + $0x24] sm:$0xf]
        %v3307 = vld [vmem:[%s5 + $0x28] sm:$0xf]
        %v3308 = vld [vmem:[%s5 + $0x2c] sm:$0xf]
        %v3309 = vld [vmem:[%s5 + $0x30] sm:$0xf]
        %v3310 = vld [vmem:[%s5 + $0x34] sm:$0xf]
        %v3311 = vld [vmem:[%s5 + $0x38] sm:$0xf]
        %v3312 = vld [vmem:[%s5 + $0x3c] sm:$0xf]
        %v3313 = vunpack.c.l.bf16 %v3297
        %v3314 = vunpack.c.l.bf16 %v3298
        %v3315 = vunpack.c.l.bf16 %v3299
        %v3316 = vunpack.c.l.bf16 %v3300
        %v3317 = vunpack.c.l.bf16 %v3301
        %v3318 = vunpack.c.l.bf16 %v3302
        %v3319 = vunpack.c.l.bf16 %v3303
        %v3320 = vunpack.c.l.bf16 %v3304
        %v3321 = vunpack.c.l.bf16 %v3305
        %v3322 = vunpack.c.l.bf16 %v3306
        %v3323 = vunpack.c.l.bf16 %v3307
        %v3324 = vunpack.c.l.bf16 %v3308
        %v3325 = vunpack.c.l.bf16 %v3309
        %v3326 = vunpack.c.l.bf16 %v3310
        %v3327 = vunpack.c.l.bf16 %v3311
        %v3328 = vunpack.c.l.bf16 %v3312
        %3329 = vxpose.xlu0.c.b16.start [1/8] %v3295, 128
        %3330 = vxpose.xlu0.c.b16.cont [2/8] 0, 128
        %3331 = vxpose.xlu0.c.b16.cont [3/8] 0, 128
        %3332 = vxpose.xlu0.c.b16.cont [4/8] 0, 128
        %3333 = vxpose.xlu0.c.b16.cont [5/8] 0, 128
        %3334 = vxpose.xlu0.c.b16.cont [6/8] 0, 128
        %3335 = vxpose.xlu0.c.b16.cont [7/8] 0, 128
        %3336 = vxpose.xlu0.c.b16.end [8/8] 0, 128
        %v3337 = vpop.trf.xlu0
        %v3338 = vpop.trf.xlu0
        %v3339 = vpop.trf.xlu0
        %v3340 = vpop.trf.xlu0
        %v3341 = vpop.trf.xlu0
        %v3342 = vpop.trf.xlu0
        %v3343 = vpop.trf.xlu0
        %v3344 = vpop.trf.xlu0
        %v3346 = vsel %vm658, %v3337, 0
        %v3349 = vsel %vm658, %v3338, 0
        %v3352 = vsel %vm658, %v3339, 0
        %v3355 = vsel %vm658, %v3340, 0
        %v3358 = vsel %vm658, %v3341, 0
        %v3361 = vsel %vm658, %v3342, 0
        %v3364 = vsel %vm658, %v3343, 0
        %v3367 = vsel %vm658, %v3344, 0
        %v3370 = vsel %vm683, %v3296, 0
        %3372 = vmatpush.bf16.msra.mxu0 0
        %3373 = vmatpush.bf16.msra.mxu0 0
        %3374 = vmatpush.bf16.msra.mxu0 0
        %3375 = vmatpush.bf16.msra.mxu0 0
        %3376 = vmatpush.bf16.msra.mxu0 0
        %3377 = vmatpush.bf16.msra.mxu0 0
        %3378 = vmatpush.bf16.msra.mxu0 0
        %3379 = vmatpush.bf16.msra.mxu0 %v3370
        %3380 = vmatmul.bf16.gmra.mxu0 %v3346
        %v3381 = vpop.f32.mrf.mxu0
        %v3382 = vadd.f32 %v3313, %v3381
        %v3383 = vpop.f32.mrf.mxu0
        %v3384 = vadd.f32 %v3314, %v3383
        %3385 = vmatmul.bf16.gmra.mxu0 %v3349
        %v3386 = vpop.f32.mrf.mxu0
        %v3387 = vadd.f32 %v3315, %v3386
        %v3388 = vpop.f32.mrf.mxu0
        %v3389 = vadd.f32 %v3316, %v3388
        %3390 = vmatmul.bf16.gmra.mxu0 %v3352
        %v3391 = vpop.f32.mrf.mxu0
        %v3392 = vadd.f32 %v3317, %v3391
        %v3393 = vpop.f32.mrf.mxu0
        %v3394 = vadd.f32 %v3318, %v3393
        %3395 = vmatmul.bf16.gmra.mxu0 %v3355
        %v3396 = vpop.f32.mrf.mxu0
        %v3397 = vadd.f32 %v3319, %v3396
        %v3398 = vpop.f32.mrf.mxu0
        %v3399 = vadd.f32 %v3320, %v3398
        %3400 = vmatmul.bf16.gmra.mxu0 %v3358
        %v3401 = vpop.f32.mrf.mxu0
        %v3402 = vadd.f32 %v3321, %v3401
        %v3403 = vpop.f32.mrf.mxu0
        %v3404 = vadd.f32 %v3322, %v3403
        %3405 = vmatmul.bf16.gmra.mxu0 %v3361
        %v3406 = vpop.f32.mrf.mxu0
        %v3407 = vadd.f32 %v3323, %v3406
        %v3408 = vpop.f32.mrf.mxu0
        %v3409 = vadd.f32 %v3324, %v3408
        %3410 = vmatmul.bf16.gmra.mxu0 %v3364
        %v3411 = vpop.f32.mrf.mxu0
        %v3412 = vadd.f32 %v3325, %v3411
        %v3413 = vpop.f32.mrf.mxu0
        %v3414 = vadd.f32 %v3326, %v3413
        %3415 = vmatmul.bf16.gmra.mxu0 %v3367
        %v3416 = vpop.f32.mrf.mxu0
        %v3417 = vadd.f32 %v3327, %v3416
        %v3418 = vpop.f32.mrf.mxu0
        %v3419 = vadd.f32 %v3328, %v3418
        %3420 = vdwg.mxu0
        %3421 = vmax.xlane.f32.xlu0 %v3382
        %v3422 = vpop.xlane.xlu0 %3421
        %3423 = vmax.xlane.f32.xlu0 %v3384
        %v3424 = vpop.xlane.xlu0 %3423
        %3425 = vmax.xlane.f32.xlu0 %v3387
        %v3426 = vpop.xlane.xlu0 %3425
        %3427 = vmax.xlane.f32.xlu0 %v3389
        %v3428 = vpop.xlane.xlu0 %3427
        %3429 = vmax.xlane.f32.xlu0 %v3392
        %v3430 = vpop.xlane.xlu0 %3429
        %3431 = vmax.xlane.f32.xlu0 %v3394
        %v3432 = vpop.xlane.xlu0 %3431
        %3433 = vmax.xlane.f32.xlu0 %v3397
        %v3434 = vpop.xlane.xlu0 %3433
        %3435 = vmax.xlane.f32.xlu0 %v3399
        %v3436 = vpop.xlane.xlu0 %3435
        %3437 = vmax.xlane.f32.xlu0 %v3402
        %v3438 = vpop.xlane.xlu0 %3437
        %3439 = vmax.xlane.f32.xlu0 %v3404
        %v3440 = vpop.xlane.xlu0 %3439
        %3441 = vmax.xlane.f32.xlu0 %v3407
        %v3442 = vpop.xlane.xlu0 %3441
        %3443 = vmax.xlane.f32.xlu0 %v3409
        %v3444 = vpop.xlane.xlu0 %3443
        %3445 = vmax.xlane.f32.xlu0 %v3412
        %v3446 = vpop.xlane.xlu0 %3445
        %3447 = vmax.xlane.f32.xlu0 %v3414
        %v3448 = vpop.xlane.xlu0 %3447
        %3449 = vmax.xlane.f32.xlu0 %v3417
        %v3450 = vpop.xlane.xlu0 %3449
        %3451 = vmax.xlane.f32.xlu0 %v3419
        %v3452 = vpop.xlane.xlu0 %3451
        %v3453 = vsub.f32 %v3382, %v3422
        %v3454 = vsub.f32 %v3384, %v3424
        %v3455 = vsub.f32 %v3387, %v3426
        %v3456 = vsub.f32 %v3389, %v3428
        %v3457 = vsub.f32 %v3392, %v3430
        %v3458 = vsub.f32 %v3394, %v3432
        %v3459 = vsub.f32 %v3397, %v3434
        %v3460 = vsub.f32 %v3399, %v3436
        %v3461 = vsub.f32 %v3402, %v3438
        %v3462 = vsub.f32 %v3404, %v3440
        %v3463 = vsub.f32 %v3407, %v3442
        %v3464 = vsub.f32 %v3409, %v3444
        %v3465 = vsub.f32 %v3412, %v3446
        %v3466 = vsub.f32 %v3414, %v3448
        %v3467 = vsub.f32 %v3417, %v3450
        %v3468 = vsub.f32 %v3419, %v3452
        %v3469 = vmul.f32 %v3453, 1.442695
        %v3470 = vpow.pop %v3469
        %v3471 = vmul.f32 %v3454, 1.442695
        %v3472 = vpow.pop %v3471
        %v3473 = vmul.f32 %v3455, 1.442695
        %v3474 = vpow.pop %v3473
        %v3475 = vmul.f32 %v3456, 1.442695
        %v3476 = vpow.pop %v3475
        %v3477 = vmul.f32 %v3457, 1.442695
        %v3478 = vpow.pop %v3477
        %v3479 = vmul.f32 %v3458, 1.442695
        %v3480 = vpow.pop %v3479
        %v3481 = vmul.f32 %v3459, 1.442695
        %v3482 = vpow.pop %v3481
        %v3483 = vmul.f32 %v3460, 1.442695
        %v3484 = vpow.pop %v3483
        %v3485 = vmul.f32 %v3461, 1.442695
        %v3486 = vpow.pop %v3485
        %v3487 = vmul.f32 %v3462, 1.442695
        %v3488 = vpow.pop %v3487
        %v3489 = vmul.f32 %v3463, 1.442695
        %v3490 = vpow.pop %v3489
        %v3491 = vmul.f32 %v3464, 1.442695
        %v3492 = vpow.pop %v3491
        %v3493 = vmul.f32 %v3465, 1.442695
        %v3494 = vpow.pop %v3493
        %v3495 = vmul.f32 %v3466, 1.442695
        %v3496 = vpow.pop %v3495
        %v3497 = vmul.f32 %v3467, 1.442695
        %v3498 = vpow.pop %v3497
        %v3499 = vmul.f32 %v3468, 1.442695
        %v3500 = vpow.pop %v3499
        %3501 = vadd.xlane.f32.xlu0 %v3470
        %v3502 = vpop.xlane.xlu0 %3501
        %3503 = vadd.xlane.f32.xlu0 %v3472
        %v3504 = vpop.xlane.xlu0 %3503
        %3505 = vadd.xlane.f32.xlu0 %v3474
        %v3506 = vpop.xlane.xlu0 %3505
        %3507 = vadd.xlane.f32.xlu0 %v3476
        %v3508 = vpop.xlane.xlu0 %3507
        %3509 = vadd.xlane.f32.xlu0 %v3478
        %v3510 = vpop.xlane.xlu0 %3509
        %3511 = vadd.xlane.f32.xlu0 %v3480
        %v3512 = vpop.xlane.xlu0 %3511
        %3513 = vadd.xlane.f32.xlu0 %v3482
        %v3514 = vpop.xlane.xlu0 %3513
        %3515 = vadd.xlane.f32.xlu0 %v3484
        %v3516 = vpop.xlane.xlu0 %3515
        %3517 = vadd.xlane.f32.xlu0 %v3486
        %v3518 = vpop.xlane.xlu0 %3517
        %3519 = vadd.xlane.f32.xlu0 %v3488
        %v3520 = vpop.xlane.xlu0 %3519
        %3521 = vadd.xlane.f32.xlu0 %v3490
        %v3522 = vpop.xlane.xlu0 %3521
        %3523 = vadd.xlane.f32.xlu0 %v3492
        %v3524 = vpop.xlane.xlu0 %3523
        %3525 = vadd.xlane.f32.xlu0 %v3494
        %v3526 = vpop.xlane.xlu0 %3525
        %3527 = vadd.xlane.f32.xlu0 %v3496
        %v3528 = vpop.xlane.xlu0 %3527
        %3529 = vadd.xlane.f32.xlu0 %v3498
        %v3530 = vpop.xlane.xlu0 %3529
        %3531 = vadd.xlane.f32.xlu0 %v3500
        %v3532 = vpop.xlane.xlu0 %3531
        %v3533 = vrcp.pop %v3502
        %v3534 = vrcp.pop %v3504
        %v3535 = vrcp.pop %v3506
        %v3536 = vrcp.pop %v3508
        %v3537 = vrcp.pop %v3510
        %v3538 = vrcp.pop %v3512
        %v3539 = vrcp.pop %v3514
        %v3540 = vrcp.pop %v3516
        %v3541 = vrcp.pop %v3518
        %v3542 = vrcp.pop %v3520
        %v3543 = vrcp.pop %v3522
        %v3544 = vrcp.pop %v3524
        %v3545 = vrcp.pop %v3526
        %v3546 = vrcp.pop %v3528
        %v3547 = vrcp.pop %v3530
        %v3548 = vrcp.pop %v3532
        %v3549 = vmul.f32 %v3470, %v3533
        %v3550 = vmul.f32 %v3472, %v3534
        %v3551 = vmul.f32 %v3474, %v3535
        %v3552 = vmul.f32 %v3476, %v3536
        %v3553 = vmul.f32 %v3478, %v3537
        %v3554 = vmul.f32 %v3480, %v3538
        %v3555 = vmul.f32 %v3482, %v3539
        %v3556 = vmul.f32 %v3484, %v3540
        %v3557 = vmul.f32 %v3486, %v3541
        %v3558 = vmul.f32 %v3488, %v3542
        %v3559 = vmul.f32 %v3490, %v3543
        %v3560 = vmul.f32 %v3492, %v3544
        %v3561 = vmul.f32 %v3494, %v3545
        %v3562 = vmul.f32 %v3496, %v3546
        %v3563 = vmul.f32 %v3498, %v3547
        %v3564 = vmul.f32 %v3500, %v3548
        %v3565 = vpack.c.bf16 %v3133, %v3130
        %v3566 = vpack.c.bf16 %v3139, %v3136
        %v3567 = vpack.c.bf16 %v3550, %v3549
        %v3568 = vpack.c.bf16 %v3552, %v3551
        %v3569 = vpack.c.bf16 %v3554, %v3553
        %v3570 = vpack.c.bf16 %v3556, %v3555
        %v3571 = vpack.c.bf16 %v3558, %v3557
        %v3572 = vpack.c.bf16 %v3560, %v3559
        %v3573 = vpack.c.bf16 %v3562, %v3561
        %v3574 = vpack.c.bf16 %v3564, %v3563
        %3575 = vmatpush.bf16.xpose.msra.mxu0 %v3574
        %3576 = vmatpush.bf16.xpose.msra.mxu0 %v3573
        %3577 = vmatpush.bf16.xpose.msra.mxu0 %v3572
        %3578 = vmatpush.bf16.xpose.msra.mxu0 %v3571
        %3579 = vmatpush.bf16.xpose.msra.mxu0 %v3570
        %3580 = vmatpush.bf16.xpose.msra.mxu0 %v3569
        %3581 = vmatpush.bf16.xpose.msra.mxu0 %v3568
        %3582 = vmatpush.bf16.xpose.msra.mxu0 %v3567
        %3583 = vmatmul.bf16.gmra.mxu0 %v3565
        %v3584 = vpop.f32.mrf.mxu0
        %v3585 = vadd.f32 0.0, %v3584
        %v3586 = vpop.f32.mrf.mxu0
        %v3587 = vadd.f32 0.0, %v3586
        %3588 = vmatmul.bf16.gmra.mxu0 %v3566
        %v3589 = vpop.f32.mrf.mxu0
        %v3590 = vadd.f32 0.0, %v3589
        %v3591 = vpop.f32.mrf.mxu0
        %v3592 = vadd.f32 0.0, %v3591
        %3593 = vdwg.mxu0
        %v3594 = vld [vmem:[%s6] sm:$0xff]
        %v3595 = vld [vmem:[%s6 + $0x8] sm:$0xff]
        %v3596 = vld [vmem:[%s6 + $0x10] sm:$0xff]
        %v3597 = vld [vmem:[%s6 + $0x18] sm:$0xff]
        %v3598 = vld [vmem:[%s6 + $0x20] sm:$0xff]
        %v3599 = vld [vmem:[%s6 + $0x28] sm:$0xff]
        %v3600 = vld [vmem:[%s6 + $0x30] sm:$0xff]
        %v3601 = vld [vmem:[%s6 + $0x38] sm:$0xff]
        %v3602 = vmax.f32 %v3585, 0.0
        %v3603 = vmax.f32 %v3587, 0.0
        %v3604 = vmax.f32 %v3590, 0.0
        %v3605 = vmax.f32 %v3592, 0.0
        %v3606 = vld [vmem:[%s3041 + $0x20] sm:$0xff]
        %v3607 = vld [vmem:[%s3041 + $0x28] sm:$0xff]
        %v3608 = vld [vmem:[%s3041 + $0x30] sm:$0xff]
        %v3609 = vld [vmem:[%s3041 + $0x38] sm:$0xff]
        %v3610 = vadd.f32 %v3585, %v3606
        %v3611 = vadd.f32 %v3587, %v3607
        %v3612 = vadd.f32 %v3590, %v3608
        %v3613 = vadd.f32 %v3592, %v3609
        %v3614 = vld [vmem:[%s929] sm:$0xff]
        %v3615 = vld [vmem:[%s929 + $0x8] sm:$0xff]
        %v3616 = vld [vmem:[%s929 + $0x10] sm:$0xff]
        %v3617 = vld [vmem:[%s929 + $0x18] sm:$0xff]
        %v3618 = vld [vmem:[%s929 + $0x20] sm:$0xff]
        %v3619 = vld [vmem:[%s929 + $0x28] sm:$0xff]
        %v3620 = vld [vmem:[%s936] sm:$0xff]
        %v3621 = vld [vmem:[%s936 + $0x8] sm:$0xff]
        %v3622 = vld [vmem:[%s936 + $0x10] sm:$0xff]
        %v3623 = vld [vmem:[%s936 + $0x18] sm:$0xff]
        %v3624 = vld [vmem:[%s936 + $0x20] sm:$0xff]
        %v3625 = vld [vmem:[%s936 + $0x28] sm:$0xff]
        %3627 = vset.pattern.permute.xlu0 0
        %3628 = vperm.xlu0 %3627, %v3620
        %v3629 = vpop.permute.xlu0 %3628
        %3632 = vset.pattern.permute.xlu0 0
        %3633 = vperm.xlu0 %3632, %v3621
        %v3634 = vpop.permute.xlu0 %3633
        %3637 = vset.pattern.permute.xlu0 0
        %3638 = vperm.xlu0 %3637, %v3622
        %v3639 = vpop.permute.xlu0 %3638
        %3642 = vset.pattern.permute.xlu0 0
        %3643 = vperm.xlu0 %3642, %v3623
        %v3644 = vpop.permute.xlu0 %3643
        %3647 = vset.pattern.permute.xlu0 0
        %3648 = vperm.xlu0 %3647, %v3624
        %v3649 = vpop.permute.xlu0 %3648
        %3652 = vset.pattern.permute.xlu0 0
        %3653 = vperm.xlu0 %3652, %v3625
        %v3654 = vpop.permute.xlu0 %3653
        %v3657 = vsel %vm376, %v3614, 0
        %v3660 = vsel %vm376, %v3615, 0
        %v3663 = vsel %vm376, %v3616, 0
        %v3666 = vsel %vm376, %v3617, 0
        %v3669 = vsel %vm376, %v3618, 0
        %v3672 = vsel %vm376, %v3619, 0
        %3674 = vmatpush.msra.mxu0 0.0
        %3675 = vmatpush.msra.mxu0 0.0
        %3676 = vmatpush.msra.mxu0 0.0
        %3677 = vmatpush.msra.mxu0 0.0
        %3678 = vmatpush.msra.mxu0 0.0
        %3679 = vmatpush.msra.mxu0 0.0
        %3680 = vmatpush.msra.mxu0 0.0
        %3681 = vmatpush.msra.mxu0 0.0
        %3682 = vmatpush.msra.mxu0 0.0
        %3683 = vmatpush.msra.mxu0 0.0
        %3684 = vmatpush.msra.mxu0 0.0
        %3685 = vmatpush.msra.mxu0 0.0
        %3686 = vmatpush.msra.mxu0 %v3613
        %3687 = vmatpush.msra.mxu0 %v3612
        %3688 = vmatpush.msra.mxu0 %v3611
        %3689 = vmatpush.msra.mxu0 %v3610
        %3690 = vmatmul.f32.gmra.mxu0 %v3657
        %v3691 = vpop.f32.mrf.mxu0
        %v3692 = vadd.f32 %v3629, %v3691
        %3693 = vmatmul.f32.gmra.mxu0 %v3660
        %v3694 = vpop.f32.mrf.mxu0
        %v3695 = vadd.f32 %v3634, %v3694
        %3696 = vmatmul.f32.gmra.mxu0 %v3663
        %v3697 = vpop.f32.mrf.mxu0
        %v3698 = vadd.f32 %v3639, %v3697
        %3699 = vmatmul.f32.gmra.mxu0 %v3666
        %v3700 = vpop.f32.mrf.mxu0
        %v3701 = vadd.f32 %v3644, %v3700
        %3702 = vmatmul.f32.gmra.mxu0 %v3669
        %v3703 = vpop.f32.mrf.mxu0
        %v3704 = vadd.f32 %v3649, %v3703
        %3705 = vmatmul.f32.gmra.mxu0 %v3672
        %v3706 = vpop.f32.mrf.mxu0
        %v3707 = vadd.f32 %v3654, %v3706
        %3708 = vdwg.mxu0
        %3709 = vrot.lane.b32.xlu0 %v3692, 18
        %v3710 = vpop.permute.xlu0 %3709
        %v3711 = vld [vmem:[%s1028] sm:$0xf]
        %v3712 = vunpack.c.l.bf16 %v3711
        %v3713 = vmul.f32 %v3712, %v3710
        %3714 = vrot.lane.b32.xlu0 %v3692, 17
        %v3715 = vpop.permute.xlu0 %3714
        %v3716 = vld [vmem:[%s1034] sm:$0xf]
        %v3717 = vunpack.c.l.bf16 %v3716
        %v3718 = vmul.f32 %v3717, %v3715
        %3719 = vrot.lane.b32.xlu0 %v3692, 16
        %v3720 = vpop.permute.xlu0 %3719
        %v3721 = vld [vmem:[%s1040] sm:$0xf]
        %v3722 = vunpack.c.l.bf16 %v3721
        %v3723 = vmul.f32 %v3722, %v3720
        %3724 = vrot.lane.b32.xlu0 %v3692, 15
        %v3725 = vpop.permute.xlu0 %3724
        %v3726 = vld [vmem:[%s1046] sm:$0xf]
        %v3727 = vunpack.c.l.bf16 %v3726
        %v3728 = vmul.f32 %v3727, %v3725
        %3729 = vrot.lane.b32.xlu0 %v3692, 14
        %v3730 = vpop.permute.xlu0 %3729
        %v3731 = vld [vmem:[%s1052] sm:$0xf]
        %v3732 = vunpack.c.l.bf16 %v3731
        %v3733 = vmul.f32 %v3732, %v3730
        %v3734 = vadd.f32 %v3713, %v3733
        %3735 = vrot.lane.b32.xlu0 %v3692, 10
        %v3736 = vpop.permute.xlu0 %3735
        %v3737 = vld [vmem:[%s1059] sm:$0xf]
        %v3738 = vunpack.c.l.bf16 %v3737
        %v3739 = vmul.f32 %v3738, %v3736
        %v3740 = vadd.f32 %v3718, %v3739
        %3741 = vrot.lane.b32.xlu0 %v3692, 9
        %v3742 = vpop.permute.xlu0 %3741
        %v3743 = vld [vmem:[%s1066] sm:$0xf]
        %v3744 = vunpack.c.l.bf16 %v3743
        %v3745 = vmul.f32 %v3744, %v3742
        %v3746 = vadd.f32 %v3723, %v3745
        %3747 = vrot.lane.b32.xlu0 %v3692, 8
        %v3748 = vpop.permute.xlu0 %3747
        %v3749 = vld [vmem:[%s1073] sm:$0xf]
        %v3750 = vunpack.c.l.bf16 %v3749
        %v3751 = vmul.f32 %v3750, %v3748
        %v3752 = vadd.f32 %v3728, %v3751
        %3753 = vrot.lane.b32.xlu0 %v3692, 7
        %v3754 = vpop.permute.xlu0 %3753
        %v3755 = vld [vmem:[%s1080] sm:$0xf]
        %v3756 = vunpack.c.l.bf16 %v3755
        %v3757 = vmul.f32 %v3756, %v3754
        %v3758 = vadd.f32 %v3734, %v3757
        %3759 = vrot.lane.b32.xlu0 %v3692, 6
        %v3760 = vpop.permute.xlu0 %3759
        %v3761 = vld [vmem:[%s1087] sm:$0xf]
        %v3762 = vunpack.c.l.bf16 %v3761
        %v3763 = vmul.f32 %v3762, %v3760
        %v3764 = vadd.f32 %v3740, %v3763
        %3765 = vrot.lane.b32.xlu0 %v3692, 2
        %v3766 = vpop.permute.xlu0 %3765
        %v3767 = vld [vmem:[%s1094] sm:$0xf]
        %v3768 = vunpack.c.l.bf16 %v3767
        %v3769 = vmul.f32 %v3768, %v3766
        %v3770 = vadd.f32 %v3746, %v3769
        %3771 = vrot.lane.b32.xlu0 %v3692, 1
        %v3772 = vpop.permute.xlu0 %3771
        %v3773 = vld [vmem:[%s1101] sm:$0xf]
        %v3774 = vunpack.c.l.bf16 %v3773
        %v3775 = vmul.f32 %v3774, %v3772
        %v3776 = vadd.f32 %v3752, %v3775
        %v3777 = vld [vmem:[%s1106] sm:$0xf]
        %v3778 = vunpack.c.l.bf16 %v3777
        %v3779 = vmul.f32 %v3778, %v3692
        %v3780 = vadd.f32 %v3758, %v3779
        %3781 = vrot.lane.b32.xlu0 %v3692, 127
        %v3782 = vpop.permute.xlu0 %3781
        %v3783 = vld [vmem:[%s1113] sm:$0xf]
        %v3784 = vunpack.c.l.bf16 %v3783
        %v3785 = vmul.f32 %v3784, %v3782
        %v3786 = vadd.f32 %v3764, %v3785
        %3787 = vrot.lane.b32.xlu0 %v3692, 126
        %v3788 = vpop.permute.xlu0 %3787
        %v3789 = vld [vmem:[%s1120] sm:$0xf]
        %v3790 = vunpack.c.l.bf16 %v3789
        %v3791 = vmul.f32 %v3790, %v3788
        %v3792 = vadd.f32 %v3770, %v3791
        %3793 = vrot.lane.b32.xlu0 %v3692, 122
        %v3794 = vpop.permute.xlu0 %3793
        %v3795 = vld [vmem:[%s1127] sm:$0xf]
        %v3796 = vunpack.c.l.bf16 %v3795
        %v3797 = vmul.f32 %v3796, %v3794
        %v3798 = vadd.f32 %v3776, %v3797
        %3799 = vrot.lane.b32.xlu0 %v3692, 121
        %v3800 = vpop.permute.xlu0 %3799
        %v3801 = vld [vmem:[%s1134] sm:$0xf]
        %v3802 = vunpack.c.l.bf16 %v3801
        %v3803 = vmul.f32 %v3802, %v3800
        %v3804 = vadd.f32 %v3780, %v3803
        %3805 = vrot.lane.b32.xlu0 %v3692, 120
        %v3806 = vpop.permute.xlu0 %3805
        %v3807 = vld [vmem:[%s1141] sm:$0xf]
        %v3808 = vunpack.c.l.bf16 %v3807
        %v3809 = vmul.f32 %v3808, %v3806
        %v3810 = vadd.f32 %v3786, %v3809
        %3811 = vrot.lane.b32.xlu0 %v3692, 119
        %v3812 = vpop.permute.xlu0 %3811
        %v3813 = vld [vmem:[%s1148] sm:$0xf]
        %v3814 = vunpack.c.l.bf16 %v3813
        %v3815 = vmul.f32 %v3814, %v3812
        %v3816 = vadd.f32 %v3792, %v3815
        %3817 = vrot.lane.b32.xlu0 %v3692, 118
        %v3818 = vpop.permute.xlu0 %3817
        %v3819 = vld [vmem:[%s1155] sm:$0xf]
        %v3820 = vunpack.c.l.bf16 %v3819
        %v3821 = vmul.f32 %v3820, %v3818
        %v3822 = vadd.f32 %v3798, %v3821
        %3823 = vrot.lane.b32.xlu0 %v3692, 114
        %v3824 = vpop.permute.xlu0 %3823
        %v3825 = vld [vmem:[%s1162] sm:$0xf]
        %v3826 = vunpack.c.l.bf16 %v3825
        %v3827 = vmul.f32 %v3826, %v3824
        %v3828 = vadd.f32 %v3804, %v3827
        %3829 = vrot.lane.b32.xlu0 %v3692, 113
        %v3830 = vpop.permute.xlu0 %3829
        %v3831 = vld [vmem:[%s1169] sm:$0xf]
        %v3832 = vunpack.c.l.bf16 %v3831
        %v3833 = vmul.f32 %v3832, %v3830
        %v3834 = vadd.f32 %v3810, %v3833
        %3835 = vrot.lane.b32.xlu0 %v3692, 112
        %v3836 = vpop.permute.xlu0 %3835
        %v3837 = vld [vmem:[%s1176] sm:$0xf]
        %v3838 = vunpack.c.l.bf16 %v3837
        %v3839 = vmul.f32 %v3838, %v3836
        %v3840 = vadd.f32 %v3816, %v3839
        %3841 = vrot.lane.b32.xlu0 %v3692, 111
        %v3842 = vpop.permute.xlu0 %3841
        %v3843 = vld [vmem:[%s1183] sm:$0xf]
        %v3844 = vunpack.c.l.bf16 %v3843
        %v3845 = vmul.f32 %v3844, %v3842
        %v3846 = vadd.f32 %v3822, %v3845
        %3847 = vrot.lane.b32.xlu0 %v3692, 110
        %v3848 = vpop.permute.xlu0 %3847
        %v3849 = vld [vmem:[%s1190] sm:$0xf]
        %v3850 = vunpack.c.l.bf16 %v3849
        %v3851 = vmul.f32 %v3850, %v3848
        %v3852 = vadd.f32 %v3828, %v3851
        %v3853 = vld [vmem:[%s1195] sm:$0xff]
        %v3854 = vadd.f32 %v3852, %v3834
        %v3855 = vadd.f32 %v3840, %v3846
        %v3856 = vadd.f32 %v3854, %v3855
        %3858 = vset.pattern.permute.xlu0 0
        %3859 = vperm.xlu0 %3858, %v3853
        %v3860 = vpop.permute.xlu0 %3859
        %v3862 = vadd.f32 %v3860, %v3856
        %v3863 = vpack.c.bf16 %v3862, %v3862
        %v3864 = vpack.c.bf16 %v3695, %v3695
        %v3865 = vld [vmem:[%s1208] sm:$0xf]
        %v3866 = vld [vmem:[%s1208 + $0x4] sm:$0xf]
        %v3867 = vld [vmem:[%s1208 + $0x8] sm:$0xf]
        %v3868 = vld [vmem:[%s1208 + $0xc] sm:$0xf]
        %v3869 = vld [vmem:[%s1208 + $0x10] sm:$0xf]
        %v3870 = vld [vmem:[%s1208 + $0x14] sm:$0xf]
        %v3871 = vld [vmem:[%s1208 + $0x18] sm:$0xf]
        %v3872 = vld [vmem:[%s1208 + $0x1c] sm:$0xf]
        %v3873 = vld [vmem:[%s1208 + $0x20] sm:$0xf]
        %v3874 = vld [vmem:[%s1208 + $0x24] sm:$0xf]
        %v3875 = vld [vmem:[%s1208 + $0x28] sm:$0xf]
        %v3876 = vld [vmem:[%s1208 + $0x2c] sm:$0xf]
        %v3877 = vld [vmem:[%s1208 + $0x30] sm:$0xf]
        %v3878 = vld [vmem:[%s1208 + $0x34] sm:$0xf]
        %v3879 = vld [vmem:[%s1208 + $0x38] sm:$0xf]
        %v3880 = vld [vmem:[%s1208 + $0x3c] sm:$0xf]
        %v3881 = vunpack.c.l.bf16 %v3865
        %v3882 = vunpack.c.l.bf16 %v3866
        %v3883 = vunpack.c.l.bf16 %v3867
        %v3884 = vunpack.c.l.bf16 %v3868
        %v3885 = vunpack.c.l.bf16 %v3869
        %v3886 = vunpack.c.l.bf16 %v3870
        %v3887 = vunpack.c.l.bf16 %v3871
        %v3888 = vunpack.c.l.bf16 %v3872
        %v3889 = vunpack.c.l.bf16 %v3873
        %v3890 = vunpack.c.l.bf16 %v3874
        %v3891 = vunpack.c.l.bf16 %v3875
        %v3892 = vunpack.c.l.bf16 %v3876
        %v3893 = vunpack.c.l.bf16 %v3877
        %v3894 = vunpack.c.l.bf16 %v3878
        %v3895 = vunpack.c.l.bf16 %v3879
        %v3896 = vunpack.c.l.bf16 %v3880
        %3897 = vxpose.xlu0.c.b16.start [1/8] %v3863, 128
        %3898 = vxpose.xlu0.c.b16.cont [2/8] 0, 128
        %3899 = vxpose.xlu0.c.b16.cont [3/8] 0, 128
        %3900 = vxpose.xlu0.c.b16.cont [4/8] 0, 128
        %3901 = vxpose.xlu0.c.b16.cont [5/8] 0, 128
        %3902 = vxpose.xlu0.c.b16.cont [6/8] 0, 128
        %3903 = vxpose.xlu0.c.b16.cont [7/8] 0, 128
        %3904 = vxpose.xlu0.c.b16.end [8/8] 0, 128
        %v3905 = vpop.trf.xlu0
        %v3906 = vpop.trf.xlu0
        %v3907 = vpop.trf.xlu0
        %v3908 = vpop.trf.xlu0
        %v3909 = vpop.trf.xlu0
        %v3910 = vpop.trf.xlu0
        %v3911 = vpop.trf.xlu0
        %v3912 = vpop.trf.xlu0
        %v3914 = vsel %vm658, %v3905, 0
        %v3917 = vsel %vm658, %v3906, 0
        %v3920 = vsel %vm658, %v3907, 0
        %v3923 = vsel %vm658, %v3908, 0
        %v3926 = vsel %vm658, %v3909, 0
        %v3929 = vsel %vm658, %v3910, 0
        %v3932 = vsel %vm658, %v3911, 0
        %v3935 = vsel %vm658, %v3912, 0
        %v3938 = vsel %vm683, %v3864, 0
        %3940 = vmatpush.bf16.msra.mxu0 0
        %3941 = vmatpush.bf16.msra.mxu0 0
        %3942 = vmatpush.bf16.msra.mxu0 0
        %3943 = vmatpush.bf16.msra.mxu0 0
        %3944 = vmatpush.bf16.msra.mxu0 0
        %3945 = vmatpush.bf16.msra.mxu0 0
        %3946 = vmatpush.bf16.msra.mxu0 0
        %3947 = vmatpush.bf16.msra.mxu0 %v3938
        %3948 = vmatmul.bf16.gmra.mxu0 %v3914
        %v3949 = vpop.f32.mrf.mxu0
        %v3950 = vadd.f32 %v3881, %v3949
        %v3951 = vpop.f32.mrf.mxu0
        %v3952 = vadd.f32 %v3882, %v3951
        %3953 = vmatmul.bf16.gmra.mxu0 %v3917
        %v3954 = vpop.f32.mrf.mxu0
        %v3955 = vadd.f32 %v3883, %v3954
        %v3956 = vpop.f32.mrf.mxu0
        %v3957 = vadd.f32 %v3884, %v3956
        %3958 = vmatmul.bf16.gmra.mxu0 %v3920
        %v3959 = vpop.f32.mrf.mxu0
        %v3960 = vadd.f32 %v3885, %v3959
        %v3961 = vpop.f32.mrf.mxu0
        %v3962 = vadd.f32 %v3886, %v3961
        %3963 = vmatmul.bf16.gmra.mxu0 %v3923
        %v3964 = vpop.f32.mrf.mxu0
        %v3965 = vadd.f32 %v3887, %v3964
        %v3966 = vpop.f32.mrf.mxu0
        %v3967 = vadd.f32 %v3888, %v3966
        %3968 = vmatmul.bf16.gmra.mxu0 %v3926
        %v3969 = vpop.f32.mrf.mxu0
        %v3970 = vadd.f32 %v3889, %v3969
        %v3971 = vpop.f32.mrf.mxu0
        %v3972 = vadd.f32 %v3890, %v3971
        %3973 = vmatmul.bf16.gmra.mxu0 %v3929
        %v3974 = vpop.f32.mrf.mxu0
        %v3975 = vadd.f32 %v3891, %v3974
        %v3976 = vpop.f32.mrf.mxu0
        %v3977 = vadd.f32 %v3892, %v3976
        %3978 = vmatmul.bf16.gmra.mxu0 %v3932
        %v3979 = vpop.f32.mrf.mxu0
        %v3980 = vadd.f32 %v3893, %v3979
        %v3981 = vpop.f32.mrf.mxu0
        %v3982 = vadd.f32 %v3894, %v3981
        %3983 = vmatmul.bf16.gmra.mxu0 %v3935
        %v3984 = vpop.f32.mrf.mxu0
        %v3985 = vadd.f32 %v3895, %v3984
        %v3986 = vpop.f32.mrf.mxu0
        %v3987 = vadd.f32 %v3896, %v3986
        %3988 = vdwg.mxu0
        %3989 = vmax.xlane.f32.xlu0 %v3950
        %v3990 = vpop.xlane.xlu0 %3989
        %3991 = vmax.xlane.f32.xlu0 %v3952
        %v3992 = vpop.xlane.xlu0 %3991
        %3993 = vmax.xlane.f32.xlu0 %v3955
        %v3994 = vpop.xlane.xlu0 %3993
        %3995 = vmax.xlane.f32.xlu0 %v3957
        %v3996 = vpop.xlane.xlu0 %3995
        %3997 = vmax.xlane.f32.xlu0 %v3960
        %v3998 = vpop.xlane.xlu0 %3997
        %3999 = vmax.xlane.f32.xlu0 %v3962
        %v4000 = vpop.xlane.xlu0 %3999
        %4001 = vmax.xlane.f32.xlu0 %v3965
        %v4002 = vpop.xlane.xlu0 %4001
        %4003 = vmax.xlane.f32.xlu0 %v3967
        %v4004 = vpop.xlane.xlu0 %4003
        %4005 = vmax.xlane.f32.xlu0 %v3970
        %v4006 = vpop.xlane.xlu0 %4005
        %4007 = vmax.xlane.f32.xlu0 %v3972
        %v4008 = vpop.xlane.xlu0 %4007
        %4009 = vmax.xlane.f32.xlu0 %v3975
        %v4010 = vpop.xlane.xlu0 %4009
        %4011 = vmax.xlane.f32.xlu0 %v3977
        %v4012 = vpop.xlane.xlu0 %4011
        %4013 = vmax.xlane.f32.xlu0 %v3980
        %v4014 = vpop.xlane.xlu0 %4013
        %4015 = vmax.xlane.f32.xlu0 %v3982
        %v4016 = vpop.xlane.xlu0 %4015
        %4017 = vmax.xlane.f32.xlu0 %v3985
        %v4018 = vpop.xlane.xlu0 %4017
        %4019 = vmax.xlane.f32.xlu0 %v3987
        %v4020 = vpop.xlane.xlu0 %4019
        %v4021 = vsub.f32 %v3950, %v3990
        %v4022 = vsub.f32 %v3952, %v3992
        %v4023 = vsub.f32 %v3955, %v3994
        %v4024 = vsub.f32 %v3957, %v3996
        %v4025 = vsub.f32 %v3960, %v3998
        %v4026 = vsub.f32 %v3962, %v4000
        %v4027 = vsub.f32 %v3965, %v4002
        %v4028 = vsub.f32 %v3967, %v4004
        %v4029 = vsub.f32 %v3970, %v4006
        %v4030 = vsub.f32 %v3972, %v4008
        %v4031 = vsub.f32 %v3975, %v4010
        %v4032 = vsub.f32 %v3977, %v4012
        %v4033 = vsub.f32 %v3980, %v4014
        %v4034 = vsub.f32 %v3982, %v4016
        %v4035 = vsub.f32 %v3985, %v4018
        %v4036 = vsub.f32 %v3987, %v4020
        %v4037 = vmul.f32 %v4021, 1.442695
        %v4038 = vpow.pop %v4037
        %v4039 = vmul.f32 %v4022, 1.442695
        %v4040 = vpow.pop %v4039
        %v4041 = vmul.f32 %v4023, 1.442695
        %v4042 = vpow.pop %v4041
        %v4043 = vmul.f32 %v4024, 1.442695
        %v4044 = vpow.pop %v4043
        %v4045 = vmul.f32 %v4025, 1.442695
        %v4046 = vpow.pop %v4045
        %v4047 = vmul.f32 %v4026, 1.442695
        %v4048 = vpow.pop %v4047
        %v4049 = vmul.f32 %v4027, 1.442695
        %v4050 = vpow.pop %v4049
        %v4051 = vmul.f32 %v4028, 1.442695
        %v4052 = vpow.pop %v4051
        %v4053 = vmul.f32 %v4029, 1.442695
        %v4054 = vpow.pop %v4053
        %v4055 = vmul.f32 %v4030, 1.442695
        %v4056 = vpow.pop %v4055
        %v4057 = vmul.f32 %v4031, 1.442695
        %v4058 = vpow.pop %v4057
        %v4059 = vmul.f32 %v4032, 1.442695
        %v4060 = vpow.pop %v4059
        %v4061 = vmul.f32 %v4033, 1.442695
        %v4062 = vpow.pop %v4061
        %v4063 = vmul.f32 %v4034, 1.442695
        %v4064 = vpow.pop %v4063
        %v4065 = vmul.f32 %v4035, 1.442695
        %v4066 = vpow.pop %v4065
        %v4067 = vmul.f32 %v4036, 1.442695
        %v4068 = vpow.pop %v4067
        %4069 = vadd.xlane.f32.xlu0 %v4038
        %v4070 = vpop.xlane.xlu0 %4069
        %4071 = vadd.xlane.f32.xlu0 %v4040
        %v4072 = vpop.xlane.xlu0 %4071
        %4073 = vadd.xlane.f32.xlu0 %v4042
        %v4074 = vpop.xlane.xlu0 %4073
        %4075 = vadd.xlane.f32.xlu0 %v4044
        %v4076 = vpop.xlane.xlu0 %4075
        %4077 = vadd.xlane.f32.xlu0 %v4046
        %v4078 = vpop.xlane.xlu0 %4077
        %4079 = vadd.xlane.f32.xlu0 %v4048
        %v4080 = vpop.xlane.xlu0 %4079
        %4081 = vadd.xlane.f32.xlu0 %v4050
        %v4082 = vpop.xlane.xlu0 %4081
        %4083 = vadd.xlane.f32.xlu0 %v4052
        %v4084 = vpop.xlane.xlu0 %4083
        %4085 = vadd.xlane.f32.xlu0 %v4054
        %v4086 = vpop.xlane.xlu0 %4085
        %4087 = vadd.xlane.f32.xlu0 %v4056
        %v4088 = vpop.xlane.xlu0 %4087
        %4089 = vadd.xlane.f32.xlu0 %v4058
        %v4090 = vpop.xlane.xlu0 %4089
        %4091 = vadd.xlane.f32.xlu0 %v4060
        %v4092 = vpop.xlane.xlu0 %4091
        %4093 = vadd.xlane.f32.xlu0 %v4062
        %v4094 = vpop.xlane.xlu0 %4093
        %4095 = vadd.xlane.f32.xlu0 %v4064
        %v4096 = vpop.xlane.xlu0 %4095
        %4097 = vadd.xlane.f32.xlu0 %v4066
        %v4098 = vpop.xlane.xlu0 %4097
        %4099 = vadd.xlane.f32.xlu0 %v4068
        %v4100 = vpop.xlane.xlu0 %4099
        %v4101 = vrcp.pop %v4070
        %v4102 = vrcp.pop %v4072
        %v4103 = vrcp.pop %v4074
        %v4104 = vrcp.pop %v4076
        %v4105 = vrcp.pop %v4078
        %v4106 = vrcp.pop %v4080
        %v4107 = vrcp.pop %v4082
        %v4108 = vrcp.pop %v4084
        %v4109 = vrcp.pop %v4086
        %v4110 = vrcp.pop %v4088
        %v4111 = vrcp.pop %v4090
        %v4112 = vrcp.pop %v4092
        %v4113 = vrcp.pop %v4094
        %v4114 = vrcp.pop %v4096
        %v4115 = vrcp.pop %v4098
        %v4116 = vrcp.pop %v4100
        %v4117 = vmul.f32 %v4038, %v4101
        %v4118 = vmul.f32 %v4040, %v4102
        %v4119 = vmul.f32 %v4042, %v4103
        %v4120 = vmul.f32 %v4044, %v4104
        %v4121 = vmul.f32 %v4046, %v4105
        %v4122 = vmul.f32 %v4048, %v4106
        %v4123 = vmul.f32 %v4050, %v4107
        %v4124 = vmul.f32 %v4052, %v4108
        %v4125 = vmul.f32 %v4054, %v4109
        %v4126 = vmul.f32 %v4056, %v4110
        %v4127 = vmul.f32 %v4058, %v4111
        %v4128 = vmul.f32 %v4060, %v4112
        %v4129 = vmul.f32 %v4062, %v4113
        %v4130 = vmul.f32 %v4064, %v4114
        %v4131 = vmul.f32 %v4066, %v4115
        %v4132 = vmul.f32 %v4068, %v4116
        %v4133 = vpack.c.bf16 %v3701, %v3698
        %v4134 = vpack.c.bf16 %v3707, %v3704
        %v4135 = vpack.c.bf16 %v4118, %v4117
        %v4136 = vpack.c.bf16 %v4120, %v4119
        %v4137 = vpack.c.bf16 %v4122, %v4121
        %v4138 = vpack.c.bf16 %v4124, %v4123
        %v4139 = vpack.c.bf16 %v4126, %v4125
        %v4140 = vpack.c.bf16 %v4128, %v4127
        %v4141 = vpack.c.bf16 %v4130, %v4129
        %v4142 = vpack.c.bf16 %v4132, %v4131
        %4143 = vmatpush.bf16.xpose.msra.mxu0 %v4142
        %4144 = vmatpush.bf16.xpose.msra.mxu0 %v4141
        %4145 = vmatpush.bf16.xpose.msra.mxu0 %v4140
        %4146 = vmatpush.bf16.xpose.msra.mxu0 %v4139
        %4147 = vmatpush.bf16.xpose.msra.mxu0 %v4138
        %4148 = vmatpush.bf16.xpose.msra.mxu0 %v4137
        %4149 = vmatpush.bf16.xpose.msra.mxu0 %v4136
        %4150 = vmatpush.bf16.xpose.msra.mxu0 %v4135
        %4151 = vmatmul.bf16.gmra.mxu0 %v4133
        %v4152 = vpop.f32.mrf.mxu0
        %v4153 = vadd.f32 0.0, %v4152
        %v4154 = vpop.f32.mrf.mxu0
        %v4155 = vadd.f32 0.0, %v4154
        %4156 = vmatmul.bf16.gmra.mxu0 %v4134
        %v4157 = vpop.f32.mrf.mxu0
        %v4158 = vadd.f32 0.0, %v4157
        %v4159 = vpop.f32.mrf.mxu0
        %v4160 = vadd.f32 0.0, %v4159
        %4161 = vdwg.mxu0
        %v4162 = vld [vmem:[%s1506] sm:$0xff]
        %v4163 = vld [vmem:[%s1506 + $0x8] sm:$0xff]
        %v4164 = vld [vmem:[%s1506 + $0x10] sm:$0xff]
        %v4165 = vld [vmem:[%s1506 + $0x18] sm:$0xff]
        %v4166 = vld [vmem:[%s1506 + $0x20] sm:$0xff]
        %v4167 = vld [vmem:[%s1506 + $0x28] sm:$0xff]
        %v4168 = vld [vmem:[%s1506 + $0x30] sm:$0xff]
        %v4169 = vld [vmem:[%s1506 + $0x38] sm:$0xff]
        %v4170 = vmax.f32 %v4153, 0.0
        %v4171 = vmax.f32 %v4155, 0.0
        %v4172 = vmax.f32 %v4158, 0.0
        %v4173 = vmax.f32 %v4160, 0.0
        %v4175 = vsel %vm376, %v4162, 0
        %v4178 = vsel %vm376, %v4163, 0
        %v4181 = vsel %vm376, %v4164, 0
        %v4184 = vsel %vm376, %v4165, 0
        %v4187 = vsel %vm376, %v4166, 0
        %v4190 = vsel %vm376, %v4167, 0
        %v4193 = vsel %vm376, %v4168, 0
        %v4196 = vsel %vm376, %v4169, 0
        %4198 = vmatpush.msra.mxu0 0.0
        %4199 = vmatpush.msra.mxu0 0.0
        %4200 = vmatpush.msra.mxu0 0.0
        %4201 = vmatpush.msra.mxu0 0.0
        %4202 = vmatpush.msra.mxu0 0.0
        %4203 = vmatpush.msra.mxu0 0.0
        %4204 = vmatpush.msra.mxu0 0.0
        %4205 = vmatpush.msra.mxu0 0.0
        %4206 = vmatpush.msra.mxu0 0.0
        %4207 = vmatpush.msra.mxu0 0.0
        %4208 = vmatpush.msra.mxu0 0.0
        %4209 = vmatpush.msra.mxu0 0.0
        %4210 = vmatpush.msra.mxu0 %v4173
        %4211 = vmatpush.msra.mxu0 %v4172
        %4212 = vmatpush.msra.mxu0 %v4171
        %4213 = vmatpush.msra.mxu0 %v4170
        %4214 = vmatmul.f32.gmra.mxu0 %v4175
        %v4215 = vpop.f32.mrf.mxu0
        %v4216 = vadd.f32 0.0, %v4215
        %4217 = vmatmul.f32.gmra.mxu0 %v4178
        %v4218 = vpop.f32.mrf.mxu0
        %v4219 = vadd.f32 0.0, %v4218
        %4220 = vmatmul.f32.gmra.mxu0 %v4181
        %v4221 = vpop.f32.mrf.mxu0
        %v4222 = vadd.f32 0.0, %v4221
        %4223 = vmatmul.f32.gmra.mxu0 %v4184
        %v4224 = vpop.f32.mrf.mxu0
        %v4225 = vadd.f32 0.0, %v4224
        %4226 = vmatmul.f32.gmra.mxu0 %v4187
        %v4227 = vpop.f32.mrf.mxu0
        %v4228 = vadd.f32 0.0, %v4227
        %4229 = vmatmul.f32.gmra.mxu0 %v4190
        %v4230 = vpop.f32.mrf.mxu0
        %v4231 = vadd.f32 0.0, %v4230
        %4232 = vmatmul.f32.gmra.mxu0 %v4193
        %v4233 = vpop.f32.mrf.mxu0
        %v4234 = vadd.f32 0.0, %v4233
        %4235 = vmatmul.f32.gmra.mxu0 %v4196
        %v4236 = vpop.f32.mrf.mxu0
        %v4237 = vadd.f32 0.0, %v4236
        %4238 = vdwg.mxu0
        %v4240 = vsel %vm376, %v3594, 0
        %v4243 = vsel %vm376, %v3595, 0
        %v4246 = vsel %vm376, %v3596, 0
        %v4249 = vsel %vm376, %v3597, 0
        %v4252 = vsel %vm376, %v3598, 0
        %v4255 = vsel %vm376, %v3599, 0
        %v4258 = vsel %vm376, %v3600, 0
        %v4261 = vsel %vm376, %v3601, 0
        %4263 = vmatpush.msra.mxu0 0.0
        %4264 = vmatpush.msra.mxu0 0.0
        %4265 = vmatpush.msra.mxu0 0.0
        %4266 = vmatpush.msra.mxu0 0.0
        %4267 = vmatpush.msra.mxu0 0.0
        %4268 = vmatpush.msra.mxu0 0.0
        %4269 = vmatpush.msra.mxu0 0.0
        %4270 = vmatpush.msra.mxu0 0.0
        %4271 = vmatpush.msra.mxu0 0.0
        %4272 = vmatpush.msra.mxu0 0.0
        %4273 = vmatpush.msra.mxu0 0.0
        %4274 = vmatpush.msra.mxu0 0.0
        %4275 = vmatpush.msra.mxu0 %v3605
        %4276 = vmatpush.msra.mxu0 %v3604
        %4277 = vmatpush.msra.mxu0 %v3603
        %4278 = vmatpush.msra.mxu0 %v3602
        %4279 = vmatmul.f32.gmra.mxu0 %v4240
        %v4280 = vpop.f32.mrf.mxu0
        %v4281 = vadd.f32 %v4216, %v4280
        %4282 = vmatmul.f32.gmra.mxu0 %v4243
        %v4283 = vpop.f32.mrf.mxu0
        %v4284 = vadd.f32 %v4219, %v4283
        %4285 = vmatmul.f32.gmra.mxu0 %v4246
        %v4286 = vpop.f32.mrf.mxu0
        %v4287 = vadd.f32 %v4222, %v4286
        %4288 = vmatmul.f32.gmra.mxu0 %v4249
        %v4289 = vpop.f32.mrf.mxu0
        %v4290 = vadd.f32 %v4225, %v4289
        %4291 = vmatmul.f32.gmra.mxu0 %v4252
        %v4292 = vpop.f32.mrf.mxu0
        %v4293 = vadd.f32 %v4228, %v4292
        %4294 = vmatmul.f32.gmra.mxu0 %v4255
        %v4295 = vpop.f32.mrf.mxu0
        %v4296 = vadd.f32 %v4231, %v4295
        %4297 = vmatmul.f32.gmra.mxu0 %v4258
        %v4298 = vpop.f32.mrf.mxu0
        %v4299 = vadd.f32 %v4234, %v4298
        %4300 = vmatmul.f32.gmra.mxu0 %v4261
        %v4301 = vpop.f32.mrf.mxu0
        %v4302 = vadd.f32 %v4237, %v4301
        %4303 = vdwg.mxu0
        %v4304 = vld [vmem:[%s7] sm:$0xff]
        %v4305 = vld [vmem:[%s7 + $0x8] sm:$0xff]
        %v4306 = vld [vmem:[%s7 + $0x10] sm:$0xff]
        %v4307 = vld [vmem:[%s7 + $0x18] sm:$0xff]
        %v4308 = vld [vmem:[%s7 + $0x20] sm:$0xff]
        %v4309 = vld [vmem:[%s7 + $0x28] sm:$0xff]
        %v4310 = vld [vmem:[%s7 + $0x30] sm:$0xff]
        %v4311 = vld [vmem:[%s7 + $0x38] sm:$0xff]
        %4313 = vset.pattern.permute.xlu0 0
        %4314 = vperm.xlu0 %4313, %v4304
        %v4315 = vpop.permute.xlu0 %4314
        %4318 = vset.pattern.permute.xlu0 0
        %4319 = vperm.xlu0 %4318, %v4305
        %v4320 = vpop.permute.xlu0 %4319
        %4323 = vset.pattern.permute.xlu0 0
        %4324 = vperm.xlu0 %4323, %v4306
        %v4325 = vpop.permute.xlu0 %4324
        %4328 = vset.pattern.permute.xlu0 0
        %4329 = vperm.xlu0 %4328, %v4307
        %v4330 = vpop.permute.xlu0 %4329
        %4333 = vset.pattern.permute.xlu0 0
        %4334 = vperm.xlu0 %4333, %v4308
        %v4335 = vpop.permute.xlu0 %4334
        %4338 = vset.pattern.permute.xlu0 0
        %4339 = vperm.xlu0 %4338, %v4309
        %v4340 = vpop.permute.xlu0 %4339
        %4343 = vset.pattern.permute.xlu0 0
        %4344 = vperm.xlu0 %4343, %v4310
        %v4345 = vpop.permute.xlu0 %4344
        %4348 = vset.pattern.permute.xlu0 0
        %4349 = vperm.xlu0 %4348, %v4311
        %v4350 = vpop.permute.xlu0 %4349
        %v4352 = vadd.f32 %v4281, %v4315
        %v4353 = vadd.f32 %v4284, %v4320
        %v4354 = vadd.f32 %v4287, %v4325
        %v4355 = vadd.f32 %v4290, %v4330
        %v4356 = vadd.f32 %v4293, %v4335
        %v4357 = vadd.f32 %v4296, %v4340
        %v4358 = vadd.f32 %v4299, %v4345
        %v4359 = vadd.f32 %v4302, %v4350
        %s4360 = scalar_lea.vmem %s326, 128 [#allocation5]
        %4361 = vst [vmem:[%s4360] sm:$0xff] %v4352
        %4362 = vst [vmem:[%s4360 + $0x8] sm:$0xff] %v4353
        %4363 = vst [vmem:[%s4360 + $0x10] sm:$0xff] %v4354
        %4364 = vst [vmem:[%s4360 + $0x18] sm:$0xff] %v4355
        %4365 = vst [vmem:[%s4360 + $0x20] sm:$0xff] %v4356
        %4366 = vst [vmem:[%s4360 + $0x28] sm:$0xff] %v4357
        %4367 = vst [vmem:[%s4360 + $0x30] sm:$0xff] %v4358
        %4368 = vst [vmem:[%s4360 + $0x38] sm:$0xff] %v4359
        %s4369 = scalar_lea.vmem %s293, 192 [#allocation2]
        %v4370 = vld [vmem:[%s4369] sm:$0xff]
        %v4371 = vld [vmem:[%s4369 + $0x8] sm:$0xff]
        %v4372 = vld [vmem:[%s4369 + $0x10] sm:$0xff]
        %v4373 = vld [vmem:[%s4369 + $0x18] sm:$0xff]
        %v4374 = vld [vmem:[%s1] sm:$0xff]
        %v4375 = vld [vmem:[%s1 + $0x8] sm:$0xff]
        %v4376 = vld [vmem:[%s1 + $0x10] sm:$0xff]
        %v4377 = vld [vmem:[%s1 + $0x18] sm:$0xff]
        %v4378 = vld [vmem:[%s1 + $0x20] sm:$0xff]
        %v4379 = vld [vmem:[%s1 + $0x28] sm:$0xff]
        %v4380 = vld [vmem:[%s2] sm:$0xff]
        %v4381 = vld [vmem:[%s2 + $0x8] sm:$0xff]
        %v4382 = vld [vmem:[%s2 + $0x10] sm:$0xff]
        %v4383 = vld [vmem:[%s2 + $0x18] sm:$0xff]
        %v4384 = vld [vmem:[%s2 + $0x20] sm:$0xff]
        %v4385 = vld [vmem:[%s2 + $0x28] sm:$0xff]
        %4387 = vset.pattern.permute.xlu0 0
        %4388 = vperm.xlu0 %4387, %v4380
        %v4389 = vpop.permute.xlu0 %4388
        %4392 = vset.pattern.permute.xlu0 0
        %4393 = vperm.xlu0 %4392, %v4381
        %v4394 = vpop.permute.xlu0 %4393
        %4397 = vset.pattern.permute.xlu0 0
        %4398 = vperm.xlu0 %4397, %v4382
        %v4399 = vpop.permute.xlu0 %4398
        %4402 = vset.pattern.permute.xlu0 0
        %4403 = vperm.xlu0 %4402, %v4383
        %v4404 = vpop.permute.xlu0 %4403
        %4407 = vset.pattern.permute.xlu0 0
        %4408 = vperm.xlu0 %4407, %v4384
        %v4409 = vpop.permute.xlu0 %4408
        %4412 = vset.pattern.permute.xlu0 0
        %4413 = vperm.xlu0 %4412, %v4385
        %v4414 = vpop.permute.xlu0 %4413
        %v4417 = vsel %vm376, %v4374, 0
        %v4420 = vsel %vm376, %v4375, 0
        %v4423 = vsel %vm376, %v4376, 0
        %v4426 = vsel %vm376, %v4377, 0
        %v4429 = vsel %vm376, %v4378, 0
        %v4432 = vsel %vm376, %v4379, 0
        %4434 = vmatpush.msra.mxu0 0.0
        %4435 = vmatpush.msra.mxu0 0.0
        %4436 = vmatpush.msra.mxu0 0.0
        %4437 = vmatpush.msra.mxu0 0.0
        %4438 = vmatpush.msra.mxu0 0.0
        %4439 = vmatpush.msra.mxu0 0.0
        %4440 = vmatpush.msra.mxu0 0.0
        %4441 = vmatpush.msra.mxu0 0.0
        %4442 = vmatpush.msra.mxu0 0.0
        %4443 = vmatpush.msra.mxu0 0.0
        %4444 = vmatpush.msra.mxu0 0.0
        %4445 = vmatpush.msra.mxu0 0.0
        %4446 = vmatpush.msra.mxu0 %v4373
        %4447 = vmatpush.msra.mxu0 %v4372
        %4448 = vmatpush.msra.mxu0 %v4371
        %4449 = vmatpush.msra.mxu0 %v4370
        %4450 = vmatmul.f32.gmra.mxu0 %v4417
        %v4451 = vpop.f32.mrf.mxu0
        %v4452 = vadd.f32 %v4389, %v4451
        %4453 = vmatmul.f32.gmra.mxu0 %v4420
        %v4454 = vpop.f32.mrf.mxu0
        %v4455 = vadd.f32 %v4394, %v4454
        %4456 = vmatmul.f32.gmra.mxu0 %v4423
        %v4457 = vpop.f32.mrf.mxu0
        %v4458 = vadd.f32 %v4399, %v4457
        %4459 = vmatmul.f32.gmra.mxu0 %v4426
        %v4460 = vpop.f32.mrf.mxu0
        %v4461 = vadd.f32 %v4404, %v4460
        %4462 = vmatmul.f32.gmra.mxu0 %v4429
        %v4463 = vpop.f32.mrf.mxu0
        %v4464 = vadd.f32 %v4409, %v4463
        %4465 = vmatmul.f32.gmra.mxu0 %v4432
        %v4466 = vpop.f32.mrf.mxu0
        %v4467 = vadd.f32 %v4414, %v4466
        %4468 = vdwg.mxu0
        %4469 = vrot.lane.b32.xlu0 %v4452, 18
        %v4470 = vpop.permute.xlu0 %4469
        %v4471 = vld [vmem:[%s3] sm:$0xf]
        %v4472 = vunpack.c.l.bf16 %v4471
        %v4473 = vmul.f32 %v4472, %v4470
        %4474 = vrot.lane.b32.xlu0 %v4452, 17
        %v4475 = vpop.permute.xlu0 %4474
        %v4476 = vld [vmem:[%s437] sm:$0xf]
        %v4477 = vunpack.c.l.bf16 %v4476
        %v4478 = vmul.f32 %v4477, %v4475
        %4479 = vrot.lane.b32.xlu0 %v4452, 16
        %v4480 = vpop.permute.xlu0 %4479
        %v4481 = vld [vmem:[%s443] sm:$0xf]
        %v4482 = vunpack.c.l.bf16 %v4481
        %v4483 = vmul.f32 %v4482, %v4480
        %4484 = vrot.lane.b32.xlu0 %v4452, 15
        %v4485 = vpop.permute.xlu0 %4484
        %v4486 = vld [vmem:[%s449] sm:$0xf]
        %v4487 = vunpack.c.l.bf16 %v4486
        %v4488 = vmul.f32 %v4487, %v4485
        %4489 = vrot.lane.b32.xlu0 %v4452, 14
        %v4490 = vpop.permute.xlu0 %4489
        %v4491 = vld [vmem:[%s455] sm:$0xf]
        %v4492 = vunpack.c.l.bf16 %v4491
        %v4493 = vmul.f32 %v4492, %v4490
        %v4494 = vadd.f32 %v4473, %v4493
        %4495 = vrot.lane.b32.xlu0 %v4452, 10
        %v4496 = vpop.permute.xlu0 %4495
        %v4497 = vld [vmem:[%s462] sm:$0xf]
        %v4498 = vunpack.c.l.bf16 %v4497
        %v4499 = vmul.f32 %v4498, %v4496
        %v4500 = vadd.f32 %v4478, %v4499
        %4501 = vrot.lane.b32.xlu0 %v4452, 9
        %v4502 = vpop.permute.xlu0 %4501
        %v4503 = vld [vmem:[%s469] sm:$0xf]
        %v4504 = vunpack.c.l.bf16 %v4503
        %v4505 = vmul.f32 %v4504, %v4502
        %v4506 = vadd.f32 %v4483, %v4505
        %4507 = vrot.lane.b32.xlu0 %v4452, 8
        %v4508 = vpop.permute.xlu0 %4507
        %v4509 = vld [vmem:[%s476] sm:$0xf]
        %v4510 = vunpack.c.l.bf16 %v4509
        %v4511 = vmul.f32 %v4510, %v4508
        %v4512 = vadd.f32 %v4488, %v4511
        %4513 = vrot.lane.b32.xlu0 %v4452, 7
        %v4514 = vpop.permute.xlu0 %4513
        %v4515 = vld [vmem:[%s483] sm:$0xf]
        %v4516 = vunpack.c.l.bf16 %v4515
        %v4517 = vmul.f32 %v4516, %v4514
        %v4518 = vadd.f32 %v4494, %v4517
        %4519 = vrot.lane.b32.xlu0 %v4452, 6
        %v4520 = vpop.permute.xlu0 %4519
        %v4521 = vld [vmem:[%s490] sm:$0xf]
        %v4522 = vunpack.c.l.bf16 %v4521
        %v4523 = vmul.f32 %v4522, %v4520
        %v4524 = vadd.f32 %v4500, %v4523
        %4525 = vrot.lane.b32.xlu0 %v4452, 2
        %v4526 = vpop.permute.xlu0 %4525
        %v4527 = vld [vmem:[%s497] sm:$0xf]
        %v4528 = vunpack.c.l.bf16 %v4527
        %v4529 = vmul.f32 %v4528, %v4526
        %v4530 = vadd.f32 %v4506, %v4529
        %4531 = vrot.lane.b32.xlu0 %v4452, 1
        %v4532 = vpop.permute.xlu0 %4531
        %v4533 = vld [vmem:[%s504] sm:$0xf]
        %v4534 = vunpack.c.l.bf16 %v4533
        %v4535 = vmul.f32 %v4534, %v4532
        %v4536 = vadd.f32 %v4512, %v4535
        %v4537 = vld [vmem:[%s509] sm:$0xf]
        %v4538 = vunpack.c.l.bf16 %v4537
        %v4539 = vmul.f32 %v4538, %v4452
        %v4540 = vadd.f32 %v4518, %v4539
        %4541 = vrot.lane.b32.xlu0 %v4452, 127
        %v4542 = vpop.permute.xlu0 %4541
        %v4543 = vld [vmem:[%s516] sm:$0xf]
        %v4544 = vunpack.c.l.bf16 %v4543
        %v4545 = vmul.f32 %v4544, %v4542
        %v4546 = vadd.f32 %v4524, %v4545
        %4547 = vrot.lane.b32.xlu0 %v4452, 126
        %v4548 = vpop.permute.xlu0 %4547
        %v4549 = vld [vmem:[%s523] sm:$0xf]
        %v4550 = vunpack.c.l.bf16 %v4549
        %v4551 = vmul.f32 %v4550, %v4548
        %v4552 = vadd.f32 %v4530, %v4551
        %4553 = vrot.lane.b32.xlu0 %v4452, 122
        %v4554 = vpop.permute.xlu0 %4553
        %v4555 = vld [vmem:[%s530] sm:$0xf]
        %v4556 = vunpack.c.l.bf16 %v4555
        %v4557 = vmul.f32 %v4556, %v4554
        %v4558 = vadd.f32 %v4536, %v4557
        %4559 = vrot.lane.b32.xlu0 %v4452, 121
        %v4560 = vpop.permute.xlu0 %4559
        %v4561 = vld [vmem:[%s537] sm:$0xf]
        %v4562 = vunpack.c.l.bf16 %v4561
        %v4563 = vmul.f32 %v4562, %v4560
        %v4564 = vadd.f32 %v4540, %v4563
        %4565 = vrot.lane.b32.xlu0 %v4452, 120
        %v4566 = vpop.permute.xlu0 %4565
        %v4567 = vld [vmem:[%s544] sm:$0xf]
        %v4568 = vunpack.c.l.bf16 %v4567
        %v4569 = vmul.f32 %v4568, %v4566
        %v4570 = vadd.f32 %v4546, %v4569
        %4571 = vrot.lane.b32.xlu0 %v4452, 119
        %v4572 = vpop.permute.xlu0 %4571
        %v4573 = vld [vmem:[%s551] sm:$0xf]
        %v4574 = vunpack.c.l.bf16 %v4573
        %v4575 = vmul.f32 %v4574, %v4572
        %v4576 = vadd.f32 %v4552, %v4575
        %4577 = vrot.lane.b32.xlu0 %v4452, 118
        %v4578 = vpop.permute.xlu0 %4577
        %v4579 = vld [vmem:[%s558] sm:$0xf]
        %v4580 = vunpack.c.l.bf16 %v4579
        %v4581 = vmul.f32 %v4580, %v4578
        %v4582 = vadd.f32 %v4558, %v4581
        %4583 = vrot.lane.b32.xlu0 %v4452, 114
        %v4584 = vpop.permute.xlu0 %4583
        %v4585 = vld [vmem:[%s565] sm:$0xf]
        %v4586 = vunpack.c.l.bf16 %v4585
        %v4587 = vmul.f32 %v4586, %v4584
        %v4588 = vadd.f32 %v4564, %v4587
        %4589 = vrot.lane.b32.xlu0 %v4452, 113
        %v4590 = vpop.permute.xlu0 %4589
        %v4591 = vld [vmem:[%s572] sm:$0xf]
        %v4592 = vunpack.c.l.bf16 %v4591
        %v4593 = vmul.f32 %v4592, %v4590
        %v4594 = vadd.f32 %v4570, %v4593
        %4595 = vrot.lane.b32.xlu0 %v4452, 112
        %v4596 = vpop.permute.xlu0 %4595
        %v4597 = vld [vmem:[%s579] sm:$0xf]
        %v4598 = vunpack.c.l.bf16 %v4597
        %v4599 = vmul.f32 %v4598, %v4596
        %v4600 = vadd.f32 %v4576, %v4599
        %4601 = vrot.lane.b32.xlu0 %v4452, 111
        %v4602 = vpop.permute.xlu0 %4601
        %v4603 = vld [vmem:[%s586] sm:$0xf]
        %v4604 = vunpack.c.l.bf16 %v4603
        %v4605 = vmul.f32 %v4604, %v4602
        %v4606 = vadd.f32 %v4582, %v4605
        %4607 = vrot.lane.b32.xlu0 %v4452, 110
        %v4608 = vpop.permute.xlu0 %4607
        %v4609 = vld [vmem:[%s593] sm:$0xf]
        %v4610 = vunpack.c.l.bf16 %v4609
        %v4611 = vmul.f32 %v4610, %v4608
        %v4612 = vadd.f32 %v4588, %v4611
        %v4613 = vld [vmem:[%s4] sm:$0xff]
        %v4614 = vadd.f32 %v4612, %v4594
        %v4615 = vadd.f32 %v4600, %v4606
        %v4616 = vadd.f32 %v4614, %v4615
        %4618 = vset.pattern.permute.xlu0 0
        %4619 = vperm.xlu0 %4618, %v4613
        %v4620 = vpop.permute.xlu0 %4619
        %v4622 = vadd.f32 %v4620, %v4616
        %v4623 = vpack.c.bf16 %v4622, %v4622
        %v4624 = vpack.c.bf16 %v4455, %v4455
        %v4625 = vld [vmem:[%s5] sm:$0xf]
        %v4626 = vld [vmem:[%s5 + $0x4] sm:$0xf]
        %v4627 = vld [vmem:[%s5 + $0x8] sm:$0xf]
        %v4628 = vld [vmem:[%s5 + $0xc] sm:$0xf]
        %v4629 = vld [vmem:[%s5 + $0x10] sm:$0xf]
        %v4630 = vld [vmem:[%s5 + $0x14] sm:$0xf]
        %v4631 = vld [vmem:[%s5 + $0x18] sm:$0xf]
        %v4632 = vld [vmem:[%s5 + $0x1c] sm:$0xf]
        %v4633 = vld [vmem:[%s5 + $0x20] sm:$0xf]
        %v4634 = vld [vmem:[%s5 + $0x24] sm:$0xf]
        %v4635 = vld [vmem:[%s5 + $0x28] sm:$0xf]
        %v4636 = vld [vmem:[%s5 + $0x2c] sm:$0xf]
        %v4637 = vld [vmem:[%s5 + $0x30] sm:$0xf]
        %v4638 = vld [vmem:[%s5 + $0x34] sm:$0xf]
        %v4639 = vld [vmem:[%s5 + $0x38] sm:$0xf]
        %v4640 = vld [vmem:[%s5 + $0x3c] sm:$0xf]
        %v4641 = vunpack.c.l.bf16 %v4625
        %v4642 = vunpack.c.l.bf16 %v4626
        %v4643 = vunpack.c.l.bf16 %v4627
        %v4644 = vunpack.c.l.bf16 %v4628
        %v4645 = vunpack.c.l.bf16 %v4629
        %v4646 = vunpack.c.l.bf16 %v4630
        %v4647 = vunpack.c.l.bf16 %v4631
        %v4648 = vunpack.c.l.bf16 %v4632
        %v4649 = vunpack.c.l.bf16 %v4633
        %v4650 = vunpack.c.l.bf16 %v4634
        %v4651 = vunpack.c.l.bf16 %v4635
        %v4652 = vunpack.c.l.bf16 %v4636
        %v4653 = vunpack.c.l.bf16 %v4637
        %v4654 = vunpack.c.l.bf16 %v4638
        %v4655 = vunpack.c.l.bf16 %v4639
        %v4656 = vunpack.c.l.bf16 %v4640
        %4657 = vxpose.xlu0.c.b16.start [1/8] %v4623, 128
        %4658 = vxpose.xlu0.c.b16.cont [2/8] 0, 128
        %4659 = vxpose.xlu0.c.b16.cont [3/8] 0, 128
        %4660 = vxpose.xlu0.c.b16.cont [4/8] 0, 128
        %4661 = vxpose.xlu0.c.b16.cont [5/8] 0, 128
        %4662 = vxpose.xlu0.c.b16.cont [6/8] 0, 128
        %4663 = vxpose.xlu0.c.b16.cont [7/8] 0, 128
        %4664 = vxpose.xlu0.c.b16.end [8/8] 0, 128
        %v4665 = vpop.trf.xlu0
        %v4666 = vpop.trf.xlu0
        %v4667 = vpop.trf.xlu0
        %v4668 = vpop.trf.xlu0
        %v4669 = vpop.trf.xlu0
        %v4670 = vpop.trf.xlu0
        %v4671 = vpop.trf.xlu0
        %v4672 = vpop.trf.xlu0
        %v4674 = vsel %vm658, %v4665, 0
        %v4677 = vsel %vm658, %v4666, 0
        %v4680 = vsel %vm658, %v4667, 0
        %v4683 = vsel %vm658, %v4668, 0
        %v4686 = vsel %vm658, %v4669, 0
        %v4689 = vsel %vm658, %v4670, 0
        %v4692 = vsel %vm658, %v4671, 0
        %v4695 = vsel %vm658, %v4672, 0
        %v4698 = vsel %vm683, %v4624, 0
        %4700 = vmatpush.bf16.msra.mxu0 0
        %4701 = vmatpush.bf16.msra.mxu0 0
        %4702 = vmatpush.bf16.msra.mxu0 0
        %4703 = vmatpush.bf16.msra.mxu0 0
        %4704 = vmatpush.bf16.msra.mxu0 0
        %4705 = vmatpush.bf16.msra.mxu0 0
        %4706 = vmatpush.bf16.msra.mxu0 0
        %4707 = vmatpush.bf16.msra.mxu0 %v4698
        %4708 = vmatmul.bf16.gmra.mxu0 %v4674
        %v4709 = vpop.f32.mrf.mxu0
        %v4710 = vadd.f32 %v4641, %v4709
        %v4711 = vpop.f32.mrf.mxu0
        %v4712 = vadd.f32 %v4642, %v4711
        %4713 = vmatmul.bf16.gmra.mxu0 %v4677
        %v4714 = vpop.f32.mrf.mxu0
        %v4715 = vadd.f32 %v4643, %v4714
        %v4716 = vpop.f32.mrf.mxu0
        %v4717 = vadd.f32 %v4644, %v4716
        %4718 = vmatmul.bf16.gmra.mxu0 %v4680
        %v4719 = vpop.f32.mrf.mxu0
        %v4720 = vadd.f32 %v4645, %v4719
        %v4721 = vpop.f32.mrf.mxu0
        %v4722 = vadd.f32 %v4646, %v4721
        %4723 = vmatmul.bf16.gmra.mxu0 %v4683
        %v4724 = vpop.f32.mrf.mxu0
        %v4725 = vadd.f32 %v4647, %v4724
        %v4726 = vpop.f32.mrf.mxu0
        %v4727 = vadd.f32 %v4648, %v4726
        %4728 = vmatmul.bf16.gmra.mxu0 %v4686
        %v4729 = vpop.f32.mrf.mxu0
        %v4730 = vadd.f32 %v4649, %v4729
        %v4731 = vpop.f32.mrf.mxu0
        %v4732 = vadd.f32 %v4650, %v4731
        %4733 = vmatmul.bf16.gmra.mxu0 %v4689
        %v4734 = vpop.f32.mrf.mxu0
        %v4735 = vadd.f32 %v4651, %v4734
        %v4736 = vpop.f32.mrf.mxu0
        %v4737 = vadd.f32 %v4652, %v4736
        %4738 = vmatmul.bf16.gmra.mxu0 %v4692
        %v4739 = vpop.f32.mrf.mxu0
        %v4740 = vadd.f32 %v4653, %v4739
        %v4741 = vpop.f32.mrf.mxu0
        %v4742 = vadd.f32 %v4654, %v4741
        %4743 = vmatmul.bf16.gmra.mxu0 %v4695
        %v4744 = vpop.f32.mrf.mxu0
        %v4745 = vadd.f32 %v4655, %v4744
        %v4746 = vpop.f32.mrf.mxu0
        %v4747 = vadd.f32 %v4656, %v4746
        %4748 = vdwg.mxu0
        %4749 = vmax.xlane.f32.xlu0 %v4710
        %v4750 = vpop.xlane.xlu0 %4749
        %4751 = vmax.xlane.f32.xlu0 %v4712
        %v4752 = vpop.xlane.xlu0 %4751
        %4753 = vmax.xlane.f32.xlu0 %v4715
        %v4754 = vpop.xlane.xlu0 %4753
        %4755 = vmax.xlane.f32.xlu0 %v4717
        %v4756 = vpop.xlane.xlu0 %4755
        %4757 = vmax.xlane.f32.xlu0 %v4720
        %v4758 = vpop.xlane.xlu0 %4757
        %4759 = vmax.xlane.f32.xlu0 %v4722
        %v4760 = vpop.xlane.xlu0 %4759
        %4761 = vmax.xlane.f32.xlu0 %v4725
        %v4762 = vpop.xlane.xlu0 %4761
        %4763 = vmax.xlane.f32.xlu0 %v4727
        %v4764 = vpop.xlane.xlu0 %4763
        %4765 = vmax.xlane.f32.xlu0 %v4730
        %v4766 = vpop.xlane.xlu0 %4765
        %4767 = vmax.xlane.f32.xlu0 %v4732
        %v4768 = vpop.xlane.xlu0 %4767
        %4769 = vmax.xlane.f32.xlu0 %v4735
        %v4770 = vpop.xlane.xlu0 %4769
        %4771 = vmax.xlane.f32.xlu0 %v4737
        %v4772 = vpop.xlane.xlu0 %4771
        %4773 = vmax.xlane.f32.xlu0 %v4740
        %v4774 = vpop.xlane.xlu0 %4773
        %4775 = vmax.xlane.f32.xlu0 %v4742
        %v4776 = vpop.xlane.xlu0 %4775
        %4777 = vmax.xlane.f32.xlu0 %v4745
        %v4778 = vpop.xlane.xlu0 %4777
        %4779 = vmax.xlane.f32.xlu0 %v4747
        %v4780 = vpop.xlane.xlu0 %4779
        %v4781 = vsub.f32 %v4710, %v4750
        %v4782 = vsub.f32 %v4712, %v4752
        %v4783 = vsub.f32 %v4715, %v4754
        %v4784 = vsub.f32 %v4717, %v4756
        %v4785 = vsub.f32 %v4720, %v4758
        %v4786 = vsub.f32 %v4722, %v4760
        %v4787 = vsub.f32 %v4725, %v4762
        %v4788 = vsub.f32 %v4727, %v4764
        %v4789 = vsub.f32 %v4730, %v4766
        %v4790 = vsub.f32 %v4732, %v4768
        %v4791 = vsub.f32 %v4735, %v4770
        %v4792 = vsub.f32 %v4737, %v4772
        %v4793 = vsub.f32 %v4740, %v4774
        %v4794 = vsub.f32 %v4742, %v4776
        %v4795 = vsub.f32 %v4745, %v4778
        %v4796 = vsub.f32 %v4747, %v4780
        %v4797 = vmul.f32 %v4781, 1.442695
        %v4798 = vpow.pop %v4797
        %v4799 = vmul.f32 %v4782, 1.442695
        %v4800 = vpow.pop %v4799
        %v4801 = vmul.f32 %v4783, 1.442695
        %v4802 = vpow.pop %v4801
        %v4803 = vmul.f32 %v4784, 1.442695
        %v4804 = vpow.pop %v4803
        %v4805 = vmul.f32 %v4785, 1.442695
        %v4806 = vpow.pop %v4805
        %v4807 = vmul.f32 %v4786, 1.442695
        %v4808 = vpow.pop %v4807
        %v4809 = vmul.f32 %v4787, 1.442695
        %v4810 = vpow.pop %v4809
        %v4811 = vmul.f32 %v4788, 1.442695
        %v4812 = vpow.pop %v4811
        %v4813 = vmul.f32 %v4789, 1.442695
        %v4814 = vpow.pop %v4813
        %v4815 = vmul.f32 %v4790, 1.442695
        %v4816 = vpow.pop %v4815
        %v4817 = vmul.f32 %v4791, 1.442695
        %v4818 = vpow.pop %v4817
        %v4819 = vmul.f32 %v4792, 1.442695
        %v4820 = vpow.pop %v4819
        %v4821 = vmul.f32 %v4793, 1.442695
        %v4822 = vpow.pop %v4821
        %v4823 = vmul.f32 %v4794, 1.442695
        %v4824 = vpow.pop %v4823
        %v4825 = vmul.f32 %v4795, 1.442695
        %v4826 = vpow.pop %v4825
        %v4827 = vmul.f32 %v4796, 1.442695
        %v4828 = vpow.pop %v4827
        %4829 = vadd.xlane.f32.xlu0 %v4798
        %v4830 = vpop.xlane.xlu0 %4829
        %4831 = vadd.xlane.f32.xlu0 %v4800
        %v4832 = vpop.xlane.xlu0 %4831
        %4833 = vadd.xlane.f32.xlu0 %v4802
        %v4834 = vpop.xlane.xlu0 %4833
        %4835 = vadd.xlane.f32.xlu0 %v4804
        %v4836 = vpop.xlane.xlu0 %4835
        %4837 = vadd.xlane.f32.xlu0 %v4806
        %v4838 = vpop.xlane.xlu0 %4837
        %4839 = vadd.xlane.f32.xlu0 %v4808
        %v4840 = vpop.xlane.xlu0 %4839
        %4841 = vadd.xlane.f32.xlu0 %v4810
        %v4842 = vpop.xlane.xlu0 %4841
        %4843 = vadd.xlane.f32.xlu0 %v4812
        %v4844 = vpop.xlane.xlu0 %4843
        %4845 = vadd.xlane.f32.xlu0 %v4814
        %v4846 = vpop.xlane.xlu0 %4845
        %4847 = vadd.xlane.f32.xlu0 %v4816
        %v4848 = vpop.xlane.xlu0 %4847
        %4849 = vadd.xlane.f32.xlu0 %v4818
        %v4850 = vpop.xlane.xlu0 %4849
        %4851 = vadd.xlane.f32.xlu0 %v4820
        %v4852 = vpop.xlane.xlu0 %4851
        %4853 = vadd.xlane.f32.xlu0 %v4822
        %v4854 = vpop.xlane.xlu0 %4853
        %4855 = vadd.xlane.f32.xlu0 %v4824
        %v4856 = vpop.xlane.xlu0 %4855
        %4857 = vadd.xlane.f32.xlu0 %v4826
        %v4858 = vpop.xlane.xlu0 %4857
        %4859 = vadd.xlane.f32.xlu0 %v4828
        %v4860 = vpop.xlane.xlu0 %4859
        %v4861 = vrcp.pop %v4830
        %v4862 = vrcp.pop %v4832
        %v4863 = vrcp.pop %v4834
        %v4864 = vrcp.pop %v4836
        %v4865 = vrcp.pop %v4838
        %v4866 = vrcp.pop %v4840
        %v4867 = vrcp.pop %v4842
        %v4868 = vrcp.pop %v4844
        %v4869 = vrcp.pop %v4846
        %v4870 = vrcp.pop %v4848
        %v4871 = vrcp.pop %v4850
        %v4872 = vrcp.pop %v4852
        %v4873 = vrcp.pop %v4854
        %v4874 = vrcp.pop %v4856
        %v4875 = vrcp.pop %v4858
        %v4876 = vrcp.pop %v4860
        %v4877 = vmul.f32 %v4798, %v4861
        %v4878 = vmul.f32 %v4800, %v4862
        %v4879 = vmul.f32 %v4802, %v4863
        %v4880 = vmul.f32 %v4804, %v4864
        %v4881 = vmul.f32 %v4806, %v4865
        %v4882 = vmul.f32 %v4808, %v4866
        %v4883 = vmul.f32 %v4810, %v4867
        %v4884 = vmul.f32 %v4812, %v4868
        %v4885 = vmul.f32 %v4814, %v4869
        %v4886 = vmul.f32 %v4816, %v4870
        %v4887 = vmul.f32 %v4818, %v4871
        %v4888 = vmul.f32 %v4820, %v4872
        %v4889 = vmul.f32 %v4822, %v4873
        %v4890 = vmul.f32 %v4824, %v4874
        %v4891 = vmul.f32 %v4826, %v4875
        %v4892 = vmul.f32 %v4828, %v4876
        %v4893 = vpack.c.bf16 %v4461, %v4458
        %v4894 = vpack.c.bf16 %v4467, %v4464
        %v4895 = vpack.c.bf16 %v4878, %v4877
        %v4896 = vpack.c.bf16 %v4880, %v4879
        %v4897 = vpack.c.bf16 %v4882, %v4881
        %v4898 = vpack.c.bf16 %v4884, %v4883
        %v4899 = vpack.c.bf16 %v4886, %v4885
        %v4900 = vpack.c.bf16 %v4888, %v4887
        %v4901 = vpack.c.bf16 %v4890, %v4889
        %v4902 = vpack.c.bf16 %v4892, %v4891
        %4903 = vmatpush.bf16.xpose.msra.mxu0 %v4902
        %4904 = vmatpush.bf16.xpose.msra.mxu0 %v4901
        %4905 = vmatpush.bf16.xpose.msra.mxu0 %v4900
        %4906 = vmatpush.bf16.xpose.msra.mxu0 %v4899
        %4907 = vmatpush.bf16.xpose.msra.mxu0 %v4898
        %4908 = vmatpush.bf16.xpose.msra.mxu0 %v4897
        %4909 = vmatpush.bf16.xpose.msra.mxu0 %v4896
        %4910 = vmatpush.bf16.xpose.msra.mxu0 %v4895
        %4911 = vmatmul.bf16.gmra.mxu0 %v4893
        %v4912 = vpop.f32.mrf.mxu0
        %v4913 = vadd.f32 0.0, %v4912
        %v4914 = vpop.f32.mrf.mxu0
        %v4915 = vadd.f32 0.0, %v4914
        %4916 = vmatmul.bf16.gmra.mxu0 %v4894
        %v4917 = vpop.f32.mrf.mxu0
        %v4918 = vadd.f32 0.0, %v4917
        %v4919 = vpop.f32.mrf.mxu0
        %v4920 = vadd.f32 0.0, %v4919
        %4921 = vdwg.mxu0
        %v4922 = vld [vmem:[%s6] sm:$0xff]
        %v4923 = vld [vmem:[%s6 + $0x8] sm:$0xff]
        %v4924 = vld [vmem:[%s6 + $0x10] sm:$0xff]
        %v4925 = vld [vmem:[%s6 + $0x18] sm:$0xff]
        %v4926 = vld [vmem:[%s6 + $0x20] sm:$0xff]
        %v4927 = vld [vmem:[%s6 + $0x28] sm:$0xff]
        %v4928 = vld [vmem:[%s6 + $0x30] sm:$0xff]
        %v4929 = vld [vmem:[%s6 + $0x38] sm:$0xff]
        %v4930 = vmax.f32 %v4913, 0.0
        %v4931 = vmax.f32 %v4915, 0.0
        %v4932 = vmax.f32 %v4918, 0.0
        %v4933 = vmax.f32 %v4920, 0.0
        %v4934 = vld [vmem:[%s4369 + $0x20] sm:$0xff]
        %v4935 = vld [vmem:[%s4369 + $0x28] sm:$0xff]
        %v4936 = vld [vmem:[%s4369 + $0x30] sm:$0xff]
        %v4937 = vld [vmem:[%s4369 + $0x38] sm:$0xff]
        %v4938 = vadd.f32 %v4913, %v4934
        %v4939 = vadd.f32 %v4915, %v4935
        %v4940 = vadd.f32 %v4918, %v4936
        %v4941 = vadd.f32 %v4920, %v4937
        %v4942 = vld [vmem:[%s929] sm:$0xff]
        %v4943 = vld [vmem:[%s929 + $0x8] sm:$0xff]
        %v4944 = vld [vmem:[%s929 + $0x10] sm:$0xff]
        %v4945 = vld [vmem:[%s929 + $0x18] sm:$0xff]
        %v4946 = vld [vmem:[%s929 + $0x20] sm:$0xff]
        %v4947 = vld [vmem:[%s929 + $0x28] sm:$0xff]
        %v4948 = vld [vmem:[%s936] sm:$0xff]
        %v4949 = vld [vmem:[%s936 + $0x8] sm:$0xff]
        %v4950 = vld [vmem:[%s936 + $0x10] sm:$0xff]
        %v4951 = vld [vmem:[%s936 + $0x18] sm:$0xff]
        %v4952 = vld [vmem:[%s936 + $0x20] sm:$0xff]
        %v4953 = vld [vmem:[%s936 + $0x28] sm:$0xff]
        %4955 = vset.pattern.permute.xlu0 0
        %4956 = vperm.xlu0 %4955, %v4948
        %v4957 = vpop.permute.xlu0 %4956
        %4960 = vset.pattern.permute.xlu0 0
        %4961 = vperm.xlu0 %4960, %v4949
        %v4962 = vpop.permute.xlu0 %4961
        %4965 = vset.pattern.permute.xlu0 0
        %4966 = vperm.xlu0 %4965, %v4950
        %v4967 = vpop.permute.xlu0 %4966
        %4970 = vset.pattern.permute.xlu0 0
        %4971 = vperm.xlu0 %4970, %v4951
        %v4972 = vpop.permute.xlu0 %4971
        %4975 = vset.pattern.permute.xlu0 0
        %4976 = vperm.xlu0 %4975, %v4952
        %v4977 = vpop.permute.xlu0 %4976
        %4980 = vset.pattern.permute.xlu0 0
        %4981 = vperm.xlu0 %4980, %v4953
        %v4982 = vpop.permute.xlu0 %4981
        %v4985 = vsel %vm376, %v4942, 0
        %v4988 = vsel %vm376, %v4943, 0
        %v4991 = vsel %vm376, %v4944, 0
        %v4994 = vsel %vm376, %v4945, 0
        %v4997 = vsel %vm376, %v4946, 0
        %v5000 = vsel %vm376, %v4947, 0
        %5002 = vmatpush.msra.mxu0 0.0
        %5003 = vmatpush.msra.mxu0 0.0
        %5004 = vmatpush.msra.mxu0 0.0
        %5005 = vmatpush.msra.mxu0 0.0
        %5006 = vmatpush.msra.mxu0 0.0
        %5007 = vmatpush.msra.mxu0 0.0
        %5008 = vmatpush.msra.mxu0 0.0
        %5009 = vmatpush.msra.mxu0 0.0
        %5010 = vmatpush.msra.mxu0 0.0
        %5011 = vmatpush.msra.mxu0 0.0
        %5012 = vmatpush.msra.mxu0 0.0
        %5013 = vmatpush.msra.mxu0 0.0
        %5014 = vmatpush.msra.mxu0 %v4941
        %5015 = vmatpush.msra.mxu0 %v4940
        %5016 = vmatpush.msra.mxu0 %v4939
        %5017 = vmatpush.msra.mxu0 %v4938
        %5018 = vmatmul.f32.gmra.mxu0 %v4985
        %v5019 = vpop.f32.mrf.mxu0
        %v5020 = vadd.f32 %v4957, %v5019
        %5021 = vmatmul.f32.gmra.mxu0 %v4988
        %v5022 = vpop.f32.mrf.mxu0
        %v5023 = vadd.f32 %v4962, %v5022
        %5024 = vmatmul.f32.gmra.mxu0 %v4991
        %v5025 = vpop.f32.mrf.mxu0
        %v5026 = vadd.f32 %v4967, %v5025
        %5027 = vmatmul.f32.gmra.mxu0 %v4994
        %v5028 = vpop.f32.mrf.mxu0
        %v5029 = vadd.f32 %v4972, %v5028
        %5030 = vmatmul.f32.gmra.mxu0 %v4997
        %v5031 = vpop.f32.mrf.mxu0
        %v5032 = vadd.f32 %v4977, %v5031
        %5033 = vmatmul.f32.gmra.mxu0 %v5000
        %v5034 = vpop.f32.mrf.mxu0
        %v5035 = vadd.f32 %v4982, %v5034
        %5036 = vdwg.mxu0
        %5037 = vrot.lane.b32.xlu0 %v5020, 18
        %v5038 = vpop.permute.xlu0 %5037
        %v5039 = vld [vmem:[%s1028] sm:$0xf]
        %v5040 = vunpack.c.l.bf16 %v5039
        %v5041 = vmul.f32 %v5040, %v5038
        %5042 = vrot.lane.b32.xlu0 %v5020, 17
        %v5043 = vpop.permute.xlu0 %5042
        %v5044 = vld [vmem:[%s1034] sm:$0xf]
        %v5045 = vunpack.c.l.bf16 %v5044
        %v5046 = vmul.f32 %v5045, %v5043
        %5047 = vrot.lane.b32.xlu0 %v5020, 16
        %v5048 = vpop.permute.xlu0 %5047
        %v5049 = vld [vmem:[%s1040] sm:$0xf]
        %v5050 = vunpack.c.l.bf16 %v5049
        %v5051 = vmul.f32 %v5050, %v5048
        %5052 = vrot.lane.b32.xlu0 %v5020, 15
        %v5053 = vpop.permute.xlu0 %5052
        %v5054 = vld [vmem:[%s1046] sm:$0xf]
        %v5055 = vunpack.c.l.bf16 %v5054
        %v5056 = vmul.f32 %v5055, %v5053
        %5057 = vrot.lane.b32.xlu0 %v5020, 14
        %v5058 = vpop.permute.xlu0 %5057
        %v5059 = vld [vmem:[%s1052] sm:$0xf]
        %v5060 = vunpack.c.l.bf16 %v5059
        %v5061 = vmul.f32 %v5060, %v5058
        %v5062 = vadd.f32 %v5041, %v5061
        %5063 = vrot.lane.b32.xlu0 %v5020, 10
        %v5064 = vpop.permute.xlu0 %5063
        %v5065 = vld [vmem:[%s1059] sm:$0xf]
        %v5066 = vunpack.c.l.bf16 %v5065
        %v5067 = vmul.f32 %v5066, %v5064
        %v5068 = vadd.f32 %v5046, %v5067
        %5069 = vrot.lane.b32.xlu0 %v5020, 9
        %v5070 = vpop.permute.xlu0 %5069
        %v5071 = vld [vmem:[%s1066] sm:$0xf]
        %v5072 = vunpack.c.l.bf16 %v5071
        %v5073 = vmul.f32 %v5072, %v5070
        %v5074 = vadd.f32 %v5051, %v5073
        %5075 = vrot.lane.b32.xlu0 %v5020, 8
        %v5076 = vpop.permute.xlu0 %5075
        %v5077 = vld [vmem:[%s1073] sm:$0xf]
        %v5078 = vunpack.c.l.bf16 %v5077
        %v5079 = vmul.f32 %v5078, %v5076
        %v5080 = vadd.f32 %v5056, %v5079
        %5081 = vrot.lane.b32.xlu0 %v5020, 7
        %v5082 = vpop.permute.xlu0 %5081
        %v5083 = vld [vmem:[%s1080] sm:$0xf]
        %v5084 = vunpack.c.l.bf16 %v5083
        %v5085 = vmul.f32 %v5084, %v5082
        %v5086 = vadd.f32 %v5062, %v5085
        %5087 = vrot.lane.b32.xlu0 %v5020, 6
        %v5088 = vpop.permute.xlu0 %5087
        %v5089 = vld [vmem:[%s1087] sm:$0xf]
        %v5090 = vunpack.c.l.bf16 %v5089
        %v5091 = vmul.f32 %v5090, %v5088
        %v5092 = vadd.f32 %v5068, %v5091
        %5093 = vrot.lane.b32.xlu0 %v5020, 2
        %v5094 = vpop.permute.xlu0 %5093
        %v5095 = vld [vmem:[%s1094] sm:$0xf]
        %v5096 = vunpack.c.l.bf16 %v5095
        %v5097 = vmul.f32 %v5096, %v5094
        %v5098 = vadd.f32 %v5074, %v5097
        %5099 = vrot.lane.b32.xlu0 %v5020, 1
        %v5100 = vpop.permute.xlu0 %5099
        %v5101 = vld [vmem:[%s1101] sm:$0xf]
        %v5102 = vunpack.c.l.bf16 %v5101
        %v5103 = vmul.f32 %v5102, %v5100
        %v5104 = vadd.f32 %v5080, %v5103
        %v5105 = vld [vmem:[%s1106] sm:$0xf]
        %v5106 = vunpack.c.l.bf16 %v5105
        %v5107 = vmul.f32 %v5106, %v5020
        %v5108 = vadd.f32 %v5086, %v5107
        %5109 = vrot.lane.b32.xlu0 %v5020, 127
        %v5110 = vpop.permute.xlu0 %5109
        %v5111 = vld [vmem:[%s1113] sm:$0xf]
        %v5112 = vunpack.c.l.bf16 %v5111
        %v5113 = vmul.f32 %v5112, %v5110
        %v5114 = vadd.f32 %v5092, %v5113
        %5115 = vrot.lane.b32.xlu0 %v5020, 126
        %v5116 = vpop.permute.xlu0 %5115
        %v5117 = vld [vmem:[%s1120] sm:$0xf]
        %v5118 = vunpack.c.l.bf16 %v5117
        %v5119 = vmul.f32 %v5118, %v5116
        %v5120 = vadd.f32 %v5098, %v5119
        %5121 = vrot.lane.b32.xlu0 %v5020, 122
        %v5122 = vpop.permute.xlu0 %5121
        %v5123 = vld [vmem:[%s1127] sm:$0xf]
        %v5124 = vunpack.c.l.bf16 %v5123
        %v5125 = vmul.f32 %v5124, %v5122
        %v5126 = vadd.f32 %v5104, %v5125
        %5127 = vrot.lane.b32.xlu0 %v5020, 121
        %v5128 = vpop.permute.xlu0 %5127
        %v5129 = vld [vmem:[%s1134] sm:$0xf]
        %v5130 = vunpack.c.l.bf16 %v5129
        %v5131 = vmul.f32 %v5130, %v5128
        %v5132 = vadd.f32 %v5108, %v5131
        %5133 = vrot.lane.b32.xlu0 %v5020, 120
        %v5134 = vpop.permute.xlu0 %5133
        %v5135 = vld [vmem:[%s1141] sm:$0xf]
        %v5136 = vunpack.c.l.bf16 %v5135
        %v5137 = vmul.f32 %v5136, %v5134
        %v5138 = vadd.f32 %v5114, %v5137
        %5139 = vrot.lane.b32.xlu0 %v5020, 119
        %v5140 = vpop.permute.xlu0 %5139
        %v5141 = vld [vmem:[%s1148] sm:$0xf]
        %v5142 = vunpack.c.l.bf16 %v5141
        %v5143 = vmul.f32 %v5142, %v5140
        %v5144 = vadd.f32 %v5120, %v5143
        %5145 = vrot.lane.b32.xlu0 %v5020, 118
        %v5146 = vpop.permute.xlu0 %5145
        %v5147 = vld [vmem:[%s1155] sm:$0xf]
        %v5148 = vunpack.c.l.bf16 %v5147
        %v5149 = vmul.f32 %v5148, %v5146
        %v5150 = vadd.f32 %v5126, %v5149
        %5151 = vrot.lane.b32.xlu0 %v5020, 114
        %v5152 = vpop.permute.xlu0 %5151
        %v5153 = vld [vmem:[%s1162] sm:$0xf]
        %v5154 = vunpack.c.l.bf16 %v5153
        %v5155 = vmul.f32 %v5154, %v5152
        %v5156 = vadd.f32 %v5132, %v5155
        %5157 = vrot.lane.b32.xlu0 %v5020, 113
        %v5158 = vpop.permute.xlu0 %5157
        %v5159 = vld [vmem:[%s1169] sm:$0xf]
        %v5160 = vunpack.c.l.bf16 %v5159
        %v5161 = vmul.f32 %v5160, %v5158
        %v5162 = vadd.f32 %v5138, %v5161
        %5163 = vrot.lane.b32.xlu0 %v5020, 112
        %v5164 = vpop.permute.xlu0 %5163
        %v5165 = vld [vmem:[%s1176] sm:$0xf]
        %v5166 = vunpack.c.l.bf16 %v5165
        %v5167 = vmul.f32 %v5166, %v5164
        %v5168 = vadd.f32 %v5144, %v5167
        %5169 = vrot.lane.b32.xlu0 %v5020, 111
        %v5170 = vpop.permute.xlu0 %5169
        %v5171 = vld [vmem:[%s1183] sm:$0xf]
        %v5172 = vunpack.c.l.bf16 %v5171
        %v5173 = vmul.f32 %v5172, %v5170
        %v5174 = vadd.f32 %v5150, %v5173
        %5175 = vrot.lane.b32.xlu0 %v5020, 110
        %v5176 = vpop.permute.xlu0 %5175
        %v5177 = vld [vmem:[%s1190] sm:$0xf]
        %v5178 = vunpack.c.l.bf16 %v5177
        %v5179 = vmul.f32 %v5178, %v5176
        %v5180 = vadd.f32 %v5156, %v5179
        %v5181 = vld [vmem:[%s1195] sm:$0xff]
        %v5182 = vadd.f32 %v5180, %v5162
        %v5183 = vadd.f32 %v5168, %v5174
        %v5184 = vadd.f32 %v5182, %v5183
        %5186 = vset.pattern.permute.xlu0 0
        %5187 = vperm.xlu0 %5186, %v5181
        %v5188 = vpop.permute.xlu0 %5187
        %v5190 = vadd.f32 %v5188, %v5184
        %v5191 = vpack.c.bf16 %v5190, %v5190
        %v5192 = vpack.c.bf16 %v5023, %v5023
        %v5193 = vld [vmem:[%s1208] sm:$0xf]
        %v5194 = vld [vmem:[%s1208 + $0x4] sm:$0xf]
        %v5195 = vld [vmem:[%s1208 + $0x8] sm:$0xf]
        %v5196 = vld [vmem:[%s1208 + $0xc] sm:$0xf]
        %v5197 = vld [vmem:[%s1208 + $0x10] sm:$0xf]
        %v5198 = vld [vmem:[%s1208 + $0x14] sm:$0xf]
        %v5199 = vld [vmem:[%s1208 + $0x18] sm:$0xf]
        %v5200 = vld [vmem:[%s1208 + $0x1c] sm:$0xf]
        %v5201 = vld [vmem:[%s1208 + $0x20] sm:$0xf]
        %v5202 = vld [vmem:[%s1208 + $0x24] sm:$0xf]
        %v5203 = vld [vmem:[%s1208 + $0x28] sm:$0xf]
        %v5204 = vld [vmem:[%s1208 + $0x2c] sm:$0xf]
        %v5205 = vld [vmem:[%s1208 + $0x30] sm:$0xf]
        %v5206 = vld [vmem:[%s1208 + $0x34] sm:$0xf]
        %v5207 = vld [vmem:[%s1208 + $0x38] sm:$0xf]
        %v5208 = vld [vmem:[%s1208 + $0x3c] sm:$0xf]
        %v5209 = vunpack.c.l.bf16 %v5193
        %v5210 = vunpack.c.l.bf16 %v5194
        %v5211 = vunpack.c.l.bf16 %v5195
        %v5212 = vunpack.c.l.bf16 %v5196
        %v5213 = vunpack.c.l.bf16 %v5197
        %v5214 = vunpack.c.l.bf16 %v5198
        %v5215 = vunpack.c.l.bf16 %v5199
        %v5216 = vunpack.c.l.bf16 %v5200
        %v5217 = vunpack.c.l.bf16 %v5201
        %v5218 = vunpack.c.l.bf16 %v5202
        %v5219 = vunpack.c.l.bf16 %v5203
        %v5220 = vunpack.c.l.bf16 %v5204
        %v5221 = vunpack.c.l.bf16 %v5205
        %v5222 = vunpack.c.l.bf16 %v5206
        %v5223 = vunpack.c.l.bf16 %v5207
        %v5224 = vunpack.c.l.bf16 %v5208
        %5225 = vxpose.xlu0.c.b16.start [1/8] %v5191, 128
        %5226 = vxpose.xlu0.c.b16.cont [2/8] 0, 128
        %5227 = vxpose.xlu0.c.b16.cont [3/8] 0, 128
        %5228 = vxpose.xlu0.c.b16.cont [4/8] 0, 128
        %5229 = vxpose.xlu0.c.b16.cont [5/8] 0, 128
        %5230 = vxpose.xlu0.c.b16.cont [6/8] 0, 128
        %5231 = vxpose.xlu0.c.b16.cont [7/8] 0, 128
        %5232 = vxpose.xlu0.c.b16.end [8/8] 0, 128
        %v5233 = vpop.trf.xlu0
        %v5234 = vpop.trf.xlu0
        %v5235 = vpop.trf.xlu0
        %v5236 = vpop.trf.xlu0
        %v5237 = vpop.trf.xlu0
        %v5238 = vpop.trf.xlu0
        %v5239 = vpop.trf.xlu0
        %v5240 = vpop.trf.xlu0
        %v5242 = vsel %vm658, %v5233, 0
        %v5245 = vsel %vm658, %v5234, 0
        %v5248 = vsel %vm658, %v5235, 0
        %v5251 = vsel %vm658, %v5236, 0
        %v5254 = vsel %vm658, %v5237, 0
        %v5257 = vsel %vm658, %v5238, 0
        %v5260 = vsel %vm658, %v5239, 0
        %v5263 = vsel %vm658, %v5240, 0
        %v5266 = vsel %vm683, %v5192, 0
        %5268 = vmatpush.bf16.msra.mxu0 0
        %5269 = vmatpush.bf16.msra.mxu0 0
        %5270 = vmatpush.bf16.msra.mxu0 0
        %5271 = vmatpush.bf16.msra.mxu0 0
        %5272 = vmatpush.bf16.msra.mxu0 0
        %5273 = vmatpush.bf16.msra.mxu0 0
        %5274 = vmatpush.bf16.msra.mxu0 0
        %5275 = vmatpush.bf16.msra.mxu0 %v5266
        %5276 = vmatmul.bf16.gmra.mxu0 %v5242
        %v5277 = vpop.f32.mrf.mxu0
        %v5278 = vadd.f32 %v5209, %v5277
        %v5279 = vpop.f32.mrf.mxu0
        %v5280 = vadd.f32 %v5210, %v5279
        %5281 = vmatmul.bf16.gmra.mxu0 %v5245
        %v5282 = vpop.f32.mrf.mxu0
        %v5283 = vadd.f32 %v5211, %v5282
        %v5284 = vpop.f32.mrf.mxu0
        %v5285 = vadd.f32 %v5212, %v5284
        %5286 = vmatmul.bf16.gmra.mxu0 %v5248
        %v5287 = vpop.f32.mrf.mxu0
        %v5288 = vadd.f32 %v5213, %v5287
        %v5289 = vpop.f32.mrf.mxu0
        %v5290 = vadd.f32 %v5214, %v5289
        %5291 = vmatmul.bf16.gmra.mxu0 %v5251
        %v5292 = vpop.f32.mrf.mxu0
        %v5293 = vadd.f32 %v5215, %v5292
        %v5294 = vpop.f32.mrf.mxu0
        %v5295 = vadd.f32 %v5216, %v5294
        %5296 = vmatmul.bf16.gmra.mxu0 %v5254
        %v5297 = vpop.f32.mrf.mxu0
        %v5298 = vadd.f32 %v5217, %v5297
        %v5299 = vpop.f32.mrf.mxu0
        %v5300 = vadd.f32 %v5218, %v5299
        %5301 = vmatmul.bf16.gmra.mxu0 %v5257
        %v5302 = vpop.f32.mrf.mxu0
        %v5303 = vadd.f32 %v5219, %v5302
        %v5304 = vpop.f32.mrf.mxu0
        %v5305 = vadd.f32 %v5220, %v5304
        %5306 = vmatmul.bf16.gmra.mxu0 %v5260
        %v5307 = vpop.f32.mrf.mxu0
        %v5308 = vadd.f32 %v5221, %v5307
        %v5309 = vpop.f32.mrf.mxu0
        %v5310 = vadd.f32 %v5222, %v5309
        %5311 = vmatmul.bf16.gmra.mxu0 %v5263
        %v5312 = vpop.f32.mrf.mxu0
        %v5313 = vadd.f32 %v5223, %v5312
        %v5314 = vpop.f32.mrf.mxu0
        %v5315 = vadd.f32 %v5224, %v5314
        %5316 = vdwg.mxu0
        %5317 = vmax.xlane.f32.xlu0 %v5278
        %v5318 = vpop.xlane.xlu0 %5317
        %5319 = vmax.xlane.f32.xlu0 %v5280
        %v5320 = vpop.xlane.xlu0 %5319
        %5321 = vmax.xlane.f32.xlu0 %v5283
        %v5322 = vpop.xlane.xlu0 %5321
        %5323 = vmax.xlane.f32.xlu0 %v5285
        %v5324 = vpop.xlane.xlu0 %5323
        %5325 = vmax.xlane.f32.xlu0 %v5288
        %v5326 = vpop.xlane.xlu0 %5325
        %5327 = vmax.xlane.f32.xlu0 %v5290
        %v5328 = vpop.xlane.xlu0 %5327
        %5329 = vmax.xlane.f32.xlu0 %v5293
        %v5330 = vpop.xlane.xlu0 %5329
        %5331 = vmax.xlane.f32.xlu0 %v5295
        %v5332 = vpop.xlane.xlu0 %5331
        %5333 = vmax.xlane.f32.xlu0 %v5298
        %v5334 = vpop.xlane.xlu0 %5333
        %5335 = vmax.xlane.f32.xlu0 %v5300
        %v5336 = vpop.xlane.xlu0 %5335
        %5337 = vmax.xlane.f32.xlu0 %v5303
        %v5338 = vpop.xlane.xlu0 %5337
        %5339 = vmax.xlane.f32.xlu0 %v5305
        %v5340 = vpop.xlane.xlu0 %5339
        %5341 = vmax.xlane.f32.xlu0 %v5308
        %v5342 = vpop.xlane.xlu0 %5341
        %5343 = vmax.xlane.f32.xlu0 %v5310
        %v5344 = vpop.xlane.xlu0 %5343
        %5345 = vmax.xlane.f32.xlu0 %v5313
        %v5346 = vpop.xlane.xlu0 %5345
        %5347 = vmax.xlane.f32.xlu0 %v5315
        %v5348 = vpop.xlane.xlu0 %5347
        %v5349 = vsub.f32 %v5278, %v5318
        %v5350 = vsub.f32 %v5280, %v5320
        %v5351 = vsub.f32 %v5283, %v5322
        %v5352 = vsub.f32 %v5285, %v5324
        %v5353 = vsub.f32 %v5288, %v5326
        %v5354 = vsub.f32 %v5290, %v5328
        %v5355 = vsub.f32 %v5293, %v5330
        %v5356 = vsub.f32 %v5295, %v5332
        %v5357 = vsub.f32 %v5298, %v5334
        %v5358 = vsub.f32 %v5300, %v5336
        %v5359 = vsub.f32 %v5303, %v5338
        %v5360 = vsub.f32 %v5305, %v5340
        %v5361 = vsub.f32 %v5308, %v5342
        %v5362 = vsub.f32 %v5310, %v5344
        %v5363 = vsub.f32 %v5313, %v5346
        %v5364 = vsub.f32 %v5315, %v5348
        %v5365 = vmul.f32 %v5349, 1.442695
        %v5366 = vpow.pop %v5365
        %v5367 = vmul.f32 %v5350, 1.442695
        %v5368 = vpow.pop %v5367
        %v5369 = vmul.f32 %v5351, 1.442695
        %v5370 = vpow.pop %v5369
        %v5371 = vmul.f32 %v5352, 1.442695
        %v5372 = vpow.pop %v5371
        %v5373 = vmul.f32 %v5353, 1.442695
        %v5374 = vpow.pop %v5373
        %v5375 = vmul.f32 %v5354, 1.442695
        %v5376 = vpow.pop %v5375
        %v5377 = vmul.f32 %v5355, 1.442695
        %v5378 = vpow.pop %v5377
        %v5379 = vmul.f32 %v5356, 1.442695
        %v5380 = vpow.pop %v5379
        %v5381 = vmul.f32 %v5357, 1.442695
        %v5382 = vpow.pop %v5381
        %v5383 = vmul.f32 %v5358, 1.442695
        %v5384 = vpow.pop %v5383
        %v5385 = vmul.f32 %v5359, 1.442695
        %v5386 = vpow.pop %v5385
        %v5387 = vmul.f32 %v5360, 1.442695
        %v5388 = vpow.pop %v5387
        %v5389 = vmul.f32 %v5361, 1.442695
        %v5390 = vpow.pop %v5389
        %v5391 = vmul.f32 %v5362, 1.442695
        %v5392 = vpow.pop %v5391
        %v5393 = vmul.f32 %v5363, 1.442695
        %v5394 = vpow.pop %v5393
        %v5395 = vmul.f32 %v5364, 1.442695
        %v5396 = vpow.pop %v5395
        %5397 = vadd.xlane.f32.xlu0 %v5366
        %v5398 = vpop.xlane.xlu0 %5397
        %5399 = vadd.xlane.f32.xlu0 %v5368
        %v5400 = vpop.xlane.xlu0 %5399
        %5401 = vadd.xlane.f32.xlu0 %v5370
        %v5402 = vpop.xlane.xlu0 %5401
        %5403 = vadd.xlane.f32.xlu0 %v5372
        %v5404 = vpop.xlane.xlu0 %5403
        %5405 = vadd.xlane.f32.xlu0 %v5374
        %v5406 = vpop.xlane.xlu0 %5405
        %5407 = vadd.xlane.f32.xlu0 %v5376
        %v5408 = vpop.xlane.xlu0 %5407
        %5409 = vadd.xlane.f32.xlu0 %v5378
        %v5410 = vpop.xlane.xlu0 %5409
        %5411 = vadd.xlane.f32.xlu0 %v5380
        %v5412 = vpop.xlane.xlu0 %5411
        %5413 = vadd.xlane.f32.xlu0 %v5382
        %v5414 = vpop.xlane.xlu0 %5413
        %5415 = vadd.xlane.f32.xlu0 %v5384
        %v5416 = vpop.xlane.xlu0 %5415
        %5417 = vadd.xlane.f32.xlu0 %v5386
        %v5418 = vpop.xlane.xlu0 %5417
        %5419 = vadd.xlane.f32.xlu0 %v5388
        %v5420 = vpop.xlane.xlu0 %5419
        %5421 = vadd.xlane.f32.xlu0 %v5390
        %v5422 = vpop.xlane.xlu0 %5421
        %5423 = vadd.xlane.f32.xlu0 %v5392
        %v5424 = vpop.xlane.xlu0 %5423
        %5425 = vadd.xlane.f32.xlu0 %v5394
        %v5426 = vpop.xlane.xlu0 %5425
        %5427 = vadd.xlane.f32.xlu0 %v5396
        %v5428 = vpop.xlane.xlu0 %5427
        %v5429 = vrcp.pop %v5398
        %v5430 = vrcp.pop %v5400
        %v5431 = vrcp.pop %v5402
        %v5432 = vrcp.pop %v5404
        %v5433 = vrcp.pop %v5406
        %v5434 = vrcp.pop %v5408
        %v5435 = vrcp.pop %v5410
        %v5436 = vrcp.pop %v5412
        %v5437 = vrcp.pop %v5414
        %v5438 = vrcp.pop %v5416
        %v5439 = vrcp.pop %v5418
        %v5440 = vrcp.pop %v5420
        %v5441 = vrcp.pop %v5422
        %v5442 = vrcp.pop %v5424
        %v5443 = vrcp.pop %v5426
        %v5444 = vrcp.pop %v5428
        %v5445 = vmul.f32 %v5366, %v5429
        %v5446 = vmul.f32 %v5368, %v5430
        %v5447 = vmul.f32 %v5370, %v5431
        %v5448 = vmul.f32 %v5372, %v5432
        %v5449 = vmul.f32 %v5374, %v5433
        %v5450 = vmul.f32 %v5376, %v5434
        %v5451 = vmul.f32 %v5378, %v5435
        %v5452 = vmul.f32 %v5380, %v5436
        %v5453 = vmul.f32 %v5382, %v5437
        %v5454 = vmul.f32 %v5384, %v5438
        %v5455 = vmul.f32 %v5386, %v5439
        %v5456 = vmul.f32 %v5388, %v5440
        %v5457 = vmul.f32 %v5390, %v5441
        %v5458 = vmul.f32 %v5392, %v5442
        %v5459 = vmul.f32 %v5394, %v5443
        %v5460 = vmul.f32 %v5396, %v5444
        %v5461 = vpack.c.bf16 %v5029, %v5026
        %v5462 = vpack.c.bf16 %v5035, %v5032
        %v5463 = vpack.c.bf16 %v5446, %v5445
        %v5464 = vpack.c.bf16 %v5448, %v5447
        %v5465 = vpack.c.bf16 %v5450, %v5449
        %v5466 = vpack.c.bf16 %v5452, %v5451
        %v5467 = vpack.c.bf16 %v5454, %v5453
        %v5468 = vpack.c.bf16 %v5456, %v5455
        %v5469 = vpack.c.bf16 %v5458, %v5457
        %v5470 = vpack.c.bf16 %v5460, %v5459
        %5471 = vmatpush.bf16.xpose.msra.mxu0 %v5470
        %5472 = vmatpush.bf16.xpose.msra.mxu0 %v5469
        %5473 = vmatpush.bf16.xpose.msra.mxu0 %v5468
        %5474 = vmatpush.bf16.xpose.msra.mxu0 %v5467
        %5475 = vmatpush.bf16.xpose.msra.mxu0 %v5466
        %5476 = vmatpush.bf16.xpose.msra.mxu0 %v5465
        %5477 = vmatpush.bf16.xpose.msra.mxu0 %v5464
        %5478 = vmatpush.bf16.xpose.msra.mxu0 %v5463
        %5479 = vmatmul.bf16.gmra.mxu0 %v5461
        %v5480 = vpop.f32.mrf.mxu0
        %v5481 = vadd.f32 0.0, %v5480
        %v5482 = vpop.f32.mrf.mxu0
        %v5483 = vadd.f32 0.0, %v5482
        %5484 = vmatmul.bf16.gmra.mxu0 %v5462
        %v5485 = vpop.f32.mrf.mxu0
        %v5486 = vadd.f32 0.0, %v5485
        %v5487 = vpop.f32.mrf.mxu0
        %v5488 = vadd.f32 0.0, %v5487
        %5489 = vdwg.mxu0
        %v5490 = vld [vmem:[%s1506] sm:$0xff]
        %v5491 = vld [vmem:[%s1506 + $0x8] sm:$0xff]
        %v5492 = vld [vmem:[%s1506 + $0x10] sm:$0xff]
        %v5493 = vld [vmem:[%s1506 + $0x18] sm:$0xff]
        %v5494 = vld [vmem:[%s1506 + $0x20] sm:$0xff]
        %v5495 = vld [vmem:[%s1506 + $0x28] sm:$0xff]
        %v5496 = vld [vmem:[%s1506 + $0x30] sm:$0xff]
        %v5497 = vld [vmem:[%s1506 + $0x38] sm:$0xff]
        %v5498 = vmax.f32 %v5481, 0.0
        %v5499 = vmax.f32 %v5483, 0.0
        %v5500 = vmax.f32 %v5486, 0.0
        %v5501 = vmax.f32 %v5488, 0.0
        %v5503 = vsel %vm376, %v5490, 0
        %v5506 = vsel %vm376, %v5491, 0
        %v5509 = vsel %vm376, %v5492, 0
        %v5512 = vsel %vm376, %v5493, 0
        %v5515 = vsel %vm376, %v5494, 0
        %v5518 = vsel %vm376, %v5495, 0
        %v5521 = vsel %vm376, %v5496, 0
        %v5524 = vsel %vm376, %v5497, 0
        %5526 = vmatpush.msra.mxu0 0.0
        %5527 = vmatpush.msra.mxu0 0.0
        %5528 = vmatpush.msra.mxu0 0.0
        %5529 = vmatpush.msra.mxu0 0.0
        %5530 = vmatpush.msra.mxu0 0.0
        %5531 = vmatpush.msra.mxu0 0.0
        %5532 = vmatpush.msra.mxu0 0.0
        %5533 = vmatpush.msra.mxu0 0.0
        %5534 = vmatpush.msra.mxu0 0.0
        %5535 = vmatpush.msra.mxu0 0.0
        %5536 = vmatpush.msra.mxu0 0.0
        %5537 = vmatpush.msra.mxu0 0.0
        %5538 = vmatpush.msra.mxu0 %v5501
        %5539 = vmatpush.msra.mxu0 %v5500
        %5540 = vmatpush.msra.mxu0 %v5499
        %5541 = vmatpush.msra.mxu0 %v5498
        %5542 = vmatmul.f32.gmra.mxu0 %v5503
        %v5543 = vpop.f32.mrf.mxu0
        %v5544 = vadd.f32 0.0, %v5543
        %5545 = vmatmul.f32.gmra.mxu0 %v5506
        %v5546 = vpop.f32.mrf.mxu0
        %v5547 = vadd.f32 0.0, %v5546
        %5548 = vmatmul.f32.gmra.mxu0 %v5509
        %v5549 = vpop.f32.mrf.mxu0
        %v5550 = vadd.f32 0.0, %v5549
        %5551 = vmatmul.f32.gmra.mxu0 %v5512
        %v5552 = vpop.f32.mrf.mxu0
        %v5553 = vadd.f32 0.0, %v5552
        %5554 = vmatmul.f32.gmra.mxu0 %v5515
        %v5555 = vpop.f32.mrf.mxu0
        %v5556 = vadd.f32 0.0, %v5555
        %5557 = vmatmul.f32.gmra.mxu0 %v5518
        %v5558 = vpop.f32.mrf.mxu0
        %v5559 = vadd.f32 0.0, %v5558
        %5560 = vmatmul.f32.gmra.mxu0 %v5521
        %v5561 = vpop.f32.mrf.mxu0
        %v5562 = vadd.f32 0.0, %v5561
        %5563 = vmatmul.f32.gmra.mxu0 %v5524
        %v5564 = vpop.f32.mrf.mxu0
        %v5565 = vadd.f32 0.0, %v5564
        %5566 = vdwg.mxu0
        %v5568 = vsel %vm376, %v4922, 0
        %v5571 = vsel %vm376, %v4923, 0
        %v5574 = vsel %vm376, %v4924, 0
        %v5577 = vsel %vm376, %v4925, 0
        %v5580 = vsel %vm376, %v4926, 0
        %v5583 = vsel %vm376, %v4927, 0
        %v5586 = vsel %vm376, %v4928, 0
        %v5589 = vsel %vm376, %v4929, 0
        %5591 = vmatpush.msra.mxu0 0.0
        %5592 = vmatpush.msra.mxu0 0.0
        %5593 = vmatpush.msra.mxu0 0.0
        %5594 = vmatpush.msra.mxu0 0.0
        %5595 = vmatpush.msra.mxu0 0.0
        %5596 = vmatpush.msra.mxu0 0.0
        %5597 = vmatpush.msra.mxu0 0.0
        %5598 = vmatpush.msra.mxu0 0.0
        %5599 = vmatpush.msra.mxu0 0.0
        %5600 = vmatpush.msra.mxu0 0.0
        %5601 = vmatpush.msra.mxu0 0.0
        %5602 = vmatpush.msra.mxu0 0.0
        %5603 = vmatpush.msra.mxu0 %v4933
        %5604 = vmatpush.msra.mxu0 %v4932
        %5605 = vmatpush.msra.mxu0 %v4931
        %5606 = vmatpush.msra.mxu0 %v4930
        %5607 = vmatmul.f32.gmra.mxu0 %v5568
        %v5608 = vpop.f32.mrf.mxu0
        %v5609 = vadd.f32 %v5544, %v5608
        %5610 = vmatmul.f32.gmra.mxu0 %v5571
        %v5611 = vpop.f32.mrf.mxu0
        %v5612 = vadd.f32 %v5547, %v5611
        %5613 = vmatmul.f32.gmra.mxu0 %v5574
        %v5614 = vpop.f32.mrf.mxu0
        %v5615 = vadd.f32 %v5550, %v5614
        %5616 = vmatmul.f32.gmra.mxu0 %v5577
        %v5617 = vpop.f32.mrf.mxu0
        %v5618 = vadd.f32 %v5553, %v5617
        %5619 = vmatmul.f32.gmra.mxu0 %v5580
        %v5620 = vpop.f32.mrf.mxu0
        %v5621 = vadd.f32 %v5556, %v5620
        %5622 = vmatmul.f32.gmra.mxu0 %v5583
        %v5623 = vpop.f32.mrf.mxu0
        %v5624 = vadd.f32 %v5559, %v5623
        %5625 = vmatmul.f32.gmra.mxu0 %v5586
        %v5626 = vpop.f32.mrf.mxu0
        %v5627 = vadd.f32 %v5562, %v5626
        %5628 = vmatmul.f32.gmra.mxu0 %v5589
        %v5629 = vpop.f32.mrf.mxu0
        %v5630 = vadd.f32 %v5565, %v5629
        %5631 = vdwg.mxu0
        %v5632 = vld [vmem:[%s7] sm:$0xff]
        %v5633 = vld [vmem:[%s7 + $0x8] sm:$0xff]
        %v5634 = vld [vmem:[%s7 + $0x10] sm:$0xff]
        %v5635 = vld [vmem:[%s7 + $0x18] sm:$0xff]
        %v5636 = vld [vmem:[%s7 + $0x20] sm:$0xff]
        %v5637 = vld [vmem:[%s7 + $0x28] sm:$0xff]
        %v5638 = vld [vmem:[%s7 + $0x30] sm:$0xff]
        %v5639 = vld [vmem:[%s7 + $0x38] sm:$0xff]
        %5641 = vset.pattern.permute.xlu0 0
        %5642 = vperm.xlu0 %5641, %v5632
        %v5643 = vpop.permute.xlu0 %5642
        %5646 = vset.pattern.permute.xlu0 0
        %5647 = vperm.xlu0 %5646, %v5633
        %v5648 = vpop.permute.xlu0 %5647
        %5651 = vset.pattern.permute.xlu0 0
        %5652 = vperm.xlu0 %5651, %v5634
        %v5653 = vpop.permute.xlu0 %5652
        %5656 = vset.pattern.permute.xlu0 0
        %5657 = vperm.xlu0 %5656, %v5635
        %v5658 = vpop.permute.xlu0 %5657
        %5661 = vset.pattern.permute.xlu0 0
        %5662 = vperm.xlu0 %5661, %v5636
        %v5663 = vpop.permute.xlu0 %5662
        %5666 = vset.pattern.permute.xlu0 0
        %5667 = vperm.xlu0 %5666, %v5637
        %v5668 = vpop.permute.xlu0 %5667
        %5671 = vset.pattern.permute.xlu0 0
        %5672 = vperm.xlu0 %5671, %v5638
        %v5673 = vpop.permute.xlu0 %5672
        %5676 = vset.pattern.permute.xlu0 0
        %5677 = vperm.xlu0 %5676, %v5639
        %v5678 = vpop.permute.xlu0 %5677
        %v5680 = vadd.f32 %v5609, %v5643
        %v5681 = vadd.f32 %v5612, %v5648
        %v5682 = vadd.f32 %v5615, %v5653
        %v5683 = vadd.f32 %v5618, %v5658
        %v5684 = vadd.f32 %v5621, %v5663
        %v5685 = vadd.f32 %v5624, %v5668
        %v5686 = vadd.f32 %v5627, %v5673
        %v5687 = vadd.f32 %v5630, %v5678
        %s5688 = scalar_lea.vmem %s326, 192 [#allocation5]
        %5689 = vst [vmem:[%s5688] sm:$0xff] %v5680
        %5690 = vst [vmem:[%s5688 + $0x8] sm:$0xff] %v5681
        %5691 = vst [vmem:[%s5688 + $0x10] sm:$0xff] %v5682
        %5692 = vst [vmem:[%s5688 + $0x18] sm:$0xff] %v5683
        %5693 = vst [vmem:[%s5688 + $0x20] sm:$0xff] %v5684
        %5694 = vst [vmem:[%s5688 + $0x28] sm:$0xff] %v5685
        %5695 = vst [vmem:[%s5688 + $0x30] sm:$0xff] %v5686
        %5696 = vst [vmem:[%s5688 + $0x38] sm:$0xff] %v5687
        %s5697 = sand.u32 %s206, 1
        %s5698 = scalar_lea.sflag [#allocation4], %s5697
        %s5699 = sand.u32 %s206, 1
        %s5700 = smul.addr %s5699, 256
        %s5701 = scalar_lea.vmem [#allocation5], %s5700
        // Predicated region
        $region57: #{tpu_custom_call.1} parent=51 // pred_check
          %p5702 = pneg %p216
        $region58: #{tpu_custom_call.1} parent=51 // pred_check_branch
          %5704 = sbr.rel (%p5702) target = $region60
        $region59: #{tpu_custom_call.1} parent=51 // pred_region
          %s5705 = smul.u32 4, %s25
          %5707 = vsyncadd %s5698, 0
          %s5708 = smul.addr %s5705, 8
          %s5709 = smul.addr %s5708, 8
          %s5710 = scalar_lea.hbm %s8, %s5709
          %s5711 = sshll.u32 %s5701, 4
          %s5712 = int_to_ptr.vmem [resolvable:$true] %s5711
          %s5713 = sshll.u32 %s5710, 4
          %s5714 = int_to_ptr.hbm [resolvable:$true] %s5713
          %5719 = dma.vmem_to_hbm [thread:$0]  %s5712, 4096, %s5714, %s5698, 128, 128, 8
        $region60: #{tpu_custom_call.1} parent=51 // pred_fallthru
          _
      $region52: #{tpu_custom_call.1} parent=5 // pred_fallthru
        _
      %p5720 = scmp.le.s32.totalorder 2, %s20
      // Predicated region
      $region61: #{tpu_custom_call.1} parent=5 // pred_check
        %p5721 = pneg %p5720
      $region62: #{tpu_custom_call.1} parent=5 // pred_check_branch
        %5723 = sbr.rel (%p5721) target = $region64
      $region63: #{tpu_custom_call.1} parent=5 // pred_region
        %s5724 = ssub.s32 %s20, 2
        // Predicated region
        $region65: #{tpu_custom_call.1} parent=63 // pred_check
          %p5725 = pneg %p222
        $region66: #{tpu_custom_call.1} parent=63 // pred_check_branch
          %5727 = sbr.rel (%p5725) target = $region68
        $region67: #{tpu_custom_call.1} parent=63 // pred_region
          %s5728 = sand.u32 %s207, 1
          %s5729 = scalar_lea.sflag [#allocation4], %s5728
          %s5730 = sand.u32 %s207, 1
          %s5731 = smul.addr %s5730, 256
          %s5732 = scalar_lea.vmem [#allocation5], %s5731
          %5734 = dma.done %s5729, 4096
        $region68: #{tpu_custom_call.1} parent=63 // pred_fallthru
          _
      $region64: #{tpu_custom_call.1} parent=5 // pred_fallthru
        _
    $region6: #{tpu_custom_call.1} parent=1 // loop_footer
      %s24 = sadd.s32 1, %s20
    $region7: #{tpu_custom_call.1} parent=1 // loop_footer_branch
      %19 = sbr.rel target = $region3
    $region8: #{tpu_custom_call.1} parent=1 // loop_exit
      _
    %5735 = vsyncpa [#allocation3], 1
    %s5736 = scalar_lea.sflag [#allocation3], 1
    %5737 = vsyncpa %s5736, 1
    %5738 = vsyncpa [#allocation4], 1
    %s5739 = scalar_lea.sflag [#allocation4], 1
    %5740 = vsyncpa %s5739, 1

</llo_original>
